<compile_context>
chip_gen: v6e
topology: v6e:2x2x1
jax: 0.10.0
libtpu: 0.0.40
codegen_flags: <defaults>
</compile_context>

<pallas_src>
import jax
import jax.numpy as jnp
from jax.experimental import pallas as pl
from jax.experimental.pallas import tpu as pltpu

# ----- problem sizes (small, consistent with the module's forward) -----
B = 2            # questions
NC = 4           # choices per question
BN = B * NC      # flattened batch (8)
R = 8            # ROIs per image (module uses coord[:32]; keep small)
BNR = BN * R     # flattened ROI rows (64)
F = 1000         # resnet101 output dim (unpadded)
H = 1024         # hidden dim
EPS = 1e-12      # LayerNorm eps from the module spec
K0 = 512         # w_feat DMA chunk 0 rows (lane/sublane aligned)
K1 = F - K0      # w_feat DMA chunk 1 rows (488)


def _layernorm(x, gamma, beta):
    # Single-pass LN: mean and E[x^2] are independent reductions (no dependent 2nd sweep).
    mu = jnp.mean(x, axis=-1, keepdims=True)
    m2 = jnp.mean(x * x, axis=-1, keepdims=True)
    var = jnp.maximum(m2 - mu * mu, 0.0)
    return (x - mu) * jax.lax.rsqrt(var + EPS) * gamma + beta


# ---------------------------------------------------------------------------
# Single fused kernel: ROI pipeline + per-image relation logits + QA head.
# ---------------------------------------------------------------------------
def fused_kernel(coords_ref, feats_ref, rob_ref,
                 wbox_ref, bbox_ref, gboxh_ref, betbh_ref,
                 wfeat_hbm, bfeat_ref, gfeath_ref, betfh_ref,
                 wrel_ref, wcls_ref, brel_ref, bcls_ref,
                 rel_ref, logit_ref,
                 wbuf0, wbuf1, sem):
    # ---- manual double-buffered DMA of w_feat (dominant HBM read) ----------
    cp0 = pltpu.make_async_copy(wfeat_hbm.at[pl.ds(0, K0), :], wbuf0, sem.at[0])
    cp1 = pltpu.make_async_copy(wfeat_hbm.at[pl.ds(K0, K1), :], wbuf1, sem.at[1])
    cp0.start()
    cp1.start()

    # ---- boxes = 0.5 * LayerNorm(Linear(4 -> H)(coords)) -------------------
    # (pure VPU/XLU work; overlaps the in-flight w_feat DMA)
    coords = coords_ref[...]                      # [BNR, 4] f32
    wbox = wbox_ref[...]                          # [4, H]   f32
    boxes = (coords[:, 0:1] * wbox[0:1, :] +
             coords[:, 1:2] * wbox[1:2, :] +
             coords[:, 2:3] * wbox[2:3, :] +
             coords[:, 3:4] * wbox[3:4, :] + bbox_ref[...])
    # gamma/beta are pre-scaled by 0.5 in init: LN output already carries the "/2".
    boxes = _layernorm(boxes, gboxh_ref[...], betbh_ref[...])        # [BNR, H]

    # in-kernel bf16 cast of the raw resnet activations (also overlaps the DMA)
    f_lo = feats_ref[:, 0:K0].astype(jnp.bfloat16)                   # [BNR, 512]
    f_hi = feats_ref[:, K0:F].astype(jnp.bfloat16)                   # [BNR, 488]

    # ---- feats = 0.5 * LayerNorm(Linear(1000 -> H)(resnet)) ----------------
    # partial matmul on chunk 0 overlaps chunk 1's DMA
    cp0.wait()
    acc = jnp.dot(f_lo, wbuf0[...], preferred_element_type=jnp.float32)
    cp1.wait()
    acc = acc + jnp.dot(f_hi, wbuf1[...], preferred_element_type=jnp.float32)
    rfeat = _layernorm(acc + bfeat_ref[...], gfeath_ref[...], betfh_ref[...])

    roi = rfeat + boxes            # == (LN_feat + LN_box) / 2       # [BNR, H] f32

    # ---- per-image pairwise relation logits: rel[b,i,j] --------------------
    # rel[b,i,j] = sum_d roi[b,i,d] * w_rel[d] * roi[b,j,d] + b_rel
    # Only same-image pairs are computed (batched over images), written as [BN, R, R].
    # TODO(synk): training-mode dropout before rel_classifier omitted (eval identity).
    roi3 = roi.reshape(BN, R, H)                                     # tile-aligned view
    roiw3 = (roi * wrel_ref[...]).reshape(BN, R, H)
    rel = jnp.einsum('brd,bsd->brs',
                     roiw3.astype(jnp.bfloat16), roi3.astype(jnp.bfloat16),
                     preferred_element_type=jnp.float32)             # [BN, R, R]
    rel_ref[...] = rel + brel_ref[0, 0]

    # ---- visual[b] = sum_i roi[b, i]  (sublane reduce; no 0/1 matmul) -------
    visual = jnp.sum(roi3, axis=1)                                   # [BN, H]

    # ---- fused QA head: logits = sum_d roberta*visual*w_cls + b_cls --------
    prod = rob_ref[...] * visual * wcls_ref[...]                     # [BN, H]
    logit_ref[...] = jnp.sum(prod, axis=-1, keepdims=True) + bcls_ref[0, 0]


def fused_heads(params, out_roberta, resnet_feats, coords):
    # wrapper-side layout prep is only leading-dim merges (XLA bitcasts, no extra kernels)
    feats = resnet_feats.reshape(BNR, F)          # raw f32, unpadded
    coords_flat = coords.reshape(BNR, 4)

    vspec = lambda shape: pl.BlockSpec(shape, lambda i, _s=shape: (0,) * len(_s))
    sspec = pl.BlockSpec(memory_space=pltpu.MemorySpace.SMEM)
    hbm_spec = pl.BlockSpec(memory_space=pl.ANY)   # w_feat stays in HBM; manual DMA

    rel, logits = pl.pallas_call(
        fused_kernel,
        out_shape=(jax.ShapeDtypeStruct((BN, R, R), jnp.float32),
                   jax.ShapeDtypeStruct((BN, 1), jnp.float32)),
        grid_spec=pltpu.PrefetchScalarGridSpec(
            num_scalar_prefetch=0,
            grid=(1,),
            in_specs=[
                vspec((BNR, 4)),        # coords
                vspec((BNR, F)),        # resnet feats (raw f32, full-array block)
                vspec((BN, H)),         # roberta pooled output
                vspec((4, H)),          # w_box
                vspec((1, H)),          # b_box
                vspec((1, H)),          # g_box  (pre-scaled by 0.5)
                vspec((1, H)),          # beta_box (pre-scaled by 0.5)
                hbm_spec,               # w_feat (bf16, HBM; manual double-buffered DMA)
                vspec((1, H)),          # b_feat
                vspec((1, H)),          # g_feat (pre-scaled by 0.5)
                vspec((1, H)),          # beta_feat (pre-scaled by 0.5)
                vspec((1, H)),          # w_rel
                vspec((1, H)),          # w_cls
                sspec,                  # b_rel scalar (SMEM)
                sspec,                  # b_cls scalar (SMEM)
            ],
            out_specs=[
                vspec((BN, R, R)),      # rel logits, same-image pairs only
                vspec((BN, 1)),         # qa logits
            ],
            scratch_shapes=[
                pltpu.VMEM((K0, H), jnp.bfloat16),   # w_feat chunk 0
                pltpu.VMEM((K1, H), jnp.bfloat16),   # w_feat chunk 1
                pltpu.SemaphoreType.DMA((2,)),
            ],
        ),
        compiler_params=pltpu.CompilerParams(
            dimension_semantics=("arbitrary",)),
    )(coords_flat, feats, out_roberta,
      params["w_box"], params["b_box"], params["g_box_h"], params["beta_box_h"],
      params["w_feat"], params["b_feat"], params["g_feat_h"], params["beta_feat_h"],
      params["w_rel"], params["w_cls"], params["b_rel"], params["b_cls"])

    # flattened order [image, i, j] — matches per-image row-major concat in the module
    return rel.reshape(-1), logits


# ---------------------------------------------------------------------------
# Full forward (losses in plain-JAX glue, matching the PyTorch semantics).
# TODO(synk): this path is forward-only; training would need a custom_vjp for the kernel.
# ---------------------------------------------------------------------------
@jax.jit
def forward(params, out_roberta, resnet_feats, coords, labels, rel_labels):
    rel_logits, logits = fused_heads(params, out_roberta, resnet_feats, coords)
    reshaped_logits = logits.reshape(B, NC)

    # CrossEntropyLoss over choices
    logp = jax.nn.log_softmax(reshaped_logits, axis=-1)
    loss0 = -jnp.mean(jnp.take_along_axis(logp, labels[:, None], axis=-1))

    # BCEWithLogitsLoss(pos_weight=1.5) over relation logits
    pos_w = 1.5
    sp_pos = jax.nn.softplus(-rel_logits)
    sp_neg = jax.nn.softplus(rel_logits)
    loss1 = jnp.mean(pos_w * rel_labels * sp_pos + (1.0 - rel_labels) * sp_neg)

    loss = loss0 + 0.1 * loss1
    return loss, loss0, loss1, reshaped_logits, rel_logits, rel_labels


def init_params(key):
    ks = jax.random.split(key, 4)
    s = 0.02
    return {
        "w_box": s * jax.random.normal(ks[0], (4, H), jnp.float32),
        "b_box": jnp.zeros((1, H), jnp.float32),
        # LayerNorm gamma/beta pre-scaled by 0.5 once at init: folds the
        # "(feats + boxes) / 2" average into the affines (saves a full VPU pass).
        "g_box_h": 0.5 * jnp.ones((1, H), jnp.float32),
        "beta_box_h": 0.5 * jnp.zeros((1, H), jnp.float32),
        # dominant HBM read stored bf16, UNPADDED [1000, 1024]; chunk-DMA'd in-kernel
        "w_feat": (s * jax.random.normal(ks[1], (F, H), jnp.float32)).astype(jnp.bfloat16),
        "b_feat": jnp.zeros((1, H), jnp.float32),
        "g_feat_h": 0.5 * jnp.ones((1, H), jnp.float32),
        "beta_feat_h": 0.5 * jnp.zeros((1, H), jnp.float32),
        "w_rel": s * jax.random.normal(ks[2], (1, H), jnp.float32),
        "b_rel": jnp.zeros((1, 1), jnp.float32),
        "w_cls": s * jax.random.normal(ks[3], (1, H), jnp.float32),
        "b_cls": jnp.zeros((1, 1), jnp.float32),
    }


if __name__ == "__main__":
    key = jax.random.PRNGKey(0)
    kp, k1, k2, k3, k4, k5 = jax.random.split(key, 6)
    params = init_params(kp)

    # Backbone outputs are synthetic inputs (RoBERTa / ResNet are black boxes).
    out_roberta = jax.random.normal(k1, (BN, H), jnp.float32)
    resnet_feats = jax.random.normal(k2, (BN, R, F), jnp.float32)
    coords = jax.random.uniform(k3, (BN, R, 4), jnp.float32)
    labels = jax.random.randint(k4, (B,), 0, NC)
    # TODO(synk): get_relation_label (IoU/distance-based pair labels) not specified;
    # using deterministic synthetic 0/1 labels of the correct shape.
    rel_labels = jax.random.bernoulli(k5, 0.3, (BN * R * R,)).astype(jnp.float32)

    outs = forward(params, out_roberta, resnet_feats, coords, labels, rel_labels)
    jax.block_until_ready(outs)
    loss, loss0, loss1, qa_logits, rel_logits, _ = outs
    assert qa_logits.shape == (B, NC)
    assert rel_logits.shape == (BN * R * R,)
    assert jnp.isfinite(loss)
    print("KERNEL_OK")
</pallas_src>

<mosaic_0001>
module attributes {stable_mosaic.version = 11 : i64} {
  func.func @fused_kernel(%arg0: i32, %arg1: memref<64x4xf32, #tpu.memory_space<vmem>>, %arg2: memref<64x1000xf32, #tpu.memory_space<vmem>>, %arg3: memref<8x1024xf32, #tpu.memory_space<vmem>>, %arg4: memref<4x1024xf32, #tpu.memory_space<vmem>>, %arg5: memref<1x1024xf32, #tpu.memory_space<vmem>>, %arg6: memref<1x1024xf32, #tpu.memory_space<vmem>>, %arg7: memref<1x1024xf32, #tpu.memory_space<vmem>>, %arg8: memref<1000x1024xbf16, #tpu.memory_space<any>>, %arg9: memref<1x1024xf32, #tpu.memory_space<vmem>>, %arg10: memref<1x1024xf32, #tpu.memory_space<vmem>>, %arg11: memref<1x1024xf32, #tpu.memory_space<vmem>>, %arg12: memref<1x1024xf32, #tpu.memory_space<vmem>>, %arg13: memref<1x1024xf32, #tpu.memory_space<vmem>>, %arg14: memref<1x1xf32, #tpu.memory_space<smem>>, %arg15: memref<1x1xf32, #tpu.memory_space<smem>>, %arg16: memref<8x8x8xf32, #tpu.memory_space<vmem>>, %arg17: memref<8x1xf32, #tpu.memory_space<vmem>>, %arg18: memref<512x1024xbf16, #tpu.memory_space<vmem>>, %arg19: memref<488x1024xbf16, #tpu.memory_space<vmem>>, %arg20: memref<2x!tpu.dma_semaphore, #tpu.memory_space<semaphore_mem>>) attributes {dimension_semantics = [#tpu.dimension_semantics<arbitrary>], iteration_bounds = array<i64: 1>, scalar_prefetch = 0 : i64, scratch_operands = 3 : i64, tpu.core_type = #tpu.core_type<tc>, window_params = [{pipeline_mode = #tpu.pipeline_mode<synchronous>, transform_indices = @transform_0, window_bounds = array<i64: 64, 4>}, {pipeline_mode = #tpu.pipeline_mode<synchronous>, transform_indices = @transform_1, window_bounds = array<i64: 64, 1000>}, {pipeline_mode = #tpu.pipeline_mode<synchronous>, transform_indices = @transform_2, window_bounds = array<i64: 8, 1024>}, {pipeline_mode = #tpu.pipeline_mode<synchronous>, transform_indices = @transform_3, window_bounds = array<i64: 4, 1024>}, {pipeline_mode = #tpu.pipeline_mode<synchronous>, transform_indices = @transform_4, window_bounds = array<i64: 1, 1024>}, {pipeline_mode = #tpu.pipeline_mode<synchronous>, transform_indices = @transform_5, window_bounds = array<i64: 1, 1024>}, {pipeline_mode = #tpu.pipeline_mode<synchronous>, transform_indices = @transform_6, window_bounds = array<i64: 1, 1024>}, {}, {pipeline_mode = #tpu.pipeline_mode<synchronous>, transform_indices = @transform_8, window_bounds = array<i64: 1, 1024>}, {pipeline_mode = #tpu.pipeline_mode<synchronous>, transform_indices = @transform_9, window_bounds = array<i64: 1, 1024>}, {pipeline_mode = #tpu.pipeline_mode<synchronous>, transform_indices = @transform_10, window_bounds = array<i64: 1, 1024>}, {pipeline_mode = #tpu.pipeline_mode<synchronous>, transform_indices = @transform_11, window_bounds = array<i64: 1, 1024>}, {pipeline_mode = #tpu.pipeline_mode<synchronous>, transform_indices = @transform_12, window_bounds = array<i64: 1, 1024>}, {transform_indices = @transform_13, window_bounds = array<i64: 1, 1>}, {transform_indices = @transform_14, window_bounds = array<i64: 1, 1>}, {pipeline_mode = #tpu.pipeline_mode<synchronous>, transform_indices = @transform_15, window_bounds = array<i64: 8, 8, 8>}, {pipeline_mode = #tpu.pipeline_mode<synchronous>, transform_indices = @transform_16, window_bounds = array<i64: 8, 1>}]} {
    %c0_i32 = arith.constant 0 : i32
    %c0_i32_0 = arith.constant 0 : i32
    %c0_i32_1 = arith.constant 0 : i32
    %0 = tpu.memref_slice %arg8[%c0_i32_0, %c0_i32_1] : memref<1000x1024xbf16, #tpu.memory_space<any>> -> memref<512x1024xbf16, #tpu.memory_space<any>>
    %1 = tpu.memref_slice %arg20[%c0_i32] : memref<2x!tpu.dma_semaphore, #tpu.memory_space<semaphore_mem>> -> memref<1x!tpu.dma_semaphore, #tpu.memory_space<semaphore_mem>>
    %2 = tpu.memref_squeeze %1 : memref<1x!tpu.dma_semaphore, #tpu.memory_space<semaphore_mem>> -> memref<!tpu.dma_semaphore, #tpu.memory_space<semaphore_mem>>
    tpu.enqueue_dma source(%0 : memref<512x1024xbf16, #tpu.memory_space<any>>) target(%arg18 : memref<512x1024xbf16, #tpu.memory_space<vmem>>) target_semaphore(%2 : memref<!tpu.dma_semaphore, #tpu.memory_space<semaphore_mem>>)
    %c1_i32 = arith.constant 1 : i32
    %c512_i32 = arith.constant 512 : i32
    %c0_i32_2 = arith.constant 0 : i32
    %3 = tpu.memref_slice %arg8[%c512_i32, %c0_i32_2] : memref<1000x1024xbf16, #tpu.memory_space<any>> -> memref<488x1024xbf16, #tpu.memory_space<any>>
    %4 = tpu.memref_slice %arg20[%c1_i32] : memref<2x!tpu.dma_semaphore, #tpu.memory_space<semaphore_mem>> -> memref<1x!tpu.dma_semaphore, #tpu.memory_space<semaphore_mem>>
    %5 = tpu.memref_squeeze %4 : memref<1x!tpu.dma_semaphore, #tpu.memory_space<semaphore_mem>> -> memref<!tpu.dma_semaphore, #tpu.memory_space<semaphore_mem>>
    tpu.enqueue_dma source(%3 : memref<488x1024xbf16, #tpu.memory_space<any>>) target(%arg19 : memref<488x1024xbf16, #tpu.memory_space<vmem>>) target_semaphore(%5 : memref<!tpu.dma_semaphore, #tpu.memory_space<semaphore_mem>>)
    %c0 = arith.constant 0 : index
    %c0_3 = arith.constant 0 : index
    %6 = vector.load %arg1[%c0, %c0_3] : memref<64x4xf32, #tpu.memory_space<vmem>>, vector<64x4xf32>
    %c0_4 = arith.constant 0 : index
    %c0_5 = arith.constant 0 : index
    %7 = vector.load %arg4[%c0_4, %c0_5] : memref<4x1024xf32, #tpu.memory_space<vmem>>, vector<4x1024xf32>
    %8 = vector.extract_strided_slice %6 {offsets = [0, 0], sizes = [64, 1], strides = [1, 1]} : vector<64x4xf32> to vector<64x1xf32>
    %9 = vector.extract_strided_slice %7 {offsets = [0, 0], sizes = [1, 1024], strides = [1, 1]} : vector<4x1024xf32> to vector<1x1024xf32>
    %10 = vector.broadcast %8 : vector<64x1xf32> to vector<64x1024xf32>
    %11 = vector.broadcast %9 : vector<1x1024xf32> to vector<64x1024xf32>
    %12 = arith.mulf %10, %11 : vector<64x1024xf32>
    %13 = vector.extract_strided_slice %6 {offsets = [0, 1], sizes = [64, 1], strides = [1, 1]} : vector<64x4xf32> to vector<64x1xf32>
    %14 = vector.extract_strided_slice %7 {offsets = [1, 0], sizes = [1, 1024], strides = [1, 1]} : vector<4x1024xf32> to vector<1x1024xf32>
    %15 = vector.broadcast %13 : vector<64x1xf32> to vector<64x1024xf32>
    %16 = vector.broadcast %14 : vector<1x1024xf32> to vector<64x1024xf32>
    %17 = arith.mulf %15, %16 : vector<64x1024xf32>
    %18 = arith.addf %12, %17 : vector<64x1024xf32>
    %19 = vector.extract_strided_slice %6 {offsets = [0, 2], sizes = [64, 1], strides = [1, 1]} : vector<64x4xf32> to vector<64x1xf32>
    %20 = vector.extract_strided_slice %7 {offsets = [2, 0], sizes = [1, 1024], strides = [1, 1]} : vector<4x1024xf32> to vector<1x1024xf32>
    %21 = vector.broadcast %19 : vector<64x1xf32> to vector<64x1024xf32>
    %22 = vector.broadcast %20 : vector<1x1024xf32> to vector<64x1024xf32>
    %23 = arith.mulf %21, %22 : vector<64x1024xf32>
    %24 = arith.addf %18, %23 : vector<64x1024xf32>
    %25 = vector.extract_strided_slice %6 {offsets = [0, 3], sizes = [64, 1], strides = [1, 1]} : vector<64x4xf32> to vector<64x1xf32>
    %26 = vector.extract_strided_slice %7 {offsets = [3, 0], sizes = [1, 1024], strides = [1, 1]} : vector<4x1024xf32> to vector<1x1024xf32>
    %27 = vector.broadcast %25 : vector<64x1xf32> to vector<64x1024xf32>
    %28 = vector.broadcast %26 : vector<1x1024xf32> to vector<64x1024xf32>
    %29 = arith.mulf %27, %28 : vector<64x1024xf32>
    %30 = arith.addf %24, %29 : vector<64x1024xf32>
    %c0_6 = arith.constant 0 : index
    %c0_7 = arith.constant 0 : index
    %31 = vector.load %arg5[%c0_6, %c0_7] : memref<1x1024xf32, #tpu.memory_space<vmem>>, vector<1x1024xf32>
    %32 = vector.broadcast %31 : vector<1x1024xf32> to vector<64x1024xf32>
    %33 = arith.addf %30, %32 : vector<64x1024xf32>
    %c0_8 = arith.constant 0 : index
    %c0_9 = arith.constant 0 : index
    %34 = vector.load %arg6[%c0_8, %c0_9] : memref<1x1024xf32, #tpu.memory_space<vmem>>, vector<1x1024xf32>
    %c0_10 = arith.constant 0 : index
    %c0_11 = arith.constant 0 : index
    %35 = vector.load %arg7[%c0_10, %c0_11] : memref<1x1024xf32, #tpu.memory_space<vmem>>, vector<1x1024xf32>
    %cst = arith.constant dense<0.000000e+00> : vector<64xf32>
    %36 = vector.multi_reduction <add>, %33, %cst [1] : vector<64x1024xf32> to vector<64xf32>
    %37 = vector.shape_cast %36 : vector<64xf32> to vector<64x1xf32>
    %cst_12 = arith.constant 1.024000e+03 : f32
    %38 = vector.broadcast %cst_12 : f32 to vector<64x1xf32>
    %39 = arith.divf %37, %38 : vector<64x1xf32>
    %40 = arith.mulf %33, %33 : vector<64x1024xf32>
    %cst_13 = arith.constant dense<0.000000e+00> : vector<64xf32>
    %41 = vector.multi_reduction <add>, %40, %cst_13 [1] : vector<64x1024xf32> to vector<64xf32>
    %42 = vector.shape_cast %41 : vector<64xf32> to vector<64x1xf32>
    %cst_14 = arith.constant 1.024000e+03 : f32
    %43 = vector.broadcast %cst_14 : f32 to vector<64x1xf32>
    %44 = arith.divf %42, %43 : vector<64x1xf32>
    %45 = arith.mulf %39, %39 : vector<64x1xf32>
    %46 = arith.subf %44, %45 : vector<64x1xf32>
    %cst_15 = arith.constant 0.000000e+00 : f32
    %47 = vector.broadcast %cst_15 : f32 to vector<64x1xf32>
    %48 = arith.maximumf %46, %47 : vector<64x1xf32>
    %49 = vector.broadcast %39 : vector<64x1xf32> to vector<64x1024xf32>
    %50 = arith.subf %33, %49 : vector<64x1024xf32>
    %cst_16 = arith.constant 9.99999996E-13 : f32
    %51 = vector.broadcast %cst_16 : f32 to vector<64x1xf32>
    %52 = arith.addf %48, %51 : vector<64x1xf32>
    %53 = math.rsqrt %52 : vector<64x1xf32>
    %54 = vector.broadcast %53 : vector<64x1xf32> to vector<64x1024xf32>
    %55 = arith.mulf %50, %54 : vector<64x1024xf32>
    %56 = vector.broadcast %34 : vector<1x1024xf32> to vector<64x1024xf32>
    %57 = arith.mulf %55, %56 : vector<64x1024xf32>
    %58 = vector.broadcast %35 : vector<1x1024xf32> to vector<64x1024xf32>
    %59 = arith.addf %57, %58 : vector<64x1024xf32>
    %c0_17 = arith.constant 0 : index
    %c0_18 = arith.constant 0 : index
    %60 = vector.load %arg2[%c0_17, %c0_18] : memref<64x1000xf32, #tpu.memory_space<vmem>>, vector<64x512xf32>
    %61 = arith.truncf %60 : vector<64x512xf32> to vector<64x512xbf16>
    %c0_19 = arith.constant 0 : index
    %c512 = arith.constant 512 : index
    %62 = vector.load %arg2[%c0_19, %c512] : memref<64x1000xf32, #tpu.memory_space<vmem>>, vector<64x488xf32>
    %63 = arith.truncf %62 : vector<64x488xf32> to vector<64x488xbf16>
    %c0_i32_20 = arith.constant 0 : i32
    %c0_i32_21 = arith.constant 0 : i32
    %c0_i32_22 = arith.constant 0 : i32
    %64 = tpu.memref_slice %arg8[%c0_i32_21, %c0_i32_22] : memref<1000x1024xbf16, #tpu.memory_space<any>> -> memref<512x1024xbf16, #tpu.memory_space<any>>
    %65 = tpu.memref_slice %arg20[%c0_i32_20] : memref<2x!tpu.dma_semaphore, #tpu.memory_space<semaphore_mem>> -> memref<1x!tpu.dma_semaphore, #tpu.memory_space<semaphore_mem>>
    %66 = tpu.memref_squeeze %65 : memref<1x!tpu.dma_semaphore, #tpu.memory_space<semaphore_mem>> -> memref<!tpu.dma_semaphore, #tpu.memory_space<semaphore_mem>>
    tpu.wait_dma2 semaphore(%66 : memref<!tpu.dma_semaphore, #tpu.memory_space<semaphore_mem>>) src(%64 : memref<512x1024xbf16, #tpu.memory_space<any>>) dst(%arg18 : memref<512x1024xbf16, #tpu.memory_space<vmem>>)
    %c0_23 = arith.constant 0 : index
    %c0_24 = arith.constant 0 : index
    %67 = vector.load %arg18[%c0_23, %c0_24] : memref<512x1024xbf16, #tpu.memory_space<vmem>>, vector<512x1024xbf16>
    %cst_25 = arith.constant dense<0.000000e+00> : vector<64x1024xf32>
    %68 = tpu.matmul %61, %67, %cst_25 {dimension_numbers = #tpu.dot_dimension_numbers<[1], [0], [0], [1], [0, 0, 1, 1], [], []>} : vector<64x512xbf16>, vector<512x1024xbf16>, vector<64x1024xf32> -> vector<64x1024xf32>
    %c1_i32_26 = arith.constant 1 : i32
    %c512_i32_27 = arith.constant 512 : i32
    %c0_i32_28 = arith.constant 0 : i32
    %69 = tpu.memref_slice %arg8[%c512_i32_27, %c0_i32_28] : memref<1000x1024xbf16, #tpu.memory_space<any>> -> memref<488x1024xbf16, #tpu.memory_space<any>>
    %70 = tpu.memref_slice %arg20[%c1_i32_26] : memref<2x!tpu.dma_semaphore, #tpu.memory_space<semaphore_mem>> -> memref<1x!tpu.dma_semaphore, #tpu.memory_space<semaphore_mem>>
    %71 = tpu.memref_squeeze %70 : memref<1x!tpu.dma_semaphore, #tpu.memory_space<semaphore_mem>> -> memref<!tpu.dma_semaphore, #tpu.memory_space<semaphore_mem>>
    tpu.wait_dma2 semaphore(%71 : memref<!tpu.dma_semaphore, #tpu.memory_space<semaphore_mem>>) src(%69 : memref<488x1024xbf16, #tpu.memory_space<any>>) dst(%arg19 : memref<488x1024xbf16, #tpu.memory_space<vmem>>)
    %c0_29 = arith.constant 0 : index
    %c0_30 = arith.constant 0 : index
    %72 = vector.load %arg19[%c0_29, %c0_30] : memref<488x1024xbf16, #tpu.memory_space<vmem>>, vector<488x1024xbf16>
    %cst_31 = arith.constant dense<0.000000e+00> : vector<64x1024xf32>
    %73 = tpu.matmul %63, %72, %cst_31 {dimension_numbers = #tpu.dot_dimension_numbers<[1], [0], [0], [1], [0, 0, 1, 1], [], []>} : vector<64x488xbf16>, vector<488x1024xbf16>, vector<64x1024xf32> -> vector<64x1024xf32>
    %74 = arith.addf %68, %73 : vector<64x1024xf32>
    %c0_32 = arith.constant 0 : index
    %c0_33 = arith.constant 0 : index
    %75 = vector.load %arg9[%c0_32, %c0_33] : memref<1x1024xf32, #tpu.memory_space<vmem>>, vector<1x1024xf32>
    %76 = vector.broadcast %75 : vector<1x1024xf32> to vector<64x1024xf32>
    %77 = arith.addf %74, %76 : vector<64x1024xf32>
    %c0_34 = arith.constant 0 : index
    %c0_35 = arith.constant 0 : index
    %78 = vector.load %arg10[%c0_34, %c0_35] : memref<1x1024xf32, #tpu.memory_space<vmem>>, vector<1x1024xf32>
    %c0_36 = arith.constant 0 : index
    %c0_37 = arith.constant 0 : index
    %79 = vector.load %arg11[%c0_36, %c0_37] : memref<1x1024xf32, #tpu.memory_space<vmem>>, vector<1x1024xf32>
    %cst_38 = arith.constant dense<0.000000e+00> : vector<64xf32>
    %80 = vector.multi_reduction <add>, %77, %cst_38 [1] : vector<64x1024xf32> to vector<64xf32>
    %81 = vector.shape_cast %80 : vector<64xf32> to vector<64x1xf32>
    %cst_39 = arith.constant 1.024000e+03 : f32
    %82 = vector.broadcast %cst_39 : f32 to vector<64x1xf32>
    %83 = arith.divf %81, %82 : vector<64x1xf32>
    %84 = arith.mulf %77, %77 : vector<64x1024xf32>
    %cst_40 = arith.constant dense<0.000000e+00> : vector<64xf32>
    %85 = vector.multi_reduction <add>, %84, %cst_40 [1] : vector<64x1024xf32> to vector<64xf32>
    %86 = vector.shape_cast %85 : vector<64xf32> to vector<64x1xf32>
    %cst_41 = arith.constant 1.024000e+03 : f32
    %87 = vector.broadcast %cst_41 : f32 to vector<64x1xf32>
    %88 = arith.divf %86, %87 : vector<64x1xf32>
    %89 = arith.mulf %83, %83 : vector<64x1xf32>
    %90 = arith.subf %88, %89 : vector<64x1xf32>
    %cst_42 = arith.constant 0.000000e+00 : f32
    %91 = vector.broadcast %cst_42 : f32 to vector<64x1xf32>
    %92 = arith.maximumf %90, %91 : vector<64x1xf32>
    %93 = vector.broadcast %83 : vector<64x1xf32> to vector<64x1024xf32>
    %94 = arith.subf %77, %93 : vector<64x1024xf32>
    %cst_43 = arith.constant 9.99999996E-13 : f32
    %95 = vector.broadcast %cst_43 : f32 to vector<64x1xf32>
    %96 = arith.addf %92, %95 : vector<64x1xf32>
    %97 = math.rsqrt %96 : vector<64x1xf32>
    %98 = vector.broadcast %97 : vector<64x1xf32> to vector<64x1024xf32>
    %99 = arith.mulf %94, %98 : vector<64x1024xf32>
    %100 = vector.broadcast %78 : vector<1x1024xf32> to vector<64x1024xf32>
    %101 = arith.mulf %99, %100 : vector<64x1024xf32>
    %102 = vector.broadcast %79 : vector<1x1024xf32> to vector<64x1024xf32>
    %103 = arith.addf %101, %102 : vector<64x1024xf32>
    %104 = arith.addf %103, %59 : vector<64x1024xf32>
    %105 = vector.shape_cast %104 : vector<64x1024xf32> to vector<8x8x1024xf32>
    %c0_44 = arith.constant 0 : index
    %c0_45 = arith.constant 0 : index
    %106 = vector.load %arg12[%c0_44, %c0_45] : memref<1x1024xf32, #tpu.memory_space<vmem>>, vector<1x1024xf32>
    %107 = vector.broadcast %106 : vector<1x1024xf32> to vector<64x1024xf32>
    %108 = arith.mulf %104, %107 : vector<64x1024xf32>
    %109 = vector.shape_cast %108 : vector<64x1024xf32> to vector<8x8x1024xf32>
    %110 = arith.truncf %109 : vector<8x8x1024xf32> to vector<8x8x1024xbf16>
    %111 = arith.truncf %105 : vector<8x8x1024xf32> to vector<8x8x1024xbf16>
    "tpu.trace_start"() <{level = 10 : i32, message = "brd,bsd->brs"}> : () -> ()
    %cst_46 = arith.constant dense<0.000000e+00> : vector<8x8x8xf32>
    %112 = tpu.matmul %110, %111, %cst_46 {dimension_numbers = #tpu.dot_dimension_numbers<[2], [2], [1], [1], [0, 0, 0, 1, 1, 1], [0], [0]>} : vector<8x8x1024xbf16>, vector<8x8x1024xbf16>, vector<8x8x8xf32> -> vector<8x8x8xf32>
    "tpu.trace_stop"() : () -> ()
    %c0_47 = arith.constant 0 : index
    %c0_48 = arith.constant 0 : index
    %113 = memref.load %arg14[%c0_47, %c0_48] : memref<1x1xf32, #tpu.memory_space<smem>>
    %114 = vector.broadcast %113 : f32 to vector<8x8x8xf32>
    %115 = arith.addf %112, %114 : vector<8x8x8xf32>
    %c0_49 = arith.constant 0 : index
    %c0_50 = arith.constant 0 : index
    %c0_51 = arith.constant 0 : index
    %116 = vector.load %arg16[%c0_49, %c0_50, %c0_51] : memref<8x8x8xf32, #tpu.memory_space<vmem>>, vector<8x8x8xf32>
    tpu.vector_store %arg16[%c0_49, %c0_50, %c0_51], %115 {strides = array<i32>} : memref<8x8x8xf32, #tpu.memory_space<vmem>>, vector<8x8x8xf32>,
    %cst_52 = arith.constant dense<0.000000e+00> : vector<8x1024xf32>
    %117 = vector.multi_reduction <add>, %105, %cst_52 [1] : vector<8x8x1024xf32> to vector<8x1024xf32>
    %c0_53 = arith.constant 0 : index
    %c0_54 = arith.constant 0 : index
    %118 = vector.load %arg3[%c0_53, %c0_54] : memref<8x1024xf32, #tpu.memory_space<vmem>>, vector<8x1024xf32>
    %119 = arith.mulf %118, %117 : vector<8x1024xf32>
    %c0_55 = arith.constant 0 : index
    %c0_56 = arith.constant 0 : index
    %120 = vector.load %arg13[%c0_55, %c0_56] : memref<1x1024xf32, #tpu.memory_space<vmem>>, vector<1x1024xf32>
    %121 = vector.broadcast %120 : vector<1x1024xf32> to vector<8x1024xf32>
    %122 = arith.mulf %119, %121 : vector<8x1024xf32>
    %cst_57 = arith.constant dense<0.000000e+00> : vector<8xf32>
    %123 = vector.multi_reduction <add>, %122, %cst_57 [1] : vector<8x1024xf32> to vector<8xf32>
    %124 = vector.shape_cast %123 : vector<8xf32> to vector<8x1xf32>
    %c0_58 = arith.constant 0 : index
    %c0_59 = arith.constant 0 : index
    %125 = memref.load %arg15[%c0_58, %c0_59] : memref<1x1xf32, #tpu.memory_space<smem>>
    %126 = vector.broadcast %125 : f32 to vector<8x1xf32>
    %127 = arith.addf %124, %126 : vector<8x1xf32>
    %c0_60 = arith.constant 0 : index
    %c0_61 = arith.constant 0 : index
    %128 = vector.load %arg17[%c0_60, %c0_61] : memref<8x1xf32, #tpu.memory_space<vmem>>, vector<8x1xf32>
    tpu.vector_store %arg17[%c0_60, %c0_61], %127 {strides = array<i32>} : memref<8x1xf32, #tpu.memory_space<vmem>>, vector<8x1xf32>,
    return
  }
  func.func @transform_0(%arg0: i32) -> (i32, i32) {
    %c0_i32 = arith.constant 0 : i32
    %c0_i32_0 = arith.constant 0 : i32
    %c0_i32_1 = arith.constant 0 : i32
    return %c0_i32, %c0_i32_0 : i32, i32
  }
  func.func @transform_1(%arg0: i32) -> (i32, i32) {
    %c0_i32 = arith.constant 0 : i32
    %c0_i32_0 = arith.constant 0 : i32
    %c0_i32_1 = arith.constant 0 : i32
    return %c0_i32, %c0_i32_0 : i32, i32
  }
  func.func @transform_2(%arg0: i32) -> (i32, i32) {
    %c0_i32 = arith.constant 0 : i32
    %c0_i32_0 = arith.constant 0 : i32
    %c0_i32_1 = arith.constant 0 : i32
    return %c0_i32, %c0_i32_0 : i32, i32
  }
  func.func @transform_3(%arg0: i32) -> (i32, i32) {
    %c0_i32 = arith.constant 0 : i32
    %c0_i32_0 = arith.constant 0 : i32
    %c0_i32_1 = arith.constant 0 : i32
    return %c0_i32, %c0_i32_0 : i32, i32
  }
  func.func @transform_4(%arg0: i32) -> (i32, i32) {
    %c0_i32 = arith.constant 0 : i32
    %c0_i32_0 = arith.constant 0 : i32
    %c0_i32_1 = arith.constant 0 : i32
    return %c0_i32, %c0_i32_0 : i32, i32
  }
  func.func @transform_5(%arg0: i32) -> (i32, i32) {
    %c0_i32 = arith.constant 0 : i32
    %c0_i32_0 = arith.constant 0 : i32
    %c0_i32_1 = arith.constant 0 : i32
    return %c0_i32, %c0_i32_0 : i32, i32
  }
  func.func @transform_6(%arg0: i32) -> (i32, i32) {
    %c0_i32 = arith.constant 0 : i32
    %c0_i32_0 = arith.constant 0 : i32
    %c0_i32_1 = arith.constant 0 : i32
    return %c0_i32, %c0_i32_0 : i32, i32
  }
  func.func @transform_8(%arg0: i32) -> (i32, i32) {
    %c0_i32 = arith.constant 0 : i32
    %c0_i32_0 = arith.constant 0 : i32
    %c0_i32_1 = arith.constant 0 : i32
    return %c0_i32, %c0_i32_0 : i32, i32
  }
  func.func @transform_9(%arg0: i32) -> (i32, i32) {
    %c0_i32 = arith.constant 0 : i32
    %c0_i32_0 = arith.constant 0 : i32
    %c0_i32_1 = arith.constant 0 : i32
    return %c0_i32, %c0_i32_0 : i32, i32
  }
  func.func @transform_10(%arg0: i32) -> (i32, i32) {
    %c0_i32 = arith.constant 0 : i32
    %c0_i32_0 = arith.constant 0 : i32
    %c0_i32_1 = arith.constant 0 : i32
    return %c0_i32, %c0_i32_0 : i32, i32
  }
  func.func @transform_11(%arg0: i32) -> (i32, i32) {
    %c0_i32 = arith.constant 0 : i32
    %c0_i32_0 = arith.constant 0 : i32
    %c0_i32_1 = arith.constant 0 : i32
    return %c0_i32, %c0_i32_0 : i32, i32
  }
  func.func @transform_12(%arg0: i32) -> (i32, i32) {
    %c0_i32 = arith.constant 0 : i32
    %c0_i32_0 = arith.constant 0 : i32
    %c0_i32_1 = arith.constant 0 : i32
    return %c0_i32, %c0_i32_0 : i32, i32
  }
  func.func @transform_13(%arg0: i32) -> (i32, i32) {
    %c0_i32 = arith.constant 0 : i32
    %c0_i32_0 = arith.constant 0 : i32
    %c0_i32_1 = arith.constant 0 : i32
    return %c0_i32, %c0_i32_0 : i32, i32
  }
  func.func @transform_14(%arg0: i32) -> (i32, i32) {
    %c0_i32 = arith.constant 0 : i32
    %c0_i32_0 = arith.constant 0 : i32
    %c0_i32_1 = arith.constant 0 : i32
    return %c0_i32, %c0_i32_0 : i32, i32
  }
  func.func @transform_15(%arg0: i32) -> (i32, i32, i32) {
    %c0_i32 = arith.constant 0 : i32
    %c0_i32_0 = arith.constant 0 : i32
    %c0_i32_1 = arith.constant 0 : i32
    %c0_i32_2 = arith.constant 0 : i32
    return %c0_i32, %c0_i32_0, %c0_i32_1 : i32, i32, i32
  }
  func.func @transform_16(%arg0: i32) -> (i32, i32) {
    %c0_i32 = arith.constant 0 : i32
    %c0_i32_0 = arith.constant 0 : i32
    %c0_i32_1 = arith.constant 0 : i32
    return %c0_i32, %c0_i32_0 : i32, i32
  }
}

</mosaic_0001>

<llo_original>
// kernel: forward.1
$region0: #{forward.1}
  #allocation0 [shape = 'u32[]', space=smem, size = 0x4, offset = 0x4, fixed_abs, tag = 'smem constant byte address 0x4 - core index']
  #allocation1 [shape = 'u32[144,128]{1,0:T(1,128)}', space=vmem, size = 0x12000, scoped, tag = 'internal scratch']
  #allocation2 [shape = 'bf16[512,1024]{1,0:T(8,128)(2,1)}', space=vmem, size = 0x100000, scoped, tag = 'scratch operand']
  #allocation3 [shape = 'bf16[488,1024]{1,0:T(8,128)(2,1)}', space=vmem, size = 0xf4000, scoped, tag = 'scratch operand']
  #allocation4 [shape = 's32[2]{0}', space=sflag, size = 0x8, scoped, tag = 'scratch operand']
  #allocation5 [shape = 'f32[1,1]{1,0:T(1,128)S(6)}', space=smem, size = 0x200, scoped, tag = 'scoped memory for forward.1']
  #allocation6 [shape = 'f32[1,1]{1,0:T(1,128)S(6)}', space=smem, size = 0x200, scoped, tag = 'scoped memory for forward.1']
  #allocation24 [shape = 's32[]', space=sflag, size = 0x4, offset = 0, fixed_abs, tag = 'sflag constant byte address 0x0 - dummy sync flag']
  #allocation25 [shape = 's32[]', space=sflag, size = 0x4, offset = 0, fixed_abs, tag = 'sflag constant byte address 0x0 - dummy sync flag']
  #allocation26 [shape = 'u32[]', space=smem, size = 0x4, offset = 0x44, fixed_abs, tag = 'smem constant byte address 0x44 - assertion arg 0']
  #allocation27 [shape = 'u32[]', space=smem, size = 0x4, offset = 0x48, fixed_abs, tag = 'smem constant byte address 0x48 - assertion arg 1']
  #allocation28 [shape = 's32[]', space=sflag, size = 0x4, offset = 0, fixed_abs, tag = 'sflag constant byte address 0x0 - dummy sync flag']
  #allocation29 [shape = 's32[]', space=sflag, size = 0x4, offset = 0, fixed_abs, tag = 'sflag constant byte address 0x0 - dummy sync flag']
  %s0 = inlined_call_operand.vmem [shape: f32[64,4], index: 0, kind: input, shape index: {}]
  %s1 = inlined_call_operand.hbm [shape: f32[64,1000], index: 1, kind: input, shape index: {}]
  %s2 = inlined_call_operand.hbm [shape: f32[8,1024], index: 2, kind: input, shape index: {}]
  %s3 = inlined_call_operand.hbm [shape: f32[4,1024], index: 3, kind: input, shape index: {}]
  %s4 = inlined_call_operand.hbm [shape: f32[1,1024], index: 4, kind: input, shape index: {}]
  %s5 = inlined_call_operand.hbm [shape: f32[1,1024], index: 5, kind: input, shape index: {}]
  %s6 = inlined_call_operand.hbm [shape: f32[1,1024], index: 6, kind: input, shape index: {}]
  %s7 = inlined_call_operand.hbm [shape: bf16[1000,1024], index: 7, kind: input, shape index: {}]
  %s8 = inlined_call_operand.hbm [shape: f32[1,1024], index: 8, kind: input, shape index: {}]
  %s9 = inlined_call_operand.hbm [shape: f32[1,1024], index: 9, kind: input, shape index: {}]
  %s10 = inlined_call_operand.hbm [shape: f32[1,1024], index: 10, kind: input, shape index: {}]
  %s11 = inlined_call_operand.hbm [shape: f32[1,1024], index: 11, kind: input, shape index: {}]
  %s12 = inlined_call_operand.hbm [shape: f32[1,1024], index: 12, kind: input, shape index: {}]
  %s13 = inlined_call_operand.<no memory space> [shape: f32[1,1], index: 13, kind: input, shape index: {}]
  %s14 = inlined_call_operand.<no memory space> [shape: f32[1,1], index: 14, kind: input, shape index: {}]
  %s15 = inlined_call_operand.vmem [shape: f32[8,8,8], index: 15, kind: output, shape index: {0}]
  %s16 = inlined_call_operand.vmem [shape: f32[8,1], index: 16, kind: output, shape index: {1}]
  %17 = xla_tuple %s15, %s16
  %s18 = sld [smem:[#allocation0]]
  $region126: #{forward.1} parent=0
    _
  %s20 = ssub.s32 1, %s18
  %s21 = scalar_select 0, %s20, %s18
  %22 = sst [smem:[#allocation5]] %s13
  %23 = sst [smem:[#allocation6]] %s14
  $region1: #{forward.1} parent=0
    #allocation7 [shape = 'u8[262144]{0}', space=vmem, size = 0x40000, scoped, tag = 'input window, operand 1, single buffered']
    #allocation8 [shape = 's32[1]{0}', space=sflag, size = 0x4, scoped, tag = 'scoped memory for forward.1']
    #allocation9 [shape = 'u8[32768]{0}', space=vmem, size = 0x8000, scoped, tag = 'input window, operand 2, single buffered']
    #allocation10 [shape = 's32[1]{0}', space=sflag, size = 0x4, scoped, tag = 'scoped memory for forward.1']
    #allocation11 [shape = 'u8[16384]{0}', space=vmem, size = 0x4000, scoped, tag = 'input window, operand 3, single buffered']
    #allocation12 [shape = 'u8[4096]{0}', space=vmem, size = 0x1000, scoped, tag = 'input window, operand 4, single buffered']
    #allocation13 [shape = 's32[1]{0}', space=sflag, size = 0x4, scoped, tag = 'scoped memory for forward.1']
    #allocation14 [shape = 'u8[4096]{0}', space=vmem, size = 0x1000, scoped, tag = 'input window, operand 5, single buffered']
    #allocation15 [shape = 'u8[4096]{0}', space=vmem, size = 0x1000, scoped, tag = 'input window, operand 6, single buffered']
    #allocation16 [shape = 's32[1]{0}', space=sflag, size = 0x4, scoped, tag = 'scoped memory for forward.1']
    #allocation17 [shape = 'u8[4096]{0}', space=vmem, size = 0x1000, scoped, tag = 'input window, operand 8, single buffered']
    #allocation18 [shape = 'u8[4096]{0}', space=vmem, size = 0x1000, scoped, tag = 'input window, operand 9, single buffered']
    #allocation19 [shape = 's32[1]{0}', space=sflag, size = 0x4, scoped, tag = 'scoped memory for forward.1']
    #allocation20 [shape = 'u8[4096]{0}', space=vmem, size = 0x1000, scoped, tag = 'input window, operand 10, single buffered']
    #allocation21 [shape = 'u8[4096]{0}', space=vmem, size = 0x1000, scoped, tag = 'input window, operand 11, single buffered']
    #allocation22 [shape = 's32[1]{0}', space=sflag, size = 0x4, scoped, tag = 'scoped memory for forward.1']
    #allocation23 [shape = 'u8[4096]{0}', space=vmem, size = 0x1000, scoped, tag = 'input window, operand 12, single buffered']
    %24 = vsyncpa [#allocation8], 0
    %25 = vsyncpa [#allocation10], 0
    %26 = vsyncpa [#allocation13], 0
    %27 = vsyncpa [#allocation16], 0
    %28 = vsyncpa [#allocation19], 0
    %29 = vsyncpa [#allocation22], 0
    // Predicated region
    $region2: #{forward.1} parent=1 // pred_check
      _
    $region3: #{forward.1} parent=1 // pred_check_branch
      %31 = sbr.rel (0) target = $region5
    $region4: #{forward.1} parent=1 // pred_region
      _
    $region5: #{forward.1} parent=1 // pred_fallthru
      _
    // Predicated region
    $region6: #{forward.1} parent=1 // pred_check
      _
    $region7: #{forward.1} parent=1 // pred_check_branch
      %33 = sbr.rel (0) target = $region9
    $region8: #{forward.1} parent=1 // pred_region
      %s35 = ssub.s32 8192, 8192
      %36 = vsyncadd [#allocation8], %s35
      %s37 = sshll.u32 [#allocation7], 4
      %s38 = int_to_ptr.vmem [resolvable:$true] %s37
      %43 = dma.hbm_to_vmem [thread:$0]  %s1, 8192, %s38, [#allocation8], 1024, 1024, 64
    $region9: #{forward.1} parent=1 // pred_fallthru
      _
    // Predicated region
    $region10: #{forward.1} parent=1 // pred_check
      _
    $region11: #{forward.1} parent=1 // pred_check_branch
      %45 = sbr.rel (0) target = $region13
    $region12: #{forward.1} parent=1 // pred_region
      %s47 = ssub.s32 1024, 1024
      %48 = vsyncadd [#allocation10], %s47
      %s50 = sshll.u32 [#allocation9], 4
      %s51 = int_to_ptr.vmem [resolvable:$true] %s50
      %53 = dma.hbm_to_vmem [thread:$0]  %s2, 1024, %s51, [#allocation10]
    $region13: #{forward.1} parent=1 // pred_fallthru
      _
    // Predicated region
    $region14: #{forward.1} parent=1 // pred_check
      _
    $region15: #{forward.1} parent=1 // pred_check_branch
      %55 = sbr.rel (0) target = $region17
    $region16: #{forward.1} parent=1 // pred_region
      %s57 = ssub.s32 512, 512
      %58 = vsyncadd [#allocation10], %s57
      %s60 = sshll.u32 [#allocation11], 4
      %s61 = int_to_ptr.vmem [resolvable:$true] %s60
      %63 = dma.hbm_to_vmem [thread:$0]  %s3, 512, %s61, [#allocation10]
    $region17: #{forward.1} parent=1 // pred_fallthru
      _
    // Predicated region
    $region18: #{forward.1} parent=1 // pred_check
      _
    $region19: #{forward.1} parent=1 // pred_check_branch
      %65 = sbr.rel (0) target = $region21
    $region20: #{forward.1} parent=1 // pred_region
      %s67 = ssub.s32 128, 128
      %68 = vsyncadd [#allocation13], %s67
      %s70 = sshll.u32 [#allocation12], 4
      %s71 = int_to_ptr.vmem [resolvable:$true] %s70
      %73 = dma.hbm_to_vmem [thread:$0]  %s4, 128, %s71, [#allocation13]
    $region21: #{forward.1} parent=1 // pred_fallthru
      _
    // Predicated region
    $region22: #{forward.1} parent=1 // pred_check
      _
    $region23: #{forward.1} parent=1 // pred_check_branch
      %75 = sbr.rel (0) target = $region25
    $region24: #{forward.1} parent=1 // pred_region
      %s77 = ssub.s32 128, 128
      %78 = vsyncadd [#allocation13], %s77
      %s80 = sshll.u32 [#allocation14], 4
      %s81 = int_to_ptr.vmem [resolvable:$true] %s80
      %83 = dma.hbm_to_vmem [thread:$0]  %s5, 128, %s81, [#allocation13]
    $region25: #{forward.1} parent=1 // pred_fallthru
      _
    // Predicated region
    $region26: #{forward.1} parent=1 // pred_check
      _
    $region27: #{forward.1} parent=1 // pred_check_branch
      %85 = sbr.rel (0) target = $region29
    $region28: #{forward.1} parent=1 // pred_region
      %s87 = ssub.s32 128, 128
      %88 = vsyncadd [#allocation16], %s87
      %s90 = sshll.u32 [#allocation15], 4
      %s91 = int_to_ptr.vmem [resolvable:$true] %s90
      %93 = dma.hbm_to_vmem [thread:$0]  %s6, 128, %s91, [#allocation16]
    $region29: #{forward.1} parent=1 // pred_fallthru
      _
    // Predicated region
    $region30: #{forward.1} parent=1 // pred_check
      _
    $region31: #{forward.1} parent=1 // pred_check_branch
      %95 = sbr.rel (0) target = $region33
    $region32: #{forward.1} parent=1 // pred_region
      %s97 = ssub.s32 128, 128
      %98 = vsyncadd [#allocation16], %s97
      %s100 = sshll.u32 [#allocation17], 4
      %s101 = int_to_ptr.vmem [resolvable:$true] %s100
      %103 = dma.hbm_to_vmem [thread:$0]  %s8, 128, %s101, [#allocation16]
    $region33: #{forward.1} parent=1 // pred_fallthru
      _
    // Predicated region
    $region34: #{forward.1} parent=1 // pred_check
      _
    $region35: #{forward.1} parent=1 // pred_check_branch
      %105 = sbr.rel (0) target = $region37
    $region36: #{forward.1} parent=1 // pred_region
      %s107 = ssub.s32 128, 128
      %108 = vsyncadd [#allocation19], %s107
      %s110 = sshll.u32 [#allocation18], 4
      %s111 = int_to_ptr.vmem [resolvable:$true] %s110
      %113 = dma.hbm_to_vmem [thread:$0]  %s9, 128, %s111, [#allocation19]
    $region37: #{forward.1} parent=1 // pred_fallthru
      _
    // Predicated region
    $region38: #{forward.1} parent=1 // pred_check
      _
    $region39: #{forward.1} parent=1 // pred_check_branch
      %115 = sbr.rel (0) target = $region41
    $region40: #{forward.1} parent=1 // pred_region
      %s117 = ssub.s32 128, 128
      %118 = vsyncadd [#allocation19], %s117
      %s120 = sshll.u32 [#allocation20], 4
      %s121 = int_to_ptr.vmem [resolvable:$true] %s120
      %123 = dma.hbm_to_vmem [thread:$0]  %s10, 128, %s121, [#allocation19]
    $region41: #{forward.1} parent=1 // pred_fallthru
      _
    // Predicated region
    $region42: #{forward.1} parent=1 // pred_check
      _
    $region43: #{forward.1} parent=1 // pred_check_branch
      %125 = sbr.rel (0) target = $region45
    $region44: #{forward.1} parent=1 // pred_region
      %s127 = ssub.s32 128, 128
      %128 = vsyncadd [#allocation22], %s127
      %s130 = sshll.u32 [#allocation21], 4
      %s131 = int_to_ptr.vmem [resolvable:$true] %s130
      %133 = dma.hbm_to_vmem [thread:$0]  %s11, 128, %s131, [#allocation22]
    $region45: #{forward.1} parent=1 // pred_fallthru
      _
    // Predicated region
    $region46: #{forward.1} parent=1 // pred_check
      _
    $region47: #{forward.1} parent=1 // pred_check_branch
      %135 = sbr.rel (0) target = $region49
    $region48: #{forward.1} parent=1 // pred_region
      %s137 = ssub.s32 128, 128
      %138 = vsyncadd [#allocation22], %s137
      %s140 = sshll.u32 [#allocation23], 4
      %s141 = int_to_ptr.vmem [resolvable:$true] %s140
      %143 = dma.hbm_to_vmem [thread:$0]  %s12, 128, %s141, [#allocation22]
    $region49: #{forward.1} parent=1 // pred_fallthru
      _
    // Predicated region
    $region50: #{forward.1} parent=1 // pred_check
      _
    $region51: #{forward.1} parent=1 // pred_check_branch
      %145 = sbr.rel (0) target = $region53
    $region52: #{forward.1} parent=1 // pred_region
      _
    $region53: #{forward.1} parent=1 // pred_fallthru
      _
    // Predicated region
    $region54: #{forward.1} parent=1 // pred_check
      _
    $region55: #{forward.1} parent=1 // pred_check_branch
      %147 = sbr.rel (0) target = $region57
    $region56: #{forward.1} parent=1 // pred_region
      _
    $region57: #{forward.1} parent=1 // pred_fallthru
      _
    // Predicated region
    $region58: #{forward.1} parent=1 // pred_check
      _
    $region59: #{forward.1} parent=1 // pred_check_branch
      %149 = sbr.rel (0) target = $region61
    $region60: #{forward.1} parent=1 // pred_region
      %150 = dma.done [#allocation8], 8192
    $region61: #{forward.1} parent=1 // pred_fallthru
      _
    // Predicated region
    $region62: #{forward.1} parent=1 // pred_check
      _
    $region63: #{forward.1} parent=1 // pred_check_branch
      %152 = sbr.rel (0) target = $region65
    $region64: #{forward.1} parent=1 // pred_region
      %153 = dma.done [#allocation10], 1024
    $region65: #{forward.1} parent=1 // pred_fallthru
      _
    // Predicated region
    $region66: #{forward.1} parent=1 // pred_check
      _
    $region67: #{forward.1} parent=1 // pred_check_branch
      %155 = sbr.rel (0) target = $region69
    $region68: #{forward.1} parent=1 // pred_region
      %156 = dma.done [#allocation10], 512
    $region69: #{forward.1} parent=1 // pred_fallthru
      _
    // Predicated region
    $region70: #{forward.1} parent=1 // pred_check
      _
    $region71: #{forward.1} parent=1 // pred_check_branch
      %158 = sbr.rel (0) target = $region73
    $region72: #{forward.1} parent=1 // pred_region
      %159 = dma.done [#allocation13], 128
    $region73: #{forward.1} parent=1 // pred_fallthru
      _
    // Predicated region
    $region74: #{forward.1} parent=1 // pred_check
      _
    $region75: #{forward.1} parent=1 // pred_check_branch
      %161 = sbr.rel (0) target = $region77
    $region76: #{forward.1} parent=1 // pred_region
      %162 = dma.done [#allocation13], 128
    $region77: #{forward.1} parent=1 // pred_fallthru
      _
    // Predicated region
    $region78: #{forward.1} parent=1 // pred_check
      _
    $region79: #{forward.1} parent=1 // pred_check_branch
      %164 = sbr.rel (0) target = $region81
    $region80: #{forward.1} parent=1 // pred_region
      %165 = dma.done [#allocation16], 128
    $region81: #{forward.1} parent=1 // pred_fallthru
      _
    // Predicated region
    $region82: #{forward.1} parent=1 // pred_check
      _
    $region83: #{forward.1} parent=1 // pred_check_branch
      %167 = sbr.rel (0) target = $region85
    $region84: #{forward.1} parent=1 // pred_region
      %168 = dma.done [#allocation16], 128
    $region85: #{forward.1} parent=1 // pred_fallthru
      _
    // Predicated region
    $region86: #{forward.1} parent=1 // pred_check
      _
    $region87: #{forward.1} parent=1 // pred_check_branch
      %170 = sbr.rel (0) target = $region89
    $region88: #{forward.1} parent=1 // pred_region
      %171 = dma.done [#allocation19], 128
    $region89: #{forward.1} parent=1 // pred_fallthru
      _
    // Predicated region
    $region90: #{forward.1} parent=1 // pred_check
      _
    $region91: #{forward.1} parent=1 // pred_check_branch
      %173 = sbr.rel (0) target = $region93
    $region92: #{forward.1} parent=1 // pred_region
      %174 = dma.done [#allocation19], 128
    $region93: #{forward.1} parent=1 // pred_fallthru
      _
    // Predicated region
    $region94: #{forward.1} parent=1 // pred_check
      _
    $region95: #{forward.1} parent=1 // pred_check_branch
      %176 = sbr.rel (0) target = $region97
    $region96: #{forward.1} parent=1 // pred_region
      %177 = dma.done [#allocation22], 128
    $region97: #{forward.1} parent=1 // pred_fallthru
      _
    // Predicated region
    $region98: #{forward.1} parent=1 // pred_check
      _
    $region99: #{forward.1} parent=1 // pred_check_branch
      %179 = sbr.rel (0) target = $region101
    $region100: #{forward.1} parent=1 // pred_region
      %180 = dma.done [#allocation22], 128
    $region101: #{forward.1} parent=1 // pred_fallthru
      _
    // Predicated region
    $region102: #{forward.1} parent=1 // pred_check
      _
    $region103: #{forward.1} parent=1 // pred_check_branch
      %183 = sbr.rel target = $region105
    $region104: #{forward.1} parent=1 // pred_region
      %184 = sst [smem:[#allocation26]] [#allocation25]
      %185 = sst [smem:[#allocation27]] [#allocation24]
    $region105: #{forward.1} parent=1 // pred_fallthru
      _
    %187 = shalt.err (0)
    %s189 = sshll.u32 [#allocation2], 4
    %s190 = int_to_ptr.vmem [resolvable:$true] %s189
    %192 = dma.hbm_to_vmem [thread:$0]  %s7, 32768, %s190, [#allocation4]
    %s193 = scalar_lea.hbm %s7, 32768
    %s194 = scalar_lea.sflag [#allocation4], 1
    // Predicated region
    $region106: #{forward.1} parent=1 // pred_check
      _
    $region107: #{forward.1} parent=1 // pred_check_branch
      %196 = sbr.rel target = $region109
    $region108: #{forward.1} parent=1 // pred_region
      %197 = sst [smem:[#allocation26]] [#allocation29]
      %198 = sst [smem:[#allocation27]] [#allocation28]
    $region109: #{forward.1} parent=1 // pred_fallthru
      _
    %200 = shalt.err (0)
    %s202 = sshll.u32 [#allocation3], 4
    %s203 = int_to_ptr.vmem [resolvable:$true] %s202
    %205 = dma.hbm_to_vmem [thread:$0]  %s193, 31232, %s203, %s194
    %v206 = vld [vmem:[%s0] sm:$0xff]
    %v207 = vld [vmem:[%s0 + $0x8] sm:$0xff]
    %v208 = vld [vmem:[%s0 + $0x10] sm:$0xff]
    %v209 = vld [vmem:[%s0 + $0x18] sm:$0xff]
    %v210 = vld [vmem:[%s0 + $0x20] sm:$0xff]
    %v211 = vld [vmem:[%s0 + $0x28] sm:$0xff]
    %v212 = vld [vmem:[%s0 + $0x30] sm:$0xff]
    %v213 = vld [vmem:[%s0 + $0x38] sm:$0xff]
    %v214 = vld [vmem:[#allocation11] sm:$0xff]
    %v215 = vld [vmem:[#allocation11 + $0x8] sm:$0xff]
    %v216 = vld [vmem:[#allocation11 + $0x10] sm:$0xff]
    %v217 = vld [vmem:[#allocation11 + $0x18] sm:$0xff]
    %219 = vset.pattern.permute.xlu0 0
    %220 = vperm.xlu0 %219, %v206
    %v221 = vpop.permute.xlu0 %220
    %224 = vset.pattern.permute.xlu0 0
    %225 = vperm.xlu0 %224, %v207
    %v226 = vpop.permute.xlu0 %225
    %229 = vset.pattern.permute.xlu0 0
    %230 = vperm.xlu0 %229, %v208
    %v231 = vpop.permute.xlu0 %230
    %234 = vset.pattern.permute.xlu0 0
    %235 = vperm.xlu0 %234, %v209
    %v236 = vpop.permute.xlu0 %235
    %239 = vset.pattern.permute.xlu0 0
    %240 = vperm.xlu0 %239, %v210
    %v241 = vpop.permute.xlu0 %240
    %244 = vset.pattern.permute.xlu0 0
    %245 = vperm.xlu0 %244, %v211
    %v246 = vpop.permute.xlu0 %245
    %249 = vset.pattern.permute.xlu0 0
    %250 = vperm.xlu0 %249, %v212
    %v251 = vpop.permute.xlu0 %250
    %254 = vset.pattern.permute.xlu0 0
    %255 = vperm.xlu0 %254, %v213
    %v256 = vpop.permute.xlu0 %255
    %v262 = vlaneseq
    %v263 = vshrl.u32 %v262, 7
    %v264 = vsub.s32 0, %v263
    %v265 = vrot.slane %v214, %v264
    %v266 = vlaneseq
    %v267 = vshrl.u32 %v266, 7
    %v268 = vsub.s32 4, %v267
    %v269 = vrot.slane %v214, %v268
    %v270 = vlaneseq
    %v271 = vshrl.u32 %v270, 7
    %v272 = vsub.s32 0, %v271
    %v273 = vrot.slane %v215, %v272
    %v274 = vlaneseq
    %v275 = vshrl.u32 %v274, 7
    %v276 = vsub.s32 4, %v275
    %v277 = vrot.slane %v215, %v276
    %v278 = vlaneseq
    %v279 = vshrl.u32 %v278, 7
    %v280 = vsub.s32 0, %v279
    %v281 = vrot.slane %v216, %v280
    %v282 = vlaneseq
    %v283 = vshrl.u32 %v282, 7
    %v284 = vsub.s32 4, %v283
    %v285 = vrot.slane %v216, %v284
    %v286 = vlaneseq
    %v287 = vshrl.u32 %v286, 7
    %v288 = vsub.s32 0, %v287
    %v289 = vrot.slane %v217, %v288
    %v290 = vlaneseq
    %v291 = vshrl.u32 %v290, 7
    %v292 = vsub.s32 4, %v291
    %v293 = vrot.slane %v217, %v292
    %v302 = vlaneseq
    %v303 = vshrl.u32 %v302, 7
    %v304 = vsub.s32 0, %v303
    %v305 = vrot.slane %v265, %v304
    %v306 = vlaneseq
    %v307 = vshrl.u32 %v306, 7
    %v308 = vsub.s32 0, %v307
    %v309 = vrot.slane %v269, %v308
    %v310 = vlaneseq
    %v311 = vshrl.u32 %v310, 7
    %v312 = vsub.s32 0, %v311
    %v313 = vrot.slane %v273, %v312
    %v314 = vlaneseq
    %v315 = vshrl.u32 %v314, 7
    %v316 = vsub.s32 0, %v315
    %v317 = vrot.slane %v277, %v316
    %v318 = vlaneseq
    %v319 = vshrl.u32 %v318, 7
    %v320 = vsub.s32 0, %v319
    %v321 = vrot.slane %v281, %v320
    %v322 = vlaneseq
    %v323 = vshrl.u32 %v322, 7
    %v324 = vsub.s32 0, %v323
    %v325 = vrot.slane %v285, %v324
    %v326 = vlaneseq
    %v327 = vshrl.u32 %v326, 7
    %v328 = vsub.s32 0, %v327
    %v329 = vrot.slane %v289, %v328
    %v330 = vlaneseq
    %v331 = vshrl.u32 %v330, 7
    %v332 = vsub.s32 0, %v331
    %v333 = vrot.slane %v293, %v332
    %v334 = vmul.f32 %v221, %v305
    %v335 = vmul.f32 %v221, %v309
    %v336 = vmul.f32 %v221, %v313
    %v337 = vmul.f32 %v221, %v317
    %v338 = vmul.f32 %v221, %v321
    %v339 = vmul.f32 %v221, %v325
    %v340 = vmul.f32 %v221, %v329
    %v341 = vmul.f32 %v221, %v333
    %v342 = vmul.f32 %v226, %v305
    %v343 = vmul.f32 %v226, %v309
    %v344 = vmul.f32 %v226, %v313
    %v345 = vmul.f32 %v226, %v317
    %v346 = vmul.f32 %v226, %v321
    %v347 = vmul.f32 %v226, %v325
    %v348 = vmul.f32 %v226, %v329
    %v349 = vmul.f32 %v226, %v333
    %v350 = vmul.f32 %v231, %v305
    %v351 = vmul.f32 %v231, %v309
    %v352 = vmul.f32 %v231, %v313
    %v353 = vmul.f32 %v231, %v317
    %v354 = vmul.f32 %v231, %v321
    %v355 = vmul.f32 %v231, %v325
    %v356 = vmul.f32 %v231, %v329
    %v357 = vmul.f32 %v231, %v333
    %v358 = vmul.f32 %v236, %v305
    %v359 = vmul.f32 %v236, %v309
    %v360 = vmul.f32 %v236, %v313
    %v361 = vmul.f32 %v236, %v317
    %v362 = vmul.f32 %v236, %v321
    %v363 = vmul.f32 %v236, %v325
    %v364 = vmul.f32 %v236, %v329
    %v365 = vmul.f32 %v236, %v333
    %v366 = vmul.f32 %v241, %v305
    %v367 = vmul.f32 %v241, %v309
    %v368 = vmul.f32 %v241, %v313
    %v369 = vmul.f32 %v241, %v317
    %v370 = vmul.f32 %v241, %v321
    %v371 = vmul.f32 %v241, %v325
    %v372 = vmul.f32 %v241, %v329
    %v373 = vmul.f32 %v241, %v333
    %v374 = vmul.f32 %v246, %v305
    %v375 = vmul.f32 %v246, %v309
    %v376 = vmul.f32 %v246, %v313
    %v377 = vmul.f32 %v246, %v317
    %v378 = vmul.f32 %v246, %v321
    %v379 = vmul.f32 %v246, %v325
    %v380 = vmul.f32 %v246, %v329
    %v381 = vmul.f32 %v246, %v333
    %v382 = vmul.f32 %v251, %v305
    %v383 = vmul.f32 %v251, %v309
    %v384 = vmul.f32 %v251, %v313
    %v385 = vmul.f32 %v251, %v317
    %v386 = vmul.f32 %v251, %v321
    %v387 = vmul.f32 %v251, %v325
    %v388 = vmul.f32 %v251, %v329
    %v389 = vmul.f32 %v251, %v333
    %v390 = vmul.f32 %v256, %v305
    %v391 = vmul.f32 %v256, %v309
    %v392 = vmul.f32 %v256, %v313
    %v393 = vmul.f32 %v256, %v317
    %v394 = vmul.f32 %v256, %v321
    %v395 = vmul.f32 %v256, %v325
    %v396 = vmul.f32 %v256, %v329
    %v397 = vmul.f32 %v256, %v333
    %398 = vset.pattern.permute.xlu0 1
    %399 = vperm.xlu0 %398, %v206
    %v400 = vpop.permute.xlu0 %399
    %402 = vset.pattern.permute.xlu0 1
    %403 = vperm.xlu0 %402, %v207
    %v404 = vpop.permute.xlu0 %403
    %406 = vset.pattern.permute.xlu0 1
    %407 = vperm.xlu0 %406, %v208
    %v408 = vpop.permute.xlu0 %407
    %410 = vset.pattern.permute.xlu0 1
    %411 = vperm.xlu0 %410, %v209
    %v412 = vpop.permute.xlu0 %411
    %414 = vset.pattern.permute.xlu0 1
    %415 = vperm.xlu0 %414, %v210
    %v416 = vpop.permute.xlu0 %415
    %418 = vset.pattern.permute.xlu0 1
    %419 = vperm.xlu0 %418, %v211
    %v420 = vpop.permute.xlu0 %419
    %422 = vset.pattern.permute.xlu0 1
    %423 = vperm.xlu0 %422, %v212
    %v424 = vpop.permute.xlu0 %423
    %426 = vset.pattern.permute.xlu0 1
    %427 = vperm.xlu0 %426, %v213
    %v428 = vpop.permute.xlu0 %427
    %v430 = vlaneseq
    %v431 = vshrl.u32 %v430, 7
    %v432 = vsub.s32 1, %v431
    %v433 = vrot.slane %v214, %v432
    %v434 = vlaneseq
    %v435 = vshrl.u32 %v434, 7
    %v436 = vsub.s32 5, %v435
    %v437 = vrot.slane %v214, %v436
    %v438 = vlaneseq
    %v439 = vshrl.u32 %v438, 7
    %v440 = vsub.s32 1, %v439
    %v441 = vrot.slane %v215, %v440
    %v442 = vlaneseq
    %v443 = vshrl.u32 %v442, 7
    %v444 = vsub.s32 5, %v443
    %v445 = vrot.slane %v215, %v444
    %v446 = vlaneseq
    %v447 = vshrl.u32 %v446, 7
    %v448 = vsub.s32 1, %v447
    %v449 = vrot.slane %v216, %v448
    %v450 = vlaneseq
    %v451 = vshrl.u32 %v450, 7
    %v452 = vsub.s32 5, %v451
    %v453 = vrot.slane %v216, %v452
    %v454 = vlaneseq
    %v455 = vshrl.u32 %v454, 7
    %v456 = vsub.s32 1, %v455
    %v457 = vrot.slane %v217, %v456
    %v458 = vlaneseq
    %v459 = vshrl.u32 %v458, 7
    %v460 = vsub.s32 5, %v459
    %v461 = vrot.slane %v217, %v460
    %v470 = vlaneseq
    %v471 = vshrl.u32 %v470, 7
    %v472 = vsub.s32 1, %v471
    %v473 = vrot.slane %v433, %v472
    %v474 = vlaneseq
    %v475 = vshrl.u32 %v474, 7
    %v476 = vsub.s32 1, %v475
    %v477 = vrot.slane %v437, %v476
    %v478 = vlaneseq
    %v479 = vshrl.u32 %v478, 7
    %v480 = vsub.s32 1, %v479
    %v481 = vrot.slane %v441, %v480
    %v482 = vlaneseq
    %v483 = vshrl.u32 %v482, 7
    %v484 = vsub.s32 1, %v483
    %v485 = vrot.slane %v445, %v484
    %v486 = vlaneseq
    %v487 = vshrl.u32 %v486, 7
    %v488 = vsub.s32 1, %v487
    %v489 = vrot.slane %v449, %v488
    %v490 = vlaneseq
    %v491 = vshrl.u32 %v490, 7
    %v492 = vsub.s32 1, %v491
    %v493 = vrot.slane %v453, %v492
    %v494 = vlaneseq
    %v495 = vshrl.u32 %v494, 7
    %v496 = vsub.s32 1, %v495
    %v497 = vrot.slane %v457, %v496
    %v498 = vlaneseq
    %v499 = vshrl.u32 %v498, 7
    %v500 = vsub.s32 1, %v499
    %v501 = vrot.slane %v461, %v500
    %v502 = vmul.f32 %v400, %v473
    %v503 = vmul.f32 %v400, %v477
    %v504 = vmul.f32 %v400, %v481
    %v505 = vmul.f32 %v400, %v485
    %v506 = vmul.f32 %v400, %v489
    %v507 = vmul.f32 %v400, %v493
    %v508 = vmul.f32 %v400, %v497
    %v509 = vmul.f32 %v400, %v501
    %v510 = vmul.f32 %v404, %v473
    %v511 = vmul.f32 %v404, %v477
    %v512 = vmul.f32 %v404, %v481
    %v513 = vmul.f32 %v404, %v485
    %v514 = vmul.f32 %v404, %v489
    %v515 = vmul.f32 %v404, %v493
    %v516 = vmul.f32 %v404, %v497
    %v517 = vmul.f32 %v404, %v501
    %v518 = vmul.f32 %v408, %v473
    %v519 = vmul.f32 %v408, %v477
    %v520 = vmul.f32 %v408, %v481
    %v521 = vmul.f32 %v408, %v485
    %v522 = vmul.f32 %v408, %v489
    %v523 = vmul.f32 %v408, %v493
    %v524 = vmul.f32 %v408, %v497
    %v525 = vmul.f32 %v408, %v501
    %v526 = vmul.f32 %v412, %v473
    %v527 = vmul.f32 %v412, %v477
    %v528 = vmul.f32 %v412, %v481
    %v529 = vmul.f32 %v412, %v485
    %v530 = vmul.f32 %v412, %v489
    %v531 = vmul.f32 %v412, %v493
    %v532 = vmul.f32 %v412, %v497
    %v533 = vmul.f32 %v412, %v501
    %v534 = vmul.f32 %v416, %v473
    %v535 = vmul.f32 %v416, %v477
    %v536 = vmul.f32 %v416, %v481
    %v537 = vmul.f32 %v416, %v485
    %v538 = vmul.f32 %v416, %v489
    %v539 = vmul.f32 %v416, %v493
    %v540 = vmul.f32 %v416, %v497
    %v541 = vmul.f32 %v416, %v501
    %v542 = vmul.f32 %v420, %v473
    %v543 = vmul.f32 %v420, %v477
    %v544 = vmul.f32 %v420, %v481
    %v545 = vmul.f32 %v420, %v485
    %v546 = vmul.f32 %v420, %v489
    %v547 = vmul.f32 %v420, %v493
    %v548 = vmul.f32 %v420, %v497
    %v549 = vmul.f32 %v420, %v501
    %v550 = vmul.f32 %v424, %v473
    %v551 = vmul.f32 %v424, %v477
    %v552 = vmul.f32 %v424, %v481
    %v553 = vmul.f32 %v424, %v485
    %v554 = vmul.f32 %v424, %v489
    %v555 = vmul.f32 %v424, %v493
    %v556 = vmul.f32 %v424, %v497
    %v557 = vmul.f32 %v424, %v501
    %v558 = vmul.f32 %v428, %v473
    %v559 = vmul.f32 %v428, %v477
    %v560 = vmul.f32 %v428, %v481
    %v561 = vmul.f32 %v428, %v485
    %v562 = vmul.f32 %v428, %v489
    %v563 = vmul.f32 %v428, %v493
    %v564 = vmul.f32 %v428, %v497
    %v565 = vmul.f32 %v428, %v501
    %v566 = vadd.f32 %v334, %v502
    %v567 = vadd.f32 %v335, %v503
    %v568 = vadd.f32 %v336, %v504
    %v569 = vadd.f32 %v337, %v505
    %v570 = vadd.f32 %v338, %v506
    %v571 = vadd.f32 %v339, %v507
    %v572 = vadd.f32 %v340, %v508
    %v573 = vadd.f32 %v341, %v509
    %v574 = vadd.f32 %v342, %v510
    %v575 = vadd.f32 %v343, %v511
    %v576 = vadd.f32 %v344, %v512
    %v577 = vadd.f32 %v345, %v513
    %v578 = vadd.f32 %v346, %v514
    %v579 = vadd.f32 %v347, %v515
    %v580 = vadd.f32 %v348, %v516
    %v581 = vadd.f32 %v349, %v517
    %v582 = vadd.f32 %v350, %v518
    %v583 = vadd.f32 %v351, %v519
    %v584 = vadd.f32 %v352, %v520
    %v585 = vadd.f32 %v353, %v521
    %v586 = vadd.f32 %v354, %v522
    %v587 = vadd.f32 %v355, %v523
    %v588 = vadd.f32 %v356, %v524
    %v589 = vadd.f32 %v357, %v525
    %v590 = vadd.f32 %v358, %v526
    %v591 = vadd.f32 %v359, %v527
    %v592 = vadd.f32 %v360, %v528
    %v593 = vadd.f32 %v361, %v529
    %v594 = vadd.f32 %v362, %v530
    %v595 = vadd.f32 %v363, %v531
    %v596 = vadd.f32 %v364, %v532
    %v597 = vadd.f32 %v365, %v533
    %v598 = vadd.f32 %v366, %v534
    %v599 = vadd.f32 %v367, %v535
    %v600 = vadd.f32 %v368, %v536
    %v601 = vadd.f32 %v369, %v537
    %v602 = vadd.f32 %v370, %v538
    %v603 = vadd.f32 %v371, %v539
    %v604 = vadd.f32 %v372, %v540
    %v605 = vadd.f32 %v373, %v541
    %v606 = vadd.f32 %v374, %v542
    %v607 = vadd.f32 %v375, %v543
    %v608 = vadd.f32 %v376, %v544
    %v609 = vadd.f32 %v377, %v545
    %v610 = vadd.f32 %v378, %v546
    %v611 = vadd.f32 %v379, %v547
    %v612 = vadd.f32 %v380, %v548
    %v613 = vadd.f32 %v381, %v549
    %v614 = vadd.f32 %v382, %v550
    %v615 = vadd.f32 %v383, %v551
    %v616 = vadd.f32 %v384, %v552
    %v617 = vadd.f32 %v385, %v553
    %v618 = vadd.f32 %v386, %v554
    %v619 = vadd.f32 %v387, %v555
    %v620 = vadd.f32 %v388, %v556
    %v621 = vadd.f32 %v389, %v557
    %v622 = vadd.f32 %v390, %v558
    %v623 = vadd.f32 %v391, %v559
    %v624 = vadd.f32 %v392, %v560
    %v625 = vadd.f32 %v393, %v561
    %v626 = vadd.f32 %v394, %v562
    %v627 = vadd.f32 %v395, %v563
    %v628 = vadd.f32 %v396, %v564
    %v629 = vadd.f32 %v397, %v565
    %630 = vset.pattern.permute.xlu0 2
    %631 = vperm.xlu0 %630, %v206
    %v632 = vpop.permute.xlu0 %631
    %634 = vset.pattern.permute.xlu0 2
    %635 = vperm.xlu0 %634, %v207
    %v636 = vpop.permute.xlu0 %635
    %638 = vset.pattern.permute.xlu0 2
    %639 = vperm.xlu0 %638, %v208
    %v640 = vpop.permute.xlu0 %639
    %642 = vset.pattern.permute.xlu0 2
    %643 = vperm.xlu0 %642, %v209
    %v644 = vpop.permute.xlu0 %643
    %646 = vset.pattern.permute.xlu0 2
    %647 = vperm.xlu0 %646, %v210
    %v648 = vpop.permute.xlu0 %647
    %650 = vset.pattern.permute.xlu0 2
    %651 = vperm.xlu0 %650, %v211
    %v652 = vpop.permute.xlu0 %651
    %654 = vset.pattern.permute.xlu0 2
    %655 = vperm.xlu0 %654, %v212
    %v656 = vpop.permute.xlu0 %655
    %658 = vset.pattern.permute.xlu0 2
    %659 = vperm.xlu0 %658, %v213
    %v660 = vpop.permute.xlu0 %659
    %v662 = vlaneseq
    %v663 = vshrl.u32 %v662, 7
    %v664 = vsub.s32 2, %v663
    %v665 = vrot.slane %v214, %v664
    %v666 = vlaneseq
    %v667 = vshrl.u32 %v666, 7
    %v668 = vsub.s32 6, %v667
    %v669 = vrot.slane %v214, %v668
    %v670 = vlaneseq
    %v671 = vshrl.u32 %v670, 7
    %v672 = vsub.s32 2, %v671
    %v673 = vrot.slane %v215, %v672
    %v674 = vlaneseq
    %v675 = vshrl.u32 %v674, 7
    %v676 = vsub.s32 6, %v675
    %v677 = vrot.slane %v215, %v676
    %v678 = vlaneseq
    %v679 = vshrl.u32 %v678, 7
    %v680 = vsub.s32 2, %v679
    %v681 = vrot.slane %v216, %v680
    %v682 = vlaneseq
    %v683 = vshrl.u32 %v682, 7
    %v684 = vsub.s32 6, %v683
    %v685 = vrot.slane %v216, %v684
    %v686 = vlaneseq
    %v687 = vshrl.u32 %v686, 7
    %v688 = vsub.s32 2, %v687
    %v689 = vrot.slane %v217, %v688
    %v690 = vlaneseq
    %v691 = vshrl.u32 %v690, 7
    %v692 = vsub.s32 6, %v691
    %v693 = vrot.slane %v217, %v692
    %v702 = vlaneseq
    %v703 = vshrl.u32 %v702, 7
    %v704 = vsub.s32 2, %v703
    %v705 = vrot.slane %v665, %v704
    %v706 = vlaneseq
    %v707 = vshrl.u32 %v706, 7
    %v708 = vsub.s32 2, %v707
    %v709 = vrot.slane %v669, %v708
    %v710 = vlaneseq
    %v711 = vshrl.u32 %v710, 7
    %v712 = vsub.s32 2, %v711
    %v713 = vrot.slane %v673, %v712
    %v714 = vlaneseq
    %v715 = vshrl.u32 %v714, 7
    %v716 = vsub.s32 2, %v715
    %v717 = vrot.slane %v677, %v716
    %v718 = vlaneseq
    %v719 = vshrl.u32 %v718, 7
    %v720 = vsub.s32 2, %v719
    %v721 = vrot.slane %v681, %v720
    %v722 = vlaneseq
    %v723 = vshrl.u32 %v722, 7
    %v724 = vsub.s32 2, %v723
    %v725 = vrot.slane %v685, %v724
    %v726 = vlaneseq
    %v727 = vshrl.u32 %v726, 7
    %v728 = vsub.s32 2, %v727
    %v729 = vrot.slane %v689, %v728
    %v730 = vlaneseq
    %v731 = vshrl.u32 %v730, 7
    %v732 = vsub.s32 2, %v731
    %v733 = vrot.slane %v693, %v732
    %v734 = vmul.f32 %v632, %v705
    %v735 = vmul.f32 %v632, %v709
    %v736 = vmul.f32 %v632, %v713
    %v737 = vmul.f32 %v632, %v717
    %v738 = vmul.f32 %v632, %v721
    %v739 = vmul.f32 %v632, %v725
    %v740 = vmul.f32 %v632, %v729
    %v741 = vmul.f32 %v632, %v733
    %v742 = vmul.f32 %v636, %v705
    %v743 = vmul.f32 %v636, %v709
    %v744 = vmul.f32 %v636, %v713
    %v745 = vmul.f32 %v636, %v717
    %v746 = vmul.f32 %v636, %v721
    %v747 = vmul.f32 %v636, %v725
    %v748 = vmul.f32 %v636, %v729
    %v749 = vmul.f32 %v636, %v733
    %v750 = vmul.f32 %v640, %v705
    %v751 = vmul.f32 %v640, %v709
    %v752 = vmul.f32 %v640, %v713
    %v753 = vmul.f32 %v640, %v717
    %v754 = vmul.f32 %v640, %v721
    %v755 = vmul.f32 %v640, %v725
    %v756 = vmul.f32 %v640, %v729
    %v757 = vmul.f32 %v640, %v733
    %v758 = vmul.f32 %v644, %v705
    %v759 = vmul.f32 %v644, %v709
    %v760 = vmul.f32 %v644, %v713
    %v761 = vmul.f32 %v644, %v717
    %v762 = vmul.f32 %v644, %v721
    %v763 = vmul.f32 %v644, %v725
    %v764 = vmul.f32 %v644, %v729
    %v765 = vmul.f32 %v644, %v733
    %v766 = vmul.f32 %v648, %v705
    %v767 = vmul.f32 %v648, %v709
    %v768 = vmul.f32 %v648, %v713
    %v769 = vmul.f32 %v648, %v717
    %v770 = vmul.f32 %v648, %v721
    %v771 = vmul.f32 %v648, %v725
    %v772 = vmul.f32 %v648, %v729
    %v773 = vmul.f32 %v648, %v733
    %v774 = vmul.f32 %v652, %v705
    %v775 = vmul.f32 %v652, %v709
    %v776 = vmul.f32 %v652, %v713
    %v777 = vmul.f32 %v652, %v717
    %v778 = vmul.f32 %v652, %v721
    %v779 = vmul.f32 %v652, %v725
    %v780 = vmul.f32 %v652, %v729
    %v781 = vmul.f32 %v652, %v733
    %v782 = vmul.f32 %v656, %v705
    %v783 = vmul.f32 %v656, %v709
    %v784 = vmul.f32 %v656, %v713
    %v785 = vmul.f32 %v656, %v717
    %v786 = vmul.f32 %v656, %v721
    %v787 = vmul.f32 %v656, %v725
    %v788 = vmul.f32 %v656, %v729
    %v789 = vmul.f32 %v656, %v733
    %v790 = vmul.f32 %v660, %v705
    %v791 = vmul.f32 %v660, %v709
    %v792 = vmul.f32 %v660, %v713
    %v793 = vmul.f32 %v660, %v717
    %v794 = vmul.f32 %v660, %v721
    %v795 = vmul.f32 %v660, %v725
    %v796 = vmul.f32 %v660, %v729
    %v797 = vmul.f32 %v660, %v733
    %v798 = vadd.f32 %v566, %v734
    %v799 = vadd.f32 %v567, %v735
    %v800 = vadd.f32 %v568, %v736
    %v801 = vadd.f32 %v569, %v737
    %v802 = vadd.f32 %v570, %v738
    %v803 = vadd.f32 %v571, %v739
    %v804 = vadd.f32 %v572, %v740
    %v805 = vadd.f32 %v573, %v741
    %v806 = vadd.f32 %v574, %v742
    %v807 = vadd.f32 %v575, %v743
    %v808 = vadd.f32 %v576, %v744
    %v809 = vadd.f32 %v577, %v745
    %v810 = vadd.f32 %v578, %v746
    %v811 = vadd.f32 %v579, %v747
    %v812 = vadd.f32 %v580, %v748
    %v813 = vadd.f32 %v581, %v749
    %v814 = vadd.f32 %v582, %v750
    %v815 = vadd.f32 %v583, %v751
    %v816 = vadd.f32 %v584, %v752
    %v817 = vadd.f32 %v585, %v753
    %v818 = vadd.f32 %v586, %v754
    %v819 = vadd.f32 %v587, %v755
    %v820 = vadd.f32 %v588, %v756
    %v821 = vadd.f32 %v589, %v757
    %v822 = vadd.f32 %v590, %v758
    %v823 = vadd.f32 %v591, %v759
    %v824 = vadd.f32 %v592, %v760
    %v825 = vadd.f32 %v593, %v761
    %v826 = vadd.f32 %v594, %v762
    %v827 = vadd.f32 %v595, %v763
    %v828 = vadd.f32 %v596, %v764
    %v829 = vadd.f32 %v597, %v765
    %v830 = vadd.f32 %v598, %v766
    %v831 = vadd.f32 %v599, %v767
    %v832 = vadd.f32 %v600, %v768
    %v833 = vadd.f32 %v601, %v769
    %v834 = vadd.f32 %v602, %v770
    %v835 = vadd.f32 %v603, %v771
    %v836 = vadd.f32 %v604, %v772
    %v837 = vadd.f32 %v605, %v773
    %v838 = vadd.f32 %v606, %v774
    %v839 = vadd.f32 %v607, %v775
    %v840 = vadd.f32 %v608, %v776
    %v841 = vadd.f32 %v609, %v777
    %v842 = vadd.f32 %v610, %v778
    %v843 = vadd.f32 %v611, %v779
    %v844 = vadd.f32 %v612, %v780
    %v845 = vadd.f32 %v613, %v781
    %v846 = vadd.f32 %v614, %v782
    %v847 = vadd.f32 %v615, %v783
    %v848 = vadd.f32 %v616, %v784
    %v849 = vadd.f32 %v617, %v785
    %v850 = vadd.f32 %v618, %v786
    %v851 = vadd.f32 %v619, %v787
    %v852 = vadd.f32 %v620, %v788
    %v853 = vadd.f32 %v621, %v789
    %v854 = vadd.f32 %v622, %v790
    %v855 = vadd.f32 %v623, %v791
    %v856 = vadd.f32 %v624, %v792
    %v857 = vadd.f32 %v625, %v793
    %v858 = vadd.f32 %v626, %v794
    %v859 = vadd.f32 %v627, %v795
    %v860 = vadd.f32 %v628, %v796
    %v861 = vadd.f32 %v629, %v797
    %862 = vset.pattern.permute.xlu0 3
    %863 = vperm.xlu0 %862, %v206
    %v864 = vpop.permute.xlu0 %863
    %866 = vset.pattern.permute.xlu0 3
    %867 = vperm.xlu0 %866, %v207
    %v868 = vpop.permute.xlu0 %867
    %870 = vset.pattern.permute.xlu0 3
    %871 = vperm.xlu0 %870, %v208
    %v872 = vpop.permute.xlu0 %871
    %874 = vset.pattern.permute.xlu0 3
    %875 = vperm.xlu0 %874, %v209
    %v876 = vpop.permute.xlu0 %875
    %878 = vset.pattern.permute.xlu0 3
    %879 = vperm.xlu0 %878, %v210
    %v880 = vpop.permute.xlu0 %879
    %882 = vset.pattern.permute.xlu0 3
    %883 = vperm.xlu0 %882, %v211
    %v884 = vpop.permute.xlu0 %883
    %886 = vset.pattern.permute.xlu0 3
    %887 = vperm.xlu0 %886, %v212
    %v888 = vpop.permute.xlu0 %887
    %890 = vset.pattern.permute.xlu0 3
    %891 = vperm.xlu0 %890, %v213
    %v892 = vpop.permute.xlu0 %891
    %v894 = vlaneseq
    %v895 = vshrl.u32 %v894, 7
    %v896 = vsub.s32 3, %v895
    %v897 = vrot.slane %v214, %v896
    %v898 = vlaneseq
    %v899 = vshrl.u32 %v898, 7
    %v900 = vsub.s32 7, %v899
    %v901 = vrot.slane %v214, %v900
    %v902 = vlaneseq
    %v903 = vshrl.u32 %v902, 7
    %v904 = vsub.s32 3, %v903
    %v905 = vrot.slane %v215, %v904
    %v906 = vlaneseq
    %v907 = vshrl.u32 %v906, 7
    %v908 = vsub.s32 7, %v907
    %v909 = vrot.slane %v215, %v908
    %v910 = vlaneseq
    %v911 = vshrl.u32 %v910, 7
    %v912 = vsub.s32 3, %v911
    %v913 = vrot.slane %v216, %v912
    %v914 = vlaneseq
    %v915 = vshrl.u32 %v914, 7
    %v916 = vsub.s32 7, %v915
    %v917 = vrot.slane %v216, %v916
    %v918 = vlaneseq
    %v919 = vshrl.u32 %v918, 7
    %v920 = vsub.s32 3, %v919
    %v921 = vrot.slane %v217, %v920
    %v922 = vlaneseq
    %v923 = vshrl.u32 %v922, 7
    %v924 = vsub.s32 7, %v923
    %v925 = vrot.slane %v217, %v924
    %v934 = vlaneseq
    %v935 = vshrl.u32 %v934, 7
    %v936 = vsub.s32 3, %v935
    %v937 = vrot.slane %v897, %v936
    %v938 = vlaneseq
    %v939 = vshrl.u32 %v938, 7
    %v940 = vsub.s32 3, %v939
    %v941 = vrot.slane %v901, %v940
    %v942 = vlaneseq
    %v943 = vshrl.u32 %v942, 7
    %v944 = vsub.s32 3, %v943
    %v945 = vrot.slane %v905, %v944
    %v946 = vlaneseq
    %v947 = vshrl.u32 %v946, 7
    %v948 = vsub.s32 3, %v947
    %v949 = vrot.slane %v909, %v948
    %v950 = vlaneseq
    %v951 = vshrl.u32 %v950, 7
    %v952 = vsub.s32 3, %v951
    %v953 = vrot.slane %v913, %v952
    %v954 = vlaneseq
    %v955 = vshrl.u32 %v954, 7
    %v956 = vsub.s32 3, %v955
    %v957 = vrot.slane %v917, %v956
    %v958 = vlaneseq
    %v959 = vshrl.u32 %v958, 7
    %v960 = vsub.s32 3, %v959
    %v961 = vrot.slane %v921, %v960
    %v962 = vlaneseq
    %v963 = vshrl.u32 %v962, 7
    %v964 = vsub.s32 3, %v963
    %v965 = vrot.slane %v925, %v964
    %v966 = vmul.f32 %v864, %v937
    %v967 = vmul.f32 %v864, %v941
    %v968 = vmul.f32 %v864, %v945
    %v969 = vmul.f32 %v864, %v949
    %v970 = vmul.f32 %v864, %v953
    %v971 = vmul.f32 %v864, %v957
    %v972 = vmul.f32 %v864, %v961
    %v973 = vmul.f32 %v864, %v965
    %v974 = vmul.f32 %v868, %v937
    %v975 = vmul.f32 %v868, %v941
    %v976 = vmul.f32 %v868, %v945
    %v977 = vmul.f32 %v868, %v949
    %v978 = vmul.f32 %v868, %v953
    %v979 = vmul.f32 %v868, %v957
    %v980 = vmul.f32 %v868, %v961
    %v981 = vmul.f32 %v868, %v965
    %v982 = vmul.f32 %v872, %v937
    %v983 = vmul.f32 %v872, %v941
    %v984 = vmul.f32 %v872, %v945
    %v985 = vmul.f32 %v872, %v949
    %v986 = vmul.f32 %v872, %v953
    %v987 = vmul.f32 %v872, %v957
    %v988 = vmul.f32 %v872, %v961
    %v989 = vmul.f32 %v872, %v965
    %v990 = vmul.f32 %v876, %v937
    %v991 = vmul.f32 %v876, %v941
    %v992 = vmul.f32 %v876, %v945
    %v993 = vmul.f32 %v876, %v949
    %v994 = vmul.f32 %v876, %v953
    %v995 = vmul.f32 %v876, %v957
    %v996 = vmul.f32 %v876, %v961
    %v997 = vmul.f32 %v876, %v965
    %v998 = vmul.f32 %v880, %v937
    %v999 = vmul.f32 %v880, %v941
    %v1000 = vmul.f32 %v880, %v945
    %v1001 = vmul.f32 %v880, %v949
    %v1002 = vmul.f32 %v880, %v953
    %v1003 = vmul.f32 %v880, %v957
    %v1004 = vmul.f32 %v880, %v961
    %v1005 = vmul.f32 %v880, %v965
    %v1006 = vmul.f32 %v884, %v937
    %v1007 = vmul.f32 %v884, %v941
    %v1008 = vmul.f32 %v884, %v945
    %v1009 = vmul.f32 %v884, %v949
    %v1010 = vmul.f32 %v884, %v953
    %v1011 = vmul.f32 %v884, %v957
    %v1012 = vmul.f32 %v884, %v961
    %v1013 = vmul.f32 %v884, %v965
    %v1014 = vmul.f32 %v888, %v937
    %v1015 = vmul.f32 %v888, %v941
    %v1016 = vmul.f32 %v888, %v945
    %v1017 = vmul.f32 %v888, %v949
    %v1018 = vmul.f32 %v888, %v953
    %v1019 = vmul.f32 %v888, %v957
    %v1020 = vmul.f32 %v888, %v961
    %v1021 = vmul.f32 %v888, %v965
    %v1022 = vmul.f32 %v892, %v937
    %v1023 = vmul.f32 %v892, %v941
    %v1024 = vmul.f32 %v892, %v945
    %v1025 = vmul.f32 %v892, %v949
    %v1026 = vmul.f32 %v892, %v953
    %v1027 = vmul.f32 %v892, %v957
    %v1028 = vmul.f32 %v892, %v961
    %v1029 = vmul.f32 %v892, %v965
    %v1030 = vadd.f32 %v798, %v966
    %v1031 = vadd.f32 %v799, %v967
    %v1032 = vadd.f32 %v800, %v968
    %v1033 = vadd.f32 %v801, %v969
    %v1034 = vadd.f32 %v802, %v970
    %v1035 = vadd.f32 %v803, %v971
    %v1036 = vadd.f32 %v804, %v972
    %v1037 = vadd.f32 %v805, %v973
    %v1038 = vadd.f32 %v806, %v974
    %v1039 = vadd.f32 %v807, %v975
    %v1040 = vadd.f32 %v808, %v976
    %v1041 = vadd.f32 %v809, %v977
    %v1042 = vadd.f32 %v810, %v978
    %v1043 = vadd.f32 %v811, %v979
    %v1044 = vadd.f32 %v812, %v980
    %v1045 = vadd.f32 %v813, %v981
    %v1046 = vadd.f32 %v814, %v982
    %v1047 = vadd.f32 %v815, %v983
    %v1048 = vadd.f32 %v816, %v984
    %v1049 = vadd.f32 %v817, %v985
    %v1050 = vadd.f32 %v818, %v986
    %v1051 = vadd.f32 %v819, %v987
    %v1052 = vadd.f32 %v820, %v988
    %v1053 = vadd.f32 %v821, %v989
    %v1054 = vadd.f32 %v822, %v990
    %v1055 = vadd.f32 %v823, %v991
    %v1056 = vadd.f32 %v824, %v992
    %v1057 = vadd.f32 %v825, %v993
    %v1058 = vadd.f32 %v826, %v994
    %v1059 = vadd.f32 %v827, %v995
    %v1060 = vadd.f32 %v828, %v996
    %v1061 = vadd.f32 %v829, %v997
    %v1062 = vadd.f32 %v830, %v998
    %v1063 = vadd.f32 %v831, %v999
    %v1064 = vadd.f32 %v832, %v1000
    %v1065 = vadd.f32 %v833, %v1001
    %v1066 = vadd.f32 %v834, %v1002
    %v1067 = vadd.f32 %v835, %v1003
    %v1068 = vadd.f32 %v836, %v1004
    %v1069 = vadd.f32 %v837, %v1005
    %v1070 = vadd.f32 %v838, %v1006
    %v1071 = vadd.f32 %v839, %v1007
    %v1072 = vadd.f32 %v840, %v1008
    %v1073 = vadd.f32 %v841, %v1009
    %v1074 = vadd.f32 %v842, %v1010
    %v1075 = vadd.f32 %v843, %v1011
    %v1076 = vadd.f32 %v844, %v1012
    %v1077 = vadd.f32 %v845, %v1013
    %v1078 = vadd.f32 %v846, %v1014
    %v1079 = vadd.f32 %v847, %v1015
    %v1080 = vadd.f32 %v848, %v1016
    %v1081 = vadd.f32 %v849, %v1017
    %v1082 = vadd.f32 %v850, %v1018
    %v1083 = vadd.f32 %v851, %v1019
    %v1084 = vadd.f32 %v852, %v1020
    %v1085 = vadd.f32 %v853, %v1021
    %v1086 = vadd.f32 %v854, %v1022
    %v1087 = vadd.f32 %v855, %v1023
    %v1088 = vadd.f32 %v856, %v1024
    %v1089 = vadd.f32 %v857, %v1025
    %v1090 = vadd.f32 %v858, %v1026
    %v1091 = vadd.f32 %v859, %v1027
    %v1092 = vadd.f32 %v860, %v1028
    %v1093 = vadd.f32 %v861, %v1029
    %v1094 = vld [vmem:[#allocation12] sm:$0xff]
    %v1096 = vlaneseq
    %v1097 = vshrl.u32 %v1096, 7
    %v1098 = vsub.s32 0, %v1097
    %v1099 = vrot.slane %v1094, %v1098
    %v1100 = vlaneseq
    %v1101 = vshrl.u32 %v1100, 7
    %v1102 = vsub.s32 1, %v1101
    %v1103 = vrot.slane %v1094, %v1102
    %v1104 = vlaneseq
    %v1105 = vshrl.u32 %v1104, 7
    %v1106 = vsub.s32 2, %v1105
    %v1107 = vrot.slane %v1094, %v1106
    %v1108 = vlaneseq
    %v1109 = vshrl.u32 %v1108, 7
    %v1110 = vsub.s32 3, %v1109
    %v1111 = vrot.slane %v1094, %v1110
    %v1112 = vlaneseq
    %v1113 = vshrl.u32 %v1112, 7
    %v1114 = vsub.s32 4, %v1113
    %v1115 = vrot.slane %v1094, %v1114
    %v1116 = vlaneseq
    %v1117 = vshrl.u32 %v1116, 7
    %v1118 = vsub.s32 5, %v1117
    %v1119 = vrot.slane %v1094, %v1118
    %v1120 = vlaneseq
    %v1121 = vshrl.u32 %v1120, 7
    %v1122 = vsub.s32 6, %v1121
    %v1123 = vrot.slane %v1094, %v1122
    %v1124 = vlaneseq
    %v1125 = vshrl.u32 %v1124, 7
    %v1126 = vsub.s32 7, %v1125
    %v1127 = vrot.slane %v1094, %v1126
    %v1136 = vadd.f32 %v1030, %v1099
    %v1137 = vadd.f32 %v1031, %v1103
    %v1138 = vadd.f32 %v1032, %v1107
    %v1139 = vadd.f32 %v1033, %v1111
    %v1140 = vadd.f32 %v1034, %v1115
    %v1141 = vadd.f32 %v1035, %v1119
    %v1142 = vadd.f32 %v1036, %v1123
    %v1143 = vadd.f32 %v1037, %v1127
    %v1144 = vadd.f32 %v1038, %v1099
    %v1145 = vadd.f32 %v1039, %v1103
    %v1146 = vadd.f32 %v1040, %v1107
    %v1147 = vadd.f32 %v1041, %v1111
    %v1148 = vadd.f32 %v1042, %v1115
    %v1149 = vadd.f32 %v1043, %v1119
    %v1150 = vadd.f32 %v1044, %v1123
    %v1151 = vadd.f32 %v1045, %v1127
    %v1152 = vadd.f32 %v1046, %v1099
    %v1153 = vadd.f32 %v1047, %v1103
    %v1154 = vadd.f32 %v1048, %v1107
    %v1155 = vadd.f32 %v1049, %v1111
    %v1156 = vadd.f32 %v1050, %v1115
    %v1157 = vadd.f32 %v1051, %v1119
    %v1158 = vadd.f32 %v1052, %v1123
    %v1159 = vadd.f32 %v1053, %v1127
    %v1160 = vadd.f32 %v1054, %v1099
    %v1161 = vadd.f32 %v1055, %v1103
    %v1162 = vadd.f32 %v1056, %v1107
    %v1163 = vadd.f32 %v1057, %v1111
    %v1164 = vadd.f32 %v1058, %v1115
    %v1165 = vadd.f32 %v1059, %v1119
    %v1166 = vadd.f32 %v1060, %v1123
    %v1167 = vadd.f32 %v1061, %v1127
    %v1168 = vadd.f32 %v1062, %v1099
    %v1169 = vadd.f32 %v1063, %v1103
    %v1170 = vadd.f32 %v1064, %v1107
    %v1171 = vadd.f32 %v1065, %v1111
    %v1172 = vadd.f32 %v1066, %v1115
    %v1173 = vadd.f32 %v1067, %v1119
    %v1174 = vadd.f32 %v1068, %v1123
    %v1175 = vadd.f32 %v1069, %v1127
    %v1176 = vadd.f32 %v1070, %v1099
    %v1177 = vadd.f32 %v1071, %v1103
    %v1178 = vadd.f32 %v1072, %v1107
    %v1179 = vadd.f32 %v1073, %v1111
    %v1180 = vadd.f32 %v1074, %v1115
    %v1181 = vadd.f32 %v1075, %v1119
    %v1182 = vadd.f32 %v1076, %v1123
    %v1183 = vadd.f32 %v1077, %v1127
    %v1184 = vadd.f32 %v1078, %v1099
    %v1185 = vadd.f32 %v1079, %v1103
    %v1186 = vadd.f32 %v1080, %v1107
    %v1187 = vadd.f32 %v1081, %v1111
    %v1188 = vadd.f32 %v1082, %v1115
    %v1189 = vadd.f32 %v1083, %v1119
    %v1190 = vadd.f32 %v1084, %v1123
    %v1191 = vadd.f32 %v1085, %v1127
    %v1192 = vadd.f32 %v1086, %v1099
    %v1193 = vadd.f32 %v1087, %v1103
    %v1194 = vadd.f32 %v1088, %v1107
    %v1195 = vadd.f32 %v1089, %v1111
    %v1196 = vadd.f32 %v1090, %v1115
    %v1197 = vadd.f32 %v1091, %v1119
    %v1198 = vadd.f32 %v1092, %v1123
    %v1199 = vadd.f32 %v1093, %v1127
    %v1200 = vld [vmem:[#allocation14] sm:$0xff]
    %v1201 = vld [vmem:[#allocation15] sm:$0xff]
    %v1202 = vadd.f32 %v1136, %v1137
    %v1203 = vadd.f32 %v1202, %v1138
    %v1204 = vadd.f32 %v1203, %v1139
    %v1205 = vadd.f32 %v1204, %v1140
    %v1206 = vadd.f32 %v1205, %v1141
    %v1207 = vadd.f32 %v1206, %v1142
    %v1208 = vadd.f32 %v1207, %v1143
    %1209 = vadd.xlane.f32.xlu0 %v1208
    %v1210 = vpop.xlane.xlu0 %1209
    %v1211 = vadd.f32 %v1144, %v1145
    %v1212 = vadd.f32 %v1211, %v1146
    %v1213 = vadd.f32 %v1212, %v1147
    %v1214 = vadd.f32 %v1213, %v1148
    %v1215 = vadd.f32 %v1214, %v1149
    %v1216 = vadd.f32 %v1215, %v1150
    %v1217 = vadd.f32 %v1216, %v1151
    %1218 = vadd.xlane.f32.xlu0 %v1217
    %v1219 = vpop.xlane.xlu0 %1218
    %v1220 = vadd.f32 %v1152, %v1153
    %v1221 = vadd.f32 %v1220, %v1154
    %v1222 = vadd.f32 %v1221, %v1155
    %v1223 = vadd.f32 %v1222, %v1156
    %v1224 = vadd.f32 %v1223, %v1157
    %v1225 = vadd.f32 %v1224, %v1158
    %v1226 = vadd.f32 %v1225, %v1159
    %1227 = vadd.xlane.f32.xlu0 %v1226
    %v1228 = vpop.xlane.xlu0 %1227
    %v1229 = vadd.f32 %v1160, %v1161
    %v1230 = vadd.f32 %v1229, %v1162
    %v1231 = vadd.f32 %v1230, %v1163
    %v1232 = vadd.f32 %v1231, %v1164
    %v1233 = vadd.f32 %v1232, %v1165
    %v1234 = vadd.f32 %v1233, %v1166
    %v1235 = vadd.f32 %v1234, %v1167
    %1236 = vadd.xlane.f32.xlu0 %v1235
    %v1237 = vpop.xlane.xlu0 %1236
    %v1238 = vadd.f32 %v1168, %v1169
    %v1239 = vadd.f32 %v1238, %v1170
    %v1240 = vadd.f32 %v1239, %v1171
    %v1241 = vadd.f32 %v1240, %v1172
    %v1242 = vadd.f32 %v1241, %v1173
    %v1243 = vadd.f32 %v1242, %v1174
    %v1244 = vadd.f32 %v1243, %v1175
    %1245 = vadd.xlane.f32.xlu0 %v1244
    %v1246 = vpop.xlane.xlu0 %1245
    %v1247 = vadd.f32 %v1176, %v1177
    %v1248 = vadd.f32 %v1247, %v1178
    %v1249 = vadd.f32 %v1248, %v1179
    %v1250 = vadd.f32 %v1249, %v1180
    %v1251 = vadd.f32 %v1250, %v1181
    %v1252 = vadd.f32 %v1251, %v1182
    %v1253 = vadd.f32 %v1252, %v1183
    %1254 = vadd.xlane.f32.xlu0 %v1253
    %v1255 = vpop.xlane.xlu0 %1254
    %v1256 = vadd.f32 %v1184, %v1185
    %v1257 = vadd.f32 %v1256, %v1186
    %v1258 = vadd.f32 %v1257, %v1187
    %v1259 = vadd.f32 %v1258, %v1188
    %v1260 = vadd.f32 %v1259, %v1189
    %v1261 = vadd.f32 %v1260, %v1190
    %v1262 = vadd.f32 %v1261, %v1191
    %1263 = vadd.xlane.f32.xlu0 %v1262
    %v1264 = vpop.xlane.xlu0 %1263
    %v1265 = vadd.f32 %v1192, %v1193
    %v1266 = vadd.f32 %v1265, %v1194
    %v1267 = vadd.f32 %v1266, %v1195
    %v1268 = vadd.f32 %v1267, %v1196
    %v1269 = vadd.f32 %v1268, %v1197
    %v1270 = vadd.f32 %v1269, %v1198
    %v1271 = vadd.f32 %v1270, %v1199
    %1272 = vadd.xlane.f32.xlu0 %v1271
    %v1273 = vpop.xlane.xlu0 %1272
    %v1274 = vrcp.pop 1024.0
    %v1275 = vmul.f32 %v1210, %v1274
    %v1276 = vmul.f32 %v1219, %v1274
    %v1277 = vmul.f32 %v1228, %v1274
    %v1278 = vmul.f32 %v1237, %v1274
    %v1279 = vmul.f32 %v1246, %v1274
    %v1280 = vmul.f32 %v1255, %v1274
    %v1281 = vmul.f32 %v1264, %v1274
    %v1282 = vmul.f32 %v1273, %v1274
    %v1283 = vmul.f32 %v1136, %v1136
    %v1284 = vmul.f32 %v1137, %v1137
    %v1285 = vmul.f32 %v1138, %v1138
    %v1286 = vmul.f32 %v1139, %v1139
    %v1287 = vmul.f32 %v1140, %v1140
    %v1288 = vmul.f32 %v1141, %v1141
    %v1289 = vmul.f32 %v1142, %v1142
    %v1290 = vmul.f32 %v1143, %v1143
    %v1291 = vmul.f32 %v1144, %v1144
    %v1292 = vmul.f32 %v1145, %v1145
    %v1293 = vmul.f32 %v1146, %v1146
    %v1294 = vmul.f32 %v1147, %v1147
    %v1295 = vmul.f32 %v1148, %v1148
    %v1296 = vmul.f32 %v1149, %v1149
    %v1297 = vmul.f32 %v1150, %v1150
    %v1298 = vmul.f32 %v1151, %v1151
    %v1299 = vmul.f32 %v1152, %v1152
    %v1300 = vmul.f32 %v1153, %v1153
    %v1301 = vmul.f32 %v1154, %v1154
    %v1302 = vmul.f32 %v1155, %v1155
    %v1303 = vmul.f32 %v1156, %v1156
    %v1304 = vmul.f32 %v1157, %v1157
    %v1305 = vmul.f32 %v1158, %v1158
    %v1306 = vmul.f32 %v1159, %v1159
    %v1307 = vmul.f32 %v1160, %v1160
    %v1308 = vmul.f32 %v1161, %v1161
    %v1309 = vmul.f32 %v1162, %v1162
    %v1310 = vmul.f32 %v1163, %v1163
    %v1311 = vmul.f32 %v1164, %v1164
    %v1312 = vmul.f32 %v1165, %v1165
    %v1313 = vmul.f32 %v1166, %v1166
    %v1314 = vmul.f32 %v1167, %v1167
    %v1315 = vmul.f32 %v1168, %v1168
    %v1316 = vmul.f32 %v1169, %v1169
    %v1317 = vmul.f32 %v1170, %v1170
    %v1318 = vmul.f32 %v1171, %v1171
    %v1319 = vmul.f32 %v1172, %v1172
    %v1320 = vmul.f32 %v1173, %v1173
    %v1321 = vmul.f32 %v1174, %v1174
    %v1322 = vmul.f32 %v1175, %v1175
    %v1323 = vmul.f32 %v1176, %v1176
    %v1324 = vmul.f32 %v1177, %v1177
    %v1325 = vmul.f32 %v1178, %v1178
    %v1326 = vmul.f32 %v1179, %v1179
    %v1327 = vmul.f32 %v1180, %v1180
    %v1328 = vmul.f32 %v1181, %v1181
    %v1329 = vmul.f32 %v1182, %v1182
    %v1330 = vmul.f32 %v1183, %v1183
    %v1331 = vmul.f32 %v1184, %v1184
    %v1332 = vmul.f32 %v1185, %v1185
    %v1333 = vmul.f32 %v1186, %v1186
    %v1334 = vmul.f32 %v1187, %v1187
    %v1335 = vmul.f32 %v1188, %v1188
    %v1336 = vmul.f32 %v1189, %v1189
    %v1337 = vmul.f32 %v1190, %v1190
    %v1338 = vmul.f32 %v1191, %v1191
    %v1339 = vmul.f32 %v1192, %v1192
    %v1340 = vmul.f32 %v1193, %v1193
    %v1341 = vmul.f32 %v1194, %v1194
    %v1342 = vmul.f32 %v1195, %v1195
    %v1343 = vmul.f32 %v1196, %v1196
    %v1344 = vmul.f32 %v1197, %v1197
    %v1345 = vmul.f32 %v1198, %v1198
    %v1346 = vmul.f32 %v1199, %v1199
    %v1347 = vadd.f32 %v1283, %v1284
    %v1348 = vadd.f32 %v1347, %v1285
    %v1349 = vadd.f32 %v1348, %v1286
    %v1350 = vadd.f32 %v1349, %v1287
    %v1351 = vadd.f32 %v1350, %v1288
    %v1352 = vadd.f32 %v1351, %v1289
    %v1353 = vadd.f32 %v1352, %v1290
    %1354 = vadd.xlane.f32.xlu0 %v1353
    %v1355 = vpop.xlane.xlu0 %1354
    %v1356 = vadd.f32 %v1291, %v1292
    %v1357 = vadd.f32 %v1356, %v1293
    %v1358 = vadd.f32 %v1357, %v1294
    %v1359 = vadd.f32 %v1358, %v1295
    %v1360 = vadd.f32 %v1359, %v1296
    %v1361 = vadd.f32 %v1360, %v1297
    %v1362 = vadd.f32 %v1361, %v1298
    %1363 = vadd.xlane.f32.xlu0 %v1362
    %v1364 = vpop.xlane.xlu0 %1363
    %v1365 = vadd.f32 %v1299, %v1300
    %v1366 = vadd.f32 %v1365, %v1301
    %v1367 = vadd.f32 %v1366, %v1302
    %v1368 = vadd.f32 %v1367, %v1303
    %v1369 = vadd.f32 %v1368, %v1304
    %v1370 = vadd.f32 %v1369, %v1305
    %v1371 = vadd.f32 %v1370, %v1306
    %1372 = vadd.xlane.f32.xlu0 %v1371
    %v1373 = vpop.xlane.xlu0 %1372
    %v1374 = vadd.f32 %v1307, %v1308
    %v1375 = vadd.f32 %v1374, %v1309
    %v1376 = vadd.f32 %v1375, %v1310
    %v1377 = vadd.f32 %v1376, %v1311
    %v1378 = vadd.f32 %v1377, %v1312
    %v1379 = vadd.f32 %v1378, %v1313
    %v1380 = vadd.f32 %v1379, %v1314
    %1381 = vadd.xlane.f32.xlu0 %v1380
    %v1382 = vpop.xlane.xlu0 %1381
    %v1383 = vadd.f32 %v1315, %v1316
    %v1384 = vadd.f32 %v1383, %v1317
    %v1385 = vadd.f32 %v1384, %v1318
    %v1386 = vadd.f32 %v1385, %v1319
    %v1387 = vadd.f32 %v1386, %v1320
    %v1388 = vadd.f32 %v1387, %v1321
    %v1389 = vadd.f32 %v1388, %v1322
    %1390 = vadd.xlane.f32.xlu0 %v1389
    %v1391 = vpop.xlane.xlu0 %1390
    %v1392 = vadd.f32 %v1323, %v1324
    %v1393 = vadd.f32 %v1392, %v1325
    %v1394 = vadd.f32 %v1393, %v1326
    %v1395 = vadd.f32 %v1394, %v1327
    %v1396 = vadd.f32 %v1395, %v1328
    %v1397 = vadd.f32 %v1396, %v1329
    %v1398 = vadd.f32 %v1397, %v1330
    %1399 = vadd.xlane.f32.xlu0 %v1398
    %v1400 = vpop.xlane.xlu0 %1399
    %v1401 = vadd.f32 %v1331, %v1332
    %v1402 = vadd.f32 %v1401, %v1333
    %v1403 = vadd.f32 %v1402, %v1334
    %v1404 = vadd.f32 %v1403, %v1335
    %v1405 = vadd.f32 %v1404, %v1336
    %v1406 = vadd.f32 %v1405, %v1337
    %v1407 = vadd.f32 %v1406, %v1338
    %1408 = vadd.xlane.f32.xlu0 %v1407
    %v1409 = vpop.xlane.xlu0 %1408
    %v1410 = vadd.f32 %v1339, %v1340
    %v1411 = vadd.f32 %v1410, %v1341
    %v1412 = vadd.f32 %v1411, %v1342
    %v1413 = vadd.f32 %v1412, %v1343
    %v1414 = vadd.f32 %v1413, %v1344
    %v1415 = vadd.f32 %v1414, %v1345
    %v1416 = vadd.f32 %v1415, %v1346
    %1417 = vadd.xlane.f32.xlu0 %v1416
    %v1418 = vpop.xlane.xlu0 %1417
    %v1419 = vmul.f32 %v1355, %v1274
    %v1420 = vmul.f32 %v1364, %v1274
    %v1421 = vmul.f32 %v1373, %v1274
    %v1422 = vmul.f32 %v1382, %v1274
    %v1423 = vmul.f32 %v1391, %v1274
    %v1424 = vmul.f32 %v1400, %v1274
    %v1425 = vmul.f32 %v1409, %v1274
    %v1426 = vmul.f32 %v1418, %v1274
    %v1427 = vmul.f32 %v1275, %v1275
    %v1428 = vmul.f32 %v1276, %v1276
    %v1429 = vmul.f32 %v1277, %v1277
    %v1430 = vmul.f32 %v1278, %v1278
    %v1431 = vmul.f32 %v1279, %v1279
    %v1432 = vmul.f32 %v1280, %v1280
    %v1433 = vmul.f32 %v1281, %v1281
    %v1434 = vmul.f32 %v1282, %v1282
    %v1435 = vsub.f32 %v1419, %v1427
    %v1436 = vsub.f32 %v1420, %v1428
    %v1437 = vsub.f32 %v1421, %v1429
    %v1438 = vsub.f32 %v1422, %v1430
    %v1439 = vsub.f32 %v1423, %v1431
    %v1440 = vsub.f32 %v1424, %v1432
    %v1441 = vsub.f32 %v1425, %v1433
    %v1442 = vsub.f32 %v1426, %v1434
    %v1443 = vmax.f32 %v1435, 0.0
    %v1444 = vmax.f32 %v1436, 0.0
    %v1445 = vmax.f32 %v1437, 0.0
    %v1446 = vmax.f32 %v1438, 0.0
    %v1447 = vmax.f32 %v1439, 0.0
    %v1448 = vmax.f32 %v1440, 0.0
    %v1449 = vmax.f32 %v1441, 0.0
    %v1450 = vmax.f32 %v1442, 0.0
    %v1451 = vsub.f32 %v1136, %v1275
    %v1452 = vsub.f32 %v1137, %v1275
    %v1453 = vsub.f32 %v1138, %v1275
    %v1454 = vsub.f32 %v1139, %v1275
    %v1455 = vsub.f32 %v1140, %v1275
    %v1456 = vsub.f32 %v1141, %v1275
    %v1457 = vsub.f32 %v1142, %v1275
    %v1458 = vsub.f32 %v1143, %v1275
    %v1459 = vsub.f32 %v1144, %v1276
    %v1460 = vsub.f32 %v1145, %v1276
    %v1461 = vsub.f32 %v1146, %v1276
    %v1462 = vsub.f32 %v1147, %v1276
    %v1463 = vsub.f32 %v1148, %v1276
    %v1464 = vsub.f32 %v1149, %v1276
    %v1465 = vsub.f32 %v1150, %v1276
    %v1466 = vsub.f32 %v1151, %v1276
    %v1467 = vsub.f32 %v1152, %v1277
    %v1468 = vsub.f32 %v1153, %v1277
    %v1469 = vsub.f32 %v1154, %v1277
    %v1470 = vsub.f32 %v1155, %v1277
    %v1471 = vsub.f32 %v1156, %v1277
    %v1472 = vsub.f32 %v1157, %v1277
    %v1473 = vsub.f32 %v1158, %v1277
    %v1474 = vsub.f32 %v1159, %v1277
    %v1475 = vsub.f32 %v1160, %v1278
    %v1476 = vsub.f32 %v1161, %v1278
    %v1477 = vsub.f32 %v1162, %v1278
    %v1478 = vsub.f32 %v1163, %v1278
    %v1479 = vsub.f32 %v1164, %v1278
    %v1480 = vsub.f32 %v1165, %v1278
    %v1481 = vsub.f32 %v1166, %v1278
    %v1482 = vsub.f32 %v1167, %v1278
    %v1483 = vsub.f32 %v1168, %v1279
    %v1484 = vsub.f32 %v1169, %v1279
    %v1485 = vsub.f32 %v1170, %v1279
    %v1486 = vsub.f32 %v1171, %v1279
    %v1487 = vsub.f32 %v1172, %v1279
    %v1488 = vsub.f32 %v1173, %v1279
    %v1489 = vsub.f32 %v1174, %v1279
    %v1490 = vsub.f32 %v1175, %v1279
    %v1491 = vsub.f32 %v1176, %v1280
    %v1492 = vsub.f32 %v1177, %v1280
    %v1493 = vsub.f32 %v1178, %v1280
    %v1494 = vsub.f32 %v1179, %v1280
    %v1495 = vsub.f32 %v1180, %v1280
    %v1496 = vsub.f32 %v1181, %v1280
    %v1497 = vsub.f32 %v1182, %v1280
    %v1498 = vsub.f32 %v1183, %v1280
    %v1499 = vsub.f32 %v1184, %v1281
    %v1500 = vsub.f32 %v1185, %v1281
    %v1501 = vsub.f32 %v1186, %v1281
    %v1502 = vsub.f32 %v1187, %v1281
    %v1503 = vsub.f32 %v1188, %v1281
    %v1504 = vsub.f32 %v1189, %v1281
    %v1505 = vsub.f32 %v1190, %v1281
    %v1506 = vsub.f32 %v1191, %v1281
    %v1507 = vsub.f32 %v1192, %v1282
    %v1508 = vsub.f32 %v1193, %v1282
    %v1509 = vsub.f32 %v1194, %v1282
    %v1510 = vsub.f32 %v1195, %v1282
    %v1511 = vsub.f32 %v1196, %v1282
    %v1512 = vsub.f32 %v1197, %v1282
    %v1513 = vsub.f32 %v1198, %v1282
    %v1514 = vsub.f32 %v1199, %v1282
    %v1515 = vadd.f32 %v1443, 1e-12
    %v1516 = vadd.f32 %v1444, 1e-12
    %v1517 = vadd.f32 %v1445, 1e-12
    %v1518 = vadd.f32 %v1446, 1e-12
    %v1519 = vadd.f32 %v1447, 1e-12
    %v1520 = vadd.f32 %v1448, 1e-12
    %v1521 = vadd.f32 %v1449, 1e-12
    %v1522 = vadd.f32 %v1450, 1e-12
    %v1523 = vrsqrt.pop %v1515
    %v1524 = vrsqrt.pop %v1516
    %v1525 = vrsqrt.pop %v1517
    %v1526 = vrsqrt.pop %v1518
    %v1527 = vrsqrt.pop %v1519
    %v1528 = vrsqrt.pop %v1520
    %v1529 = vrsqrt.pop %v1521
    %v1530 = vrsqrt.pop %v1522
    %v1531 = vmul.f32 %v1451, %v1523
    %v1532 = vmul.f32 %v1452, %v1523
    %v1533 = vmul.f32 %v1453, %v1523
    %v1534 = vmul.f32 %v1454, %v1523
    %v1535 = vmul.f32 %v1455, %v1523
    %v1536 = vmul.f32 %v1456, %v1523
    %v1537 = vmul.f32 %v1457, %v1523
    %v1538 = vmul.f32 %v1458, %v1523
    %v1539 = vmul.f32 %v1459, %v1524
    %v1540 = vmul.f32 %v1460, %v1524
    %v1541 = vmul.f32 %v1461, %v1524
    %v1542 = vmul.f32 %v1462, %v1524
    %v1543 = vmul.f32 %v1463, %v1524
    %v1544 = vmul.f32 %v1464, %v1524
    %v1545 = vmul.f32 %v1465, %v1524
    %v1546 = vmul.f32 %v1466, %v1524
    %v1547 = vmul.f32 %v1467, %v1525
    %v1548 = vmul.f32 %v1468, %v1525
    %v1549 = vmul.f32 %v1469, %v1525
    %v1550 = vmul.f32 %v1470, %v1525
    %v1551 = vmul.f32 %v1471, %v1525
    %v1552 = vmul.f32 %v1472, %v1525
    %v1553 = vmul.f32 %v1473, %v1525
    %v1554 = vmul.f32 %v1474, %v1525
    %v1555 = vmul.f32 %v1475, %v1526
    %v1556 = vmul.f32 %v1476, %v1526
    %v1557 = vmul.f32 %v1477, %v1526
    %v1558 = vmul.f32 %v1478, %v1526
    %v1559 = vmul.f32 %v1479, %v1526
    %v1560 = vmul.f32 %v1480, %v1526
    %v1561 = vmul.f32 %v1481, %v1526
    %v1562 = vmul.f32 %v1482, %v1526
    %v1563 = vmul.f32 %v1483, %v1527
    %v1564 = vmul.f32 %v1484, %v1527
    %v1565 = vmul.f32 %v1485, %v1527
    %v1566 = vmul.f32 %v1486, %v1527
    %v1567 = vmul.f32 %v1487, %v1527
    %v1568 = vmul.f32 %v1488, %v1527
    %v1569 = vmul.f32 %v1489, %v1527
    %v1570 = vmul.f32 %v1490, %v1527
    %v1571 = vmul.f32 %v1491, %v1528
    %v1572 = vmul.f32 %v1492, %v1528
    %v1573 = vmul.f32 %v1493, %v1528
    %v1574 = vmul.f32 %v1494, %v1528
    %v1575 = vmul.f32 %v1495, %v1528
    %v1576 = vmul.f32 %v1496, %v1528
    %v1577 = vmul.f32 %v1497, %v1528
    %v1578 = vmul.f32 %v1498, %v1528
    %v1579 = vmul.f32 %v1499, %v1529
    %v1580 = vmul.f32 %v1500, %v1529
    %v1581 = vmul.f32 %v1501, %v1529
    %v1582 = vmul.f32 %v1502, %v1529
    %v1583 = vmul.f32 %v1503, %v1529
    %v1584 = vmul.f32 %v1504, %v1529
    %v1585 = vmul.f32 %v1505, %v1529
    %v1586 = vmul.f32 %v1506, %v1529
    %v1587 = vmul.f32 %v1507, %v1530
    %v1588 = vmul.f32 %v1508, %v1530
    %v1589 = vmul.f32 %v1509, %v1530
    %v1590 = vmul.f32 %v1510, %v1530
    %v1591 = vmul.f32 %v1511, %v1530
    %v1592 = vmul.f32 %v1512, %v1530
    %v1593 = vmul.f32 %v1513, %v1530
    %v1594 = vmul.f32 %v1514, %v1530
    %v1596 = vlaneseq
    %v1597 = vshrl.u32 %v1596, 7
    %v1598 = vsub.s32 0, %v1597
    %v1599 = vrot.slane %v1200, %v1598
    %v1600 = vlaneseq
    %v1601 = vshrl.u32 %v1600, 7
    %v1602 = vsub.s32 1, %v1601
    %v1603 = vrot.slane %v1200, %v1602
    %v1604 = vlaneseq
    %v1605 = vshrl.u32 %v1604, 7
    %v1606 = vsub.s32 2, %v1605
    %v1607 = vrot.slane %v1200, %v1606
    %v1608 = vlaneseq
    %v1609 = vshrl.u32 %v1608, 7
    %v1610 = vsub.s32 3, %v1609
    %v1611 = vrot.slane %v1200, %v1610
    %v1612 = vlaneseq
    %v1613 = vshrl.u32 %v1612, 7
    %v1614 = vsub.s32 4, %v1613
    %v1615 = vrot.slane %v1200, %v1614
    %v1616 = vlaneseq
    %v1617 = vshrl.u32 %v1616, 7
    %v1618 = vsub.s32 5, %v1617
    %v1619 = vrot.slane %v1200, %v1618
    %v1620 = vlaneseq
    %v1621 = vshrl.u32 %v1620, 7
    %v1622 = vsub.s32 6, %v1621
    %v1623 = vrot.slane %v1200, %v1622
    %v1624 = vlaneseq
    %v1625 = vshrl.u32 %v1624, 7
    %v1626 = vsub.s32 7, %v1625
    %v1627 = vrot.slane %v1200, %v1626
    %v1636 = vmul.f32 %v1531, %v1599
    %v1637 = vmul.f32 %v1532, %v1603
    %v1638 = vmul.f32 %v1533, %v1607
    %v1639 = vmul.f32 %v1534, %v1611
    %v1640 = vmul.f32 %v1535, %v1615
    %v1641 = vmul.f32 %v1536, %v1619
    %v1642 = vmul.f32 %v1537, %v1623
    %v1643 = vmul.f32 %v1538, %v1627
    %v1644 = vmul.f32 %v1539, %v1599
    %v1645 = vmul.f32 %v1540, %v1603
    %v1646 = vmul.f32 %v1541, %v1607
    %v1647 = vmul.f32 %v1542, %v1611
    %v1648 = vmul.f32 %v1543, %v1615
    %v1649 = vmul.f32 %v1544, %v1619
    %v1650 = vmul.f32 %v1545, %v1623
    %v1651 = vmul.f32 %v1546, %v1627
    %v1652 = vmul.f32 %v1547, %v1599
    %v1653 = vmul.f32 %v1548, %v1603
    %v1654 = vmul.f32 %v1549, %v1607
    %v1655 = vmul.f32 %v1550, %v1611
    %v1656 = vmul.f32 %v1551, %v1615
    %v1657 = vmul.f32 %v1552, %v1619
    %v1658 = vmul.f32 %v1553, %v1623
    %v1659 = vmul.f32 %v1554, %v1627
    %v1660 = vmul.f32 %v1555, %v1599
    %v1661 = vmul.f32 %v1556, %v1603
    %v1662 = vmul.f32 %v1557, %v1607
    %v1663 = vmul.f32 %v1558, %v1611
    %v1664 = vmul.f32 %v1559, %v1615
    %v1665 = vmul.f32 %v1560, %v1619
    %v1666 = vmul.f32 %v1561, %v1623
    %v1667 = vmul.f32 %v1562, %v1627
    %v1668 = vmul.f32 %v1563, %v1599
    %v1669 = vmul.f32 %v1564, %v1603
    %v1670 = vmul.f32 %v1565, %v1607
    %v1671 = vmul.f32 %v1566, %v1611
    %v1672 = vmul.f32 %v1567, %v1615
    %v1673 = vmul.f32 %v1568, %v1619
    %v1674 = vmul.f32 %v1569, %v1623
    %v1675 = vmul.f32 %v1570, %v1627
    %v1676 = vmul.f32 %v1571, %v1599
    %v1677 = vmul.f32 %v1572, %v1603
    %v1678 = vmul.f32 %v1573, %v1607
    %v1679 = vmul.f32 %v1574, %v1611
    %v1680 = vmul.f32 %v1575, %v1615
    %v1681 = vmul.f32 %v1576, %v1619
    %v1682 = vmul.f32 %v1577, %v1623
    %v1683 = vmul.f32 %v1578, %v1627
    %v1684 = vmul.f32 %v1579, %v1599
    %v1685 = vmul.f32 %v1580, %v1603
    %v1686 = vmul.f32 %v1581, %v1607
    %v1687 = vmul.f32 %v1582, %v1611
    %v1688 = vmul.f32 %v1583, %v1615
    %v1689 = vmul.f32 %v1584, %v1619
    %v1690 = vmul.f32 %v1585, %v1623
    %v1691 = vmul.f32 %v1586, %v1627
    %v1692 = vmul.f32 %v1587, %v1599
    %v1693 = vmul.f32 %v1588, %v1603
    %v1694 = vmul.f32 %v1589, %v1607
    %v1695 = vmul.f32 %v1590, %v1611
    %v1696 = vmul.f32 %v1591, %v1615
    %v1697 = vmul.f32 %v1592, %v1619
    %v1698 = vmul.f32 %v1593, %v1623
    %v1699 = vmul.f32 %v1594, %v1627
    %v1701 = vlaneseq
    %v1702 = vshrl.u32 %v1701, 7
    %v1703 = vsub.s32 0, %v1702
    %v1704 = vrot.slane %v1201, %v1703
    %v1705 = vlaneseq
    %v1706 = vshrl.u32 %v1705, 7
    %v1707 = vsub.s32 1, %v1706
    %v1708 = vrot.slane %v1201, %v1707
    %v1709 = vlaneseq
    %v1710 = vshrl.u32 %v1709, 7
    %v1711 = vsub.s32 2, %v1710
    %v1712 = vrot.slane %v1201, %v1711
    %v1713 = vlaneseq
    %v1714 = vshrl.u32 %v1713, 7
    %v1715 = vsub.s32 3, %v1714
    %v1716 = vrot.slane %v1201, %v1715
    %v1717 = vlaneseq
    %v1718 = vshrl.u32 %v1717, 7
    %v1719 = vsub.s32 4, %v1718
    %v1720 = vrot.slane %v1201, %v1719
    %v1721 = vlaneseq
    %v1722 = vshrl.u32 %v1721, 7
    %v1723 = vsub.s32 5, %v1722
    %v1724 = vrot.slane %v1201, %v1723
    %v1725 = vlaneseq
    %v1726 = vshrl.u32 %v1725, 7
    %v1727 = vsub.s32 6, %v1726
    %v1728 = vrot.slane %v1201, %v1727
    %v1729 = vlaneseq
    %v1730 = vshrl.u32 %v1729, 7
    %v1731 = vsub.s32 7, %v1730
    %v1732 = vrot.slane %v1201, %v1731
    %v1741 = vadd.f32 %v1636, %v1704
    %v1742 = vadd.f32 %v1637, %v1708
    %v1743 = vadd.f32 %v1638, %v1712
    %v1744 = vadd.f32 %v1639, %v1716
    %v1745 = vadd.f32 %v1640, %v1720
    %v1746 = vadd.f32 %v1641, %v1724
    %v1747 = vadd.f32 %v1642, %v1728
    %v1748 = vadd.f32 %v1643, %v1732
    %v1749 = vadd.f32 %v1644, %v1704
    %v1750 = vadd.f32 %v1645, %v1708
    %v1751 = vadd.f32 %v1646, %v1712
    %v1752 = vadd.f32 %v1647, %v1716
    %v1753 = vadd.f32 %v1648, %v1720
    %v1754 = vadd.f32 %v1649, %v1724
    %v1755 = vadd.f32 %v1650, %v1728
    %v1756 = vadd.f32 %v1651, %v1732
    %v1757 = vadd.f32 %v1652, %v1704
    %v1758 = vadd.f32 %v1653, %v1708
    %v1759 = vadd.f32 %v1654, %v1712
    %v1760 = vadd.f32 %v1655, %v1716
    %v1761 = vadd.f32 %v1656, %v1720
    %v1762 = vadd.f32 %v1657, %v1724
    %v1763 = vadd.f32 %v1658, %v1728
    %v1764 = vadd.f32 %v1659, %v1732
    %v1765 = vadd.f32 %v1660, %v1704
    %v1766 = vadd.f32 %v1661, %v1708
    %v1767 = vadd.f32 %v1662, %v1712
    %v1768 = vadd.f32 %v1663, %v1716
    %v1769 = vadd.f32 %v1664, %v1720
    %v1770 = vadd.f32 %v1665, %v1724
    %v1771 = vadd.f32 %v1666, %v1728
    %v1772 = vadd.f32 %v1667, %v1732
    %v1773 = vadd.f32 %v1668, %v1704
    %v1774 = vadd.f32 %v1669, %v1708
    %v1775 = vadd.f32 %v1670, %v1712
    %v1776 = vadd.f32 %v1671, %v1716
    %v1777 = vadd.f32 %v1672, %v1720
    %v1778 = vadd.f32 %v1673, %v1724
    %v1779 = vadd.f32 %v1674, %v1728
    %v1780 = vadd.f32 %v1675, %v1732
    %v1781 = vadd.f32 %v1676, %v1704
    %v1782 = vadd.f32 %v1677, %v1708
    %v1783 = vadd.f32 %v1678, %v1712
    %v1784 = vadd.f32 %v1679, %v1716
    %v1785 = vadd.f32 %v1680, %v1720
    %v1786 = vadd.f32 %v1681, %v1724
    %v1787 = vadd.f32 %v1682, %v1728
    %v1788 = vadd.f32 %v1683, %v1732
    %v1789 = vadd.f32 %v1684, %v1704
    %v1790 = vadd.f32 %v1685, %v1708
    %v1791 = vadd.f32 %v1686, %v1712
    %v1792 = vadd.f32 %v1687, %v1716
    %v1793 = vadd.f32 %v1688, %v1720
    %v1794 = vadd.f32 %v1689, %v1724
    %v1795 = vadd.f32 %v1690, %v1728
    %v1796 = vadd.f32 %v1691, %v1732
    %v1797 = vadd.f32 %v1692, %v1704
    %v1798 = vadd.f32 %v1693, %v1708
    %v1799 = vadd.f32 %v1694, %v1712
    %v1800 = vadd.f32 %v1695, %v1716
    %v1801 = vadd.f32 %v1696, %v1720
    %v1802 = vadd.f32 %v1697, %v1724
    %v1803 = vadd.f32 %v1698, %v1728
    %v1804 = vadd.f32 %v1699, %v1732
    %v1805 = vld [vmem:[#allocation7] sm:$0xff]
    %v1806 = vld [vmem:[#allocation7 + $0x8] sm:$0xff]
    %v1807 = vld [vmem:[#allocation7 + $0x10] sm:$0xff]
    %v1808 = vld [vmem:[#allocation7 + $0x18] sm:$0xff]
    %v1809 = vld [vmem:[#allocation7 + $0x40] sm:$0xff]
    %v1810 = vld [vmem:[#allocation7 + $0x48] sm:$0xff]
    %v1811 = vld [vmem:[#allocation7 + $0x50] sm:$0xff]
    %v1812 = vld [vmem:[#allocation7 + $0x58] sm:$0xff]
    %v1813 = vld [vmem:[#allocation7 + $0x80] sm:$0xff]
    %v1814 = vld [vmem:[#allocation7 + $0x88] sm:$0xff]
    %v1815 = vld [vmem:[#allocation7 + $0x90] sm:$0xff]
    %v1816 = vld [vmem:[#allocation7 + $0x98] sm:$0xff]
    %v1817 = vld [vmem:[#allocation7 + $0xc0] sm:$0xff]
    %v1818 = vld [vmem:[#allocation7 + $0xc8] sm:$0xff]
    %v1819 = vld [vmem:[#allocation7 + $0xd0] sm:$0xff]
    %v1820 = vld [vmem:[#allocation7 + $0xd8] sm:$0xff]
    %v1821 = vld [vmem:[#allocation7 + $0x100] sm:$0xff]
    %v1822 = vld [vmem:[#allocation7 + $0x108] sm:$0xff]
    %v1823 = vld [vmem:[#allocation7 + $0x110] sm:$0xff]
    %v1824 = vld [vmem:[#allocation7 + $0x118] sm:$0xff]
    %v1825 = vld [vmem:[#allocation7 + $0x140] sm:$0xff]
    %v1826 = vld [vmem:[#allocation7 + $0x148] sm:$0xff]
    %v1827 = vld [vmem:[#allocation7 + $0x150] sm:$0xff]
    %v1828 = vld [vmem:[#allocation7 + $0x158] sm:$0xff]
    %v1829 = vld [vmem:[#allocation7 + $0x180] sm:$0xff]
    %v1830 = vld [vmem:[#allocation7 + $0x188] sm:$0xff]
    %v1831 = vld [vmem:[#allocation7 + $0x190] sm:$0xff]
    %v1832 = vld [vmem:[#allocation7 + $0x198] sm:$0xff]
    %v1833 = vld [vmem:[#allocation7 + $0x1c0] sm:$0xff]
    %v1834 = vld [vmem:[#allocation7 + $0x1c8] sm:$0xff]
    %v1835 = vld [vmem:[#allocation7 + $0x1d0] sm:$0xff]
    %v1836 = vld [vmem:[#allocation7 + $0x1d8] sm:$0xff]
    %v1837 = vpack.c.bf16 %v1809, %v1805
    %v1838 = vpack.c.bf16 %v1810, %v1806
    %v1839 = vpack.c.bf16 %v1811, %v1807
    %v1840 = vpack.c.bf16 %v1812, %v1808
    %v1841 = vpack.c.bf16 %v1817, %v1813
    %v1842 = vpack.c.bf16 %v1818, %v1814
    %v1843 = vpack.c.bf16 %v1819, %v1815
    %v1844 = vpack.c.bf16 %v1820, %v1816
    %v1845 = vpack.c.bf16 %v1825, %v1821
    %v1846 = vpack.c.bf16 %v1826, %v1822
    %v1847 = vpack.c.bf16 %v1827, %v1823
    %v1848 = vpack.c.bf16 %v1828, %v1824
    %v1849 = vpack.c.bf16 %v1833, %v1829
    %v1850 = vpack.c.bf16 %v1834, %v1830
    %v1851 = vpack.c.bf16 %v1835, %v1831
    %v1852 = vpack.c.bf16 %v1836, %v1832
    %v1853 = vld [vmem:[#allocation7 + $0x20] sm:$0xff]
    %v1854 = vld [vmem:[#allocation7 + $0x28] sm:$0xff]
    %v1855 = vld [vmem:[#allocation7 + $0x30] sm:$0xff]
    %v1856 = vld [vmem:[#allocation7 + $0x38] sm:$0xff]
    %v1857 = vld [vmem:[#allocation7 + $0x60] sm:$0xff]
    %v1858 = vld [vmem:[#allocation7 + $0x68] sm:$0xff]
    %v1859 = vld [vmem:[#allocation7 + $0x70] sm:$0xff]
    %v1860 = vld [vmem:[#allocation7 + $0x78] sm:$0xff]
    %v1861 = vld [vmem:[#allocation7 + $0xa0] sm:$0xff]
    %v1862 = vld [vmem:[#allocation7 + $0xa8] sm:$0xff]
    %v1863 = vld [vmem:[#allocation7 + $0xb0] sm:$0xff]
    %v1864 = vld [vmem:[#allocation7 + $0xb8] sm:$0xff]
    %v1865 = vld [vmem:[#allocation7 + $0xe0] sm:$0xff]
    %v1866 = vld [vmem:[#allocation7 + $0xe8] sm:$0xff]
    %v1867 = vld [vmem:[#allocation7 + $0xf0] sm:$0xff]
    %v1868 = vld [vmem:[#allocation7 + $0xf8] sm:$0xff]
    %v1869 = vld [vmem:[#allocation7 + $0x120] sm:$0xff]
    %v1870 = vld [vmem:[#allocation7 + $0x128] sm:$0xff]
    %v1871 = vld [vmem:[#allocation7 + $0x130] sm:$0xff]
    %v1872 = vld [vmem:[#allocation7 + $0x138] sm:$0xff]
    %v1873 = vld [vmem:[#allocation7 + $0x160] sm:$0xff]
    %v1874 = vld [vmem:[#allocation7 + $0x168] sm:$0xff]
    %v1875 = vld [vmem:[#allocation7 + $0x170] sm:$0xff]
    %v1876 = vld [vmem:[#allocation7 + $0x178] sm:$0xff]
    %v1877 = vld [vmem:[#allocation7 + $0x1a0] sm:$0xff]
    %v1878 = vld [vmem:[#allocation7 + $0x1a8] sm:$0xff]
    %v1879 = vld [vmem:[#allocation7 + $0x1b0] sm:$0xff]
    %v1880 = vld [vmem:[#allocation7 + $0x1b8] sm:$0xff]
    %v1881 = vld [vmem:[#allocation7 + $0x1e0] sm:$0xff]
    %v1882 = vld [vmem:[#allocation7 + $0x1e8] sm:$0xff]
    %v1883 = vld [vmem:[#allocation7 + $0x1f0] sm:$0xff]
    %v1884 = vld [vmem:[#allocation7 + $0x1f8] sm:$0xff]
    %v1885 = vpack.c.bf16 %v1857, %v1853
    %v1886 = vpack.c.bf16 %v1858, %v1854
    %v1887 = vpack.c.bf16 %v1859, %v1855
    %v1888 = vpack.c.bf16 %v1860, %v1856
    %v1889 = vpack.c.bf16 %v1865, %v1861
    %v1890 = vpack.c.bf16 %v1866, %v1862
    %v1891 = vpack.c.bf16 %v1867, %v1863
    %v1892 = vpack.c.bf16 %v1868, %v1864
    %v1893 = vpack.c.bf16 %v1873, %v1869
    %v1894 = vpack.c.bf16 %v1874, %v1870
    %v1895 = vpack.c.bf16 %v1875, %v1871
    %v1896 = vpack.c.bf16 %v1876, %v1872
    %v1897 = vpack.c.bf16 %v1881, %v1877
    %v1898 = vpack.c.bf16 %v1882, %v1878
    %v1899 = vpack.c.bf16 %v1883, %v1879
    %v1900 = vpack.c.bf16 %v1884, %v1880
    %s1901 = smul.u32 4, 64
    %s1902 = smul.u32 %s1901, 8
    %s1903 = sshll.u32 %s1902, 4
    %1904 = dma.done [#allocation4], %s1903
    %v1905 = vld [vmem:[#allocation2] sm:$0xff]
    %v1906 = vld [vmem:[#allocation2 + $0x8] sm:$0xff]
    %v1907 = vld [vmem:[#allocation2 + $0x10] sm:$0xff]
    %v1908 = vld [vmem:[#allocation2 + $0x18] sm:$0xff]
    %v1909 = vld [vmem:[#allocation2 + $0x20] sm:$0xff]
    %v1910 = vld [vmem:[#allocation2 + $0x28] sm:$0xff]
    %v1911 = vld [vmem:[#allocation2 + $0x30] sm:$0xff]
    %v1912 = vld [vmem:[#allocation2 + $0x38] sm:$0xff]
    %v1913 = vld [vmem:[#allocation2 + $0x40] sm:$0xff]
    %v1914 = vld [vmem:[#allocation2 + $0x48] sm:$0xff]
    %v1915 = vld [vmem:[#allocation2 + $0x50] sm:$0xff]
    %v1916 = vld [vmem:[#allocation2 + $0x58] sm:$0xff]
    %v1917 = vld [vmem:[#allocation2 + $0x60] sm:$0xff]
    %v1918 = vld [vmem:[#allocation2 + $0x68] sm:$0xff]
    %v1919 = vld [vmem:[#allocation2 + $0x70] sm:$0xff]
    %v1920 = vld [vmem:[#allocation2 + $0x78] sm:$0xff]
    %v1921 = vld [vmem:[#allocation2 + $0x80] sm:$0xff]
    %v1922 = vld [vmem:[#allocation2 + $0x88] sm:$0xff]
    %v1923 = vld [vmem:[#allocation2 + $0x90] sm:$0xff]
    %v1924 = vld [vmem:[#allocation2 + $0x98] sm:$0xff]
    %v1925 = vld [vmem:[#allocation2 + $0xa0] sm:$0xff]
    %v1926 = vld [vmem:[#allocation2 + $0xa8] sm:$0xff]
    %v1927 = vld [vmem:[#allocation2 + $0xb0] sm:$0xff]
    %v1928 = vld [vmem:[#allocation2 + $0xb8] sm:$0xff]
    %v1929 = vld [vmem:[#allocation2 + $0xc0] sm:$0xff]
    %v1930 = vld [vmem:[#allocation2 + $0xc8] sm:$0xff]
    %v1931 = vld [vmem:[#allocation2 + $0xd0] sm:$0xff]
    %v1932 = vld [vmem:[#allocation2 + $0xd8] sm:$0xff]
    %v1933 = vld [vmem:[#allocation2 + $0xe0] sm:$0xff]
    %v1934 = vld [vmem:[#allocation2 + $0xe8] sm:$0xff]
    %v1935 = vld [vmem:[#allocation2 + $0xf0] sm:$0xff]
    %v1936 = vld [vmem:[#allocation2 + $0xf8] sm:$0xff]
    %v1937 = vld [vmem:[#allocation2 + $0x100] sm:$0xff]
    %v1938 = vld [vmem:[#allocation2 + $0x108] sm:$0xff]
    %v1939 = vld [vmem:[#allocation2 + $0x110] sm:$0xff]
    %v1940 = vld [vmem:[#allocation2 + $0x118] sm:$0xff]
    %v1941 = vld [vmem:[#allocation2 + $0x120] sm:$0xff]
    %v1942 = vld [vmem:[#allocation2 + $0x128] sm:$0xff]
    %v1943 = vld [vmem:[#allocation2 + $0x130] sm:$0xff]
    %v1944 = vld [vmem:[#allocation2 + $0x138] sm:$0xff]
    %v1945 = vld [vmem:[#allocation2 + $0x140] sm:$0xff]
    %v1946 = vld [vmem:[#allocation2 + $0x148] sm:$0xff]
    %v1947 = vld [vmem:[#allocation2 + $0x150] sm:$0xff]
    %v1948 = vld [vmem:[#allocation2 + $0x158] sm:$0xff]
    %v1949 = vld [vmem:[#allocation2 + $0x160] sm:$0xff]
    %v1950 = vld [vmem:[#allocation2 + $0x168] sm:$0xff]
    %v1951 = vld [vmem:[#allocation2 + $0x170] sm:$0xff]
    %v1952 = vld [vmem:[#allocation2 + $0x178] sm:$0xff]
    %v1953 = vld [vmem:[#allocation2 + $0x180] sm:$0xff]
    %v1954 = vld [vmem:[#allocation2 + $0x188] sm:$0xff]
    %v1955 = vld [vmem:[#allocation2 + $0x190] sm:$0xff]
    %v1956 = vld [vmem:[#allocation2 + $0x198] sm:$0xff]
    %v1957 = vld [vmem:[#allocation2 + $0x1a0] sm:$0xff]
    %v1958 = vld [vmem:[#allocation2 + $0x1a8] sm:$0xff]
    %v1959 = vld [vmem:[#allocation2 + $0x1b0] sm:$0xff]
    %v1960 = vld [vmem:[#allocation2 + $0x1b8] sm:$0xff]
    %v1961 = vld [vmem:[#allocation2 + $0x1c0] sm:$0xff]
    %v1962 = vld [vmem:[#allocation2 + $0x1c8] sm:$0xff]
    %v1963 = vld [vmem:[#allocation2 + $0x1d0] sm:$0xff]
    %v1964 = vld [vmem:[#allocation2 + $0x1d8] sm:$0xff]
    %v1965 = vld [vmem:[#allocation2 + $0x1e0] sm:$0xff]
    %v1966 = vld [vmem:[#allocation2 + $0x1e8] sm:$0xff]
    %v1967 = vld [vmem:[#allocation2 + $0x1f0] sm:$0xff]
    %v1968 = vld [vmem:[#allocation2 + $0x1f8] sm:$0xff]
    %v1969 = vld [vmem:[#allocation2 + $0x200] sm:$0xff]
    %v1970 = vld [vmem:[#allocation2 + $0x208] sm:$0xff]
    %v1971 = vld [vmem:[#allocation2 + $0x210] sm:$0xff]
    %v1972 = vld [vmem:[#allocation2 + $0x218] sm:$0xff]
    %v1973 = vld [vmem:[#allocation2 + $0x220] sm:$0xff]
    %v1974 = vld [vmem:[#allocation2 + $0x228] sm:$0xff]
    %v1975 = vld [vmem:[#allocation2 + $0x230] sm:$0xff]
    %v1976 = vld [vmem:[#allocation2 + $0x238] sm:$0xff]
    %v1977 = vld [vmem:[#allocation2 + $0x240] sm:$0xff]
    %v1978 = vld [vmem:[#allocation2 + $0x248] sm:$0xff]
    %v1979 = vld [vmem:[#allocation2 + $0x250] sm:$0xff]
    %v1980 = vld [vmem:[#allocation2 + $0x258] sm:$0xff]
    %v1981 = vld [vmem:[#allocation2 + $0x260] sm:$0xff]
    %v1982 = vld [vmem:[#allocation2 + $0x268] sm:$0xff]
    %v1983 = vld [vmem:[#allocation2 + $0x270] sm:$0xff]
    %v1984 = vld [vmem:[#allocation2 + $0x278] sm:$0xff]
    %v1985 = vld [vmem:[#allocation2 + $0x280] sm:$0xff]
    %v1986 = vld [vmem:[#allocation2 + $0x288] sm:$0xff]
    %v1987 = vld [vmem:[#allocation2 + $0x290] sm:$0xff]
    %v1988 = vld [vmem:[#allocation2 + $0x298] sm:$0xff]
    %v1989 = vld [vmem:[#allocation2 + $0x2a0] sm:$0xff]
    %v1990 = vld [vmem:[#allocation2 + $0x2a8] sm:$0xff]
    %v1991 = vld [vmem:[#allocation2 + $0x2b0] sm:$0xff]
    %v1992 = vld [vmem:[#allocation2 + $0x2b8] sm:$0xff]
    %v1993 = vld [vmem:[#allocation2 + $0x2c0] sm:$0xff]
    %v1994 = vld [vmem:[#allocation2 + $0x2c8] sm:$0xff]
    %v1995 = vld [vmem:[#allocation2 + $0x2d0] sm:$0xff]
    %v1996 = vld [vmem:[#allocation2 + $0x2d8] sm:$0xff]
    %v1997 = vld [vmem:[#allocation2 + $0x2e0] sm:$0xff]
    %v1998 = vld [vmem:[#allocation2 + $0x2e8] sm:$0xff]
    %v1999 = vld [vmem:[#allocation2 + $0x2f0] sm:$0xff]
    %v2000 = vld [vmem:[#allocation2 + $0x2f8] sm:$0xff]
    %v2001 = vld [vmem:[#allocation2 + $0x300] sm:$0xff]
    %v2002 = vld [vmem:[#allocation2 + $0x308] sm:$0xff]
    %v2003 = vld [vmem:[#allocation2 + $0x310] sm:$0xff]
    %v2004 = vld [vmem:[#allocation2 + $0x318] sm:$0xff]
    %v2005 = vld [vmem:[#allocation2 + $0x320] sm:$0xff]
    %v2006 = vld [vmem:[#allocation2 + $0x328] sm:$0xff]
    %v2007 = vld [vmem:[#allocation2 + $0x330] sm:$0xff]
    %v2008 = vld [vmem:[#allocation2 + $0x338] sm:$0xff]
    %v2009 = vld [vmem:[#allocation2 + $0x340] sm:$0xff]
    %v2010 = vld [vmem:[#allocation2 + $0x348] sm:$0xff]
    %v2011 = vld [vmem:[#allocation2 + $0x350] sm:$0xff]
    %v2012 = vld [vmem:[#allocation2 + $0x358] sm:$0xff]
    %v2013 = vld [vmem:[#allocation2 + $0x360] sm:$0xff]
    %v2014 = vld [vmem:[#allocation2 + $0x368] sm:$0xff]
    %v2015 = vld [vmem:[#allocation2 + $0x370] sm:$0xff]
    %v2016 = vld [vmem:[#allocation2 + $0x378] sm:$0xff]
    %v2017 = vld [vmem:[#allocation2 + $0x380] sm:$0xff]
    %v2018 = vld [vmem:[#allocation2 + $0x388] sm:$0xff]
    %v2019 = vld [vmem:[#allocation2 + $0x390] sm:$0xff]
    %v2020 = vld [vmem:[#allocation2 + $0x398] sm:$0xff]
    %v2021 = vld [vmem:[#allocation2 + $0x3a0] sm:$0xff]
    %v2022 = vld [vmem:[#allocation2 + $0x3a8] sm:$0xff]
    %v2023 = vld [vmem:[#allocation2 + $0x3b0] sm:$0xff]
    %v2024 = vld [vmem:[#allocation2 + $0x3b8] sm:$0xff]
    %v2025 = vld [vmem:[#allocation2 + $0x3c0] sm:$0xff]
    %v2026 = vld [vmem:[#allocation2 + $0x3c8] sm:$0xff]
    %v2027 = vld [vmem:[#allocation2 + $0x3d0] sm:$0xff]
    %v2028 = vld [vmem:[#allocation2 + $0x3d8] sm:$0xff]
    %v2029 = vld [vmem:[#allocation2 + $0x3e0] sm:$0xff]
    %v2030 = vld [vmem:[#allocation2 + $0x3e8] sm:$0xff]
    %v2031 = vld [vmem:[#allocation2 + $0x3f0] sm:$0xff]
    %v2032 = vld [vmem:[#allocation2 + $0x3f8] sm:$0xff]
    %v2033 = vld [vmem:[#allocation2 + $0x400] sm:$0xff]
    %v2034 = vld [vmem:[#allocation2 + $0x408] sm:$0xff]
    %v2035 = vld [vmem:[#allocation2 + $0x410] sm:$0xff]
    %v2036 = vld [vmem:[#allocation2 + $0x418] sm:$0xff]
    %v2037 = vld [vmem:[#allocation2 + $0x420] sm:$0xff]
    %v2038 = vld [vmem:[#allocation2 + $0x428] sm:$0xff]
    %v2039 = vld [vmem:[#allocation2 + $0x430] sm:$0xff]
    %v2040 = vld [vmem:[#allocation2 + $0x438] sm:$0xff]
    %v2041 = vld [vmem:[#allocation2 + $0x440] sm:$0xff]
    %v2042 = vld [vmem:[#allocation2 + $0x448] sm:$0xff]
    %v2043 = vld [vmem:[#allocation2 + $0x450] sm:$0xff]
    %v2044 = vld [vmem:[#allocation2 + $0x458] sm:$0xff]
    %v2045 = vld [vmem:[#allocation2 + $0x460] sm:$0xff]
    %v2046 = vld [vmem:[#allocation2 + $0x468] sm:$0xff]
    %v2047 = vld [vmem:[#allocation2 + $0x470] sm:$0xff]
    %v2048 = vld [vmem:[#allocation2 + $0x478] sm:$0xff]
    %v2049 = vld [vmem:[#allocation2 + $0x480] sm:$0xff]
    %v2050 = vld [vmem:[#allocation2 + $0x488] sm:$0xff]
    %v2051 = vld [vmem:[#allocation2 + $0x490] sm:$0xff]
    %v2052 = vld [vmem:[#allocation2 + $0x498] sm:$0xff]
    %v2053 = vld [vmem:[#allocation2 + $0x4a0] sm:$0xff]
    %v2054 = vld [vmem:[#allocation2 + $0x4a8] sm:$0xff]
    %v2055 = vld [vmem:[#allocation2 + $0x4b0] sm:$0xff]
    %v2056 = vld [vmem:[#allocation2 + $0x4b8] sm:$0xff]
    %v2057 = vld [vmem:[#allocation2 + $0x4c0] sm:$0xff]
    %v2058 = vld [vmem:[#allocation2 + $0x4c8] sm:$0xff]
    %v2059 = vld [vmem:[#allocation2 + $0x4d0] sm:$0xff]
    %v2060 = vld [vmem:[#allocation2 + $0x4d8] sm:$0xff]
    %v2061 = vld [vmem:[#allocation2 + $0x4e0] sm:$0xff]
    %v2062 = vld [vmem:[#allocation2 + $0x4e8] sm:$0xff]
    %v2063 = vld [vmem:[#allocation2 + $0x4f0] sm:$0xff]
    %v2064 = vld [vmem:[#allocation2 + $0x4f8] sm:$0xff]
    %v2065 = vld [vmem:[#allocation2 + $0x500] sm:$0xff]
    %v2066 = vld [vmem:[#allocation2 + $0x508] sm:$0xff]
    %v2067 = vld [vmem:[#allocation2 + $0x510] sm:$0xff]
    %v2068 = vld [vmem:[#allocation2 + $0x518] sm:$0xff]
    %v2069 = vld [vmem:[#allocation2 + $0x520] sm:$0xff]
    %v2070 = vld [vmem:[#allocation2 + $0x528] sm:$0xff]
    %v2071 = vld [vmem:[#allocation2 + $0x530] sm:$0xff]
    %v2072 = vld [vmem:[#allocation2 + $0x538] sm:$0xff]
    %v2073 = vld [vmem:[#allocation2 + $0x540] sm:$0xff]
    %v2074 = vld [vmem:[#allocation2 + $0x548] sm:$0xff]
    %v2075 = vld [vmem:[#allocation2 + $0x550] sm:$0xff]
    %v2076 = vld [vmem:[#allocation2 + $0x558] sm:$0xff]
    %v2077 = vld [vmem:[#allocation2 + $0x560] sm:$0xff]
    %v2078 = vld [vmem:[#allocation2 + $0x568] sm:$0xff]
    %v2079 = vld [vmem:[#allocation2 + $0x570] sm:$0xff]
    %v2080 = vld [vmem:[#allocation2 + $0x578] sm:$0xff]
    %v2081 = vld [vmem:[#allocation2 + $0x580] sm:$0xff]
    %v2082 = vld [vmem:[#allocation2 + $0x588] sm:$0xff]
    %v2083 = vld [vmem:[#allocation2 + $0x590] sm:$0xff]
    %v2084 = vld [vmem:[#allocation2 + $0x598] sm:$0xff]
    %v2085 = vld [vmem:[#allocation2 + $0x5a0] sm:$0xff]
    %v2086 = vld [vmem:[#allocation2 + $0x5a8] sm:$0xff]
    %v2087 = vld [vmem:[#allocation2 + $0x5b0] sm:$0xff]
    %v2088 = vld [vmem:[#allocation2 + $0x5b8] sm:$0xff]
    %v2089 = vld [vmem:[#allocation2 + $0x5c0] sm:$0xff]
    %v2090 = vld [vmem:[#allocation2 + $0x5c8] sm:$0xff]
    %v2091 = vld [vmem:[#allocation2 + $0x5d0] sm:$0xff]
    %v2092 = vld [vmem:[#allocation2 + $0x5d8] sm:$0xff]
    %v2093 = vld [vmem:[#allocation2 + $0x5e0] sm:$0xff]
    %v2094 = vld [vmem:[#allocation2 + $0x5e8] sm:$0xff]
    %v2095 = vld [vmem:[#allocation2 + $0x5f0] sm:$0xff]
    %v2096 = vld [vmem:[#allocation2 + $0x5f8] sm:$0xff]
    %v2097 = vld [vmem:[#allocation2 + $0x600] sm:$0xff]
    %v2098 = vld [vmem:[#allocation2 + $0x608] sm:$0xff]
    %v2099 = vld [vmem:[#allocation2 + $0x610] sm:$0xff]
    %v2100 = vld [vmem:[#allocation2 + $0x618] sm:$0xff]
    %v2101 = vld [vmem:[#allocation2 + $0x620] sm:$0xff]
    %v2102 = vld [vmem:[#allocation2 + $0x628] sm:$0xff]
    %v2103 = vld [vmem:[#allocation2 + $0x630] sm:$0xff]
    %v2104 = vld [vmem:[#allocation2 + $0x638] sm:$0xff]
    %v2105 = vld [vmem:[#allocation2 + $0x640] sm:$0xff]
    %v2106 = vld [vmem:[#allocation2 + $0x648] sm:$0xff]
    %v2107 = vld [vmem:[#allocation2 + $0x650] sm:$0xff]
    %v2108 = vld [vmem:[#allocation2 + $0x658] sm:$0xff]
    %v2109 = vld [vmem:[#allocation2 + $0x660] sm:$0xff]
    %v2110 = vld [vmem:[#allocation2 + $0x668] sm:$0xff]
    %v2111 = vld [vmem:[#allocation2 + $0x670] sm:$0xff]
    %v2112 = vld [vmem:[#allocation2 + $0x678] sm:$0xff]
    %v2113 = vld [vmem:[#allocation2 + $0x680] sm:$0xff]
    %v2114 = vld [vmem:[#allocation2 + $0x688] sm:$0xff]
    %v2115 = vld [vmem:[#allocation2 + $0x690] sm:$0xff]
    %v2116 = vld [vmem:[#allocation2 + $0x698] sm:$0xff]
    %v2117 = vld [vmem:[#allocation2 + $0x6a0] sm:$0xff]
    %v2118 = vld [vmem:[#allocation2 + $0x6a8] sm:$0xff]
    %v2119 = vld [vmem:[#allocation2 + $0x6b0] sm:$0xff]
    %v2120 = vld [vmem:[#allocation2 + $0x6b8] sm:$0xff]
    %v2121 = vld [vmem:[#allocation2 + $0x6c0] sm:$0xff]
    %v2122 = vld [vmem:[#allocation2 + $0x6c8] sm:$0xff]
    %v2123 = vld [vmem:[#allocation2 + $0x6d0] sm:$0xff]
    %v2124 = vld [vmem:[#allocation2 + $0x6d8] sm:$0xff]
    %v2125 = vld [vmem:[#allocation2 + $0x6e0] sm:$0xff]
    %v2126 = vld [vmem:[#allocation2 + $0x6e8] sm:$0xff]
    %v2127 = vld [vmem:[#allocation2 + $0x6f0] sm:$0xff]
    %v2128 = vld [vmem:[#allocation2 + $0x6f8] sm:$0xff]
    %v2129 = vld [vmem:[#allocation2 + $0x700] sm:$0xff]
    %v2130 = vld [vmem:[#allocation2 + $0x708] sm:$0xff]
    %v2131 = vld [vmem:[#allocation2 + $0x710] sm:$0xff]
    %v2132 = vld [vmem:[#allocation2 + $0x718] sm:$0xff]
    %v2133 = vld [vmem:[#allocation2 + $0x720] sm:$0xff]
    %v2134 = vld [vmem:[#allocation2 + $0x728] sm:$0xff]
    %v2135 = vld [vmem:[#allocation2 + $0x730] sm:$0xff]
    %v2136 = vld [vmem:[#allocation2 + $0x738] sm:$0xff]
    %v2137 = vld [vmem:[#allocation2 + $0x740] sm:$0xff]
    %v2138 = vld [vmem:[#allocation2 + $0x748] sm:$0xff]
    %v2139 = vld [vmem:[#allocation2 + $0x750] sm:$0xff]
    %v2140 = vld [vmem:[#allocation2 + $0x758] sm:$0xff]
    %v2141 = vld [vmem:[#allocation2 + $0x760] sm:$0xff]
    %v2142 = vld [vmem:[#allocation2 + $0x768] sm:$0xff]
    %v2143 = vld [vmem:[#allocation2 + $0x770] sm:$0xff]
    %v2144 = vld [vmem:[#allocation2 + $0x778] sm:$0xff]
    %v2145 = vld [vmem:[#allocation2 + $0x780] sm:$0xff]
    %v2146 = vld [vmem:[#allocation2 + $0x788] sm:$0xff]
    %v2147 = vld [vmem:[#allocation2 + $0x790] sm:$0xff]
    %v2148 = vld [vmem:[#allocation2 + $0x798] sm:$0xff]
    %v2149 = vld [vmem:[#allocation2 + $0x7a0] sm:$0xff]
    %v2150 = vld [vmem:[#allocation2 + $0x7a8] sm:$0xff]
    %v2151 = vld [vmem:[#allocation2 + $0x7b0] sm:$0xff]
    %v2152 = vld [vmem:[#allocation2 + $0x7b8] sm:$0xff]
    %v2153 = vld [vmem:[#allocation2 + $0x7c0] sm:$0xff]
    %v2154 = vld [vmem:[#allocation2 + $0x7c8] sm:$0xff]
    %v2155 = vld [vmem:[#allocation2 + $0x7d0] sm:$0xff]
    %v2156 = vld [vmem:[#allocation2 + $0x7d8] sm:$0xff]
    %v2157 = vld [vmem:[#allocation2 + $0x7e0] sm:$0xff]
    %v2158 = vld [vmem:[#allocation2 + $0x7e8] sm:$0xff]
    %v2159 = vld [vmem:[#allocation2 + $0x7f0] sm:$0xff]
    %v2160 = vld [vmem:[#allocation2 + $0x7f8] sm:$0xff]
    %s2161 = smul.u32 4, 61
    %s2162 = smul.u32 %s2161, 8
    %s2163 = sshll.u32 %s2162, 4
    %2164 = dma.done %s194, %s2163
    %v2165 = vld [vmem:[#allocation3] sm:$0xff]
    %v2166 = vld [vmem:[#allocation3 + $0x8] sm:$0xff]
    %v2167 = vld [vmem:[#allocation3 + $0x10] sm:$0xff]
    %v2168 = vld [vmem:[#allocation3 + $0x18] sm:$0xff]
    %v2169 = vld [vmem:[#allocation3 + $0x20] sm:$0xff]
    %v2170 = vld [vmem:[#allocation3 + $0x28] sm:$0xff]
    %v2171 = vld [vmem:[#allocation3 + $0x30] sm:$0xff]
    %v2172 = vld [vmem:[#allocation3 + $0x38] sm:$0xff]
    %v2173 = vld [vmem:[#allocation3 + $0x40] sm:$0xff]
    %v2174 = vld [vmem:[#allocation3 + $0x48] sm:$0xff]
    %v2175 = vld [vmem:[#allocation3 + $0x50] sm:$0xff]
    %v2176 = vld [vmem:[#allocation3 + $0x58] sm:$0xff]
    %v2177 = vld [vmem:[#allocation3 + $0x60] sm:$0xff]
    %v2178 = vld [vmem:[#allocation3 + $0x68] sm:$0xff]
    %v2179 = vld [vmem:[#allocation3 + $0x70] sm:$0xff]
    %v2180 = vld [vmem:[#allocation3 + $0x78] sm:$0xff]
    %v2181 = vld [vmem:[#allocation3 + $0x80] sm:$0xff]
    %v2182 = vld [vmem:[#allocation3 + $0x88] sm:$0xff]
    %v2183 = vld [vmem:[#allocation3 + $0x90] sm:$0xff]
    %v2184 = vld [vmem:[#allocation3 + $0x98] sm:$0xff]
    %v2185 = vld [vmem:[#allocation3 + $0xa0] sm:$0xff]
    %v2186 = vld [vmem:[#allocation3 + $0xa8] sm:$0xff]
    %v2187 = vld [vmem:[#allocation3 + $0xb0] sm:$0xff]
    %v2188 = vld [vmem:[#allocation3 + $0xb8] sm:$0xff]
    %v2189 = vld [vmem:[#allocation3 + $0xc0] sm:$0xff]
    %v2190 = vld [vmem:[#allocation3 + $0xc8] sm:$0xff]
    %v2191 = vld [vmem:[#allocation3 + $0xd0] sm:$0xff]
    %v2192 = vld [vmem:[#allocation3 + $0xd8] sm:$0xff]
    %v2193 = vld [vmem:[#allocation3 + $0xe0] sm:$0xff]
    %v2194 = vld [vmem:[#allocation3 + $0xe8] sm:$0xff]
    %v2195 = vld [vmem:[#allocation3 + $0xf0] sm:$0xff]
    %v2196 = vld [vmem:[#allocation3 + $0xf8] sm:$0xff]
    %v2197 = vld [vmem:[#allocation3 + $0x100] sm:$0xff]
    %v2198 = vld [vmem:[#allocation3 + $0x108] sm:$0xff]
    %v2199 = vld [vmem:[#allocation3 + $0x110] sm:$0xff]
    %v2200 = vld [vmem:[#allocation3 + $0x118] sm:$0xff]
    %v2201 = vld [vmem:[#allocation3 + $0x120] sm:$0xff]
    %v2202 = vld [vmem:[#allocation3 + $0x128] sm:$0xff]
    %v2203 = vld [vmem:[#allocation3 + $0x130] sm:$0xff]
    %v2204 = vld [vmem:[#allocation3 + $0x138] sm:$0xff]
    %v2205 = vld [vmem:[#allocation3 + $0x140] sm:$0xff]
    %v2206 = vld [vmem:[#allocation3 + $0x148] sm:$0xff]
    %v2207 = vld [vmem:[#allocation3 + $0x150] sm:$0xff]
    %v2208 = vld [vmem:[#allocation3 + $0x158] sm:$0xff]
    %v2209 = vld [vmem:[#allocation3 + $0x160] sm:$0xff]
    %v2210 = vld [vmem:[#allocation3 + $0x168] sm:$0xff]
    %v2211 = vld [vmem:[#allocation3 + $0x170] sm:$0xff]
    %v2212 = vld [vmem:[#allocation3 + $0x178] sm:$0xff]
    %v2213 = vld [vmem:[#allocation3 + $0x180] sm:$0xff]
    %v2214 = vld [vmem:[#allocation3 + $0x188] sm:$0xff]
    %v2215 = vld [vmem:[#allocation3 + $0x190] sm:$0xff]
    %v2216 = vld [vmem:[#allocation3 + $0x198] sm:$0xff]
    %v2217 = vld [vmem:[#allocation3 + $0x1a0] sm:$0xff]
    %v2218 = vld [vmem:[#allocation3 + $0x1a8] sm:$0xff]
    %v2219 = vld [vmem:[#allocation3 + $0x1b0] sm:$0xff]
    %v2220 = vld [vmem:[#allocation3 + $0x1b8] sm:$0xff]
    %v2221 = vld [vmem:[#allocation3 + $0x1c0] sm:$0xff]
    %v2222 = vld [vmem:[#allocation3 + $0x1c8] sm:$0xff]
    %v2223 = vld [vmem:[#allocation3 + $0x1d0] sm:$0xff]
    %v2224 = vld [vmem:[#allocation3 + $0x1d8] sm:$0xff]
    %v2225 = vld [vmem:[#allocation3 + $0x1e0] sm:$0xff]
    %v2226 = vld [vmem:[#allocation3 + $0x1e8] sm:$0xff]
    %v2227 = vld [vmem:[#allocation3 + $0x1f0] sm:$0xff]
    %v2228 = vld [vmem:[#allocation3 + $0x1f8] sm:$0xff]
    %v2229 = vld [vmem:[#allocation3 + $0x200] sm:$0xff]
    %v2230 = vld [vmem:[#allocation3 + $0x208] sm:$0xff]
    %v2231 = vld [vmem:[#allocation3 + $0x210] sm:$0xff]
    %v2232 = vld [vmem:[#allocation3 + $0x218] sm:$0xff]
    %v2233 = vld [vmem:[#allocation3 + $0x220] sm:$0xff]
    %v2234 = vld [vmem:[#allocation3 + $0x228] sm:$0xff]
    %v2235 = vld [vmem:[#allocation3 + $0x230] sm:$0xff]
    %v2236 = vld [vmem:[#allocation3 + $0x238] sm:$0xff]
    %v2237 = vld [vmem:[#allocation3 + $0x240] sm:$0xff]
    %v2238 = vld [vmem:[#allocation3 + $0x248] sm:$0xff]
    %v2239 = vld [vmem:[#allocation3 + $0x250] sm:$0xff]
    %v2240 = vld [vmem:[#allocation3 + $0x258] sm:$0xff]
    %v2241 = vld [vmem:[#allocation3 + $0x260] sm:$0xff]
    %v2242 = vld [vmem:[#allocation3 + $0x268] sm:$0xff]
    %v2243 = vld [vmem:[#allocation3 + $0x270] sm:$0xff]
    %v2244 = vld [vmem:[#allocation3 + $0x278] sm:$0xff]
    %v2245 = vld [vmem:[#allocation3 + $0x280] sm:$0xff]
    %v2246 = vld [vmem:[#allocation3 + $0x288] sm:$0xff]
    %v2247 = vld [vmem:[#allocation3 + $0x290] sm:$0xff]
    %v2248 = vld [vmem:[#allocation3 + $0x298] sm:$0xff]
    %v2249 = vld [vmem:[#allocation3 + $0x2a0] sm:$0xff]
    %v2250 = vld [vmem:[#allocation3 + $0x2a8] sm:$0xff]
    %v2251 = vld [vmem:[#allocation3 + $0x2b0] sm:$0xff]
    %v2252 = vld [vmem:[#allocation3 + $0x2b8] sm:$0xff]
    %v2253 = vld [vmem:[#allocation3 + $0x2c0] sm:$0xff]
    %v2254 = vld [vmem:[#allocation3 + $0x2c8] sm:$0xff]
    %v2255 = vld [vmem:[#allocation3 + $0x2d0] sm:$0xff]
    %v2256 = vld [vmem:[#allocation3 + $0x2d8] sm:$0xff]
    %v2257 = vld [vmem:[#allocation3 + $0x2e0] sm:$0xff]
    %v2258 = vld [vmem:[#allocation3 + $0x2e8] sm:$0xff]
    %v2259 = vld [vmem:[#allocation3 + $0x2f0] sm:$0xff]
    %v2260 = vld [vmem:[#allocation3 + $0x2f8] sm:$0xff]
    %v2261 = vld [vmem:[#allocation3 + $0x300] sm:$0xff]
    %v2262 = vld [vmem:[#allocation3 + $0x308] sm:$0xff]
    %v2263 = vld [vmem:[#allocation3 + $0x310] sm:$0xff]
    %v2264 = vld [vmem:[#allocation3 + $0x318] sm:$0xff]
    %v2265 = vld [vmem:[#allocation3 + $0x320] sm:$0xff]
    %v2266 = vld [vmem:[#allocation3 + $0x328] sm:$0xff]
    %v2267 = vld [vmem:[#allocation3 + $0x330] sm:$0xff]
    %v2268 = vld [vmem:[#allocation3 + $0x338] sm:$0xff]
    %v2269 = vld [vmem:[#allocation3 + $0x340] sm:$0xff]
    %v2270 = vld [vmem:[#allocation3 + $0x348] sm:$0xff]
    %v2271 = vld [vmem:[#allocation3 + $0x350] sm:$0xff]
    %v2272 = vld [vmem:[#allocation3 + $0x358] sm:$0xff]
    %v2273 = vld [vmem:[#allocation3 + $0x360] sm:$0xff]
    %v2274 = vld [vmem:[#allocation3 + $0x368] sm:$0xff]
    %v2275 = vld [vmem:[#allocation3 + $0x370] sm:$0xff]
    %v2276 = vld [vmem:[#allocation3 + $0x378] sm:$0xff]
    %v2277 = vld [vmem:[#allocation3 + $0x380] sm:$0xff]
    %v2278 = vld [vmem:[#allocation3 + $0x388] sm:$0xff]
    %v2279 = vld [vmem:[#allocation3 + $0x390] sm:$0xff]
    %v2280 = vld [vmem:[#allocation3 + $0x398] sm:$0xff]
    %v2281 = vld [vmem:[#allocation3 + $0x3a0] sm:$0xff]
    %v2282 = vld [vmem:[#allocation3 + $0x3a8] sm:$0xff]
    %v2283 = vld [vmem:[#allocation3 + $0x3b0] sm:$0xff]
    %v2284 = vld [vmem:[#allocation3 + $0x3b8] sm:$0xff]
    %v2285 = vld [vmem:[#allocation3 + $0x3c0] sm:$0xff]
    %v2286 = vld [vmem:[#allocation3 + $0x3c8] sm:$0xff]
    %v2287 = vld [vmem:[#allocation3 + $0x3d0] sm:$0xff]
    %v2288 = vld [vmem:[#allocation3 + $0x3d8] sm:$0xff]
    %v2289 = vld [vmem:[#allocation3 + $0x3e0] sm:$0xff]
    %v2290 = vld [vmem:[#allocation3 + $0x3e8] sm:$0xff]
    %v2291 = vld [vmem:[#allocation3 + $0x3f0] sm:$0xff]
    %v2292 = vld [vmem:[#allocation3 + $0x3f8] sm:$0xff]
    %v2293 = vld [vmem:[#allocation3 + $0x400] sm:$0xff]
    %v2294 = vld [vmem:[#allocation3 + $0x408] sm:$0xff]
    %v2295 = vld [vmem:[#allocation3 + $0x410] sm:$0xff]
    %v2296 = vld [vmem:[#allocation3 + $0x418] sm:$0xff]
    %v2297 = vld [vmem:[#allocation3 + $0x420] sm:$0xff]
    %v2298 = vld [vmem:[#allocation3 + $0x428] sm:$0xff]
    %v2299 = vld [vmem:[#allocation3 + $0x430] sm:$0xff]
    %v2300 = vld [vmem:[#allocation3 + $0x438] sm:$0xff]
    %v2301 = vld [vmem:[#allocation3 + $0x440] sm:$0xff]
    %v2302 = vld [vmem:[#allocation3 + $0x448] sm:$0xff]
    %v2303 = vld [vmem:[#allocation3 + $0x450] sm:$0xff]
    %v2304 = vld [vmem:[#allocation3 + $0x458] sm:$0xff]
    %v2305 = vld [vmem:[#allocation3 + $0x460] sm:$0xff]
    %v2306 = vld [vmem:[#allocation3 + $0x468] sm:$0xff]
    %v2307 = vld [vmem:[#allocation3 + $0x470] sm:$0xff]
    %v2308 = vld [vmem:[#allocation3 + $0x478] sm:$0xff]
    %v2309 = vld [vmem:[#allocation3 + $0x480] sm:$0xff]
    %v2310 = vld [vmem:[#allocation3 + $0x488] sm:$0xff]
    %v2311 = vld [vmem:[#allocation3 + $0x490] sm:$0xff]
    %v2312 = vld [vmem:[#allocation3 + $0x498] sm:$0xff]
    %v2313 = vld [vmem:[#allocation3 + $0x4a0] sm:$0xff]
    %v2314 = vld [vmem:[#allocation3 + $0x4a8] sm:$0xff]
    %v2315 = vld [vmem:[#allocation3 + $0x4b0] sm:$0xff]
    %v2316 = vld [vmem:[#allocation3 + $0x4b8] sm:$0xff]
    %v2317 = vld [vmem:[#allocation3 + $0x4c0] sm:$0xff]
    %v2318 = vld [vmem:[#allocation3 + $0x4c8] sm:$0xff]
    %v2319 = vld [vmem:[#allocation3 + $0x4d0] sm:$0xff]
    %v2320 = vld [vmem:[#allocation3 + $0x4d8] sm:$0xff]
    %v2321 = vld [vmem:[#allocation3 + $0x4e0] sm:$0xff]
    %v2322 = vld [vmem:[#allocation3 + $0x4e8] sm:$0xff]
    %v2323 = vld [vmem:[#allocation3 + $0x4f0] sm:$0xff]
    %v2324 = vld [vmem:[#allocation3 + $0x4f8] sm:$0xff]
    %v2325 = vld [vmem:[#allocation3 + $0x500] sm:$0xff]
    %v2326 = vld [vmem:[#allocation3 + $0x508] sm:$0xff]
    %v2327 = vld [vmem:[#allocation3 + $0x510] sm:$0xff]
    %v2328 = vld [vmem:[#allocation3 + $0x518] sm:$0xff]
    %v2329 = vld [vmem:[#allocation3 + $0x520] sm:$0xff]
    %v2330 = vld [vmem:[#allocation3 + $0x528] sm:$0xff]
    %v2331 = vld [vmem:[#allocation3 + $0x530] sm:$0xff]
    %v2332 = vld [vmem:[#allocation3 + $0x538] sm:$0xff]
    %v2333 = vld [vmem:[#allocation3 + $0x540] sm:$0xff]
    %v2334 = vld [vmem:[#allocation3 + $0x548] sm:$0xff]
    %v2335 = vld [vmem:[#allocation3 + $0x550] sm:$0xff]
    %v2336 = vld [vmem:[#allocation3 + $0x558] sm:$0xff]
    %v2337 = vld [vmem:[#allocation3 + $0x560] sm:$0xff]
    %v2338 = vld [vmem:[#allocation3 + $0x568] sm:$0xff]
    %v2339 = vld [vmem:[#allocation3 + $0x570] sm:$0xff]
    %v2340 = vld [vmem:[#allocation3 + $0x578] sm:$0xff]
    %v2341 = vld [vmem:[#allocation3 + $0x580] sm:$0xff]
    %v2342 = vld [vmem:[#allocation3 + $0x588] sm:$0xff]
    %v2343 = vld [vmem:[#allocation3 + $0x590] sm:$0xff]
    %v2344 = vld [vmem:[#allocation3 + $0x598] sm:$0xff]
    %v2345 = vld [vmem:[#allocation3 + $0x5a0] sm:$0xff]
    %v2346 = vld [vmem:[#allocation3 + $0x5a8] sm:$0xff]
    %v2347 = vld [vmem:[#allocation3 + $0x5b0] sm:$0xff]
    %v2348 = vld [vmem:[#allocation3 + $0x5b8] sm:$0xff]
    %v2349 = vld [vmem:[#allocation3 + $0x5c0] sm:$0xff]
    %v2350 = vld [vmem:[#allocation3 + $0x5c8] sm:$0xff]
    %v2351 = vld [vmem:[#allocation3 + $0x5d0] sm:$0xff]
    %v2352 = vld [vmem:[#allocation3 + $0x5d8] sm:$0xff]
    %v2353 = vld [vmem:[#allocation3 + $0x5e0] sm:$0xff]
    %v2354 = vld [vmem:[#allocation3 + $0x5e8] sm:$0xff]
    %v2355 = vld [vmem:[#allocation3 + $0x5f0] sm:$0xff]
    %v2356 = vld [vmem:[#allocation3 + $0x5f8] sm:$0xff]
    %v2357 = vld [vmem:[#allocation3 + $0x600] sm:$0xff]
    %v2358 = vld [vmem:[#allocation3 + $0x608] sm:$0xff]
    %v2359 = vld [vmem:[#allocation3 + $0x610] sm:$0xff]
    %v2360 = vld [vmem:[#allocation3 + $0x618] sm:$0xff]
    %v2361 = vld [vmem:[#allocation3 + $0x620] sm:$0xff]
    %v2362 = vld [vmem:[#allocation3 + $0x628] sm:$0xff]
    %v2363 = vld [vmem:[#allocation3 + $0x630] sm:$0xff]
    %v2364 = vld [vmem:[#allocation3 + $0x638] sm:$0xff]
    %v2365 = vld [vmem:[#allocation3 + $0x640] sm:$0xff]
    %v2366 = vld [vmem:[#allocation3 + $0x648] sm:$0xff]
    %v2367 = vld [vmem:[#allocation3 + $0x650] sm:$0xff]
    %v2368 = vld [vmem:[#allocation3 + $0x658] sm:$0xff]
    %v2369 = vld [vmem:[#allocation3 + $0x660] sm:$0xff]
    %v2370 = vld [vmem:[#allocation3 + $0x668] sm:$0xff]
    %v2371 = vld [vmem:[#allocation3 + $0x670] sm:$0xff]
    %v2372 = vld [vmem:[#allocation3 + $0x678] sm:$0xff]
    %v2373 = vld [vmem:[#allocation3 + $0x680] sm:$0xff]
    %v2374 = vld [vmem:[#allocation3 + $0x688] sm:$0xff]
    %v2375 = vld [vmem:[#allocation3 + $0x690] sm:$0xff]
    %v2376 = vld [vmem:[#allocation3 + $0x698] sm:$0xff]
    %v2377 = vld [vmem:[#allocation3 + $0x6a0] sm:$0xff]
    %v2378 = vld [vmem:[#allocation3 + $0x6a8] sm:$0xff]
    %v2379 = vld [vmem:[#allocation3 + $0x6b0] sm:$0xff]
    %v2380 = vld [vmem:[#allocation3 + $0x6b8] sm:$0xff]
    %v2381 = vld [vmem:[#allocation3 + $0x6c0] sm:$0xff]
    %v2382 = vld [vmem:[#allocation3 + $0x6c8] sm:$0xff]
    %v2383 = vld [vmem:[#allocation3 + $0x6d0] sm:$0xff]
    %v2384 = vld [vmem:[#allocation3 + $0x6d8] sm:$0xff]
    %v2385 = vld [vmem:[#allocation3 + $0x6e0] sm:$0xff]
    %v2386 = vld [vmem:[#allocation3 + $0x6e8] sm:$0xff]
    %v2387 = vld [vmem:[#allocation3 + $0x6f0] sm:$0xff]
    %v2388 = vld [vmem:[#allocation3 + $0x6f8] sm:$0xff]
    %v2389 = vld [vmem:[#allocation3 + $0x700] sm:$0xff]
    %v2390 = vld [vmem:[#allocation3 + $0x708] sm:$0xff]
    %v2391 = vld [vmem:[#allocation3 + $0x710] sm:$0xff]
    %v2392 = vld [vmem:[#allocation3 + $0x718] sm:$0xff]
    %v2393 = vld [vmem:[#allocation3 + $0x720] sm:$0xff]
    %v2394 = vld [vmem:[#allocation3 + $0x728] sm:$0xff]
    %v2395 = vld [vmem:[#allocation3 + $0x730] sm:$0xff]
    %v2396 = vld [vmem:[#allocation3 + $0x738] sm:$0xff]
    %v2397 = vld [vmem:[#allocation3 + $0x740] sm:$0xff]
    %v2398 = vld [vmem:[#allocation3 + $0x748] sm:$0xff]
    %v2399 = vld [vmem:[#allocation3 + $0x750] sm:$0xff]
    %v2400 = vld [vmem:[#allocation3 + $0x758] sm:$0xff]
    %v2401 = vld [vmem:[#allocation3 + $0x760] sm:$0xff]
    %v2402 = vld [vmem:[#allocation3 + $0x768] sm:$0xff]
    %v2403 = vld [vmem:[#allocation3 + $0x770] sm:$0xff]
    %v2404 = vld [vmem:[#allocation3 + $0x778] sm:$0xff]
    %v2405 = vld [vmem:[#allocation3 + $0x780] sm:$0xff]
    %v2406 = vld [vmem:[#allocation3 + $0x788] sm:$0xff]
    %v2407 = vld [vmem:[#allocation3 + $0x790] sm:$0xff]
    %v2408 = vld [vmem:[#allocation3 + $0x798] sm:$0xff]
    %v2653 = vunpack.c.l.b16 %v2165
    %v2654 = vunpack.c.h.b16 %v2165
    %v2655 = vunpack.c.l.b16 %v2166
    %v2656 = vunpack.c.h.b16 %v2166
    %v2657 = vunpack.c.l.b16 %v2167
    %v2658 = vunpack.c.h.b16 %v2167
    %v2659 = vunpack.c.l.b16 %v2168
    %v2660 = vunpack.c.h.b16 %v2168
    %v2661 = vunpack.c.l.b16 %v2169
    %v2662 = vunpack.c.h.b16 %v2169
    %v2663 = vunpack.c.l.b16 %v2170
    %v2664 = vunpack.c.h.b16 %v2170
    %v2665 = vunpack.c.l.b16 %v2171
    %v2666 = vunpack.c.h.b16 %v2171
    %v2667 = vunpack.c.l.b16 %v2172
    %v2668 = vunpack.c.h.b16 %v2172
    %v2669 = vunpack.c.l.b16 %v2173
    %v2670 = vunpack.c.h.b16 %v2173
    %v2671 = vunpack.c.l.b16 %v2174
    %v2672 = vunpack.c.h.b16 %v2174
    %v2673 = vunpack.c.l.b16 %v2175
    %v2674 = vunpack.c.h.b16 %v2175
    %v2675 = vunpack.c.l.b16 %v2176
    %v2676 = vunpack.c.h.b16 %v2176
    %v2677 = vunpack.c.l.b16 %v2177
    %v2678 = vunpack.c.h.b16 %v2177
    %v2679 = vunpack.c.l.b16 %v2178
    %v2680 = vunpack.c.h.b16 %v2178
    %v2681 = vunpack.c.l.b16 %v2179
    %v2682 = vunpack.c.h.b16 %v2179
    %v2683 = vunpack.c.l.b16 %v2180
    %v2684 = vunpack.c.h.b16 %v2180
    %v2685 = vunpack.c.l.b16 %v2181
    %v2686 = vunpack.c.h.b16 %v2181
    %v2687 = vunpack.c.l.b16 %v2182
    %v2688 = vunpack.c.h.b16 %v2182
    %v2689 = vunpack.c.l.b16 %v2183
    %v2690 = vunpack.c.h.b16 %v2183
    %v2691 = vunpack.c.l.b16 %v2184
    %v2692 = vunpack.c.h.b16 %v2184
    %v2693 = vunpack.c.l.b16 %v2185
    %v2694 = vunpack.c.h.b16 %v2185
    %v2695 = vunpack.c.l.b16 %v2186
    %v2696 = vunpack.c.h.b16 %v2186
    %v2697 = vunpack.c.l.b16 %v2187
    %v2698 = vunpack.c.h.b16 %v2187
    %v2699 = vunpack.c.l.b16 %v2188
    %v2700 = vunpack.c.h.b16 %v2188
    %v2701 = vunpack.c.l.b16 %v2189
    %v2702 = vunpack.c.h.b16 %v2189
    %v2703 = vunpack.c.l.b16 %v2190
    %v2704 = vunpack.c.h.b16 %v2190
    %v2705 = vunpack.c.l.b16 %v2191
    %v2706 = vunpack.c.h.b16 %v2191
    %v2707 = vunpack.c.l.b16 %v2192
    %v2708 = vunpack.c.h.b16 %v2192
    %v2709 = vunpack.c.l.b16 %v2193
    %v2710 = vunpack.c.h.b16 %v2193
    %v2711 = vunpack.c.l.b16 %v2194
    %v2712 = vunpack.c.h.b16 %v2194
    %v2713 = vunpack.c.l.b16 %v2195
    %v2714 = vunpack.c.h.b16 %v2195
    %v2715 = vunpack.c.l.b16 %v2196
    %v2716 = vunpack.c.h.b16 %v2196
    %v2717 = vunpack.c.l.b16 %v2197
    %v2718 = vunpack.c.h.b16 %v2197
    %v2719 = vunpack.c.l.b16 %v2198
    %v2720 = vunpack.c.h.b16 %v2198
    %v2721 = vunpack.c.l.b16 %v2199
    %v2722 = vunpack.c.h.b16 %v2199
    %v2723 = vunpack.c.l.b16 %v2200
    %v2724 = vunpack.c.h.b16 %v2200
    %v2725 = vunpack.c.l.b16 %v2201
    %v2726 = vunpack.c.h.b16 %v2201
    %v2727 = vunpack.c.l.b16 %v2202
    %v2728 = vunpack.c.h.b16 %v2202
    %v2729 = vunpack.c.l.b16 %v2203
    %v2730 = vunpack.c.h.b16 %v2203
    %v2731 = vunpack.c.l.b16 %v2204
    %v2732 = vunpack.c.h.b16 %v2204
    %v2733 = vunpack.c.l.b16 %v2205
    %v2734 = vunpack.c.h.b16 %v2205
    %v2735 = vunpack.c.l.b16 %v2206
    %v2736 = vunpack.c.h.b16 %v2206
    %v2737 = vunpack.c.l.b16 %v2207
    %v2738 = vunpack.c.h.b16 %v2207
    %v2739 = vunpack.c.l.b16 %v2208
    %v2740 = vunpack.c.h.b16 %v2208
    %v2741 = vunpack.c.l.b16 %v2209
    %v2742 = vunpack.c.h.b16 %v2209
    %v2743 = vunpack.c.l.b16 %v2210
    %v2744 = vunpack.c.h.b16 %v2210
    %v2745 = vunpack.c.l.b16 %v2211
    %v2746 = vunpack.c.h.b16 %v2211
    %v2747 = vunpack.c.l.b16 %v2212
    %v2748 = vunpack.c.h.b16 %v2212
    %v2749 = vunpack.c.l.b16 %v2213
    %v2750 = vunpack.c.h.b16 %v2213
    %v2751 = vunpack.c.l.b16 %v2214
    %v2752 = vunpack.c.h.b16 %v2214
    %v2753 = vunpack.c.l.b16 %v2215
    %v2754 = vunpack.c.h.b16 %v2215
    %v2755 = vunpack.c.l.b16 %v2216
    %v2756 = vunpack.c.h.b16 %v2216
    %v2757 = vunpack.c.l.b16 %v2217
    %v2758 = vunpack.c.h.b16 %v2217
    %v2759 = vunpack.c.l.b16 %v2218
    %v2760 = vunpack.c.h.b16 %v2218
    %v2761 = vunpack.c.l.b16 %v2219
    %v2762 = vunpack.c.h.b16 %v2219
    %v2763 = vunpack.c.l.b16 %v2220
    %v2764 = vunpack.c.h.b16 %v2220
    %v2765 = vunpack.c.l.b16 %v2221
    %v2766 = vunpack.c.h.b16 %v2221
    %v2767 = vunpack.c.l.b16 %v2222
    %v2768 = vunpack.c.h.b16 %v2222
    %v2769 = vunpack.c.l.b16 %v2223
    %v2770 = vunpack.c.h.b16 %v2223
    %v2771 = vunpack.c.l.b16 %v2224
    %v2772 = vunpack.c.h.b16 %v2224
    %v2773 = vunpack.c.l.b16 %v2225
    %v2774 = vunpack.c.h.b16 %v2225
    %v2775 = vunpack.c.l.b16 %v2226
    %v2776 = vunpack.c.h.b16 %v2226
    %v2777 = vunpack.c.l.b16 %v2227
    %v2778 = vunpack.c.h.b16 %v2227
    %v2779 = vunpack.c.l.b16 %v2228
    %v2780 = vunpack.c.h.b16 %v2228
    %v2781 = vunpack.c.l.b16 %v2229
    %v2782 = vunpack.c.h.b16 %v2229
    %v2783 = vunpack.c.l.b16 %v2230
    %v2784 = vunpack.c.h.b16 %v2230
    %v2785 = vunpack.c.l.b16 %v2231
    %v2786 = vunpack.c.h.b16 %v2231
    %v2787 = vunpack.c.l.b16 %v2232
    %v2788 = vunpack.c.h.b16 %v2232
    %v2789 = vunpack.c.l.b16 %v2233
    %v2790 = vunpack.c.h.b16 %v2233
    %v2791 = vunpack.c.l.b16 %v2234
    %v2792 = vunpack.c.h.b16 %v2234
    %v2793 = vunpack.c.l.b16 %v2235
    %v2794 = vunpack.c.h.b16 %v2235
    %v2795 = vunpack.c.l.b16 %v2236
    %v2796 = vunpack.c.h.b16 %v2236
    %v2797 = vunpack.c.l.b16 %v2237
    %v2798 = vunpack.c.h.b16 %v2237
    %v2799 = vunpack.c.l.b16 %v2238
    %v2800 = vunpack.c.h.b16 %v2238
    %v2801 = vunpack.c.l.b16 %v2239
    %v2802 = vunpack.c.h.b16 %v2239
    %v2803 = vunpack.c.l.b16 %v2240
    %v2804 = vunpack.c.h.b16 %v2240
    %v2805 = vunpack.c.l.b16 %v2241
    %v2806 = vunpack.c.h.b16 %v2241
    %v2807 = vunpack.c.l.b16 %v2242
    %v2808 = vunpack.c.h.b16 %v2242
    %v2809 = vunpack.c.l.b16 %v2243
    %v2810 = vunpack.c.h.b16 %v2243
    %v2811 = vunpack.c.l.b16 %v2244
    %v2812 = vunpack.c.h.b16 %v2244
    %v2813 = vunpack.c.l.b16 %v2245
    %v2814 = vunpack.c.h.b16 %v2245
    %v2815 = vunpack.c.l.b16 %v2246
    %v2816 = vunpack.c.h.b16 %v2246
    %v2817 = vunpack.c.l.b16 %v2247
    %v2818 = vunpack.c.h.b16 %v2247
    %v2819 = vunpack.c.l.b16 %v2248
    %v2820 = vunpack.c.h.b16 %v2248
    %v2821 = vunpack.c.l.b16 %v2249
    %v2822 = vunpack.c.h.b16 %v2249
    %v2823 = vunpack.c.l.b16 %v2250
    %v2824 = vunpack.c.h.b16 %v2250
    %v2825 = vunpack.c.l.b16 %v2251
    %v2826 = vunpack.c.h.b16 %v2251
    %v2827 = vunpack.c.l.b16 %v2252
    %v2828 = vunpack.c.h.b16 %v2252
    %v2829 = vunpack.c.l.b16 %v2253
    %v2830 = vunpack.c.h.b16 %v2253
    %v2831 = vunpack.c.l.b16 %v2254
    %v2832 = vunpack.c.h.b16 %v2254
    %v2833 = vunpack.c.l.b16 %v2255
    %v2834 = vunpack.c.h.b16 %v2255
    %v2835 = vunpack.c.l.b16 %v2256
    %v2836 = vunpack.c.h.b16 %v2256
    %v2837 = vunpack.c.l.b16 %v2257
    %v2838 = vunpack.c.h.b16 %v2257
    %v2839 = vunpack.c.l.b16 %v2258
    %v2840 = vunpack.c.h.b16 %v2258
    %v2841 = vunpack.c.l.b16 %v2259
    %v2842 = vunpack.c.h.b16 %v2259
    %v2843 = vunpack.c.l.b16 %v2260
    %v2844 = vunpack.c.h.b16 %v2260
    %v2845 = vunpack.c.l.b16 %v2261
    %v2846 = vunpack.c.h.b16 %v2261
    %v2847 = vunpack.c.l.b16 %v2262
    %v2848 = vunpack.c.h.b16 %v2262
    %v2849 = vunpack.c.l.b16 %v2263
    %v2850 = vunpack.c.h.b16 %v2263
    %v2851 = vunpack.c.l.b16 %v2264
    %v2852 = vunpack.c.h.b16 %v2264
    %v2853 = vunpack.c.l.b16 %v2265
    %v2854 = vunpack.c.h.b16 %v2265
    %v2855 = vunpack.c.l.b16 %v2266
    %v2856 = vunpack.c.h.b16 %v2266
    %v2857 = vunpack.c.l.b16 %v2267
    %v2858 = vunpack.c.h.b16 %v2267
    %v2859 = vunpack.c.l.b16 %v2268
    %v2860 = vunpack.c.h.b16 %v2268
    %v2861 = vunpack.c.l.b16 %v2269
    %v2862 = vunpack.c.h.b16 %v2269
    %v2863 = vunpack.c.l.b16 %v2270
    %v2864 = vunpack.c.h.b16 %v2270
    %v2865 = vunpack.c.l.b16 %v2271
    %v2866 = vunpack.c.h.b16 %v2271
    %v2867 = vunpack.c.l.b16 %v2272
    %v2868 = vunpack.c.h.b16 %v2272
    %v2869 = vunpack.c.l.b16 %v2273
    %v2870 = vunpack.c.h.b16 %v2273
    %v2871 = vunpack.c.l.b16 %v2274
    %v2872 = vunpack.c.h.b16 %v2274
    %v2873 = vunpack.c.l.b16 %v2275
    %v2874 = vunpack.c.h.b16 %v2275
    %v2875 = vunpack.c.l.b16 %v2276
    %v2876 = vunpack.c.h.b16 %v2276
    %v2877 = vunpack.c.l.b16 %v2277
    %v2878 = vunpack.c.h.b16 %v2277
    %v2879 = vunpack.c.l.b16 %v2278
    %v2880 = vunpack.c.h.b16 %v2278
    %v2881 = vunpack.c.l.b16 %v2279
    %v2882 = vunpack.c.h.b16 %v2279
    %v2883 = vunpack.c.l.b16 %v2280
    %v2884 = vunpack.c.h.b16 %v2280
    %v2885 = vunpack.c.l.b16 %v2281
    %v2886 = vunpack.c.h.b16 %v2281
    %v2887 = vunpack.c.l.b16 %v2282
    %v2888 = vunpack.c.h.b16 %v2282
    %v2889 = vunpack.c.l.b16 %v2283
    %v2890 = vunpack.c.h.b16 %v2283
    %v2891 = vunpack.c.l.b16 %v2284
    %v2892 = vunpack.c.h.b16 %v2284
    %v2893 = vunpack.c.l.b16 %v2285
    %v2894 = vunpack.c.h.b16 %v2285
    %v2895 = vunpack.c.l.b16 %v2286
    %v2896 = vunpack.c.h.b16 %v2286
    %v2897 = vunpack.c.l.b16 %v2287
    %v2898 = vunpack.c.h.b16 %v2287
    %v2899 = vunpack.c.l.b16 %v2288
    %v2900 = vunpack.c.h.b16 %v2288
    %v2901 = vunpack.c.l.b16 %v2289
    %v2902 = vunpack.c.h.b16 %v2289
    %v2903 = vunpack.c.l.b16 %v2290
    %v2904 = vunpack.c.h.b16 %v2290
    %v2905 = vunpack.c.l.b16 %v2291
    %v2906 = vunpack.c.h.b16 %v2291
    %v2907 = vunpack.c.l.b16 %v2292
    %v2908 = vunpack.c.h.b16 %v2292
    %v2909 = vunpack.c.l.b16 %v2293
    %v2910 = vunpack.c.h.b16 %v2293
    %v2911 = vunpack.c.l.b16 %v2294
    %v2912 = vunpack.c.h.b16 %v2294
    %v2913 = vunpack.c.l.b16 %v2295
    %v2914 = vunpack.c.h.b16 %v2295
    %v2915 = vunpack.c.l.b16 %v2296
    %v2916 = vunpack.c.h.b16 %v2296
    %v2917 = vunpack.c.l.b16 %v2297
    %v2918 = vunpack.c.h.b16 %v2297
    %v2919 = vunpack.c.l.b16 %v2298
    %v2920 = vunpack.c.h.b16 %v2298
    %v2921 = vunpack.c.l.b16 %v2299
    %v2922 = vunpack.c.h.b16 %v2299
    %v2923 = vunpack.c.l.b16 %v2300
    %v2924 = vunpack.c.h.b16 %v2300
    %v2925 = vunpack.c.l.b16 %v2301
    %v2926 = vunpack.c.h.b16 %v2301
    %v2927 = vunpack.c.l.b16 %v2302
    %v2928 = vunpack.c.h.b16 %v2302
    %v2929 = vunpack.c.l.b16 %v2303
    %v2930 = vunpack.c.h.b16 %v2303
    %v2931 = vunpack.c.l.b16 %v2304
    %v2932 = vunpack.c.h.b16 %v2304
    %v2933 = vunpack.c.l.b16 %v2305
    %v2934 = vunpack.c.h.b16 %v2305
    %v2935 = vunpack.c.l.b16 %v2306
    %v2936 = vunpack.c.h.b16 %v2306
    %v2937 = vunpack.c.l.b16 %v2307
    %v2938 = vunpack.c.h.b16 %v2307
    %v2939 = vunpack.c.l.b16 %v2308
    %v2940 = vunpack.c.h.b16 %v2308
    %v2941 = vunpack.c.l.b16 %v2309
    %v2942 = vunpack.c.h.b16 %v2309
    %v2943 = vunpack.c.l.b16 %v2310
    %v2944 = vunpack.c.h.b16 %v2310
    %v2945 = vunpack.c.l.b16 %v2311
    %v2946 = vunpack.c.h.b16 %v2311
    %v2947 = vunpack.c.l.b16 %v2312
    %v2948 = vunpack.c.h.b16 %v2312
    %v2949 = vunpack.c.l.b16 %v2313
    %v2950 = vunpack.c.h.b16 %v2313
    %v2951 = vunpack.c.l.b16 %v2314
    %v2952 = vunpack.c.h.b16 %v2314
    %v2953 = vunpack.c.l.b16 %v2315
    %v2954 = vunpack.c.h.b16 %v2315
    %v2955 = vunpack.c.l.b16 %v2316
    %v2956 = vunpack.c.h.b16 %v2316
    %v2957 = vunpack.c.l.b16 %v2317
    %v2958 = vunpack.c.h.b16 %v2317
    %v2959 = vunpack.c.l.b16 %v2318
    %v2960 = vunpack.c.h.b16 %v2318
    %v2961 = vunpack.c.l.b16 %v2319
    %v2962 = vunpack.c.h.b16 %v2319
    %v2963 = vunpack.c.l.b16 %v2320
    %v2964 = vunpack.c.h.b16 %v2320
    %v2965 = vunpack.c.l.b16 %v2321
    %v2966 = vunpack.c.h.b16 %v2321
    %v2967 = vunpack.c.l.b16 %v2322
    %v2968 = vunpack.c.h.b16 %v2322
    %v2969 = vunpack.c.l.b16 %v2323
    %v2970 = vunpack.c.h.b16 %v2323
    %v2971 = vunpack.c.l.b16 %v2324
    %v2972 = vunpack.c.h.b16 %v2324
    %v2973 = vunpack.c.l.b16 %v2325
    %v2974 = vunpack.c.h.b16 %v2325
    %v2975 = vunpack.c.l.b16 %v2326
    %v2976 = vunpack.c.h.b16 %v2326
    %v2977 = vunpack.c.l.b16 %v2327
    %v2978 = vunpack.c.h.b16 %v2327
    %v2979 = vunpack.c.l.b16 %v2328
    %v2980 = vunpack.c.h.b16 %v2328
    %v2981 = vunpack.c.l.b16 %v2329
    %v2982 = vunpack.c.h.b16 %v2329
    %v2983 = vunpack.c.l.b16 %v2330
    %v2984 = vunpack.c.h.b16 %v2330
    %v2985 = vunpack.c.l.b16 %v2331
    %v2986 = vunpack.c.h.b16 %v2331
    %v2987 = vunpack.c.l.b16 %v2332
    %v2988 = vunpack.c.h.b16 %v2332
    %v2989 = vunpack.c.l.b16 %v2333
    %v2990 = vunpack.c.h.b16 %v2333
    %v2991 = vunpack.c.l.b16 %v2334
    %v2992 = vunpack.c.h.b16 %v2334
    %v2993 = vunpack.c.l.b16 %v2335
    %v2994 = vunpack.c.h.b16 %v2335
    %v2995 = vunpack.c.l.b16 %v2336
    %v2996 = vunpack.c.h.b16 %v2336
    %v2997 = vunpack.c.l.b16 %v2337
    %v2998 = vunpack.c.h.b16 %v2337
    %v2999 = vunpack.c.l.b16 %v2338
    %v3000 = vunpack.c.h.b16 %v2338
    %v3001 = vunpack.c.l.b16 %v2339
    %v3002 = vunpack.c.h.b16 %v2339
    %v3003 = vunpack.c.l.b16 %v2340
    %v3004 = vunpack.c.h.b16 %v2340
    %v3005 = vunpack.c.l.b16 %v2341
    %v3006 = vunpack.c.h.b16 %v2341
    %v3007 = vunpack.c.l.b16 %v2342
    %v3008 = vunpack.c.h.b16 %v2342
    %v3009 = vunpack.c.l.b16 %v2343
    %v3010 = vunpack.c.h.b16 %v2343
    %v3011 = vunpack.c.l.b16 %v2344
    %v3012 = vunpack.c.h.b16 %v2344
    %v3013 = vunpack.c.l.b16 %v2345
    %v3014 = vunpack.c.h.b16 %v2345
    %v3015 = vunpack.c.l.b16 %v2346
    %v3016 = vunpack.c.h.b16 %v2346
    %v3017 = vunpack.c.l.b16 %v2347
    %v3018 = vunpack.c.h.b16 %v2347
    %v3019 = vunpack.c.l.b16 %v2348
    %v3020 = vunpack.c.h.b16 %v2348
    %v3021 = vunpack.c.l.b16 %v2349
    %v3022 = vunpack.c.h.b16 %v2349
    %v3023 = vunpack.c.l.b16 %v2350
    %v3024 = vunpack.c.h.b16 %v2350
    %v3025 = vunpack.c.l.b16 %v2351
    %v3026 = vunpack.c.h.b16 %v2351
    %v3027 = vunpack.c.l.b16 %v2352
    %v3028 = vunpack.c.h.b16 %v2352
    %v3029 = vunpack.c.l.b16 %v2353
    %v3030 = vunpack.c.h.b16 %v2353
    %v3031 = vunpack.c.l.b16 %v2354
    %v3032 = vunpack.c.h.b16 %v2354
    %v3033 = vunpack.c.l.b16 %v2355
    %v3034 = vunpack.c.h.b16 %v2355
    %v3035 = vunpack.c.l.b16 %v2356
    %v3036 = vunpack.c.h.b16 %v2356
    %v3037 = vunpack.c.l.b16 %v2357
    %v3038 = vunpack.c.h.b16 %v2357
    %v3039 = vunpack.c.l.b16 %v2358
    %v3040 = vunpack.c.h.b16 %v2358
    %v3041 = vunpack.c.l.b16 %v2359
    %v3042 = vunpack.c.h.b16 %v2359
    %v3043 = vunpack.c.l.b16 %v2360
    %v3044 = vunpack.c.h.b16 %v2360
    %v3045 = vunpack.c.l.b16 %v2361
    %v3046 = vunpack.c.h.b16 %v2361
    %v3047 = vunpack.c.l.b16 %v2362
    %v3048 = vunpack.c.h.b16 %v2362
    %v3049 = vunpack.c.l.b16 %v2363
    %v3050 = vunpack.c.h.b16 %v2363
    %v3051 = vunpack.c.l.b16 %v2364
    %v3052 = vunpack.c.h.b16 %v2364
    %v3053 = vunpack.c.l.b16 %v2365
    %v3054 = vunpack.c.h.b16 %v2365
    %v3055 = vunpack.c.l.b16 %v2366
    %v3056 = vunpack.c.h.b16 %v2366
    %v3057 = vunpack.c.l.b16 %v2367
    %v3058 = vunpack.c.h.b16 %v2367
    %v3059 = vunpack.c.l.b16 %v2368
    %v3060 = vunpack.c.h.b16 %v2368
    %v3061 = vunpack.c.l.b16 %v2369
    %v3062 = vunpack.c.h.b16 %v2369
    %v3063 = vunpack.c.l.b16 %v2370
    %v3064 = vunpack.c.h.b16 %v2370
    %v3065 = vunpack.c.l.b16 %v2371
    %v3066 = vunpack.c.h.b16 %v2371
    %v3067 = vunpack.c.l.b16 %v2372
    %v3068 = vunpack.c.h.b16 %v2372
    %v3069 = vunpack.c.l.b16 %v2373
    %v3070 = vunpack.c.h.b16 %v2373
    %v3071 = vunpack.c.l.b16 %v2374
    %v3072 = vunpack.c.h.b16 %v2374
    %v3073 = vunpack.c.l.b16 %v2375
    %v3074 = vunpack.c.h.b16 %v2375
    %v3075 = vunpack.c.l.b16 %v2376
    %v3076 = vunpack.c.h.b16 %v2376
    %v3077 = vunpack.c.l.b16 %v2377
    %v3078 = vunpack.c.h.b16 %v2377
    %v3079 = vunpack.c.l.b16 %v2378
    %v3080 = vunpack.c.h.b16 %v2378
    %v3081 = vunpack.c.l.b16 %v2379
    %v3082 = vunpack.c.h.b16 %v2379
    %v3083 = vunpack.c.l.b16 %v2380
    %v3084 = vunpack.c.h.b16 %v2380
    %v3085 = vunpack.c.l.b16 %v2381
    %v3086 = vunpack.c.h.b16 %v2381
    %v3087 = vunpack.c.l.b16 %v2382
    %v3088 = vunpack.c.h.b16 %v2382
    %v3089 = vunpack.c.l.b16 %v2383
    %v3090 = vunpack.c.h.b16 %v2383
    %v3091 = vunpack.c.l.b16 %v2384
    %v3092 = vunpack.c.h.b16 %v2384
    %v3093 = vunpack.c.l.b16 %v2385
    %v3094 = vunpack.c.h.b16 %v2385
    %v3095 = vunpack.c.l.b16 %v2386
    %v3096 = vunpack.c.h.b16 %v2386
    %v3097 = vunpack.c.l.b16 %v2387
    %v3098 = vunpack.c.h.b16 %v2387
    %v3099 = vunpack.c.l.b16 %v2388
    %v3100 = vunpack.c.h.b16 %v2388
    %v3101 = vunpack.c.l.b16 %v2389
    %v3102 = vunpack.c.h.b16 %v2389
    %v3103 = vunpack.c.l.b16 %v2390
    %v3104 = vunpack.c.h.b16 %v2390
    %v3105 = vunpack.c.l.b16 %v2391
    %v3106 = vunpack.c.h.b16 %v2391
    %v3107 = vunpack.c.l.b16 %v2392
    %v3108 = vunpack.c.h.b16 %v2392
    %v3109 = vunpack.c.l.b16 %v2393
    %v3110 = vunpack.c.h.b16 %v2393
    %v3111 = vunpack.c.l.b16 %v2394
    %v3112 = vunpack.c.h.b16 %v2394
    %v3113 = vunpack.c.l.b16 %v2395
    %v3114 = vunpack.c.h.b16 %v2395
    %v3115 = vunpack.c.l.b16 %v2396
    %v3116 = vunpack.c.h.b16 %v2396
    %v3117 = vunpack.c.l.b16 %v2397
    %v3118 = vunpack.c.h.b16 %v2397
    %v3119 = vunpack.c.l.b16 %v2398
    %v3120 = vunpack.c.h.b16 %v2398
    %v3121 = vunpack.c.l.b16 %v2399
    %v3122 = vunpack.c.h.b16 %v2399
    %v3123 = vunpack.c.l.b16 %v2400
    %v3124 = vunpack.c.h.b16 %v2400
    %v3125 = vunpack.c.l.b16 %v2401
    %v3126 = vunpack.c.h.b16 %v2401
    %v3127 = vunpack.c.l.b16 %v2402
    %v3128 = vunpack.c.h.b16 %v2402
    %v3129 = vunpack.c.l.b16 %v2403
    %v3130 = vunpack.c.h.b16 %v2403
    %v3131 = vunpack.c.l.b16 %v2404
    %v3132 = vunpack.c.h.b16 %v2404
    %v3133 = vunpack.c.l.b16 %v2405
    %v3134 = vunpack.c.h.b16 %v2405
    %v3135 = vunpack.c.l.b16 %v2406
    %v3136 = vunpack.c.h.b16 %v2406
    %v3137 = vunpack.c.l.b16 %v2407
    %v3138 = vunpack.c.h.b16 %v2407
    %v3139 = vunpack.c.l.b16 %v2408
    %v3140 = vunpack.c.h.b16 %v2408
    %v3141 = vpack.c.b16 %v2661, %v2653
    %v3142 = vpack.c.b16 %v2662, %v2654
    %v3143 = vpack.c.b16 %v2663, %v2655
    %v3144 = vpack.c.b16 %v2664, %v2656
    %v3145 = vpack.c.b16 %v2665, %v2657
    %v3146 = vpack.c.b16 %v2666, %v2658
    %v3147 = vpack.c.b16 %v2667, %v2659
    %v3148 = vpack.c.b16 %v2668, %v2660
    %v3149 = vpack.c.b16 %v2677, %v2669
    %v3150 = vpack.c.b16 %v2678, %v2670
    %v3151 = vpack.c.b16 %v2679, %v2671
    %v3152 = vpack.c.b16 %v2680, %v2672
    %v3153 = vpack.c.b16 %v2681, %v2673
    %v3154 = vpack.c.b16 %v2682, %v2674
    %v3155 = vpack.c.b16 %v2683, %v2675
    %v3156 = vpack.c.b16 %v2684, %v2676
    %v3157 = vpack.c.b16 %v2693, %v2685
    %v3158 = vpack.c.b16 %v2694, %v2686
    %v3159 = vpack.c.b16 %v2695, %v2687
    %v3160 = vpack.c.b16 %v2696, %v2688
    %v3161 = vpack.c.b16 %v2697, %v2689
    %v3162 = vpack.c.b16 %v2698, %v2690
    %v3163 = vpack.c.b16 %v2699, %v2691
    %v3164 = vpack.c.b16 %v2700, %v2692
    %v3165 = vpack.c.b16 %v2709, %v2701
    %v3166 = vpack.c.b16 %v2710, %v2702
    %v3167 = vpack.c.b16 %v2711, %v2703
    %v3168 = vpack.c.b16 %v2712, %v2704
    %v3169 = vpack.c.b16 %v2713, %v2705
    %v3170 = vpack.c.b16 %v2714, %v2706
    %v3171 = vpack.c.b16 %v2715, %v2707
    %v3172 = vpack.c.b16 %v2716, %v2708
    %v3173 = vpack.c.b16 %v2725, %v2717
    %v3174 = vpack.c.b16 %v2726, %v2718
    %v3175 = vpack.c.b16 %v2727, %v2719
    %v3176 = vpack.c.b16 %v2728, %v2720
    %v3177 = vpack.c.b16 %v2729, %v2721
    %v3178 = vpack.c.b16 %v2730, %v2722
    %v3179 = vpack.c.b16 %v2731, %v2723
    %v3180 = vpack.c.b16 %v2732, %v2724
    %v3181 = vpack.c.b16 %v2741, %v2733
    %v3182 = vpack.c.b16 %v2742, %v2734
    %v3183 = vpack.c.b16 %v2743, %v2735
    %v3184 = vpack.c.b16 %v2744, %v2736
    %v3185 = vpack.c.b16 %v2745, %v2737
    %v3186 = vpack.c.b16 %v2746, %v2738
    %v3187 = vpack.c.b16 %v2747, %v2739
    %v3188 = vpack.c.b16 %v2748, %v2740
    %v3189 = vpack.c.b16 %v2757, %v2749
    %v3190 = vpack.c.b16 %v2758, %v2750
    %v3191 = vpack.c.b16 %v2759, %v2751
    %v3192 = vpack.c.b16 %v2760, %v2752
    %v3193 = vpack.c.b16 %v2761, %v2753
    %v3194 = vpack.c.b16 %v2762, %v2754
    %v3195 = vpack.c.b16 %v2763, %v2755
    %v3196 = vpack.c.b16 %v2764, %v2756
    %v3197 = vpack.c.b16 %v2773, %v2765
    %v3198 = vpack.c.b16 %v2774, %v2766
    %v3199 = vpack.c.b16 %v2775, %v2767
    %v3200 = vpack.c.b16 %v2776, %v2768
    %v3201 = vpack.c.b16 %v2777, %v2769
    %v3202 = vpack.c.b16 %v2778, %v2770
    %v3203 = vpack.c.b16 %v2779, %v2771
    %v3204 = vpack.c.b16 %v2780, %v2772
    %v3205 = vpack.c.b16 %v2789, %v2781
    %v3206 = vpack.c.b16 %v2790, %v2782
    %v3207 = vpack.c.b16 %v2791, %v2783
    %v3208 = vpack.c.b16 %v2792, %v2784
    %v3209 = vpack.c.b16 %v2793, %v2785
    %v3210 = vpack.c.b16 %v2794, %v2786
    %v3211 = vpack.c.b16 %v2795, %v2787
    %v3212 = vpack.c.b16 %v2796, %v2788
    %v3213 = vpack.c.b16 %v2805, %v2797
    %v3214 = vpack.c.b16 %v2806, %v2798
    %v3215 = vpack.c.b16 %v2807, %v2799
    %v3216 = vpack.c.b16 %v2808, %v2800
    %v3217 = vpack.c.b16 %v2809, %v2801
    %v3218 = vpack.c.b16 %v2810, %v2802
    %v3219 = vpack.c.b16 %v2811, %v2803
    %v3220 = vpack.c.b16 %v2812, %v2804
    %v3221 = vpack.c.b16 %v2821, %v2813
    %v3222 = vpack.c.b16 %v2822, %v2814
    %v3223 = vpack.c.b16 %v2823, %v2815
    %v3224 = vpack.c.b16 %v2824, %v2816
    %v3225 = vpack.c.b16 %v2825, %v2817
    %v3226 = vpack.c.b16 %v2826, %v2818
    %v3227 = vpack.c.b16 %v2827, %v2819
    %v3228 = vpack.c.b16 %v2828, %v2820
    %v3229 = vpack.c.b16 %v2837, %v2829
    %v3230 = vpack.c.b16 %v2838, %v2830
    %v3231 = vpack.c.b16 %v2839, %v2831
    %v3232 = vpack.c.b16 %v2840, %v2832
    %v3233 = vpack.c.b16 %v2841, %v2833
    %v3234 = vpack.c.b16 %v2842, %v2834
    %v3235 = vpack.c.b16 %v2843, %v2835
    %v3236 = vpack.c.b16 %v2844, %v2836
    %v3237 = vpack.c.b16 %v2853, %v2845
    %v3238 = vpack.c.b16 %v2854, %v2846
    %v3239 = vpack.c.b16 %v2855, %v2847
    %v3240 = vpack.c.b16 %v2856, %v2848
    %v3241 = vpack.c.b16 %v2857, %v2849
    %v3242 = vpack.c.b16 %v2858, %v2850
    %v3243 = vpack.c.b16 %v2859, %v2851
    %v3244 = vpack.c.b16 %v2860, %v2852
    %v3245 = vpack.c.b16 %v2869, %v2861
    %v3246 = vpack.c.b16 %v2870, %v2862
    %v3247 = vpack.c.b16 %v2871, %v2863
    %v3248 = vpack.c.b16 %v2872, %v2864
    %v3249 = vpack.c.b16 %v2873, %v2865
    %v3250 = vpack.c.b16 %v2874, %v2866
    %v3251 = vpack.c.b16 %v2875, %v2867
    %v3252 = vpack.c.b16 %v2876, %v2868
    %v3253 = vpack.c.b16 %v2885, %v2877
    %v3254 = vpack.c.b16 %v2886, %v2878
    %v3255 = vpack.c.b16 %v2887, %v2879
    %v3256 = vpack.c.b16 %v2888, %v2880
    %v3257 = vpack.c.b16 %v2889, %v2881
    %v3258 = vpack.c.b16 %v2890, %v2882
    %v3259 = vpack.c.b16 %v2891, %v2883
    %v3260 = vpack.c.b16 %v2892, %v2884
    %v3261 = vpack.c.b16 %v2901, %v2893
    %v3262 = vpack.c.b16 %v2902, %v2894
    %v3263 = vpack.c.b16 %v2903, %v2895
    %v3264 = vpack.c.b16 %v2904, %v2896
    %v3265 = vpack.c.b16 %v2905, %v2897
    %v3266 = vpack.c.b16 %v2906, %v2898
    %v3267 = vpack.c.b16 %v2907, %v2899
    %v3268 = vpack.c.b16 %v2908, %v2900
    %v3269 = vpack.c.b16 %v2917, %v2909
    %v3270 = vpack.c.b16 %v2918, %v2910
    %v3271 = vpack.c.b16 %v2919, %v2911
    %v3272 = vpack.c.b16 %v2920, %v2912
    %v3273 = vpack.c.b16 %v2921, %v2913
    %v3274 = vpack.c.b16 %v2922, %v2914
    %v3275 = vpack.c.b16 %v2923, %v2915
    %v3276 = vpack.c.b16 %v2924, %v2916
    %v3277 = vpack.c.b16 %v2933, %v2925
    %v3278 = vpack.c.b16 %v2934, %v2926
    %v3279 = vpack.c.b16 %v2935, %v2927
    %v3280 = vpack.c.b16 %v2936, %v2928
    %v3281 = vpack.c.b16 %v2937, %v2929
    %v3282 = vpack.c.b16 %v2938, %v2930
    %v3283 = vpack.c.b16 %v2939, %v2931
    %v3284 = vpack.c.b16 %v2940, %v2932
    %v3285 = vpack.c.b16 %v2949, %v2941
    %v3286 = vpack.c.b16 %v2950, %v2942
    %v3287 = vpack.c.b16 %v2951, %v2943
    %v3288 = vpack.c.b16 %v2952, %v2944
    %v3289 = vpack.c.b16 %v2953, %v2945
    %v3290 = vpack.c.b16 %v2954, %v2946
    %v3291 = vpack.c.b16 %v2955, %v2947
    %v3292 = vpack.c.b16 %v2956, %v2948
    %v3293 = vpack.c.b16 %v2965, %v2957
    %v3294 = vpack.c.b16 %v2966, %v2958
    %v3295 = vpack.c.b16 %v2967, %v2959
    %v3296 = vpack.c.b16 %v2968, %v2960
    %v3297 = vpack.c.b16 %v2969, %v2961
    %v3298 = vpack.c.b16 %v2970, %v2962
    %v3299 = vpack.c.b16 %v2971, %v2963
    %v3300 = vpack.c.b16 %v2972, %v2964
    %v3301 = vpack.c.b16 %v2981, %v2973
    %v3302 = vpack.c.b16 %v2982, %v2974
    %v3303 = vpack.c.b16 %v2983, %v2975
    %v3304 = vpack.c.b16 %v2984, %v2976
    %v3305 = vpack.c.b16 %v2985, %v2977
    %v3306 = vpack.c.b16 %v2986, %v2978
    %v3307 = vpack.c.b16 %v2987, %v2979
    %v3308 = vpack.c.b16 %v2988, %v2980
    %v3309 = vpack.c.b16 %v2997, %v2989
    %v3310 = vpack.c.b16 %v2998, %v2990
    %v3311 = vpack.c.b16 %v2999, %v2991
    %v3312 = vpack.c.b16 %v3000, %v2992
    %v3313 = vpack.c.b16 %v3001, %v2993
    %v3314 = vpack.c.b16 %v3002, %v2994
    %v3315 = vpack.c.b16 %v3003, %v2995
    %v3316 = vpack.c.b16 %v3004, %v2996
    %v3317 = vpack.c.b16 %v3013, %v3005
    %v3318 = vpack.c.b16 %v3014, %v3006
    %v3319 = vpack.c.b16 %v3015, %v3007
    %v3320 = vpack.c.b16 %v3016, %v3008
    %v3321 = vpack.c.b16 %v3017, %v3009
    %v3322 = vpack.c.b16 %v3018, %v3010
    %v3323 = vpack.c.b16 %v3019, %v3011
    %v3324 = vpack.c.b16 %v3020, %v3012
    %v3325 = vpack.c.b16 %v3029, %v3021
    %v3326 = vpack.c.b16 %v3030, %v3022
    %v3327 = vpack.c.b16 %v3031, %v3023
    %v3328 = vpack.c.b16 %v3032, %v3024
    %v3329 = vpack.c.b16 %v3033, %v3025
    %v3330 = vpack.c.b16 %v3034, %v3026
    %v3331 = vpack.c.b16 %v3035, %v3027
    %v3332 = vpack.c.b16 %v3036, %v3028
    %v3333 = vpack.c.b16 %v3045, %v3037
    %v3334 = vpack.c.b16 %v3046, %v3038
    %v3335 = vpack.c.b16 %v3047, %v3039
    %v3336 = vpack.c.b16 %v3048, %v3040
    %v3337 = vpack.c.b16 %v3049, %v3041
    %v3338 = vpack.c.b16 %v3050, %v3042
    %v3339 = vpack.c.b16 %v3051, %v3043
    %v3340 = vpack.c.b16 %v3052, %v3044
    %v3341 = vpack.c.b16 %v3061, %v3053
    %v3342 = vpack.c.b16 %v3062, %v3054
    %v3343 = vpack.c.b16 %v3063, %v3055
    %v3344 = vpack.c.b16 %v3064, %v3056
    %v3345 = vpack.c.b16 %v3065, %v3057
    %v3346 = vpack.c.b16 %v3066, %v3058
    %v3347 = vpack.c.b16 %v3067, %v3059
    %v3348 = vpack.c.b16 %v3068, %v3060
    %v3349 = vpack.c.b16 %v3077, %v3069
    %v3350 = vpack.c.b16 %v3078, %v3070
    %v3351 = vpack.c.b16 %v3079, %v3071
    %v3352 = vpack.c.b16 %v3080, %v3072
    %v3353 = vpack.c.b16 %v3081, %v3073
    %v3354 = vpack.c.b16 %v3082, %v3074
    %v3355 = vpack.c.b16 %v3083, %v3075
    %v3356 = vpack.c.b16 %v3084, %v3076
    %v3357 = vpack.c.b16 %v3093, %v3085
    %v3358 = vpack.c.b16 %v3094, %v3086
    %v3359 = vpack.c.b16 %v3095, %v3087
    %v3360 = vpack.c.b16 %v3096, %v3088
    %v3361 = vpack.c.b16 %v3097, %v3089
    %v3362 = vpack.c.b16 %v3098, %v3090
    %v3363 = vpack.c.b16 %v3099, %v3091
    %v3364 = vpack.c.b16 %v3100, %v3092
    %v3365 = vpack.c.b16 %v3109, %v3101
    %v3366 = vpack.c.b16 %v3110, %v3102
    %v3367 = vpack.c.b16 %v3111, %v3103
    %v3368 = vpack.c.b16 %v3112, %v3104
    %v3369 = vpack.c.b16 %v3113, %v3105
    %v3370 = vpack.c.b16 %v3114, %v3106
    %v3371 = vpack.c.b16 %v3115, %v3107
    %v3372 = vpack.c.b16 %v3116, %v3108
    %v3373 = vpack.c.b16 %v3125, %v3117
    %v3374 = vpack.c.b16 %v3126, %v3118
    %v3375 = vpack.c.b16 %v3127, %v3119
    %v3376 = vpack.c.b16 %v3128, %v3120
    %v3377 = vpack.c.b16 %v3129, %v3121
    %v3378 = vpack.c.b16 %v3130, %v3122
    %v3379 = vpack.c.b16 %v3131, %v3123
    %v3380 = vpack.c.b16 %v3132, %v3124
    %v3381 = vpack.c.b16 %v3133, %v3133
    %v3382 = vpack.c.b16 %v3134, %v3134
    %v3383 = vpack.c.b16 %v3135, %v3135
    %v3384 = vpack.c.b16 %v3136, %v3136
    %v3385 = vpack.c.b16 %v3137, %v3137
    %v3386 = vpack.c.b16 %v3138, %v3138
    %v3387 = vpack.c.b16 %v3139, %v3139
    %v3388 = vpack.c.b16 %v3140, %v3140
    %vm3629 = vcmask 850944
    %v3631 = vsel %vm3629, %v1888, 0
    %v3634 = vsel %vm3629, %v1892, 0
    %v3637 = vsel %vm3629, %v1896, 0
    %v3640 = vsel %vm3629, %v1900, 0
    %vm3642 = vcmask 1043456
    %v3644 = vsel %vm3642, %v3381, 0
    %v3647 = vsel %vm3642, %v3382, 0
    %v3650 = vsel %vm3642, %v3383, 0
    %v3653 = vsel %vm3642, %v3384, 0
    %v3656 = vsel %vm3642, %v3385, 0
    %v3659 = vsel %vm3642, %v3386, 0
    %v3662 = vsel %vm3642, %v3387, 0
    %v3665 = vsel %vm3642, %v3388, 0
    %3667 = vmatprep.subr.bf16.mxu0 %v3198
    %3668 = vmatpush1.bf16.msra.mxu0 %v3197
    %3669 = vmatprep.subr.bf16.mxu0 %v3190
    %3670 = vmatpush1.bf16.msra.mxu0 %v3189
    %3671 = vmatprep.subr.bf16.mxu0 %v3182
    %3672 = vmatpush1.bf16.msra.mxu0 %v3181
    %3673 = vmatprep.subr.bf16.mxu0 %v3174
    %3674 = vmatpush1.bf16.msra.mxu0 %v3173
    %3675 = vmatprep.subr.bf16.mxu0 %v3166
    %3676 = vmatpush1.bf16.msra.mxu0 %v3165
    %3677 = vmatprep.subr.bf16.mxu0 %v3158
    %3678 = vmatpush1.bf16.msra.mxu0 %v3157
    %3679 = vmatprep.subr.bf16.mxu0 %v3150
    %3680 = vmatpush1.bf16.msra.mxu0 %v3149
    %3681 = vmatprep.subr.bf16.mxu0 %v3142
    %3682 = vmatpush1.bf16.msra.mxu0 %v3141
    %3683 = vmatprep.subr.bf16.mxu0 %v3262
    %3684 = vmatpush2.bf16.msra.mxu0 %v3261
    %3685 = vmatprep.subr.bf16.mxu0 %v3254
    %3686 = vmatpush2.bf16.msra.mxu0 %v3253
    %3687 = vmatprep.subr.bf16.mxu0 %v3246
    %3688 = vmatpush2.bf16.msra.mxu0 %v3245
    %3689 = vmatprep.subr.bf16.mxu0 %v3238
    %3690 = vmatpush2.bf16.msra.mxu0 %v3237
    %3691 = vmatprep.subr.bf16.mxu0 %v3230
    %3692 = vmatpush2.bf16.msra.mxu0 %v3229
    %3693 = vmatprep.subr.bf16.mxu0 %v3222
    %3694 = vmatpush2.bf16.msra.mxu0 %v3221
    %3695 = vmatprep.subr.bf16.mxu0 %v3214
    %3696 = vmatpush2.bf16.msra.mxu0 %v3213
    %3697 = vmatprep.subr.bf16.mxu0 %v3206
    %3698 = vmatpush2.bf16.msra.mxu0 %v3205
    %3699 = vmatprep.mubr.bf16.mxu0 %v1886
    %3700 = vmatmul.mubr.bf16.gmra.mxu0 %v1885
    %v3701 = vpop.f32.mrf.mxu0
    %v3702 = vadd.f32 0.0, %v3701
    %v3703 = vpop.f32.mrf.mxu0
    %v3704 = vadd.f32 0.0, %v3703
    %v3705 = vpop.f32.mrf.mxu0
    %v3706 = vadd.f32 0.0, %v3705
    %v3707 = vpop.f32.mrf.mxu0
    %v3708 = vadd.f32 0.0, %v3707
    %3709 = vmatprep.mubr.bf16.mxu0 %v1890
    %3710 = vmatmul.mubr.bf16.gmra.mxu0 %v1889
    %v3711 = vpop.f32.mrf.mxu0
    %v3712 = vadd.f32 0.0, %v3711
    %v3713 = vpop.f32.mrf.mxu0
    %v3714 = vadd.f32 0.0, %v3713
    %v3715 = vpop.f32.mrf.mxu0
    %v3716 = vadd.f32 0.0, %v3715
    %v3717 = vpop.f32.mrf.mxu0
    %v3718 = vadd.f32 0.0, %v3717
    %3719 = vmatprep.mubr.bf16.mxu0 %v1894
    %3720 = vmatmul.mubr.bf16.gmra.mxu0 %v1893
    %v3721 = vpop.f32.mrf.mxu0
    %v3722 = vadd.f32 0.0, %v3721
    %v3723 = vpop.f32.mrf.mxu0
    %v3724 = vadd.f32 0.0, %v3723
    %v3725 = vpop.f32.mrf.mxu0
    %v3726 = vadd.f32 0.0, %v3725
    %v3727 = vpop.f32.mrf.mxu0
    %v3728 = vadd.f32 0.0, %v3727
    %3729 = vmatprep.mubr.bf16.mxu0 %v1898
    %3730 = vmatmul.mubr.bf16.gmra.mxu0 %v1897
    %v3731 = vpop.f32.mrf.mxu0
    %v3732 = vadd.f32 0.0, %v3731
    %v3733 = vpop.f32.mrf.mxu0
    %v3734 = vadd.f32 0.0, %v3733
    %v3735 = vpop.f32.mrf.mxu0
    %v3736 = vadd.f32 0.0, %v3735
    %v3737 = vpop.f32.mrf.mxu0
    %v3738 = vadd.f32 0.0, %v3737
    %3739 = vdwg.mxu0
    %3740 = vmatprep.subr.bf16.mxu0 %v3326
    %3741 = vmatpush1.bf16.msra.mxu0 %v3325
    %3742 = vmatprep.subr.bf16.mxu0 %v3318
    %3743 = vmatpush1.bf16.msra.mxu0 %v3317
    %3744 = vmatprep.subr.bf16.mxu0 %v3310
    %3745 = vmatpush1.bf16.msra.mxu0 %v3309
    %3746 = vmatprep.subr.bf16.mxu0 %v3302
    %3747 = vmatpush1.bf16.msra.mxu0 %v3301
    %3748 = vmatprep.subr.bf16.mxu0 %v3294
    %3749 = vmatpush1.bf16.msra.mxu0 %v3293
    %3750 = vmatprep.subr.bf16.mxu0 %v3286
    %3751 = vmatpush1.bf16.msra.mxu0 %v3285
    %3752 = vmatprep.subr.bf16.mxu0 %v3278
    %3753 = vmatpush1.bf16.msra.mxu0 %v3277
    %3754 = vmatprep.subr.bf16.mxu0 %v3270
    %3755 = vmatpush1.bf16.msra.mxu0 %v3269
    %3756 = vmatprep.subr.bf16.mxu0 0
    %3757 = vmatpush2.bf16.msra.mxu0 0
    %3758 = vmatprep.subr.bf16.mxu0 %v3647
    %3759 = vmatpush2.bf16.msra.mxu0 %v3644
    %3760 = vmatprep.subr.bf16.mxu0 %v3374
    %3761 = vmatpush2.bf16.msra.mxu0 %v3373
    %3762 = vmatprep.subr.bf16.mxu0 %v3366
    %3763 = vmatpush2.bf16.msra.mxu0 %v3365
    %3764 = vmatprep.subr.bf16.mxu0 %v3358
    %3765 = vmatpush2.bf16.msra.mxu0 %v3357
    %3766 = vmatprep.subr.bf16.mxu0 %v3350
    %3767 = vmatpush2.bf16.msra.mxu0 %v3349
    %3768 = vmatprep.subr.bf16.mxu0 %v3342
    %3769 = vmatpush2.bf16.msra.mxu0 %v3341
    %3770 = vmatprep.subr.bf16.mxu0 %v3334
    %3771 = vmatpush2.bf16.msra.mxu0 %v3333
    %3772 = vmatprep.mubr.bf16.mxu0 %v3631
    %3773 = vmatmul.mubr.bf16.gmra.mxu0 %v1887
    %v3774 = vpop.f32.mrf.mxu0
    %v3775 = vadd.f32 %v3702, %v3774
    %v3776 = vpop.f32.mrf.mxu0
    %v3777 = vadd.f32 %v3704, %v3776
    %v3778 = vpop.f32.mrf.mxu0
    %v3779 = vadd.f32 %v3706, %v3778
    %v3780 = vpop.f32.mrf.mxu0
    %v3781 = vadd.f32 %v3708, %v3780
    %3782 = vmatprep.mubr.bf16.mxu0 %v3634
    %3783 = vmatmul.mubr.bf16.gmra.mxu0 %v1891
    %v3784 = vpop.f32.mrf.mxu0
    %v3785 = vadd.f32 %v3712, %v3784
    %v3786 = vpop.f32.mrf.mxu0
    %v3787 = vadd.f32 %v3714, %v3786
    %v3788 = vpop.f32.mrf.mxu0
    %v3789 = vadd.f32 %v3716, %v3788
    %v3790 = vpop.f32.mrf.mxu0
    %v3791 = vadd.f32 %v3718, %v3790
    %3792 = vmatprep.mubr.bf16.mxu0 %v3637
    %3793 = vmatmul.mubr.bf16.gmra.mxu0 %v1895
    %v3794 = vpop.f32.mrf.mxu0
    %v3795 = vadd.f32 %v3722, %v3794
    %v3796 = vpop.f32.mrf.mxu0
    %v3797 = vadd.f32 %v3724, %v3796
    %v3798 = vpop.f32.mrf.mxu0
    %v3799 = vadd.f32 %v3726, %v3798
    %v3800 = vpop.f32.mrf.mxu0
    %v3801 = vadd.f32 %v3728, %v3800
    %3802 = vmatprep.mubr.bf16.mxu0 %v3640
    %3803 = vmatmul.mubr.bf16.gmra.mxu0 %v1899
    %v3804 = vpop.f32.mrf.mxu0
    %v3805 = vadd.f32 %v3732, %v3804
    %v3806 = vpop.f32.mrf.mxu0
    %v3807 = vadd.f32 %v3734, %v3806
    %v3808 = vpop.f32.mrf.mxu0
    %v3809 = vadd.f32 %v3736, %v3808
    %v3810 = vpop.f32.mrf.mxu0
    %v3811 = vadd.f32 %v3738, %v3810
    %3812 = vdwg.mxu0
    %3813 = vmatprep.subr.bf16.mxu0 %v3200
    %3814 = vmatpush1.bf16.msra.mxu0 %v3199
    %3815 = vmatprep.subr.bf16.mxu0 %v3192
    %3816 = vmatpush1.bf16.msra.mxu0 %v3191
    %3817 = vmatprep.subr.bf16.mxu0 %v3184
    %3818 = vmatpush1.bf16.msra.mxu0 %v3183
    %3819 = vmatprep.subr.bf16.mxu0 %v3176
    %3820 = vmatpush1.bf16.msra.mxu0 %v3175
    %3821 = vmatprep.subr.bf16.mxu0 %v3168
    %3822 = vmatpush1.bf16.msra.mxu0 %v3167
    %3823 = vmatprep.subr.bf16.mxu0 %v3160
    %3824 = vmatpush1.bf16.msra.mxu0 %v3159
    %3825 = vmatprep.subr.bf16.mxu0 %v3152
    %3826 = vmatpush1.bf16.msra.mxu0 %v3151
    %3827 = vmatprep.subr.bf16.mxu0 %v3144
    %3828 = vmatpush1.bf16.msra.mxu0 %v3143
    %3829 = vmatprep.subr.bf16.mxu0 %v3264
    %3830 = vmatpush2.bf16.msra.mxu0 %v3263
    %3831 = vmatprep.subr.bf16.mxu0 %v3256
    %3832 = vmatpush2.bf16.msra.mxu0 %v3255
    %3833 = vmatprep.subr.bf16.mxu0 %v3248
    %3834 = vmatpush2.bf16.msra.mxu0 %v3247
    %3835 = vmatprep.subr.bf16.mxu0 %v3240
    %3836 = vmatpush2.bf16.msra.mxu0 %v3239
    %3837 = vmatprep.subr.bf16.mxu0 %v3232
    %3838 = vmatpush2.bf16.msra.mxu0 %v3231
    %3839 = vmatprep.subr.bf16.mxu0 %v3224
    %3840 = vmatpush2.bf16.msra.mxu0 %v3223
    %3841 = vmatprep.subr.bf16.mxu0 %v3216
    %3842 = vmatpush2.bf16.msra.mxu0 %v3215
    %3843 = vmatprep.subr.bf16.mxu0 %v3208
    %3844 = vmatpush2.bf16.msra.mxu0 %v3207
    %3845 = vmatprep.mubr.bf16.mxu0 %v1886
    %3846 = vmatmul.mubr.bf16.gmra.mxu0 %v1885
    %v3847 = vpop.f32.mrf.mxu0
    %v3848 = vadd.f32 0.0, %v3847
    %v3849 = vpop.f32.mrf.mxu0
    %v3850 = vadd.f32 0.0, %v3849
    %v3851 = vpop.f32.mrf.mxu0
    %v3852 = vadd.f32 0.0, %v3851
    %v3853 = vpop.f32.mrf.mxu0
    %v3854 = vadd.f32 0.0, %v3853
    %3855 = vmatprep.mubr.bf16.mxu0 %v1890
    %3856 = vmatmul.mubr.bf16.gmra.mxu0 %v1889
    %v3857 = vpop.f32.mrf.mxu0
    %v3858 = vadd.f32 0.0, %v3857
    %v3859 = vpop.f32.mrf.mxu0
    %v3860 = vadd.f32 0.0, %v3859
    %v3861 = vpop.f32.mrf.mxu0
    %v3862 = vadd.f32 0.0, %v3861
    %v3863 = vpop.f32.mrf.mxu0
    %v3864 = vadd.f32 0.0, %v3863
    %3865 = vmatprep.mubr.bf16.mxu0 %v1894
    %3866 = vmatmul.mubr.bf16.gmra.mxu0 %v1893
    %v3867 = vpop.f32.mrf.mxu0
    %v3868 = vadd.f32 0.0, %v3867
    %v3869 = vpop.f32.mrf.mxu0
    %v3870 = vadd.f32 0.0, %v3869
    %v3871 = vpop.f32.mrf.mxu0
    %v3872 = vadd.f32 0.0, %v3871
    %v3873 = vpop.f32.mrf.mxu0
    %v3874 = vadd.f32 0.0, %v3873
    %3875 = vmatprep.mubr.bf16.mxu0 %v1898
    %3876 = vmatmul.mubr.bf16.gmra.mxu0 %v1897
    %v3877 = vpop.f32.mrf.mxu0
    %v3878 = vadd.f32 0.0, %v3877
    %v3879 = vpop.f32.mrf.mxu0
    %v3880 = vadd.f32 0.0, %v3879
    %v3881 = vpop.f32.mrf.mxu0
    %v3882 = vadd.f32 0.0, %v3881
    %v3883 = vpop.f32.mrf.mxu0
    %v3884 = vadd.f32 0.0, %v3883
    %3885 = vdwg.mxu0
    %3886 = vmatprep.subr.bf16.mxu0 %v3328
    %3887 = vmatpush1.bf16.msra.mxu0 %v3327
    %3888 = vmatprep.subr.bf16.mxu0 %v3320
    %3889 = vmatpush1.bf16.msra.mxu0 %v3319
    %3890 = vmatprep.subr.bf16.mxu0 %v3312
    %3891 = vmatpush1.bf16.msra.mxu0 %v3311
    %3892 = vmatprep.subr.bf16.mxu0 %v3304
    %3893 = vmatpush1.bf16.msra.mxu0 %v3303
    %3894 = vmatprep.subr.bf16.mxu0 %v3296
    %3895 = vmatpush1.bf16.msra.mxu0 %v3295
    %3896 = vmatprep.subr.bf16.mxu0 %v3288
    %3897 = vmatpush1.bf16.msra.mxu0 %v3287
    %3898 = vmatprep.subr.bf16.mxu0 %v3280
    %3899 = vmatpush1.bf16.msra.mxu0 %v3279
    %3900 = vmatprep.subr.bf16.mxu0 %v3272
    %3901 = vmatpush1.bf16.msra.mxu0 %v3271
    %3902 = vmatprep.subr.bf16.mxu0 0
    %3903 = vmatpush2.bf16.msra.mxu0 0
    %3904 = vmatprep.subr.bf16.mxu0 %v3653
    %3905 = vmatpush2.bf16.msra.mxu0 %v3650
    %3906 = vmatprep.subr.bf16.mxu0 %v3376
    %3907 = vmatpush2.bf16.msra.mxu0 %v3375
    %3908 = vmatprep.subr.bf16.mxu0 %v3368
    %3909 = vmatpush2.bf16.msra.mxu0 %v3367
    %3910 = vmatprep.subr.bf16.mxu0 %v3360
    %3911 = vmatpush2.bf16.msra.mxu0 %v3359
    %3912 = vmatprep.subr.bf16.mxu0 %v3352
    %3913 = vmatpush2.bf16.msra.mxu0 %v3351
    %3914 = vmatprep.subr.bf16.mxu0 %v3344
    %3915 = vmatpush2.bf16.msra.mxu0 %v3343
    %3916 = vmatprep.subr.bf16.mxu0 %v3336
    %3917 = vmatpush2.bf16.msra.mxu0 %v3335
    %3918 = vmatprep.mubr.bf16.mxu0 %v3631
    %3919 = vmatmul.mubr.bf16.gmra.mxu0 %v1887
    %v3920 = vpop.f32.mrf.mxu0
    %v3921 = vadd.f32 %v3848, %v3920
    %v3922 = vpop.f32.mrf.mxu0
    %v3923 = vadd.f32 %v3850, %v3922
    %v3924 = vpop.f32.mrf.mxu0
    %v3925 = vadd.f32 %v3852, %v3924
    %v3926 = vpop.f32.mrf.mxu0
    %v3927 = vadd.f32 %v3854, %v3926
    %3928 = vmatprep.mubr.bf16.mxu0 %v3634
    %3929 = vmatmul.mubr.bf16.gmra.mxu0 %v1891
    %v3930 = vpop.f32.mrf.mxu0
    %v3931 = vadd.f32 %v3858, %v3930
    %v3932 = vpop.f32.mrf.mxu0
    %v3933 = vadd.f32 %v3860, %v3932
    %v3934 = vpop.f32.mrf.mxu0
    %v3935 = vadd.f32 %v3862, %v3934
    %v3936 = vpop.f32.mrf.mxu0
    %v3937 = vadd.f32 %v3864, %v3936
    %3938 = vmatprep.mubr.bf16.mxu0 %v3637
    %3939 = vmatmul.mubr.bf16.gmra.mxu0 %v1895
    %v3940 = vpop.f32.mrf.mxu0
    %v3941 = vadd.f32 %v3868, %v3940
    %v3942 = vpop.f32.mrf.mxu0
    %v3943 = vadd.f32 %v3870, %v3942
    %v3944 = vpop.f32.mrf.mxu0
    %v3945 = vadd.f32 %v3872, %v3944
    %v3946 = vpop.f32.mrf.mxu0
    %v3947 = vadd.f32 %v3874, %v3946
    %3948 = vmatprep.mubr.bf16.mxu0 %v3640
    %3949 = vmatmul.mubr.bf16.gmra.mxu0 %v1899
    %v3950 = vpop.f32.mrf.mxu0
    %v3951 = vadd.f32 %v3878, %v3950
    %v3952 = vpop.f32.mrf.mxu0
    %v3953 = vadd.f32 %v3880, %v3952
    %v3954 = vpop.f32.mrf.mxu0
    %v3955 = vadd.f32 %v3882, %v3954
    %v3956 = vpop.f32.mrf.mxu0
    %v3957 = vadd.f32 %v3884, %v3956
    %3958 = vdwg.mxu0
    %3959 = vmatprep.subr.bf16.mxu0 %v3202
    %3960 = vmatpush1.bf16.msra.mxu0 %v3201
    %3961 = vmatprep.subr.bf16.mxu0 %v3194
    %3962 = vmatpush1.bf16.msra.mxu0 %v3193
    %3963 = vmatprep.subr.bf16.mxu0 %v3186
    %3964 = vmatpush1.bf16.msra.mxu0 %v3185
    %3965 = vmatprep.subr.bf16.mxu0 %v3178
    %3966 = vmatpush1.bf16.msra.mxu0 %v3177
    %3967 = vmatprep.subr.bf16.mxu0 %v3170
    %3968 = vmatpush1.bf16.msra.mxu0 %v3169
    %3969 = vmatprep.subr.bf16.mxu0 %v3162
    %3970 = vmatpush1.bf16.msra.mxu0 %v3161
    %3971 = vmatprep.subr.bf16.mxu0 %v3154
    %3972 = vmatpush1.bf16.msra.mxu0 %v3153
    %3973 = vmatprep.subr.bf16.mxu0 %v3146
    %3974 = vmatpush1.bf16.msra.mxu0 %v3145
    %3975 = vmatprep.subr.bf16.mxu0 %v3266
    %3976 = vmatpush2.bf16.msra.mxu0 %v3265
    %3977 = vmatprep.subr.bf16.mxu0 %v3258
    %3978 = vmatpush2.bf16.msra.mxu0 %v3257
    %3979 = vmatprep.subr.bf16.mxu0 %v3250
    %3980 = vmatpush2.bf16.msra.mxu0 %v3249
    %3981 = vmatprep.subr.bf16.mxu0 %v3242
    %3982 = vmatpush2.bf16.msra.mxu0 %v3241
    %3983 = vmatprep.subr.bf16.mxu0 %v3234
    %3984 = vmatpush2.bf16.msra.mxu0 %v3233
    %3985 = vmatprep.subr.bf16.mxu0 %v3226
    %3986 = vmatpush2.bf16.msra.mxu0 %v3225
    %3987 = vmatprep.subr.bf16.mxu0 %v3218
    %3988 = vmatpush2.bf16.msra.mxu0 %v3217
    %3989 = vmatprep.subr.bf16.mxu0 %v3210
    %3990 = vmatpush2.bf16.msra.mxu0 %v3209
    %3991 = vmatprep.mubr.bf16.mxu0 %v1886
    %3992 = vmatmul.mubr.bf16.gmra.mxu0 %v1885
    %v3993 = vpop.f32.mrf.mxu0
    %v3994 = vadd.f32 0.0, %v3993
    %v3995 = vpop.f32.mrf.mxu0
    %v3996 = vadd.f32 0.0, %v3995
    %v3997 = vpop.f32.mrf.mxu0
    %v3998 = vadd.f32 0.0, %v3997
    %v3999 = vpop.f32.mrf.mxu0
    %v4000 = vadd.f32 0.0, %v3999
    %4001 = vmatprep.mubr.bf16.mxu0 %v1890
    %4002 = vmatmul.mubr.bf16.gmra.mxu0 %v1889
    %v4003 = vpop.f32.mrf.mxu0
    %v4004 = vadd.f32 0.0, %v4003
    %v4005 = vpop.f32.mrf.mxu0
    %v4006 = vadd.f32 0.0, %v4005
    %v4007 = vpop.f32.mrf.mxu0
    %v4008 = vadd.f32 0.0, %v4007
    %v4009 = vpop.f32.mrf.mxu0
    %v4010 = vadd.f32 0.0, %v4009
    %4011 = vmatprep.mubr.bf16.mxu0 %v1894
    %4012 = vmatmul.mubr.bf16.gmra.mxu0 %v1893
    %v4013 = vpop.f32.mrf.mxu0
    %v4014 = vadd.f32 0.0, %v4013
    %v4015 = vpop.f32.mrf.mxu0
    %v4016 = vadd.f32 0.0, %v4015
    %v4017 = vpop.f32.mrf.mxu0
    %v4018 = vadd.f32 0.0, %v4017
    %v4019 = vpop.f32.mrf.mxu0
    %v4020 = vadd.f32 0.0, %v4019
    %4021 = vmatprep.mubr.bf16.mxu0 %v1898
    %4022 = vmatmul.mubr.bf16.gmra.mxu0 %v1897
    %v4023 = vpop.f32.mrf.mxu0
    %v4024 = vadd.f32 0.0, %v4023
    %v4025 = vpop.f32.mrf.mxu0
    %v4026 = vadd.f32 0.0, %v4025
    %v4027 = vpop.f32.mrf.mxu0
    %v4028 = vadd.f32 0.0, %v4027
    %v4029 = vpop.f32.mrf.mxu0
    %v4030 = vadd.f32 0.0, %v4029
    %4031 = vdwg.mxu0
    %4032 = vmatprep.subr.bf16.mxu0 %v3330
    %4033 = vmatpush1.bf16.msra.mxu0 %v3329
    %4034 = vmatprep.subr.bf16.mxu0 %v3322
    %4035 = vmatpush1.bf16.msra.mxu0 %v3321
    %4036 = vmatprep.subr.bf16.mxu0 %v3314
    %4037 = vmatpush1.bf16.msra.mxu0 %v3313
    %4038 = vmatprep.subr.bf16.mxu0 %v3306
    %4039 = vmatpush1.bf16.msra.mxu0 %v3305
    %4040 = vmatprep.subr.bf16.mxu0 %v3298
    %4041 = vmatpush1.bf16.msra.mxu0 %v3297
    %4042 = vmatprep.subr.bf16.mxu0 %v3290
    %4043 = vmatpush1.bf16.msra.mxu0 %v3289
    %4044 = vmatprep.subr.bf16.mxu0 %v3282
    %4045 = vmatpush1.bf16.msra.mxu0 %v3281
    %4046 = vmatprep.subr.bf16.mxu0 %v3274
    %4047 = vmatpush1.bf16.msra.mxu0 %v3273
    %4048 = vmatprep.subr.bf16.mxu0 0
    %4049 = vmatpush2.bf16.msra.mxu0 0
    %4050 = vmatprep.subr.bf16.mxu0 %v3659
    %4051 = vmatpush2.bf16.msra.mxu0 %v3656
    %4052 = vmatprep.subr.bf16.mxu0 %v3378
    %4053 = vmatpush2.bf16.msra.mxu0 %v3377
    %4054 = vmatprep.subr.bf16.mxu0 %v3370
    %4055 = vmatpush2.bf16.msra.mxu0 %v3369
    %4056 = vmatprep.subr.bf16.mxu0 %v3362
    %4057 = vmatpush2.bf16.msra.mxu0 %v3361
    %4058 = vmatprep.subr.bf16.mxu0 %v3354
    %4059 = vmatpush2.bf16.msra.mxu0 %v3353
    %4060 = vmatprep.subr.bf16.mxu0 %v3346
    %4061 = vmatpush2.bf16.msra.mxu0 %v3345
    %4062 = vmatprep.subr.bf16.mxu0 %v3338
    %4063 = vmatpush2.bf16.msra.mxu0 %v3337
    %4064 = vmatprep.mubr.bf16.mxu0 %v3631
    %4065 = vmatmul.mubr.bf16.gmra.mxu0 %v1887
    %v4066 = vpop.f32.mrf.mxu0
    %v4067 = vadd.f32 %v3994, %v4066
    %v4068 = vpop.f32.mrf.mxu0
    %v4069 = vadd.f32 %v3996, %v4068
    %v4070 = vpop.f32.mrf.mxu0
    %v4071 = vadd.f32 %v3998, %v4070
    %v4072 = vpop.f32.mrf.mxu0
    %v4073 = vadd.f32 %v4000, %v4072
    %4074 = vmatprep.mubr.bf16.mxu0 %v3634
    %4075 = vmatmul.mubr.bf16.gmra.mxu0 %v1891
    %v4076 = vpop.f32.mrf.mxu0
    %v4077 = vadd.f32 %v4004, %v4076
    %v4078 = vpop.f32.mrf.mxu0
    %v4079 = vadd.f32 %v4006, %v4078
    %v4080 = vpop.f32.mrf.mxu0
    %v4081 = vadd.f32 %v4008, %v4080
    %v4082 = vpop.f32.mrf.mxu0
    %v4083 = vadd.f32 %v4010, %v4082
    %4084 = vmatprep.mubr.bf16.mxu0 %v3637
    %4085 = vmatmul.mubr.bf16.gmra.mxu0 %v1895
    %v4086 = vpop.f32.mrf.mxu0
    %v4087 = vadd.f32 %v4014, %v4086
    %v4088 = vpop.f32.mrf.mxu0
    %v4089 = vadd.f32 %v4016, %v4088
    %v4090 = vpop.f32.mrf.mxu0
    %v4091 = vadd.f32 %v4018, %v4090
    %v4092 = vpop.f32.mrf.mxu0
    %v4093 = vadd.f32 %v4020, %v4092
    %4094 = vmatprep.mubr.bf16.mxu0 %v3640
    %4095 = vmatmul.mubr.bf16.gmra.mxu0 %v1899
    %v4096 = vpop.f32.mrf.mxu0
    %v4097 = vadd.f32 %v4024, %v4096
    %v4098 = vpop.f32.mrf.mxu0
    %v4099 = vadd.f32 %v4026, %v4098
    %v4100 = vpop.f32.mrf.mxu0
    %v4101 = vadd.f32 %v4028, %v4100
    %v4102 = vpop.f32.mrf.mxu0
    %v4103 = vadd.f32 %v4030, %v4102
    %4104 = vdwg.mxu0
    %4105 = vmatprep.subr.bf16.mxu0 %v3204
    %4106 = vmatpush1.bf16.msra.mxu0 %v3203
    %4107 = vmatprep.subr.bf16.mxu0 %v3196
    %4108 = vmatpush1.bf16.msra.mxu0 %v3195
    %4109 = vmatprep.subr.bf16.mxu0 %v3188
    %4110 = vmatpush1.bf16.msra.mxu0 %v3187
    %4111 = vmatprep.subr.bf16.mxu0 %v3180
    %4112 = vmatpush1.bf16.msra.mxu0 %v3179
    %4113 = vmatprep.subr.bf16.mxu0 %v3172
    %4114 = vmatpush1.bf16.msra.mxu0 %v3171
    %4115 = vmatprep.subr.bf16.mxu0 %v3164
    %4116 = vmatpush1.bf16.msra.mxu0 %v3163
    %4117 = vmatprep.subr.bf16.mxu0 %v3156
    %4118 = vmatpush1.bf16.msra.mxu0 %v3155
    %4119 = vmatprep.subr.bf16.mxu0 %v3148
    %4120 = vmatpush1.bf16.msra.mxu0 %v3147
    %4121 = vmatprep.subr.bf16.mxu0 %v3268
    %4122 = vmatpush2.bf16.msra.mxu0 %v3267
    %4123 = vmatprep.subr.bf16.mxu0 %v3260
    %4124 = vmatpush2.bf16.msra.mxu0 %v3259
    %4125 = vmatprep.subr.bf16.mxu0 %v3252
    %4126 = vmatpush2.bf16.msra.mxu0 %v3251
    %4127 = vmatprep.subr.bf16.mxu0 %v3244
    %4128 = vmatpush2.bf16.msra.mxu0 %v3243
    %4129 = vmatprep.subr.bf16.mxu0 %v3236
    %4130 = vmatpush2.bf16.msra.mxu0 %v3235
    %4131 = vmatprep.subr.bf16.mxu0 %v3228
    %4132 = vmatpush2.bf16.msra.mxu0 %v3227
    %4133 = vmatprep.subr.bf16.mxu0 %v3220
    %4134 = vmatpush2.bf16.msra.mxu0 %v3219
    %4135 = vmatprep.subr.bf16.mxu0 %v3212
    %4136 = vmatpush2.bf16.msra.mxu0 %v3211
    %4137 = vmatprep.mubr.bf16.mxu0 %v1886
    %4138 = vmatmul.mubr.bf16.gmra.mxu0 %v1885
    %v4139 = vpop.f32.mrf.mxu0
    %v4140 = vadd.f32 0.0, %v4139
    %v4141 = vpop.f32.mrf.mxu0
    %v4142 = vadd.f32 0.0, %v4141
    %v4143 = vpop.f32.mrf.mxu0
    %v4144 = vadd.f32 0.0, %v4143
    %v4145 = vpop.f32.mrf.mxu0
    %v4146 = vadd.f32 0.0, %v4145
    %4147 = vmatprep.mubr.bf16.mxu0 %v1890
    %4148 = vmatmul.mubr.bf16.gmra.mxu0 %v1889
    %v4149 = vpop.f32.mrf.mxu0
    %v4150 = vadd.f32 0.0, %v4149
    %v4151 = vpop.f32.mrf.mxu0
    %v4152 = vadd.f32 0.0, %v4151
    %v4153 = vpop.f32.mrf.mxu0
    %v4154 = vadd.f32 0.0, %v4153
    %v4155 = vpop.f32.mrf.mxu0
    %v4156 = vadd.f32 0.0, %v4155
    %4157 = vmatprep.mubr.bf16.mxu0 %v1894
    %4158 = vmatmul.mubr.bf16.gmra.mxu0 %v1893
    %v4159 = vpop.f32.mrf.mxu0
    %v4160 = vadd.f32 0.0, %v4159
    %v4161 = vpop.f32.mrf.mxu0
    %v4162 = vadd.f32 0.0, %v4161
    %v4163 = vpop.f32.mrf.mxu0
    %v4164 = vadd.f32 0.0, %v4163
    %v4165 = vpop.f32.mrf.mxu0
    %v4166 = vadd.f32 0.0, %v4165
    %4167 = vmatprep.mubr.bf16.mxu0 %v1898
    %4168 = vmatmul.mubr.bf16.gmra.mxu0 %v1897
    %v4169 = vpop.f32.mrf.mxu0
    %v4170 = vadd.f32 0.0, %v4169
    %v4171 = vpop.f32.mrf.mxu0
    %v4172 = vadd.f32 0.0, %v4171
    %v4173 = vpop.f32.mrf.mxu0
    %v4174 = vadd.f32 0.0, %v4173
    %v4175 = vpop.f32.mrf.mxu0
    %v4176 = vadd.f32 0.0, %v4175
    %4177 = vdwg.mxu0
    %4178 = vmatprep.subr.bf16.mxu0 %v3332
    %4179 = vmatpush1.bf16.msra.mxu0 %v3331
    %4180 = vmatprep.subr.bf16.mxu0 %v3324
    %4181 = vmatpush1.bf16.msra.mxu0 %v3323
    %4182 = vmatprep.subr.bf16.mxu0 %v3316
    %4183 = vmatpush1.bf16.msra.mxu0 %v3315
    %4184 = vmatprep.subr.bf16.mxu0 %v3308
    %4185 = vmatpush1.bf16.msra.mxu0 %v3307
    %4186 = vmatprep.subr.bf16.mxu0 %v3300
    %4187 = vmatpush1.bf16.msra.mxu0 %v3299
    %4188 = vmatprep.subr.bf16.mxu0 %v3292
    %4189 = vmatpush1.bf16.msra.mxu0 %v3291
    %4190 = vmatprep.subr.bf16.mxu0 %v3284
    %4191 = vmatpush1.bf16.msra.mxu0 %v3283
    %4192 = vmatprep.subr.bf16.mxu0 %v3276
    %4193 = vmatpush1.bf16.msra.mxu0 %v3275
    %4194 = vmatprep.subr.bf16.mxu0 0
    %4195 = vmatpush2.bf16.msra.mxu0 0
    %4196 = vmatprep.subr.bf16.mxu0 %v3665
    %4197 = vmatpush2.bf16.msra.mxu0 %v3662
    %4198 = vmatprep.subr.bf16.mxu0 %v3380
    %4199 = vmatpush2.bf16.msra.mxu0 %v3379
    %4200 = vmatprep.subr.bf16.mxu0 %v3372
    %4201 = vmatpush2.bf16.msra.mxu0 %v3371
    %4202 = vmatprep.subr.bf16.mxu0 %v3364
    %4203 = vmatpush2.bf16.msra.mxu0 %v3363
    %4204 = vmatprep.subr.bf16.mxu0 %v3356
    %4205 = vmatpush2.bf16.msra.mxu0 %v3355
    %4206 = vmatprep.subr.bf16.mxu0 %v3348
    %4207 = vmatpush2.bf16.msra.mxu0 %v3347
    %4208 = vmatprep.subr.bf16.mxu0 %v3340
    %4209 = vmatpush2.bf16.msra.mxu0 %v3339
    %4210 = vmatprep.mubr.bf16.mxu0 %v3631
    %4211 = vmatmul.mubr.bf16.gmra.mxu0 %v1887
    %v4212 = vpop.f32.mrf.mxu0
    %v4213 = vadd.f32 %v4140, %v4212
    %v4214 = vpop.f32.mrf.mxu0
    %v4215 = vadd.f32 %v4142, %v4214
    %v4216 = vpop.f32.mrf.mxu0
    %v4217 = vadd.f32 %v4144, %v4216
    %v4218 = vpop.f32.mrf.mxu0
    %v4219 = vadd.f32 %v4146, %v4218
    %4220 = vmatprep.mubr.bf16.mxu0 %v3634
    %4221 = vmatmul.mubr.bf16.gmra.mxu0 %v1891
    %v4222 = vpop.f32.mrf.mxu0
    %v4223 = vadd.f32 %v4150, %v4222
    %v4224 = vpop.f32.mrf.mxu0
    %v4225 = vadd.f32 %v4152, %v4224
    %v4226 = vpop.f32.mrf.mxu0
    %v4227 = vadd.f32 %v4154, %v4226
    %v4228 = vpop.f32.mrf.mxu0
    %v4229 = vadd.f32 %v4156, %v4228
    %4230 = vmatprep.mubr.bf16.mxu0 %v3637
    %4231 = vmatmul.mubr.bf16.gmra.mxu0 %v1895
    %v4232 = vpop.f32.mrf.mxu0
    %v4233 = vadd.f32 %v4160, %v4232
    %v4234 = vpop.f32.mrf.mxu0
    %v4235 = vadd.f32 %v4162, %v4234
    %v4236 = vpop.f32.mrf.mxu0
    %v4237 = vadd.f32 %v4164, %v4236
    %v4238 = vpop.f32.mrf.mxu0
    %v4239 = vadd.f32 %v4166, %v4238
    %4240 = vmatprep.mubr.bf16.mxu0 %v3640
    %4241 = vmatmul.mubr.bf16.gmra.mxu0 %v1899
    %v4242 = vpop.f32.mrf.mxu0
    %v4243 = vadd.f32 %v4170, %v4242
    %v4244 = vpop.f32.mrf.mxu0
    %v4245 = vadd.f32 %v4172, %v4244
    %v4246 = vpop.f32.mrf.mxu0
    %v4247 = vadd.f32 %v4174, %v4246
    %v4248 = vpop.f32.mrf.mxu0
    %v4249 = vadd.f32 %v4176, %v4248
    %4250 = vdwg.mxu0
    %v4507 = vunpack.c.l.b16 %v1905
    %v4508 = vunpack.c.h.b16 %v1905
    %v4509 = vunpack.c.l.b16 %v1906
    %v4510 = vunpack.c.h.b16 %v1906
    %v4511 = vunpack.c.l.b16 %v1907
    %v4512 = vunpack.c.h.b16 %v1907
    %v4513 = vunpack.c.l.b16 %v1908
    %v4514 = vunpack.c.h.b16 %v1908
    %v4515 = vunpack.c.l.b16 %v1909
    %v4516 = vunpack.c.h.b16 %v1909
    %v4517 = vunpack.c.l.b16 %v1910
    %v4518 = vunpack.c.h.b16 %v1910
    %v4519 = vunpack.c.l.b16 %v1911
    %v4520 = vunpack.c.h.b16 %v1911
    %v4521 = vunpack.c.l.b16 %v1912
    %v4522 = vunpack.c.h.b16 %v1912
    %v4523 = vunpack.c.l.b16 %v1913
    %v4524 = vunpack.c.h.b16 %v1913
    %v4525 = vunpack.c.l.b16 %v1914
    %v4526 = vunpack.c.h.b16 %v1914
    %v4527 = vunpack.c.l.b16 %v1915
    %v4528 = vunpack.c.h.b16 %v1915
    %v4529 = vunpack.c.l.b16 %v1916
    %v4530 = vunpack.c.h.b16 %v1916
    %v4531 = vunpack.c.l.b16 %v1917
    %v4532 = vunpack.c.h.b16 %v1917
    %v4533 = vunpack.c.l.b16 %v1918
    %v4534 = vunpack.c.h.b16 %v1918
    %v4535 = vunpack.c.l.b16 %v1919
    %v4536 = vunpack.c.h.b16 %v1919
    %v4537 = vunpack.c.l.b16 %v1920
    %v4538 = vunpack.c.h.b16 %v1920
    %v4539 = vunpack.c.l.b16 %v1921
    %v4540 = vunpack.c.h.b16 %v1921
    %v4541 = vunpack.c.l.b16 %v1922
    %v4542 = vunpack.c.h.b16 %v1922
    %v4543 = vunpack.c.l.b16 %v1923
    %v4544 = vunpack.c.h.b16 %v1923
    %v4545 = vunpack.c.l.b16 %v1924
    %v4546 = vunpack.c.h.b16 %v1924
    %v4547 = vunpack.c.l.b16 %v1925
    %v4548 = vunpack.c.h.b16 %v1925
    %v4549 = vunpack.c.l.b16 %v1926
    %v4550 = vunpack.c.h.b16 %v1926
    %v4551 = vunpack.c.l.b16 %v1927
    %v4552 = vunpack.c.h.b16 %v1927
    %v4553 = vunpack.c.l.b16 %v1928
    %v4554 = vunpack.c.h.b16 %v1928
    %v4555 = vunpack.c.l.b16 %v1929
    %v4556 = vunpack.c.h.b16 %v1929
    %v4557 = vunpack.c.l.b16 %v1930
    %v4558 = vunpack.c.h.b16 %v1930
    %v4559 = vunpack.c.l.b16 %v1931
    %v4560 = vunpack.c.h.b16 %v1931
    %v4561 = vunpack.c.l.b16 %v1932
    %v4562 = vunpack.c.h.b16 %v1932
    %v4563 = vunpack.c.l.b16 %v1933
    %v4564 = vunpack.c.h.b16 %v1933
    %v4565 = vunpack.c.l.b16 %v1934
    %v4566 = vunpack.c.h.b16 %v1934
    %v4567 = vunpack.c.l.b16 %v1935
    %v4568 = vunpack.c.h.b16 %v1935
    %v4569 = vunpack.c.l.b16 %v1936
    %v4570 = vunpack.c.h.b16 %v1936
    %v4571 = vunpack.c.l.b16 %v1937
    %v4572 = vunpack.c.h.b16 %v1937
    %v4573 = vunpack.c.l.b16 %v1938
    %v4574 = vunpack.c.h.b16 %v1938
    %v4575 = vunpack.c.l.b16 %v1939
    %v4576 = vunpack.c.h.b16 %v1939
    %v4577 = vunpack.c.l.b16 %v1940
    %v4578 = vunpack.c.h.b16 %v1940
    %v4579 = vunpack.c.l.b16 %v1941
    %v4580 = vunpack.c.h.b16 %v1941
    %v4581 = vunpack.c.l.b16 %v1942
    %v4582 = vunpack.c.h.b16 %v1942
    %v4583 = vunpack.c.l.b16 %v1943
    %v4584 = vunpack.c.h.b16 %v1943
    %v4585 = vunpack.c.l.b16 %v1944
    %v4586 = vunpack.c.h.b16 %v1944
    %v4587 = vunpack.c.l.b16 %v1945
    %v4588 = vunpack.c.h.b16 %v1945
    %v4589 = vunpack.c.l.b16 %v1946
    %v4590 = vunpack.c.h.b16 %v1946
    %v4591 = vunpack.c.l.b16 %v1947
    %v4592 = vunpack.c.h.b16 %v1947
    %v4593 = vunpack.c.l.b16 %v1948
    %v4594 = vunpack.c.h.b16 %v1948
    %v4595 = vunpack.c.l.b16 %v1949
    %v4596 = vunpack.c.h.b16 %v1949
    %v4597 = vunpack.c.l.b16 %v1950
    %v4598 = vunpack.c.h.b16 %v1950
    %v4599 = vunpack.c.l.b16 %v1951
    %v4600 = vunpack.c.h.b16 %v1951
    %v4601 = vunpack.c.l.b16 %v1952
    %v4602 = vunpack.c.h.b16 %v1952
    %v4603 = vunpack.c.l.b16 %v1953
    %v4604 = vunpack.c.h.b16 %v1953
    %v4605 = vunpack.c.l.b16 %v1954
    %v4606 = vunpack.c.h.b16 %v1954
    %v4607 = vunpack.c.l.b16 %v1955
    %v4608 = vunpack.c.h.b16 %v1955
    %v4609 = vunpack.c.l.b16 %v1956
    %v4610 = vunpack.c.h.b16 %v1956
    %v4611 = vunpack.c.l.b16 %v1957
    %v4612 = vunpack.c.h.b16 %v1957
    %v4613 = vunpack.c.l.b16 %v1958
    %v4614 = vunpack.c.h.b16 %v1958
    %v4615 = vunpack.c.l.b16 %v1959
    %v4616 = vunpack.c.h.b16 %v1959
    %v4617 = vunpack.c.l.b16 %v1960
    %v4618 = vunpack.c.h.b16 %v1960
    %v4619 = vunpack.c.l.b16 %v1961
    %v4620 = vunpack.c.h.b16 %v1961
    %v4621 = vunpack.c.l.b16 %v1962
    %v4622 = vunpack.c.h.b16 %v1962
    %v4623 = vunpack.c.l.b16 %v1963
    %v4624 = vunpack.c.h.b16 %v1963
    %v4625 = vunpack.c.l.b16 %v1964
    %v4626 = vunpack.c.h.b16 %v1964
    %v4627 = vunpack.c.l.b16 %v1965
    %v4628 = vunpack.c.h.b16 %v1965
    %v4629 = vunpack.c.l.b16 %v1966
    %v4630 = vunpack.c.h.b16 %v1966
    %v4631 = vunpack.c.l.b16 %v1967
    %v4632 = vunpack.c.h.b16 %v1967
    %v4633 = vunpack.c.l.b16 %v1968
    %v4634 = vunpack.c.h.b16 %v1968
    %v4635 = vunpack.c.l.b16 %v1969
    %v4636 = vunpack.c.h.b16 %v1969
    %v4637 = vunpack.c.l.b16 %v1970
    %v4638 = vunpack.c.h.b16 %v1970
    %v4639 = vunpack.c.l.b16 %v1971
    %v4640 = vunpack.c.h.b16 %v1971
    %v4641 = vunpack.c.l.b16 %v1972
    %v4642 = vunpack.c.h.b16 %v1972
    %v4643 = vunpack.c.l.b16 %v1973
    %v4644 = vunpack.c.h.b16 %v1973
    %v4645 = vunpack.c.l.b16 %v1974
    %v4646 = vunpack.c.h.b16 %v1974
    %v4647 = vunpack.c.l.b16 %v1975
    %v4648 = vunpack.c.h.b16 %v1975
    %v4649 = vunpack.c.l.b16 %v1976
    %v4650 = vunpack.c.h.b16 %v1976
    %v4651 = vunpack.c.l.b16 %v1977
    %v4652 = vunpack.c.h.b16 %v1977
    %v4653 = vunpack.c.l.b16 %v1978
    %v4654 = vunpack.c.h.b16 %v1978
    %v4655 = vunpack.c.l.b16 %v1979
    %v4656 = vunpack.c.h.b16 %v1979
    %v4657 = vunpack.c.l.b16 %v1980
    %v4658 = vunpack.c.h.b16 %v1980
    %v4659 = vunpack.c.l.b16 %v1981
    %v4660 = vunpack.c.h.b16 %v1981
    %v4661 = vunpack.c.l.b16 %v1982
    %v4662 = vunpack.c.h.b16 %v1982
    %v4663 = vunpack.c.l.b16 %v1983
    %v4664 = vunpack.c.h.b16 %v1983
    %v4665 = vunpack.c.l.b16 %v1984
    %v4666 = vunpack.c.h.b16 %v1984
    %v4667 = vunpack.c.l.b16 %v1985
    %v4668 = vunpack.c.h.b16 %v1985
    %v4669 = vunpack.c.l.b16 %v1986
    %v4670 = vunpack.c.h.b16 %v1986
    %v4671 = vunpack.c.l.b16 %v1987
    %v4672 = vunpack.c.h.b16 %v1987
    %v4673 = vunpack.c.l.b16 %v1988
    %v4674 = vunpack.c.h.b16 %v1988
    %v4675 = vunpack.c.l.b16 %v1989
    %v4676 = vunpack.c.h.b16 %v1989
    %v4677 = vunpack.c.l.b16 %v1990
    %v4678 = vunpack.c.h.b16 %v1990
    %v4679 = vunpack.c.l.b16 %v1991
    %v4680 = vunpack.c.h.b16 %v1991
    %v4681 = vunpack.c.l.b16 %v1992
    %v4682 = vunpack.c.h.b16 %v1992
    %v4683 = vunpack.c.l.b16 %v1993
    %v4684 = vunpack.c.h.b16 %v1993
    %v4685 = vunpack.c.l.b16 %v1994
    %v4686 = vunpack.c.h.b16 %v1994
    %v4687 = vunpack.c.l.b16 %v1995
    %v4688 = vunpack.c.h.b16 %v1995
    %v4689 = vunpack.c.l.b16 %v1996
    %v4690 = vunpack.c.h.b16 %v1996
    %v4691 = vunpack.c.l.b16 %v1997
    %v4692 = vunpack.c.h.b16 %v1997
    %v4693 = vunpack.c.l.b16 %v1998
    %v4694 = vunpack.c.h.b16 %v1998
    %v4695 = vunpack.c.l.b16 %v1999
    %v4696 = vunpack.c.h.b16 %v1999
    %v4697 = vunpack.c.l.b16 %v2000
    %v4698 = vunpack.c.h.b16 %v2000
    %v4699 = vunpack.c.l.b16 %v2001
    %v4700 = vunpack.c.h.b16 %v2001
    %v4701 = vunpack.c.l.b16 %v2002
    %v4702 = vunpack.c.h.b16 %v2002
    %v4703 = vunpack.c.l.b16 %v2003
    %v4704 = vunpack.c.h.b16 %v2003
    %v4705 = vunpack.c.l.b16 %v2004
    %v4706 = vunpack.c.h.b16 %v2004
    %v4707 = vunpack.c.l.b16 %v2005
    %v4708 = vunpack.c.h.b16 %v2005
    %v4709 = vunpack.c.l.b16 %v2006
    %v4710 = vunpack.c.h.b16 %v2006
    %v4711 = vunpack.c.l.b16 %v2007
    %v4712 = vunpack.c.h.b16 %v2007
    %v4713 = vunpack.c.l.b16 %v2008
    %v4714 = vunpack.c.h.b16 %v2008
    %v4715 = vunpack.c.l.b16 %v2009
    %v4716 = vunpack.c.h.b16 %v2009
    %v4717 = vunpack.c.l.b16 %v2010
    %v4718 = vunpack.c.h.b16 %v2010
    %v4719 = vunpack.c.l.b16 %v2011
    %v4720 = vunpack.c.h.b16 %v2011
    %v4721 = vunpack.c.l.b16 %v2012
    %v4722 = vunpack.c.h.b16 %v2012
    %v4723 = vunpack.c.l.b16 %v2013
    %v4724 = vunpack.c.h.b16 %v2013
    %v4725 = vunpack.c.l.b16 %v2014
    %v4726 = vunpack.c.h.b16 %v2014
    %v4727 = vunpack.c.l.b16 %v2015
    %v4728 = vunpack.c.h.b16 %v2015
    %v4729 = vunpack.c.l.b16 %v2016
    %v4730 = vunpack.c.h.b16 %v2016
    %v4731 = vunpack.c.l.b16 %v2017
    %v4732 = vunpack.c.h.b16 %v2017
    %v4733 = vunpack.c.l.b16 %v2018
    %v4734 = vunpack.c.h.b16 %v2018
    %v4735 = vunpack.c.l.b16 %v2019
    %v4736 = vunpack.c.h.b16 %v2019
    %v4737 = vunpack.c.l.b16 %v2020
    %v4738 = vunpack.c.h.b16 %v2020
    %v4739 = vunpack.c.l.b16 %v2021
    %v4740 = vunpack.c.h.b16 %v2021
    %v4741 = vunpack.c.l.b16 %v2022
    %v4742 = vunpack.c.h.b16 %v2022
    %v4743 = vunpack.c.l.b16 %v2023
    %v4744 = vunpack.c.h.b16 %v2023
    %v4745 = vunpack.c.l.b16 %v2024
    %v4746 = vunpack.c.h.b16 %v2024
    %v4747 = vunpack.c.l.b16 %v2025
    %v4748 = vunpack.c.h.b16 %v2025
    %v4749 = vunpack.c.l.b16 %v2026
    %v4750 = vunpack.c.h.b16 %v2026
    %v4751 = vunpack.c.l.b16 %v2027
    %v4752 = vunpack.c.h.b16 %v2027
    %v4753 = vunpack.c.l.b16 %v2028
    %v4754 = vunpack.c.h.b16 %v2028
    %v4755 = vunpack.c.l.b16 %v2029
    %v4756 = vunpack.c.h.b16 %v2029
    %v4757 = vunpack.c.l.b16 %v2030
    %v4758 = vunpack.c.h.b16 %v2030
    %v4759 = vunpack.c.l.b16 %v2031
    %v4760 = vunpack.c.h.b16 %v2031
    %v4761 = vunpack.c.l.b16 %v2032
    %v4762 = vunpack.c.h.b16 %v2032
    %v4763 = vunpack.c.l.b16 %v2033
    %v4764 = vunpack.c.h.b16 %v2033
    %v4765 = vunpack.c.l.b16 %v2034
    %v4766 = vunpack.c.h.b16 %v2034
    %v4767 = vunpack.c.l.b16 %v2035
    %v4768 = vunpack.c.h.b16 %v2035
    %v4769 = vunpack.c.l.b16 %v2036
    %v4770 = vunpack.c.h.b16 %v2036
    %v4771 = vunpack.c.l.b16 %v2037
    %v4772 = vunpack.c.h.b16 %v2037
    %v4773 = vunpack.c.l.b16 %v2038
    %v4774 = vunpack.c.h.b16 %v2038
    %v4775 = vunpack.c.l.b16 %v2039
    %v4776 = vunpack.c.h.b16 %v2039
    %v4777 = vunpack.c.l.b16 %v2040
    %v4778 = vunpack.c.h.b16 %v2040
    %v4779 = vunpack.c.l.b16 %v2041
    %v4780 = vunpack.c.h.b16 %v2041
    %v4781 = vunpack.c.l.b16 %v2042
    %v4782 = vunpack.c.h.b16 %v2042
    %v4783 = vunpack.c.l.b16 %v2043
    %v4784 = vunpack.c.h.b16 %v2043
    %v4785 = vunpack.c.l.b16 %v2044
    %v4786 = vunpack.c.h.b16 %v2044
    %v4787 = vunpack.c.l.b16 %v2045
    %v4788 = vunpack.c.h.b16 %v2045
    %v4789 = vunpack.c.l.b16 %v2046
    %v4790 = vunpack.c.h.b16 %v2046
    %v4791 = vunpack.c.l.b16 %v2047
    %v4792 = vunpack.c.h.b16 %v2047
    %v4793 = vunpack.c.l.b16 %v2048
    %v4794 = vunpack.c.h.b16 %v2048
    %v4795 = vunpack.c.l.b16 %v2049
    %v4796 = vunpack.c.h.b16 %v2049
    %v4797 = vunpack.c.l.b16 %v2050
    %v4798 = vunpack.c.h.b16 %v2050
    %v4799 = vunpack.c.l.b16 %v2051
    %v4800 = vunpack.c.h.b16 %v2051
    %v4801 = vunpack.c.l.b16 %v2052
    %v4802 = vunpack.c.h.b16 %v2052
    %v4803 = vunpack.c.l.b16 %v2053
    %v4804 = vunpack.c.h.b16 %v2053
    %v4805 = vunpack.c.l.b16 %v2054
    %v4806 = vunpack.c.h.b16 %v2054
    %v4807 = vunpack.c.l.b16 %v2055
    %v4808 = vunpack.c.h.b16 %v2055
    %v4809 = vunpack.c.l.b16 %v2056
    %v4810 = vunpack.c.h.b16 %v2056
    %v4811 = vunpack.c.l.b16 %v2057
    %v4812 = vunpack.c.h.b16 %v2057
    %v4813 = vunpack.c.l.b16 %v2058
    %v4814 = vunpack.c.h.b16 %v2058
    %v4815 = vunpack.c.l.b16 %v2059
    %v4816 = vunpack.c.h.b16 %v2059
    %v4817 = vunpack.c.l.b16 %v2060
    %v4818 = vunpack.c.h.b16 %v2060
    %v4819 = vunpack.c.l.b16 %v2061
    %v4820 = vunpack.c.h.b16 %v2061
    %v4821 = vunpack.c.l.b16 %v2062
    %v4822 = vunpack.c.h.b16 %v2062
    %v4823 = vunpack.c.l.b16 %v2063
    %v4824 = vunpack.c.h.b16 %v2063
    %v4825 = vunpack.c.l.b16 %v2064
    %v4826 = vunpack.c.h.b16 %v2064
    %v4827 = vunpack.c.l.b16 %v2065
    %v4828 = vunpack.c.h.b16 %v2065
    %v4829 = vunpack.c.l.b16 %v2066
    %v4830 = vunpack.c.h.b16 %v2066
    %v4831 = vunpack.c.l.b16 %v2067
    %v4832 = vunpack.c.h.b16 %v2067
    %v4833 = vunpack.c.l.b16 %v2068
    %v4834 = vunpack.c.h.b16 %v2068
    %v4835 = vunpack.c.l.b16 %v2069
    %v4836 = vunpack.c.h.b16 %v2069
    %v4837 = vunpack.c.l.b16 %v2070
    %v4838 = vunpack.c.h.b16 %v2070
    %v4839 = vunpack.c.l.b16 %v2071
    %v4840 = vunpack.c.h.b16 %v2071
    %v4841 = vunpack.c.l.b16 %v2072
    %v4842 = vunpack.c.h.b16 %v2072
    %v4843 = vunpack.c.l.b16 %v2073
    %v4844 = vunpack.c.h.b16 %v2073
    %v4845 = vunpack.c.l.b16 %v2074
    %v4846 = vunpack.c.h.b16 %v2074
    %v4847 = vunpack.c.l.b16 %v2075
    %v4848 = vunpack.c.h.b16 %v2075
    %v4849 = vunpack.c.l.b16 %v2076
    %v4850 = vunpack.c.h.b16 %v2076
    %v4851 = vunpack.c.l.b16 %v2077
    %v4852 = vunpack.c.h.b16 %v2077
    %v4853 = vunpack.c.l.b16 %v2078
    %v4854 = vunpack.c.h.b16 %v2078
    %v4855 = vunpack.c.l.b16 %v2079
    %v4856 = vunpack.c.h.b16 %v2079
    %v4857 = vunpack.c.l.b16 %v2080
    %v4858 = vunpack.c.h.b16 %v2080
    %v4859 = vunpack.c.l.b16 %v2081
    %v4860 = vunpack.c.h.b16 %v2081
    %v4861 = vunpack.c.l.b16 %v2082
    %v4862 = vunpack.c.h.b16 %v2082
    %v4863 = vunpack.c.l.b16 %v2083
    %v4864 = vunpack.c.h.b16 %v2083
    %v4865 = vunpack.c.l.b16 %v2084
    %v4866 = vunpack.c.h.b16 %v2084
    %v4867 = vunpack.c.l.b16 %v2085
    %v4868 = vunpack.c.h.b16 %v2085
    %v4869 = vunpack.c.l.b16 %v2086
    %v4870 = vunpack.c.h.b16 %v2086
    %v4871 = vunpack.c.l.b16 %v2087
    %v4872 = vunpack.c.h.b16 %v2087
    %v4873 = vunpack.c.l.b16 %v2088
    %v4874 = vunpack.c.h.b16 %v2088
    %v4875 = vunpack.c.l.b16 %v2089
    %v4876 = vunpack.c.h.b16 %v2089
    %v4877 = vunpack.c.l.b16 %v2090
    %v4878 = vunpack.c.h.b16 %v2090
    %v4879 = vunpack.c.l.b16 %v2091
    %v4880 = vunpack.c.h.b16 %v2091
    %v4881 = vunpack.c.l.b16 %v2092
    %v4882 = vunpack.c.h.b16 %v2092
    %v4883 = vunpack.c.l.b16 %v2093
    %v4884 = vunpack.c.h.b16 %v2093
    %v4885 = vunpack.c.l.b16 %v2094
    %v4886 = vunpack.c.h.b16 %v2094
    %v4887 = vunpack.c.l.b16 %v2095
    %v4888 = vunpack.c.h.b16 %v2095
    %v4889 = vunpack.c.l.b16 %v2096
    %v4890 = vunpack.c.h.b16 %v2096
    %v4891 = vunpack.c.l.b16 %v2097
    %v4892 = vunpack.c.h.b16 %v2097
    %v4893 = vunpack.c.l.b16 %v2098
    %v4894 = vunpack.c.h.b16 %v2098
    %v4895 = vunpack.c.l.b16 %v2099
    %v4896 = vunpack.c.h.b16 %v2099
    %v4897 = vunpack.c.l.b16 %v2100
    %v4898 = vunpack.c.h.b16 %v2100
    %v4899 = vunpack.c.l.b16 %v2101
    %v4900 = vunpack.c.h.b16 %v2101
    %v4901 = vunpack.c.l.b16 %v2102
    %v4902 = vunpack.c.h.b16 %v2102
    %v4903 = vunpack.c.l.b16 %v2103
    %v4904 = vunpack.c.h.b16 %v2103
    %v4905 = vunpack.c.l.b16 %v2104
    %v4906 = vunpack.c.h.b16 %v2104
    %v4907 = vunpack.c.l.b16 %v2105
    %v4908 = vunpack.c.h.b16 %v2105
    %v4909 = vunpack.c.l.b16 %v2106
    %v4910 = vunpack.c.h.b16 %v2106
    %v4911 = vunpack.c.l.b16 %v2107
    %v4912 = vunpack.c.h.b16 %v2107
    %v4913 = vunpack.c.l.b16 %v2108
    %v4914 = vunpack.c.h.b16 %v2108
    %v4915 = vunpack.c.l.b16 %v2109
    %v4916 = vunpack.c.h.b16 %v2109
    %v4917 = vunpack.c.l.b16 %v2110
    %v4918 = vunpack.c.h.b16 %v2110
    %v4919 = vunpack.c.l.b16 %v2111
    %v4920 = vunpack.c.h.b16 %v2111
    %v4921 = vunpack.c.l.b16 %v2112
    %v4922 = vunpack.c.h.b16 %v2112
    %v4923 = vunpack.c.l.b16 %v2113
    %v4924 = vunpack.c.h.b16 %v2113
    %v4925 = vunpack.c.l.b16 %v2114
    %v4926 = vunpack.c.h.b16 %v2114
    %v4927 = vunpack.c.l.b16 %v2115
    %v4928 = vunpack.c.h.b16 %v2115
    %v4929 = vunpack.c.l.b16 %v2116
    %v4930 = vunpack.c.h.b16 %v2116
    %v4931 = vunpack.c.l.b16 %v2117
    %v4932 = vunpack.c.h.b16 %v2117
    %v4933 = vunpack.c.l.b16 %v2118
    %v4934 = vunpack.c.h.b16 %v2118
    %v4935 = vunpack.c.l.b16 %v2119
    %v4936 = vunpack.c.h.b16 %v2119
    %v4937 = vunpack.c.l.b16 %v2120
    %v4938 = vunpack.c.h.b16 %v2120
    %v4939 = vunpack.c.l.b16 %v2121
    %v4940 = vunpack.c.h.b16 %v2121
    %v4941 = vunpack.c.l.b16 %v2122
    %v4942 = vunpack.c.h.b16 %v2122
    %v4943 = vunpack.c.l.b16 %v2123
    %v4944 = vunpack.c.h.b16 %v2123
    %v4945 = vunpack.c.l.b16 %v2124
    %v4946 = vunpack.c.h.b16 %v2124
    %v4947 = vunpack.c.l.b16 %v2125
    %v4948 = vunpack.c.h.b16 %v2125
    %v4949 = vunpack.c.l.b16 %v2126
    %v4950 = vunpack.c.h.b16 %v2126
    %v4951 = vunpack.c.l.b16 %v2127
    %v4952 = vunpack.c.h.b16 %v2127
    %v4953 = vunpack.c.l.b16 %v2128
    %v4954 = vunpack.c.h.b16 %v2128
    %v4955 = vunpack.c.l.b16 %v2129
    %v4956 = vunpack.c.h.b16 %v2129
    %v4957 = vunpack.c.l.b16 %v2130
    %v4958 = vunpack.c.h.b16 %v2130
    %v4959 = vunpack.c.l.b16 %v2131
    %v4960 = vunpack.c.h.b16 %v2131
    %v4961 = vunpack.c.l.b16 %v2132
    %v4962 = vunpack.c.h.b16 %v2132
    %v4963 = vunpack.c.l.b16 %v2133
    %v4964 = vunpack.c.h.b16 %v2133
    %v4965 = vunpack.c.l.b16 %v2134
    %v4966 = vunpack.c.h.b16 %v2134
    %v4967 = vunpack.c.l.b16 %v2135
    %v4968 = vunpack.c.h.b16 %v2135
    %v4969 = vunpack.c.l.b16 %v2136
    %v4970 = vunpack.c.h.b16 %v2136
    %v4971 = vunpack.c.l.b16 %v2137
    %v4972 = vunpack.c.h.b16 %v2137
    %v4973 = vunpack.c.l.b16 %v2138
    %v4974 = vunpack.c.h.b16 %v2138
    %v4975 = vunpack.c.l.b16 %v2139
    %v4976 = vunpack.c.h.b16 %v2139
    %v4977 = vunpack.c.l.b16 %v2140
    %v4978 = vunpack.c.h.b16 %v2140
    %v4979 = vunpack.c.l.b16 %v2141
    %v4980 = vunpack.c.h.b16 %v2141
    %v4981 = vunpack.c.l.b16 %v2142
    %v4982 = vunpack.c.h.b16 %v2142
    %v4983 = vunpack.c.l.b16 %v2143
    %v4984 = vunpack.c.h.b16 %v2143
    %v4985 = vunpack.c.l.b16 %v2144
    %v4986 = vunpack.c.h.b16 %v2144
    %v4987 = vunpack.c.l.b16 %v2145
    %v4988 = vunpack.c.h.b16 %v2145
    %v4989 = vunpack.c.l.b16 %v2146
    %v4990 = vunpack.c.h.b16 %v2146
    %v4991 = vunpack.c.l.b16 %v2147
    %v4992 = vunpack.c.h.b16 %v2147
    %v4993 = vunpack.c.l.b16 %v2148
    %v4994 = vunpack.c.h.b16 %v2148
    %v4995 = vunpack.c.l.b16 %v2149
    %v4996 = vunpack.c.h.b16 %v2149
    %v4997 = vunpack.c.l.b16 %v2150
    %v4998 = vunpack.c.h.b16 %v2150
    %v4999 = vunpack.c.l.b16 %v2151
    %v5000 = vunpack.c.h.b16 %v2151
    %v5001 = vunpack.c.l.b16 %v2152
    %v5002 = vunpack.c.h.b16 %v2152
    %v5003 = vunpack.c.l.b16 %v2153
    %v5004 = vunpack.c.h.b16 %v2153
    %v5005 = vunpack.c.l.b16 %v2154
    %v5006 = vunpack.c.h.b16 %v2154
    %v5007 = vunpack.c.l.b16 %v2155
    %v5008 = vunpack.c.h.b16 %v2155
    %v5009 = vunpack.c.l.b16 %v2156
    %v5010 = vunpack.c.h.b16 %v2156
    %v5011 = vunpack.c.l.b16 %v2157
    %v5012 = vunpack.c.h.b16 %v2157
    %v5013 = vunpack.c.l.b16 %v2158
    %v5014 = vunpack.c.h.b16 %v2158
    %v5015 = vunpack.c.l.b16 %v2159
    %v5016 = vunpack.c.h.b16 %v2159
    %v5017 = vunpack.c.l.b16 %v2160
    %v5018 = vunpack.c.h.b16 %v2160
    %v5019 = vpack.c.b16 %v4515, %v4507
    %v5020 = vpack.c.b16 %v4516, %v4508
    %v5021 = vpack.c.b16 %v4517, %v4509
    %v5022 = vpack.c.b16 %v4518, %v4510
    %v5023 = vpack.c.b16 %v4519, %v4511
    %v5024 = vpack.c.b16 %v4520, %v4512
    %v5025 = vpack.c.b16 %v4521, %v4513
    %v5026 = vpack.c.b16 %v4522, %v4514
    %v5027 = vpack.c.b16 %v4531, %v4523
    %v5028 = vpack.c.b16 %v4532, %v4524
    %v5029 = vpack.c.b16 %v4533, %v4525
    %v5030 = vpack.c.b16 %v4534, %v4526
    %v5031 = vpack.c.b16 %v4535, %v4527
    %v5032 = vpack.c.b16 %v4536, %v4528
    %v5033 = vpack.c.b16 %v4537, %v4529
    %v5034 = vpack.c.b16 %v4538, %v4530
    %v5035 = vpack.c.b16 %v4547, %v4539
    %v5036 = vpack.c.b16 %v4548, %v4540
    %v5037 = vpack.c.b16 %v4549, %v4541
    %v5038 = vpack.c.b16 %v4550, %v4542
    %v5039 = vpack.c.b16 %v4551, %v4543
    %v5040 = vpack.c.b16 %v4552, %v4544
    %v5041 = vpack.c.b16 %v4553, %v4545
    %v5042 = vpack.c.b16 %v4554, %v4546
    %v5043 = vpack.c.b16 %v4563, %v4555
    %v5044 = vpack.c.b16 %v4564, %v4556
    %v5045 = vpack.c.b16 %v4565, %v4557
    %v5046 = vpack.c.b16 %v4566, %v4558
    %v5047 = vpack.c.b16 %v4567, %v4559
    %v5048 = vpack.c.b16 %v4568, %v4560
    %v5049 = vpack.c.b16 %v4569, %v4561
    %v5050 = vpack.c.b16 %v4570, %v4562
    %v5051 = vpack.c.b16 %v4579, %v4571
    %v5052 = vpack.c.b16 %v4580, %v4572
    %v5053 = vpack.c.b16 %v4581, %v4573
    %v5054 = vpack.c.b16 %v4582, %v4574
    %v5055 = vpack.c.b16 %v4583, %v4575
    %v5056 = vpack.c.b16 %v4584, %v4576
    %v5057 = vpack.c.b16 %v4585, %v4577
    %v5058 = vpack.c.b16 %v4586, %v4578
    %v5059 = vpack.c.b16 %v4595, %v4587
    %v5060 = vpack.c.b16 %v4596, %v4588
    %v5061 = vpack.c.b16 %v4597, %v4589
    %v5062 = vpack.c.b16 %v4598, %v4590
    %v5063 = vpack.c.b16 %v4599, %v4591
    %v5064 = vpack.c.b16 %v4600, %v4592
    %v5065 = vpack.c.b16 %v4601, %v4593
    %v5066 = vpack.c.b16 %v4602, %v4594
    %v5067 = vpack.c.b16 %v4611, %v4603
    %v5068 = vpack.c.b16 %v4612, %v4604
    %v5069 = vpack.c.b16 %v4613, %v4605
    %v5070 = vpack.c.b16 %v4614, %v4606
    %v5071 = vpack.c.b16 %v4615, %v4607
    %v5072 = vpack.c.b16 %v4616, %v4608
    %v5073 = vpack.c.b16 %v4617, %v4609
    %v5074 = vpack.c.b16 %v4618, %v4610
    %v5075 = vpack.c.b16 %v4627, %v4619
    %v5076 = vpack.c.b16 %v4628, %v4620
    %v5077 = vpack.c.b16 %v4629, %v4621
    %v5078 = vpack.c.b16 %v4630, %v4622
    %v5079 = vpack.c.b16 %v4631, %v4623
    %v5080 = vpack.c.b16 %v4632, %v4624
    %v5081 = vpack.c.b16 %v4633, %v4625
    %v5082 = vpack.c.b16 %v4634, %v4626
    %v5083 = vpack.c.b16 %v4643, %v4635
    %v5084 = vpack.c.b16 %v4644, %v4636
    %v5085 = vpack.c.b16 %v4645, %v4637
    %v5086 = vpack.c.b16 %v4646, %v4638
    %v5087 = vpack.c.b16 %v4647, %v4639
    %v5088 = vpack.c.b16 %v4648, %v4640
    %v5089 = vpack.c.b16 %v4649, %v4641
    %v5090 = vpack.c.b16 %v4650, %v4642
    %v5091 = vpack.c.b16 %v4659, %v4651
    %v5092 = vpack.c.b16 %v4660, %v4652
    %v5093 = vpack.c.b16 %v4661, %v4653
    %v5094 = vpack.c.b16 %v4662, %v4654
    %v5095 = vpack.c.b16 %v4663, %v4655
    %v5096 = vpack.c.b16 %v4664, %v4656
    %v5097 = vpack.c.b16 %v4665, %v4657
    %v5098 = vpack.c.b16 %v4666, %v4658
    %v5099 = vpack.c.b16 %v4675, %v4667
    %v5100 = vpack.c.b16 %v4676, %v4668
    %v5101 = vpack.c.b16 %v4677, %v4669
    %v5102 = vpack.c.b16 %v4678, %v4670
    %v5103 = vpack.c.b16 %v4679, %v4671
    %v5104 = vpack.c.b16 %v4680, %v4672
    %v5105 = vpack.c.b16 %v4681, %v4673
    %v5106 = vpack.c.b16 %v4682, %v4674
    %v5107 = vpack.c.b16 %v4691, %v4683
    %v5108 = vpack.c.b16 %v4692, %v4684
    %v5109 = vpack.c.b16 %v4693, %v4685
    %v5110 = vpack.c.b16 %v4694, %v4686
    %v5111 = vpack.c.b16 %v4695, %v4687
    %v5112 = vpack.c.b16 %v4696, %v4688
    %v5113 = vpack.c.b16 %v4697, %v4689
    %v5114 = vpack.c.b16 %v4698, %v4690
    %v5115 = vpack.c.b16 %v4707, %v4699
    %v5116 = vpack.c.b16 %v4708, %v4700
    %v5117 = vpack.c.b16 %v4709, %v4701
    %v5118 = vpack.c.b16 %v4710, %v4702
    %v5119 = vpack.c.b16 %v4711, %v4703
    %v5120 = vpack.c.b16 %v4712, %v4704
    %v5121 = vpack.c.b16 %v4713, %v4705
    %v5122 = vpack.c.b16 %v4714, %v4706
    %v5123 = vpack.c.b16 %v4723, %v4715
    %v5124 = vpack.c.b16 %v4724, %v4716
    %v5125 = vpack.c.b16 %v4725, %v4717
    %v5126 = vpack.c.b16 %v4726, %v4718
    %v5127 = vpack.c.b16 %v4727, %v4719
    %v5128 = vpack.c.b16 %v4728, %v4720
    %v5129 = vpack.c.b16 %v4729, %v4721
    %v5130 = vpack.c.b16 %v4730, %v4722
    %v5131 = vpack.c.b16 %v4739, %v4731
    %v5132 = vpack.c.b16 %v4740, %v4732
    %v5133 = vpack.c.b16 %v4741, %v4733
    %v5134 = vpack.c.b16 %v4742, %v4734
    %v5135 = vpack.c.b16 %v4743, %v4735
    %v5136 = vpack.c.b16 %v4744, %v4736
    %v5137 = vpack.c.b16 %v4745, %v4737
    %v5138 = vpack.c.b16 %v4746, %v4738
    %v5139 = vpack.c.b16 %v4755, %v4747
    %v5140 = vpack.c.b16 %v4756, %v4748
    %v5141 = vpack.c.b16 %v4757, %v4749
    %v5142 = vpack.c.b16 %v4758, %v4750
    %v5143 = vpack.c.b16 %v4759, %v4751
    %v5144 = vpack.c.b16 %v4760, %v4752
    %v5145 = vpack.c.b16 %v4761, %v4753
    %v5146 = vpack.c.b16 %v4762, %v4754
    %v5147 = vpack.c.b16 %v4771, %v4763
    %v5148 = vpack.c.b16 %v4772, %v4764
    %v5149 = vpack.c.b16 %v4773, %v4765
    %v5150 = vpack.c.b16 %v4774, %v4766
    %v5151 = vpack.c.b16 %v4775, %v4767
    %v5152 = vpack.c.b16 %v4776, %v4768
    %v5153 = vpack.c.b16 %v4777, %v4769
    %v5154 = vpack.c.b16 %v4778, %v4770
    %v5155 = vpack.c.b16 %v4787, %v4779
    %v5156 = vpack.c.b16 %v4788, %v4780
    %v5157 = vpack.c.b16 %v4789, %v4781
    %v5158 = vpack.c.b16 %v4790, %v4782
    %v5159 = vpack.c.b16 %v4791, %v4783
    %v5160 = vpack.c.b16 %v4792, %v4784
    %v5161 = vpack.c.b16 %v4793, %v4785
    %v5162 = vpack.c.b16 %v4794, %v4786
    %v5163 = vpack.c.b16 %v4803, %v4795
    %v5164 = vpack.c.b16 %v4804, %v4796
    %v5165 = vpack.c.b16 %v4805, %v4797
    %v5166 = vpack.c.b16 %v4806, %v4798
    %v5167 = vpack.c.b16 %v4807, %v4799
    %v5168 = vpack.c.b16 %v4808, %v4800
    %v5169 = vpack.c.b16 %v4809, %v4801
    %v5170 = vpack.c.b16 %v4810, %v4802
    %v5171 = vpack.c.b16 %v4819, %v4811
    %v5172 = vpack.c.b16 %v4820, %v4812
    %v5173 = vpack.c.b16 %v4821, %v4813
    %v5174 = vpack.c.b16 %v4822, %v4814
    %v5175 = vpack.c.b16 %v4823, %v4815
    %v5176 = vpack.c.b16 %v4824, %v4816
    %v5177 = vpack.c.b16 %v4825, %v4817
    %v5178 = vpack.c.b16 %v4826, %v4818
    %v5179 = vpack.c.b16 %v4835, %v4827
    %v5180 = vpack.c.b16 %v4836, %v4828
    %v5181 = vpack.c.b16 %v4837, %v4829
    %v5182 = vpack.c.b16 %v4838, %v4830
    %v5183 = vpack.c.b16 %v4839, %v4831
    %v5184 = vpack.c.b16 %v4840, %v4832
    %v5185 = vpack.c.b16 %v4841, %v4833
    %v5186 = vpack.c.b16 %v4842, %v4834
    %v5187 = vpack.c.b16 %v4851, %v4843
    %v5188 = vpack.c.b16 %v4852, %v4844
    %v5189 = vpack.c.b16 %v4853, %v4845
    %v5190 = vpack.c.b16 %v4854, %v4846
    %v5191 = vpack.c.b16 %v4855, %v4847
    %v5192 = vpack.c.b16 %v4856, %v4848
    %v5193 = vpack.c.b16 %v4857, %v4849
    %v5194 = vpack.c.b16 %v4858, %v4850
    %v5195 = vpack.c.b16 %v4867, %v4859
    %v5196 = vpack.c.b16 %v4868, %v4860
    %v5197 = vpack.c.b16 %v4869, %v4861
    %v5198 = vpack.c.b16 %v4870, %v4862
    %v5199 = vpack.c.b16 %v4871, %v4863
    %v5200 = vpack.c.b16 %v4872, %v4864
    %v5201 = vpack.c.b16 %v4873, %v4865
    %v5202 = vpack.c.b16 %v4874, %v4866
    %v5203 = vpack.c.b16 %v4883, %v4875
    %v5204 = vpack.c.b16 %v4884, %v4876
    %v5205 = vpack.c.b16 %v4885, %v4877
    %v5206 = vpack.c.b16 %v4886, %v4878
    %v5207 = vpack.c.b16 %v4887, %v4879
    %v5208 = vpack.c.b16 %v4888, %v4880
    %v5209 = vpack.c.b16 %v4889, %v4881
    %v5210 = vpack.c.b16 %v4890, %v4882
    %v5211 = vpack.c.b16 %v4899, %v4891
    %v5212 = vpack.c.b16 %v4900, %v4892
    %v5213 = vpack.c.b16 %v4901, %v4893
    %v5214 = vpack.c.b16 %v4902, %v4894
    %v5215 = vpack.c.b16 %v4903, %v4895
    %v5216 = vpack.c.b16 %v4904, %v4896
    %v5217 = vpack.c.b16 %v4905, %v4897
    %v5218 = vpack.c.b16 %v4906, %v4898
    %v5219 = vpack.c.b16 %v4915, %v4907
    %v5220 = vpack.c.b16 %v4916, %v4908
    %v5221 = vpack.c.b16 %v4917, %v4909
    %v5222 = vpack.c.b16 %v4918, %v4910
    %v5223 = vpack.c.b16 %v4919, %v4911
    %v5224 = vpack.c.b16 %v4920, %v4912
    %v5225 = vpack.c.b16 %v4921, %v4913
    %v5226 = vpack.c.b16 %v4922, %v4914
    %v5227 = vpack.c.b16 %v4931, %v4923
    %v5228 = vpack.c.b16 %v4932, %v4924
    %v5229 = vpack.c.b16 %v4933, %v4925
    %v5230 = vpack.c.b16 %v4934, %v4926
    %v5231 = vpack.c.b16 %v4935, %v4927
    %v5232 = vpack.c.b16 %v4936, %v4928
    %v5233 = vpack.c.b16 %v4937, %v4929
    %v5234 = vpack.c.b16 %v4938, %v4930
    %v5235 = vpack.c.b16 %v4947, %v4939
    %v5236 = vpack.c.b16 %v4948, %v4940
    %v5237 = vpack.c.b16 %v4949, %v4941
    %v5238 = vpack.c.b16 %v4950, %v4942
    %v5239 = vpack.c.b16 %v4951, %v4943
    %v5240 = vpack.c.b16 %v4952, %v4944
    %v5241 = vpack.c.b16 %v4953, %v4945
    %v5242 = vpack.c.b16 %v4954, %v4946
    %v5243 = vpack.c.b16 %v4963, %v4955
    %v5244 = vpack.c.b16 %v4964, %v4956
    %v5245 = vpack.c.b16 %v4965, %v4957
    %v5246 = vpack.c.b16 %v4966, %v4958
    %v5247 = vpack.c.b16 %v4967, %v4959
    %v5248 = vpack.c.b16 %v4968, %v4960
    %v5249 = vpack.c.b16 %v4969, %v4961
    %v5250 = vpack.c.b16 %v4970, %v4962
    %v5251 = vpack.c.b16 %v4979, %v4971
    %v5252 = vpack.c.b16 %v4980, %v4972
    %v5253 = vpack.c.b16 %v4981, %v4973
    %v5254 = vpack.c.b16 %v4982, %v4974
    %v5255 = vpack.c.b16 %v4983, %v4975
    %v5256 = vpack.c.b16 %v4984, %v4976
    %v5257 = vpack.c.b16 %v4985, %v4977
    %v5258 = vpack.c.b16 %v4986, %v4978
    %v5259 = vpack.c.b16 %v4995, %v4987
    %v5260 = vpack.c.b16 %v4996, %v4988
    %v5261 = vpack.c.b16 %v4997, %v4989
    %v5262 = vpack.c.b16 %v4998, %v4990
    %v5263 = vpack.c.b16 %v4999, %v4991
    %v5264 = vpack.c.b16 %v5000, %v4992
    %v5265 = vpack.c.b16 %v5001, %v4993
    %v5266 = vpack.c.b16 %v5002, %v4994
    %v5267 = vpack.c.b16 %v5011, %v5003
    %v5268 = vpack.c.b16 %v5012, %v5004
    %v5269 = vpack.c.b16 %v5013, %v5005
    %v5270 = vpack.c.b16 %v5014, %v5006
    %v5271 = vpack.c.b16 %v5015, %v5007
    %v5272 = vpack.c.b16 %v5016, %v5008
    %v5273 = vpack.c.b16 %v5017, %v5009
    %v5274 = vpack.c.b16 %v5018, %v5010
    %5531 = vmatprep.subr.bf16.mxu0 %v5076
    %5532 = vmatpush1.bf16.msra.mxu0 %v5075
    %5533 = vmatprep.subr.bf16.mxu0 %v5068
    %5534 = vmatpush1.bf16.msra.mxu0 %v5067
    %5535 = vmatprep.subr.bf16.mxu0 %v5060
    %5536 = vmatpush1.bf16.msra.mxu0 %v5059
    %5537 = vmatprep.subr.bf16.mxu0 %v5052
    %5538 = vmatpush1.bf16.msra.mxu0 %v5051
    %5539 = vmatprep.subr.bf16.mxu0 %v5044
    %5540 = vmatpush1.bf16.msra.mxu0 %v5043
    %5541 = vmatprep.subr.bf16.mxu0 %v5036
    %5542 = vmatpush1.bf16.msra.mxu0 %v5035
    %5543 = vmatprep.subr.bf16.mxu0 %v5028
    %5544 = vmatpush1.bf16.msra.mxu0 %v5027
    %5545 = vmatprep.subr.bf16.mxu0 %v5020
    %5546 = vmatpush1.bf16.msra.mxu0 %v5019
    %5547 = vmatprep.subr.bf16.mxu0 %v5140
    %5548 = vmatpush2.bf16.msra.mxu0 %v5139
    %5549 = vmatprep.subr.bf16.mxu0 %v5132
    %5550 = vmatpush2.bf16.msra.mxu0 %v5131
    %5551 = vmatprep.subr.bf16.mxu0 %v5124
    %5552 = vmatpush2.bf16.msra.mxu0 %v5123
    %5553 = vmatprep.subr.bf16.mxu0 %v5116
    %5554 = vmatpush2.bf16.msra.mxu0 %v5115
    %5555 = vmatprep.subr.bf16.mxu0 %v5108
    %5556 = vmatpush2.bf16.msra.mxu0 %v5107
    %5557 = vmatprep.subr.bf16.mxu0 %v5100
    %5558 = vmatpush2.bf16.msra.mxu0 %v5099
    %5559 = vmatprep.subr.bf16.mxu0 %v5092
    %5560 = vmatpush2.bf16.msra.mxu0 %v5091
    %5561 = vmatprep.subr.bf16.mxu0 %v5084
    %5562 = vmatpush2.bf16.msra.mxu0 %v5083
    %5563 = vmatprep.mubr.bf16.mxu0 %v1838
    %5564 = vmatmul.mubr.bf16.gmra.mxu0 %v1837
    %v5565 = vpop.f32.mrf.mxu0
    %v5566 = vadd.f32 %v3775, %v5565
    %v5567 = vpop.f32.mrf.mxu0
    %v5568 = vadd.f32 %v3777, %v5567
    %v5569 = vpop.f32.mrf.mxu0
    %v5570 = vadd.f32 %v3779, %v5569
    %v5571 = vpop.f32.mrf.mxu0
    %v5572 = vadd.f32 %v3781, %v5571
    %5573 = vmatprep.mubr.bf16.mxu0 %v1842
    %5574 = vmatmul.mubr.bf16.gmra.mxu0 %v1841
    %v5575 = vpop.f32.mrf.mxu0
    %v5576 = vadd.f32 %v3785, %v5575
    %v5577 = vpop.f32.mrf.mxu0
    %v5578 = vadd.f32 %v3787, %v5577
    %v5579 = vpop.f32.mrf.mxu0
    %v5580 = vadd.f32 %v3789, %v5579
    %v5581 = vpop.f32.mrf.mxu0
    %v5582 = vadd.f32 %v3791, %v5581
    %5583 = vmatprep.mubr.bf16.mxu0 %v1846
    %5584 = vmatmul.mubr.bf16.gmra.mxu0 %v1845
    %v5585 = vpop.f32.mrf.mxu0
    %v5586 = vadd.f32 %v3795, %v5585
    %v5587 = vpop.f32.mrf.mxu0
    %v5588 = vadd.f32 %v3797, %v5587
    %v5589 = vpop.f32.mrf.mxu0
    %v5590 = vadd.f32 %v3799, %v5589
    %v5591 = vpop.f32.mrf.mxu0
    %v5592 = vadd.f32 %v3801, %v5591
    %5593 = vmatprep.mubr.bf16.mxu0 %v1850
    %5594 = vmatmul.mubr.bf16.gmra.mxu0 %v1849
    %v5595 = vpop.f32.mrf.mxu0
    %v5596 = vadd.f32 %v3805, %v5595
    %v5597 = vpop.f32.mrf.mxu0
    %v5598 = vadd.f32 %v3807, %v5597
    %v5599 = vpop.f32.mrf.mxu0
    %v5600 = vadd.f32 %v3809, %v5599
    %v5601 = vpop.f32.mrf.mxu0
    %v5602 = vadd.f32 %v3811, %v5601
    %5603 = vdwg.mxu0
    %5604 = vmatprep.subr.bf16.mxu0 %v5204
    %5605 = vmatpush1.bf16.msra.mxu0 %v5203
    %5606 = vmatprep.subr.bf16.mxu0 %v5196
    %5607 = vmatpush1.bf16.msra.mxu0 %v5195
    %5608 = vmatprep.subr.bf16.mxu0 %v5188
    %5609 = vmatpush1.bf16.msra.mxu0 %v5187
    %5610 = vmatprep.subr.bf16.mxu0 %v5180
    %5611 = vmatpush1.bf16.msra.mxu0 %v5179
    %5612 = vmatprep.subr.bf16.mxu0 %v5172
    %5613 = vmatpush1.bf16.msra.mxu0 %v5171
    %5614 = vmatprep.subr.bf16.mxu0 %v5164
    %5615 = vmatpush1.bf16.msra.mxu0 %v5163
    %5616 = vmatprep.subr.bf16.mxu0 %v5156
    %5617 = vmatpush1.bf16.msra.mxu0 %v5155
    %5618 = vmatprep.subr.bf16.mxu0 %v5148
    %5619 = vmatpush1.bf16.msra.mxu0 %v5147
    %5620 = vmatprep.subr.bf16.mxu0 %v5268
    %5621 = vmatpush2.bf16.msra.mxu0 %v5267
    %5622 = vmatprep.subr.bf16.mxu0 %v5260
    %5623 = vmatpush2.bf16.msra.mxu0 %v5259
    %5624 = vmatprep.subr.bf16.mxu0 %v5252
    %5625 = vmatpush2.bf16.msra.mxu0 %v5251
    %5626 = vmatprep.subr.bf16.mxu0 %v5244
    %5627 = vmatpush2.bf16.msra.mxu0 %v5243
    %5628 = vmatprep.subr.bf16.mxu0 %v5236
    %5629 = vmatpush2.bf16.msra.mxu0 %v5235
    %5630 = vmatprep.subr.bf16.mxu0 %v5228
    %5631 = vmatpush2.bf16.msra.mxu0 %v5227
    %5632 = vmatprep.subr.bf16.mxu0 %v5220
    %5633 = vmatpush2.bf16.msra.mxu0 %v5219
    %5634 = vmatprep.subr.bf16.mxu0 %v5212
    %5635 = vmatpush2.bf16.msra.mxu0 %v5211
    %5636 = vmatprep.mubr.bf16.mxu0 %v1840
    %5637 = vmatmul.mubr.bf16.gmra.mxu0 %v1839
    %v5638 = vpop.f32.mrf.mxu0
    %v5639 = vadd.f32 %v5566, %v5638
    %v5640 = vpop.f32.mrf.mxu0
    %v5641 = vadd.f32 %v5568, %v5640
    %v5642 = vpop.f32.mrf.mxu0
    %v5643 = vadd.f32 %v5570, %v5642
    %v5644 = vpop.f32.mrf.mxu0
    %v5645 = vadd.f32 %v5572, %v5644
    %5646 = vmatprep.mubr.bf16.mxu0 %v1844
    %5647 = vmatmul.mubr.bf16.gmra.mxu0 %v1843
    %v5648 = vpop.f32.mrf.mxu0
    %v5649 = vadd.f32 %v5576, %v5648
    %v5650 = vpop.f32.mrf.mxu0
    %v5651 = vadd.f32 %v5578, %v5650
    %v5652 = vpop.f32.mrf.mxu0
    %v5653 = vadd.f32 %v5580, %v5652
    %v5654 = vpop.f32.mrf.mxu0
    %v5655 = vadd.f32 %v5582, %v5654
    %5656 = vmatprep.mubr.bf16.mxu0 %v1848
    %5657 = vmatmul.mubr.bf16.gmra.mxu0 %v1847
    %v5658 = vpop.f32.mrf.mxu0
    %v5659 = vadd.f32 %v5586, %v5658
    %v5660 = vpop.f32.mrf.mxu0
    %v5661 = vadd.f32 %v5588, %v5660
    %v5662 = vpop.f32.mrf.mxu0
    %v5663 = vadd.f32 %v5590, %v5662
    %v5664 = vpop.f32.mrf.mxu0
    %v5665 = vadd.f32 %v5592, %v5664
    %5666 = vmatprep.mubr.bf16.mxu0 %v1852
    %5667 = vmatmul.mubr.bf16.gmra.mxu0 %v1851
    %v5668 = vpop.f32.mrf.mxu0
    %v5669 = vadd.f32 %v5596, %v5668
    %v5670 = vpop.f32.mrf.mxu0
    %v5671 = vadd.f32 %v5598, %v5670
    %v5672 = vpop.f32.mrf.mxu0
    %v5673 = vadd.f32 %v5600, %v5672
    %v5674 = vpop.f32.mrf.mxu0
    %v5675 = vadd.f32 %v5602, %v5674
    %5676 = vdwg.mxu0
    %5677 = vmatprep.subr.bf16.mxu0 %v5078
    %5678 = vmatpush1.bf16.msra.mxu0 %v5077
    %5679 = vmatprep.subr.bf16.mxu0 %v5070
    %5680 = vmatpush1.bf16.msra.mxu0 %v5069
    %5681 = vmatprep.subr.bf16.mxu0 %v5062
    %5682 = vmatpush1.bf16.msra.mxu0 %v5061
    %5683 = vmatprep.subr.bf16.mxu0 %v5054
    %5684 = vmatpush1.bf16.msra.mxu0 %v5053
    %5685 = vmatprep.subr.bf16.mxu0 %v5046
    %5686 = vmatpush1.bf16.msra.mxu0 %v5045
    %5687 = vmatprep.subr.bf16.mxu0 %v5038
    %5688 = vmatpush1.bf16.msra.mxu0 %v5037
    %5689 = vmatprep.subr.bf16.mxu0 %v5030
    %5690 = vmatpush1.bf16.msra.mxu0 %v5029
    %5691 = vmatprep.subr.bf16.mxu0 %v5022
    %5692 = vmatpush1.bf16.msra.mxu0 %v5021
    %5693 = vmatprep.subr.bf16.mxu0 %v5142
    %5694 = vmatpush2.bf16.msra.mxu0 %v5141
    %5695 = vmatprep.subr.bf16.mxu0 %v5134
    %5696 = vmatpush2.bf16.msra.mxu0 %v5133
    %5697 = vmatprep.subr.bf16.mxu0 %v5126
    %5698 = vmatpush2.bf16.msra.mxu0 %v5125
    %5699 = vmatprep.subr.bf16.mxu0 %v5118
    %5700 = vmatpush2.bf16.msra.mxu0 %v5117
    %5701 = vmatprep.subr.bf16.mxu0 %v5110
    %5702 = vmatpush2.bf16.msra.mxu0 %v5109
    %5703 = vmatprep.subr.bf16.mxu0 %v5102
    %5704 = vmatpush2.bf16.msra.mxu0 %v5101
    %5705 = vmatprep.subr.bf16.mxu0 %v5094
    %5706 = vmatpush2.bf16.msra.mxu0 %v5093
    %5707 = vmatprep.subr.bf16.mxu0 %v5086
    %5708 = vmatpush2.bf16.msra.mxu0 %v5085
    %5709 = vmatprep.mubr.bf16.mxu0 %v1838
    %5710 = vmatmul.mubr.bf16.gmra.mxu0 %v1837
    %v5711 = vpop.f32.mrf.mxu0
    %v5712 = vadd.f32 %v3921, %v5711
    %v5713 = vpop.f32.mrf.mxu0
    %v5714 = vadd.f32 %v3923, %v5713
    %v5715 = vpop.f32.mrf.mxu0
    %v5716 = vadd.f32 %v3925, %v5715
    %v5717 = vpop.f32.mrf.mxu0
    %v5718 = vadd.f32 %v3927, %v5717
    %5719 = vmatprep.mubr.bf16.mxu0 %v1842
    %5720 = vmatmul.mubr.bf16.gmra.mxu0 %v1841
    %v5721 = vpop.f32.mrf.mxu0
    %v5722 = vadd.f32 %v3931, %v5721
    %v5723 = vpop.f32.mrf.mxu0
    %v5724 = vadd.f32 %v3933, %v5723
    %v5725 = vpop.f32.mrf.mxu0
    %v5726 = vadd.f32 %v3935, %v5725
    %v5727 = vpop.f32.mrf.mxu0
    %v5728 = vadd.f32 %v3937, %v5727
    %5729 = vmatprep.mubr.bf16.mxu0 %v1846
    %5730 = vmatmul.mubr.bf16.gmra.mxu0 %v1845
    %v5731 = vpop.f32.mrf.mxu0
    %v5732 = vadd.f32 %v3941, %v5731
    %v5733 = vpop.f32.mrf.mxu0
    %v5734 = vadd.f32 %v3943, %v5733
    %v5735 = vpop.f32.mrf.mxu0
    %v5736 = vadd.f32 %v3945, %v5735
    %v5737 = vpop.f32.mrf.mxu0
    %v5738 = vadd.f32 %v3947, %v5737
    %5739 = vmatprep.mubr.bf16.mxu0 %v1850
    %5740 = vmatmul.mubr.bf16.gmra.mxu0 %v1849
    %v5741 = vpop.f32.mrf.mxu0
    %v5742 = vadd.f32 %v3951, %v5741
    %v5743 = vpop.f32.mrf.mxu0
    %v5744 = vadd.f32 %v3953, %v5743
    %v5745 = vpop.f32.mrf.mxu0
    %v5746 = vadd.f32 %v3955, %v5745
    %v5747 = vpop.f32.mrf.mxu0
    %v5748 = vadd.f32 %v3957, %v5747
    %5749 = vdwg.mxu0
    %5750 = vmatprep.subr.bf16.mxu0 %v5206
    %5751 = vmatpush1.bf16.msra.mxu0 %v5205
    %5752 = vmatprep.subr.bf16.mxu0 %v5198
    %5753 = vmatpush1.bf16.msra.mxu0 %v5197
    %5754 = vmatprep.subr.bf16.mxu0 %v5190
    %5755 = vmatpush1.bf16.msra.mxu0 %v5189
    %5756 = vmatprep.subr.bf16.mxu0 %v5182
    %5757 = vmatpush1.bf16.msra.mxu0 %v5181
    %5758 = vmatprep.subr.bf16.mxu0 %v5174
    %5759 = vmatpush1.bf16.msra.mxu0 %v5173
    %5760 = vmatprep.subr.bf16.mxu0 %v5166
    %5761 = vmatpush1.bf16.msra.mxu0 %v5165
    %5762 = vmatprep.subr.bf16.mxu0 %v5158
    %5763 = vmatpush1.bf16.msra.mxu0 %v5157
    %5764 = vmatprep.subr.bf16.mxu0 %v5150
    %5765 = vmatpush1.bf16.msra.mxu0 %v5149
    %5766 = vmatprep.subr.bf16.mxu0 %v5270
    %5767 = vmatpush2.bf16.msra.mxu0 %v5269
    %5768 = vmatprep.subr.bf16.mxu0 %v5262
    %5769 = vmatpush2.bf16.msra.mxu0 %v5261
    %5770 = vmatprep.subr.bf16.mxu0 %v5254
    %5771 = vmatpush2.bf16.msra.mxu0 %v5253
    %5772 = vmatprep.subr.bf16.mxu0 %v5246
    %5773 = vmatpush2.bf16.msra.mxu0 %v5245
    %5774 = vmatprep.subr.bf16.mxu0 %v5238
    %5775 = vmatpush2.bf16.msra.mxu0 %v5237
    %5776 = vmatprep.subr.bf16.mxu0 %v5230
    %5777 = vmatpush2.bf16.msra.mxu0 %v5229
    %5778 = vmatprep.subr.bf16.mxu0 %v5222
    %5779 = vmatpush2.bf16.msra.mxu0 %v5221
    %5780 = vmatprep.subr.bf16.mxu0 %v5214
    %5781 = vmatpush2.bf16.msra.mxu0 %v5213
    %5782 = vmatprep.mubr.bf16.mxu0 %v1840
    %5783 = vmatmul.mubr.bf16.gmra.mxu0 %v1839
    %v5784 = vpop.f32.mrf.mxu0
    %v5785 = vadd.f32 %v5712, %v5784
    %v5786 = vpop.f32.mrf.mxu0
    %v5787 = vadd.f32 %v5714, %v5786
    %v5788 = vpop.f32.mrf.mxu0
    %v5789 = vadd.f32 %v5716, %v5788
    %v5790 = vpop.f32.mrf.mxu0
    %v5791 = vadd.f32 %v5718, %v5790
    %5792 = vmatprep.mubr.bf16.mxu0 %v1844
    %5793 = vmatmul.mubr.bf16.gmra.mxu0 %v1843
    %v5794 = vpop.f32.mrf.mxu0
    %v5795 = vadd.f32 %v5722, %v5794
    %v5796 = vpop.f32.mrf.mxu0
    %v5797 = vadd.f32 %v5724, %v5796
    %v5798 = vpop.f32.mrf.mxu0
    %v5799 = vadd.f32 %v5726, %v5798
    %v5800 = vpop.f32.mrf.mxu0
    %v5801 = vadd.f32 %v5728, %v5800
    %5802 = vmatprep.mubr.bf16.mxu0 %v1848
    %5803 = vmatmul.mubr.bf16.gmra.mxu0 %v1847
    %v5804 = vpop.f32.mrf.mxu0
    %v5805 = vadd.f32 %v5732, %v5804
    %v5806 = vpop.f32.mrf.mxu0
    %v5807 = vadd.f32 %v5734, %v5806
    %v5808 = vpop.f32.mrf.mxu0
    %v5809 = vadd.f32 %v5736, %v5808
    %v5810 = vpop.f32.mrf.mxu0
    %v5811 = vadd.f32 %v5738, %v5810
    %5812 = vmatprep.mubr.bf16.mxu0 %v1852
    %5813 = vmatmul.mubr.bf16.gmra.mxu0 %v1851
    %v5814 = vpop.f32.mrf.mxu0
    %v5815 = vadd.f32 %v5742, %v5814
    %v5816 = vpop.f32.mrf.mxu0
    %v5817 = vadd.f32 %v5744, %v5816
    %v5818 = vpop.f32.mrf.mxu0
    %v5819 = vadd.f32 %v5746, %v5818
    %v5820 = vpop.f32.mrf.mxu0
    %v5821 = vadd.f32 %v5748, %v5820
    %5822 = vdwg.mxu0
    %5823 = vmatprep.subr.bf16.mxu0 %v5080
    %5824 = vmatpush1.bf16.msra.mxu0 %v5079
    %5825 = vmatprep.subr.bf16.mxu0 %v5072
    %5826 = vmatpush1.bf16.msra.mxu0 %v5071
    %5827 = vmatprep.subr.bf16.mxu0 %v5064
    %5828 = vmatpush1.bf16.msra.mxu0 %v5063
    %5829 = vmatprep.subr.bf16.mxu0 %v5056
    %5830 = vmatpush1.bf16.msra.mxu0 %v5055
    %5831 = vmatprep.subr.bf16.mxu0 %v5048
    %5832 = vmatpush1.bf16.msra.mxu0 %v5047
    %5833 = vmatprep.subr.bf16.mxu0 %v5040
    %5834 = vmatpush1.bf16.msra.mxu0 %v5039
    %5835 = vmatprep.subr.bf16.mxu0 %v5032
    %5836 = vmatpush1.bf16.msra.mxu0 %v5031
    %5837 = vmatprep.subr.bf16.mxu0 %v5024
    %5838 = vmatpush1.bf16.msra.mxu0 %v5023
    %5839 = vmatprep.subr.bf16.mxu0 %v5144
    %5840 = vmatpush2.bf16.msra.mxu0 %v5143
    %5841 = vmatprep.subr.bf16.mxu0 %v5136
    %5842 = vmatpush2.bf16.msra.mxu0 %v5135
    %5843 = vmatprep.subr.bf16.mxu0 %v5128
    %5844 = vmatpush2.bf16.msra.mxu0 %v5127
    %5845 = vmatprep.subr.bf16.mxu0 %v5120
    %5846 = vmatpush2.bf16.msra.mxu0 %v5119
    %5847 = vmatprep.subr.bf16.mxu0 %v5112
    %5848 = vmatpush2.bf16.msra.mxu0 %v5111
    %5849 = vmatprep.subr.bf16.mxu0 %v5104
    %5850 = vmatpush2.bf16.msra.mxu0 %v5103
    %5851 = vmatprep.subr.bf16.mxu0 %v5096
    %5852 = vmatpush2.bf16.msra.mxu0 %v5095
    %5853 = vmatprep.subr.bf16.mxu0 %v5088
    %5854 = vmatpush2.bf16.msra.mxu0 %v5087
    %5855 = vmatprep.mubr.bf16.mxu0 %v1838
    %5856 = vmatmul.mubr.bf16.gmra.mxu0 %v1837
    %v5857 = vpop.f32.mrf.mxu0
    %v5858 = vadd.f32 %v4067, %v5857
    %v5859 = vpop.f32.mrf.mxu0
    %v5860 = vadd.f32 %v4069, %v5859
    %v5861 = vpop.f32.mrf.mxu0
    %v5862 = vadd.f32 %v4071, %v5861
    %v5863 = vpop.f32.mrf.mxu0
    %v5864 = vadd.f32 %v4073, %v5863
    %5865 = vmatprep.mubr.bf16.mxu0 %v1842
    %5866 = vmatmul.mubr.bf16.gmra.mxu0 %v1841
    %v5867 = vpop.f32.mrf.mxu0
    %v5868 = vadd.f32 %v4077, %v5867
    %v5869 = vpop.f32.mrf.mxu0
    %v5870 = vadd.f32 %v4079, %v5869
    %v5871 = vpop.f32.mrf.mxu0
    %v5872 = vadd.f32 %v4081, %v5871
    %v5873 = vpop.f32.mrf.mxu0
    %v5874 = vadd.f32 %v4083, %v5873
    %5875 = vmatprep.mubr.bf16.mxu0 %v1846
    %5876 = vmatmul.mubr.bf16.gmra.mxu0 %v1845
    %v5877 = vpop.f32.mrf.mxu0
    %v5878 = vadd.f32 %v4087, %v5877
    %v5879 = vpop.f32.mrf.mxu0
    %v5880 = vadd.f32 %v4089, %v5879
    %v5881 = vpop.f32.mrf.mxu0
    %v5882 = vadd.f32 %v4091, %v5881
    %v5883 = vpop.f32.mrf.mxu0
    %v5884 = vadd.f32 %v4093, %v5883
    %5885 = vmatprep.mubr.bf16.mxu0 %v1850
    %5886 = vmatmul.mubr.bf16.gmra.mxu0 %v1849
    %v5887 = vpop.f32.mrf.mxu0
    %v5888 = vadd.f32 %v4097, %v5887
    %v5889 = vpop.f32.mrf.mxu0
    %v5890 = vadd.f32 %v4099, %v5889
    %v5891 = vpop.f32.mrf.mxu0
    %v5892 = vadd.f32 %v4101, %v5891
    %v5893 = vpop.f32.mrf.mxu0
    %v5894 = vadd.f32 %v4103, %v5893
    %5895 = vdwg.mxu0
    %5896 = vmatprep.subr.bf16.mxu0 %v5208
    %5897 = vmatpush1.bf16.msra.mxu0 %v5207
    %5898 = vmatprep.subr.bf16.mxu0 %v5200
    %5899 = vmatpush1.bf16.msra.mxu0 %v5199
    %5900 = vmatprep.subr.bf16.mxu0 %v5192
    %5901 = vmatpush1.bf16.msra.mxu0 %v5191
    %5902 = vmatprep.subr.bf16.mxu0 %v5184
    %5903 = vmatpush1.bf16.msra.mxu0 %v5183
    %5904 = vmatprep.subr.bf16.mxu0 %v5176
    %5905 = vmatpush1.bf16.msra.mxu0 %v5175
    %5906 = vmatprep.subr.bf16.mxu0 %v5168
    %5907 = vmatpush1.bf16.msra.mxu0 %v5167
    %5908 = vmatprep.subr.bf16.mxu0 %v5160
    %5909 = vmatpush1.bf16.msra.mxu0 %v5159
    %5910 = vmatprep.subr.bf16.mxu0 %v5152
    %5911 = vmatpush1.bf16.msra.mxu0 %v5151
    %5912 = vmatprep.subr.bf16.mxu0 %v5272
    %5913 = vmatpush2.bf16.msra.mxu0 %v5271
    %5914 = vmatprep.subr.bf16.mxu0 %v5264
    %5915 = vmatpush2.bf16.msra.mxu0 %v5263
    %5916 = vmatprep.subr.bf16.mxu0 %v5256
    %5917 = vmatpush2.bf16.msra.mxu0 %v5255
    %5918 = vmatprep.subr.bf16.mxu0 %v5248
    %5919 = vmatpush2.bf16.msra.mxu0 %v5247
    %5920 = vmatprep.subr.bf16.mxu0 %v5240
    %5921 = vmatpush2.bf16.msra.mxu0 %v5239
    %5922 = vmatprep.subr.bf16.mxu0 %v5232
    %5923 = vmatpush2.bf16.msra.mxu0 %v5231
    %5924 = vmatprep.subr.bf16.mxu0 %v5224
    %5925 = vmatpush2.bf16.msra.mxu0 %v5223
    %5926 = vmatprep.subr.bf16.mxu0 %v5216
    %5927 = vmatpush2.bf16.msra.mxu0 %v5215
    %5928 = vmatprep.mubr.bf16.mxu0 %v1840
    %5929 = vmatmul.mubr.bf16.gmra.mxu0 %v1839
    %v5930 = vpop.f32.mrf.mxu0
    %v5931 = vadd.f32 %v5858, %v5930
    %v5932 = vpop.f32.mrf.mxu0
    %v5933 = vadd.f32 %v5860, %v5932
    %v5934 = vpop.f32.mrf.mxu0
    %v5935 = vadd.f32 %v5862, %v5934
    %v5936 = vpop.f32.mrf.mxu0
    %v5937 = vadd.f32 %v5864, %v5936
    %5938 = vmatprep.mubr.bf16.mxu0 %v1844
    %5939 = vmatmul.mubr.bf16.gmra.mxu0 %v1843
    %v5940 = vpop.f32.mrf.mxu0
    %v5941 = vadd.f32 %v5868, %v5940
    %v5942 = vpop.f32.mrf.mxu0
    %v5943 = vadd.f32 %v5870, %v5942
    %v5944 = vpop.f32.mrf.mxu0
    %v5945 = vadd.f32 %v5872, %v5944
    %v5946 = vpop.f32.mrf.mxu0
    %v5947 = vadd.f32 %v5874, %v5946
    %5948 = vmatprep.mubr.bf16.mxu0 %v1848
    %5949 = vmatmul.mubr.bf16.gmra.mxu0 %v1847
    %v5950 = vpop.f32.mrf.mxu0
    %v5951 = vadd.f32 %v5878, %v5950
    %v5952 = vpop.f32.mrf.mxu0
    %v5953 = vadd.f32 %v5880, %v5952
    %v5954 = vpop.f32.mrf.mxu0
    %v5955 = vadd.f32 %v5882, %v5954
    %v5956 = vpop.f32.mrf.mxu0
    %v5957 = vadd.f32 %v5884, %v5956
    %5958 = vmatprep.mubr.bf16.mxu0 %v1852
    %5959 = vmatmul.mubr.bf16.gmra.mxu0 %v1851
    %v5960 = vpop.f32.mrf.mxu0
    %v5961 = vadd.f32 %v5888, %v5960
    %v5962 = vpop.f32.mrf.mxu0
    %v5963 = vadd.f32 %v5890, %v5962
    %v5964 = vpop.f32.mrf.mxu0
    %v5965 = vadd.f32 %v5892, %v5964
    %v5966 = vpop.f32.mrf.mxu0
    %v5967 = vadd.f32 %v5894, %v5966
    %5968 = vdwg.mxu0
    %5969 = vmatprep.subr.bf16.mxu0 %v5082
    %5970 = vmatpush1.bf16.msra.mxu0 %v5081
    %5971 = vmatprep.subr.bf16.mxu0 %v5074
    %5972 = vmatpush1.bf16.msra.mxu0 %v5073
    %5973 = vmatprep.subr.bf16.mxu0 %v5066
    %5974 = vmatpush1.bf16.msra.mxu0 %v5065
    %5975 = vmatprep.subr.bf16.mxu0 %v5058
    %5976 = vmatpush1.bf16.msra.mxu0 %v5057
    %5977 = vmatprep.subr.bf16.mxu0 %v5050
    %5978 = vmatpush1.bf16.msra.mxu0 %v5049
    %5979 = vmatprep.subr.bf16.mxu0 %v5042
    %5980 = vmatpush1.bf16.msra.mxu0 %v5041
    %5981 = vmatprep.subr.bf16.mxu0 %v5034
    %5982 = vmatpush1.bf16.msra.mxu0 %v5033
    %5983 = vmatprep.subr.bf16.mxu0 %v5026
    %5984 = vmatpush1.bf16.msra.mxu0 %v5025
    %5985 = vmatprep.subr.bf16.mxu0 %v5146
    %5986 = vmatpush2.bf16.msra.mxu0 %v5145
    %5987 = vmatprep.subr.bf16.mxu0 %v5138
    %5988 = vmatpush2.bf16.msra.mxu0 %v5137
    %5989 = vmatprep.subr.bf16.mxu0 %v5130
    %5990 = vmatpush2.bf16.msra.mxu0 %v5129
    %5991 = vmatprep.subr.bf16.mxu0 %v5122
    %5992 = vmatpush2.bf16.msra.mxu0 %v5121
    %5993 = vmatprep.subr.bf16.mxu0 %v5114
    %5994 = vmatpush2.bf16.msra.mxu0 %v5113
    %5995 = vmatprep.subr.bf16.mxu0 %v5106
    %5996 = vmatpush2.bf16.msra.mxu0 %v5105
    %5997 = vmatprep.subr.bf16.mxu0 %v5098
    %5998 = vmatpush2.bf16.msra.mxu0 %v5097
    %5999 = vmatprep.subr.bf16.mxu0 %v5090
    %6000 = vmatpush2.bf16.msra.mxu0 %v5089
    %6001 = vmatprep.mubr.bf16.mxu0 %v1838
    %6002 = vmatmul.mubr.bf16.gmra.mxu0 %v1837
    %v6003 = vpop.f32.mrf.mxu0
    %v6004 = vadd.f32 %v4213, %v6003
    %v6005 = vpop.f32.mrf.mxu0
    %v6006 = vadd.f32 %v4215, %v6005
    %v6007 = vpop.f32.mrf.mxu0
    %v6008 = vadd.f32 %v4217, %v6007
    %v6009 = vpop.f32.mrf.mxu0
    %v6010 = vadd.f32 %v4219, %v6009
    %6011 = vmatprep.mubr.bf16.mxu0 %v1842
    %6012 = vmatmul.mubr.bf16.gmra.mxu0 %v1841
    %v6013 = vpop.f32.mrf.mxu0
    %v6014 = vadd.f32 %v4223, %v6013
    %v6015 = vpop.f32.mrf.mxu0
    %v6016 = vadd.f32 %v4225, %v6015
    %v6017 = vpop.f32.mrf.mxu0
    %v6018 = vadd.f32 %v4227, %v6017
    %v6019 = vpop.f32.mrf.mxu0
    %v6020 = vadd.f32 %v4229, %v6019
    %6021 = vmatprep.mubr.bf16.mxu0 %v1846
    %6022 = vmatmul.mubr.bf16.gmra.mxu0 %v1845
    %v6023 = vpop.f32.mrf.mxu0
    %v6024 = vadd.f32 %v4233, %v6023
    %v6025 = vpop.f32.mrf.mxu0
    %v6026 = vadd.f32 %v4235, %v6025
    %v6027 = vpop.f32.mrf.mxu0
    %v6028 = vadd.f32 %v4237, %v6027
    %v6029 = vpop.f32.mrf.mxu0
    %v6030 = vadd.f32 %v4239, %v6029
    %6031 = vmatprep.mubr.bf16.mxu0 %v1850
    %6032 = vmatmul.mubr.bf16.gmra.mxu0 %v1849
    %v6033 = vpop.f32.mrf.mxu0
    %v6034 = vadd.f32 %v4243, %v6033
    %v6035 = vpop.f32.mrf.mxu0
    %v6036 = vadd.f32 %v4245, %v6035
    %v6037 = vpop.f32.mrf.mxu0
    %v6038 = vadd.f32 %v4247, %v6037
    %v6039 = vpop.f32.mrf.mxu0
    %v6040 = vadd.f32 %v4249, %v6039
    %6041 = vdwg.mxu0
    %6042 = vmatprep.subr.bf16.mxu0 %v5210
    %6043 = vmatpush1.bf16.msra.mxu0 %v5209
    %6044 = vmatprep.subr.bf16.mxu0 %v5202
    %6045 = vmatpush1.bf16.msra.mxu0 %v5201
    %6046 = vmatprep.subr.bf16.mxu0 %v5194
    %6047 = vmatpush1.bf16.msra.mxu0 %v5193
    %6048 = vmatprep.subr.bf16.mxu0 %v5186
    %6049 = vmatpush1.bf16.msra.mxu0 %v5185
    %6050 = vmatprep.subr.bf16.mxu0 %v5178
    %6051 = vmatpush1.bf16.msra.mxu0 %v5177
    %6052 = vmatprep.subr.bf16.mxu0 %v5170
    %6053 = vmatpush1.bf16.msra.mxu0 %v5169
    %6054 = vmatprep.subr.bf16.mxu0 %v5162
    %6055 = vmatpush1.bf16.msra.mxu0 %v5161
    %6056 = vmatprep.subr.bf16.mxu0 %v5154
    %6057 = vmatpush1.bf16.msra.mxu0 %v5153
    %6058 = vmatprep.subr.bf16.mxu0 %v5274
    %6059 = vmatpush2.bf16.msra.mxu0 %v5273
    %6060 = vmatprep.subr.bf16.mxu0 %v5266
    %6061 = vmatpush2.bf16.msra.mxu0 %v5265
    %6062 = vmatprep.subr.bf16.mxu0 %v5258
    %6063 = vmatpush2.bf16.msra.mxu0 %v5257
    %6064 = vmatprep.subr.bf16.mxu0 %v5250
    %6065 = vmatpush2.bf16.msra.mxu0 %v5249
    %6066 = vmatprep.subr.bf16.mxu0 %v5242
    %6067 = vmatpush2.bf16.msra.mxu0 %v5241
    %6068 = vmatprep.subr.bf16.mxu0 %v5234
    %6069 = vmatpush2.bf16.msra.mxu0 %v5233
    %6070 = vmatprep.subr.bf16.mxu0 %v5226
    %6071 = vmatpush2.bf16.msra.mxu0 %v5225
    %6072 = vmatprep.subr.bf16.mxu0 %v5218
    %6073 = vmatpush2.bf16.msra.mxu0 %v5217
    %6074 = vmatprep.mubr.bf16.mxu0 %v1840
    %6075 = vmatmul.mubr.bf16.gmra.mxu0 %v1839
    %v6076 = vpop.f32.mrf.mxu0
    %v6077 = vadd.f32 %v6004, %v6076
    %v6078 = vpop.f32.mrf.mxu0
    %v6079 = vadd.f32 %v6006, %v6078
    %v6080 = vpop.f32.mrf.mxu0
    %v6081 = vadd.f32 %v6008, %v6080
    %v6082 = vpop.f32.mrf.mxu0
    %v6083 = vadd.f32 %v6010, %v6082
    %6084 = vmatprep.mubr.bf16.mxu0 %v1844
    %6085 = vmatmul.mubr.bf16.gmra.mxu0 %v1843
    %v6086 = vpop.f32.mrf.mxu0
    %v6087 = vadd.f32 %v6014, %v6086
    %v6088 = vpop.f32.mrf.mxu0
    %v6089 = vadd.f32 %v6016, %v6088
    %v6090 = vpop.f32.mrf.mxu0
    %v6091 = vadd.f32 %v6018, %v6090
    %v6092 = vpop.f32.mrf.mxu0
    %v6093 = vadd.f32 %v6020, %v6092
    %6094 = vmatprep.mubr.bf16.mxu0 %v1848
    %6095 = vmatmul.mubr.bf16.gmra.mxu0 %v1847
    %v6096 = vpop.f32.mrf.mxu0
    %v6097 = vadd.f32 %v6024, %v6096
    %v6098 = vpop.f32.mrf.mxu0
    %v6099 = vadd.f32 %v6026, %v6098
    %v6100 = vpop.f32.mrf.mxu0
    %v6101 = vadd.f32 %v6028, %v6100
    %v6102 = vpop.f32.mrf.mxu0
    %v6103 = vadd.f32 %v6030, %v6102
    %6104 = vmatprep.mubr.bf16.mxu0 %v1852
    %6105 = vmatmul.mubr.bf16.gmra.mxu0 %v1851
    %v6106 = vpop.f32.mrf.mxu0
    %v6107 = vadd.f32 %v6034, %v6106
    %v6108 = vpop.f32.mrf.mxu0
    %v6109 = vadd.f32 %v6036, %v6108
    %v6110 = vpop.f32.mrf.mxu0
    %v6111 = vadd.f32 %v6038, %v6110
    %v6112 = vpop.f32.mrf.mxu0
    %v6113 = vadd.f32 %v6040, %v6112
    %6114 = vdwg.mxu0
    %v6115 = vld [vmem:[#allocation17] sm:$0xff]
    %v6117 = vlaneseq
    %v6118 = vshrl.u32 %v6117, 7
    %v6119 = vsub.s32 0, %v6118
    %v6120 = vrot.slane %v6115, %v6119
    %v6121 = vlaneseq
    %v6122 = vshrl.u32 %v6121, 7
    %v6123 = vsub.s32 1, %v6122
    %v6124 = vrot.slane %v6115, %v6123
    %v6125 = vlaneseq
    %v6126 = vshrl.u32 %v6125, 7
    %v6127 = vsub.s32 2, %v6126
    %v6128 = vrot.slane %v6115, %v6127
    %v6129 = vlaneseq
    %v6130 = vshrl.u32 %v6129, 7
    %v6131 = vsub.s32 3, %v6130
    %v6132 = vrot.slane %v6115, %v6131
    %v6133 = vlaneseq
    %v6134 = vshrl.u32 %v6133, 7
    %v6135 = vsub.s32 4, %v6134
    %v6136 = vrot.slane %v6115, %v6135
    %v6137 = vlaneseq
    %v6138 = vshrl.u32 %v6137, 7
    %v6139 = vsub.s32 5, %v6138
    %v6140 = vrot.slane %v6115, %v6139
    %v6141 = vlaneseq
    %v6142 = vshrl.u32 %v6141, 7
    %v6143 = vsub.s32 6, %v6142
    %v6144 = vrot.slane %v6115, %v6143
    %v6145 = vlaneseq
    %v6146 = vshrl.u32 %v6145, 7
    %v6147 = vsub.s32 7, %v6146
    %v6148 = vrot.slane %v6115, %v6147
    %v6157 = vadd.f32 %v5639, %v6120
    %v6158 = vadd.f32 %v5641, %v6124
    %v6159 = vadd.f32 %v5785, %v6128
    %v6160 = vadd.f32 %v5787, %v6132
    %v6161 = vadd.f32 %v5931, %v6136
    %v6162 = vadd.f32 %v5933, %v6140
    %v6163 = vadd.f32 %v6077, %v6144
    %v6164 = vadd.f32 %v6079, %v6148
    %v6165 = vadd.f32 %v5643, %v6120
    %v6166 = vadd.f32 %v5645, %v6124
    %v6167 = vadd.f32 %v5789, %v6128
    %v6168 = vadd.f32 %v5791, %v6132
    %v6169 = vadd.f32 %v5935, %v6136
    %v6170 = vadd.f32 %v5937, %v6140
    %v6171 = vadd.f32 %v6081, %v6144
    %v6172 = vadd.f32 %v6083, %v6148
    %v6173 = vadd.f32 %v5649, %v6120
    %v6174 = vadd.f32 %v5651, %v6124
    %v6175 = vadd.f32 %v5795, %v6128
    %v6176 = vadd.f32 %v5797, %v6132
    %v6177 = vadd.f32 %v5941, %v6136
    %v6178 = vadd.f32 %v5943, %v6140
    %v6179 = vadd.f32 %v6087, %v6144
    %v6180 = vadd.f32 %v6089, %v6148
    %v6181 = vadd.f32 %v5653, %v6120
    %v6182 = vadd.f32 %v5655, %v6124
    %v6183 = vadd.f32 %v5799, %v6128
    %v6184 = vadd.f32 %v5801, %v6132
    %v6185 = vadd.f32 %v5945, %v6136
    %v6186 = vadd.f32 %v5947, %v6140
    %v6187 = vadd.f32 %v6091, %v6144
    %v6188 = vadd.f32 %v6093, %v6148
    %v6189 = vadd.f32 %v5659, %v6120
    %v6190 = vadd.f32 %v5661, %v6124
    %v6191 = vadd.f32 %v5805, %v6128
    %v6192 = vadd.f32 %v5807, %v6132
    %v6193 = vadd.f32 %v5951, %v6136
    %v6194 = vadd.f32 %v5953, %v6140
    %v6195 = vadd.f32 %v6097, %v6144
    %v6196 = vadd.f32 %v6099, %v6148
    %v6197 = vadd.f32 %v5663, %v6120
    %v6198 = vadd.f32 %v5665, %v6124
    %v6199 = vadd.f32 %v5809, %v6128
    %v6200 = vadd.f32 %v5811, %v6132
    %v6201 = vadd.f32 %v5955, %v6136
    %v6202 = vadd.f32 %v5957, %v6140
    %v6203 = vadd.f32 %v6101, %v6144
    %v6204 = vadd.f32 %v6103, %v6148
    %v6205 = vadd.f32 %v5669, %v6120
    %v6206 = vadd.f32 %v5671, %v6124
    %v6207 = vadd.f32 %v5815, %v6128
    %v6208 = vadd.f32 %v5817, %v6132
    %v6209 = vadd.f32 %v5961, %v6136
    %v6210 = vadd.f32 %v5963, %v6140
    %v6211 = vadd.f32 %v6107, %v6144
    %v6212 = vadd.f32 %v6109, %v6148
    %v6213 = vadd.f32 %v5673, %v6120
    %v6214 = vadd.f32 %v5675, %v6124
    %v6215 = vadd.f32 %v5819, %v6128
    %v6216 = vadd.f32 %v5821, %v6132
    %v6217 = vadd.f32 %v5965, %v6136
    %v6218 = vadd.f32 %v5967, %v6140
    %v6219 = vadd.f32 %v6111, %v6144
    %v6220 = vadd.f32 %v6113, %v6148
    %v6221 = vld [vmem:[#allocation18] sm:$0xff]
    %v6222 = vld [vmem:[#allocation20] sm:$0xff]
    %v6223 = vadd.f32 %v6157, %v6158
    %v6224 = vadd.f32 %v6223, %v6159
    %v6225 = vadd.f32 %v6224, %v6160
    %v6226 = vadd.f32 %v6225, %v6161
    %v6227 = vadd.f32 %v6226, %v6162
    %v6228 = vadd.f32 %v6227, %v6163
    %v6229 = vadd.f32 %v6228, %v6164
    %6230 = vadd.xlane.f32.xlu0 %v6229
    %v6231 = vpop.xlane.xlu0 %6230
    %v6232 = vadd.f32 %v6165, %v6166
    %v6233 = vadd.f32 %v6232, %v6167
    %v6234 = vadd.f32 %v6233, %v6168
    %v6235 = vadd.f32 %v6234, %v6169
    %v6236 = vadd.f32 %v6235, %v6170
    %v6237 = vadd.f32 %v6236, %v6171
    %v6238 = vadd.f32 %v6237, %v6172
    %6239 = vadd.xlane.f32.xlu0 %v6238
    %v6240 = vpop.xlane.xlu0 %6239
    %v6241 = vadd.f32 %v6173, %v6174
    %v6242 = vadd.f32 %v6241, %v6175
    %v6243 = vadd.f32 %v6242, %v6176
    %v6244 = vadd.f32 %v6243, %v6177
    %v6245 = vadd.f32 %v6244, %v6178
    %v6246 = vadd.f32 %v6245, %v6179
    %v6247 = vadd.f32 %v6246, %v6180
    %6248 = vadd.xlane.f32.xlu0 %v6247
    %v6249 = vpop.xlane.xlu0 %6248
    %v6250 = vadd.f32 %v6181, %v6182
    %v6251 = vadd.f32 %v6250, %v6183
    %v6252 = vadd.f32 %v6251, %v6184
    %v6253 = vadd.f32 %v6252, %v6185
    %v6254 = vadd.f32 %v6253, %v6186
    %v6255 = vadd.f32 %v6254, %v6187
    %v6256 = vadd.f32 %v6255, %v6188
    %6257 = vadd.xlane.f32.xlu0 %v6256
    %v6258 = vpop.xlane.xlu0 %6257
    %v6259 = vadd.f32 %v6189, %v6190
    %v6260 = vadd.f32 %v6259, %v6191
    %v6261 = vadd.f32 %v6260, %v6192
    %v6262 = vadd.f32 %v6261, %v6193
    %v6263 = vadd.f32 %v6262, %v6194
    %v6264 = vadd.f32 %v6263, %v6195
    %v6265 = vadd.f32 %v6264, %v6196
    %6266 = vadd.xlane.f32.xlu0 %v6265
    %v6267 = vpop.xlane.xlu0 %6266
    %v6268 = vadd.f32 %v6197, %v6198
    %v6269 = vadd.f32 %v6268, %v6199
    %v6270 = vadd.f32 %v6269, %v6200
    %v6271 = vadd.f32 %v6270, %v6201
    %v6272 = vadd.f32 %v6271, %v6202
    %v6273 = vadd.f32 %v6272, %v6203
    %v6274 = vadd.f32 %v6273, %v6204
    %6275 = vadd.xlane.f32.xlu0 %v6274
    %v6276 = vpop.xlane.xlu0 %6275
    %v6277 = vadd.f32 %v6205, %v6206
    %v6278 = vadd.f32 %v6277, %v6207
    %v6279 = vadd.f32 %v6278, %v6208
    %v6280 = vadd.f32 %v6279, %v6209
    %v6281 = vadd.f32 %v6280, %v6210
    %v6282 = vadd.f32 %v6281, %v6211
    %v6283 = vadd.f32 %v6282, %v6212
    %6284 = vadd.xlane.f32.xlu0 %v6283
    %v6285 = vpop.xlane.xlu0 %6284
    %v6286 = vadd.f32 %v6213, %v6214
    %v6287 = vadd.f32 %v6286, %v6215
    %v6288 = vadd.f32 %v6287, %v6216
    %v6289 = vadd.f32 %v6288, %v6217
    %v6290 = vadd.f32 %v6289, %v6218
    %v6291 = vadd.f32 %v6290, %v6219
    %v6292 = vadd.f32 %v6291, %v6220
    %6293 = vadd.xlane.f32.xlu0 %v6292
    %v6294 = vpop.xlane.xlu0 %6293
    %v6295 = vmul.f32 %v6231, %v1274
    %v6296 = vmul.f32 %v6240, %v1274
    %v6297 = vmul.f32 %v6249, %v1274
    %v6298 = vmul.f32 %v6258, %v1274
    %v6299 = vmul.f32 %v6267, %v1274
    %v6300 = vmul.f32 %v6276, %v1274
    %v6301 = vmul.f32 %v6285, %v1274
    %v6302 = vmul.f32 %v6294, %v1274
    %v6303 = vmul.f32 %v6157, %v6157
    %v6304 = vmul.f32 %v6158, %v6158
    %v6305 = vmul.f32 %v6159, %v6159
    %v6306 = vmul.f32 %v6160, %v6160
    %v6307 = vmul.f32 %v6161, %v6161
    %v6308 = vmul.f32 %v6162, %v6162
    %v6309 = vmul.f32 %v6163, %v6163
    %v6310 = vmul.f32 %v6164, %v6164
    %v6311 = vmul.f32 %v6165, %v6165
    %v6312 = vmul.f32 %v6166, %v6166
    %v6313 = vmul.f32 %v6167, %v6167
    %v6314 = vmul.f32 %v6168, %v6168
    %v6315 = vmul.f32 %v6169, %v6169
    %v6316 = vmul.f32 %v6170, %v6170
    %v6317 = vmul.f32 %v6171, %v6171
    %v6318 = vmul.f32 %v6172, %v6172
    %v6319 = vmul.f32 %v6173, %v6173
    %v6320 = vmul.f32 %v6174, %v6174
    %v6321 = vmul.f32 %v6175, %v6175
    %v6322 = vmul.f32 %v6176, %v6176
    %v6323 = vmul.f32 %v6177, %v6177
    %v6324 = vmul.f32 %v6178, %v6178
    %v6325 = vmul.f32 %v6179, %v6179
    %v6326 = vmul.f32 %v6180, %v6180
    %v6327 = vmul.f32 %v6181, %v6181
    %v6328 = vmul.f32 %v6182, %v6182
    %v6329 = vmul.f32 %v6183, %v6183
    %v6330 = vmul.f32 %v6184, %v6184
    %v6331 = vmul.f32 %v6185, %v6185
    %v6332 = vmul.f32 %v6186, %v6186
    %v6333 = vmul.f32 %v6187, %v6187
    %v6334 = vmul.f32 %v6188, %v6188
    %v6335 = vmul.f32 %v6189, %v6189
    %v6336 = vmul.f32 %v6190, %v6190
    %v6337 = vmul.f32 %v6191, %v6191
    %v6338 = vmul.f32 %v6192, %v6192
    %v6339 = vmul.f32 %v6193, %v6193
    %v6340 = vmul.f32 %v6194, %v6194
    %v6341 = vmul.f32 %v6195, %v6195
    %v6342 = vmul.f32 %v6196, %v6196
    %v6343 = vmul.f32 %v6197, %v6197
    %v6344 = vmul.f32 %v6198, %v6198
    %v6345 = vmul.f32 %v6199, %v6199
    %v6346 = vmul.f32 %v6200, %v6200
    %v6347 = vmul.f32 %v6201, %v6201
    %v6348 = vmul.f32 %v6202, %v6202
    %v6349 = vmul.f32 %v6203, %v6203
    %v6350 = vmul.f32 %v6204, %v6204
    %v6351 = vmul.f32 %v6205, %v6205
    %v6352 = vmul.f32 %v6206, %v6206
    %v6353 = vmul.f32 %v6207, %v6207
    %v6354 = vmul.f32 %v6208, %v6208
    %v6355 = vmul.f32 %v6209, %v6209
    %v6356 = vmul.f32 %v6210, %v6210
    %v6357 = vmul.f32 %v6211, %v6211
    %v6358 = vmul.f32 %v6212, %v6212
    %v6359 = vmul.f32 %v6213, %v6213
    %v6360 = vmul.f32 %v6214, %v6214
    %v6361 = vmul.f32 %v6215, %v6215
    %v6362 = vmul.f32 %v6216, %v6216
    %v6363 = vmul.f32 %v6217, %v6217
    %v6364 = vmul.f32 %v6218, %v6218
    %v6365 = vmul.f32 %v6219, %v6219
    %v6366 = vmul.f32 %v6220, %v6220
    %v6367 = vadd.f32 %v6303, %v6304
    %v6368 = vadd.f32 %v6367, %v6305
    %v6369 = vadd.f32 %v6368, %v6306
    %v6370 = vadd.f32 %v6369, %v6307
    %v6371 = vadd.f32 %v6370, %v6308
    %v6372 = vadd.f32 %v6371, %v6309
    %v6373 = vadd.f32 %v6372, %v6310
    %6374 = vadd.xlane.f32.xlu0 %v6373
    %v6375 = vpop.xlane.xlu0 %6374
    %v6376 = vadd.f32 %v6311, %v6312
    %v6377 = vadd.f32 %v6376, %v6313
    %v6378 = vadd.f32 %v6377, %v6314
    %v6379 = vadd.f32 %v6378, %v6315
    %v6380 = vadd.f32 %v6379, %v6316
    %v6381 = vadd.f32 %v6380, %v6317
    %v6382 = vadd.f32 %v6381, %v6318
    %6383 = vadd.xlane.f32.xlu0 %v6382
    %v6384 = vpop.xlane.xlu0 %6383
    %v6385 = vadd.f32 %v6319, %v6320
    %v6386 = vadd.f32 %v6385, %v6321
    %v6387 = vadd.f32 %v6386, %v6322
    %v6388 = vadd.f32 %v6387, %v6323
    %v6389 = vadd.f32 %v6388, %v6324
    %v6390 = vadd.f32 %v6389, %v6325
    %v6391 = vadd.f32 %v6390, %v6326
    %6392 = vadd.xlane.f32.xlu0 %v6391
    %v6393 = vpop.xlane.xlu0 %6392
    %v6394 = vadd.f32 %v6327, %v6328
    %v6395 = vadd.f32 %v6394, %v6329
    %v6396 = vadd.f32 %v6395, %v6330
    %v6397 = vadd.f32 %v6396, %v6331
    %v6398 = vadd.f32 %v6397, %v6332
    %v6399 = vadd.f32 %v6398, %v6333
    %v6400 = vadd.f32 %v6399, %v6334
    %6401 = vadd.xlane.f32.xlu0 %v6400
    %v6402 = vpop.xlane.xlu0 %6401
    %v6403 = vadd.f32 %v6335, %v6336
    %v6404 = vadd.f32 %v6403, %v6337
    %v6405 = vadd.f32 %v6404, %v6338
    %v6406 = vadd.f32 %v6405, %v6339
    %v6407 = vadd.f32 %v6406, %v6340
    %v6408 = vadd.f32 %v6407, %v6341
    %v6409 = vadd.f32 %v6408, %v6342
    %6410 = vadd.xlane.f32.xlu0 %v6409
    %v6411 = vpop.xlane.xlu0 %6410
    %v6412 = vadd.f32 %v6343, %v6344
    %v6413 = vadd.f32 %v6412, %v6345
    %v6414 = vadd.f32 %v6413, %v6346
    %v6415 = vadd.f32 %v6414, %v6347
    %v6416 = vadd.f32 %v6415, %v6348
    %v6417 = vadd.f32 %v6416, %v6349
    %v6418 = vadd.f32 %v6417, %v6350
    %6419 = vadd.xlane.f32.xlu0 %v6418
    %v6420 = vpop.xlane.xlu0 %6419
    %v6421 = vadd.f32 %v6351, %v6352
    %v6422 = vadd.f32 %v6421, %v6353
    %v6423 = vadd.f32 %v6422, %v6354
    %v6424 = vadd.f32 %v6423, %v6355
    %v6425 = vadd.f32 %v6424, %v6356
    %v6426 = vadd.f32 %v6425, %v6357
    %v6427 = vadd.f32 %v6426, %v6358
    %6428 = vadd.xlane.f32.xlu0 %v6427
    %v6429 = vpop.xlane.xlu0 %6428
    %v6430 = vadd.f32 %v6359, %v6360
    %v6431 = vadd.f32 %v6430, %v6361
    %v6432 = vadd.f32 %v6431, %v6362
    %v6433 = vadd.f32 %v6432, %v6363
    %v6434 = vadd.f32 %v6433, %v6364
    %v6435 = vadd.f32 %v6434, %v6365
    %v6436 = vadd.f32 %v6435, %v6366
    %6437 = vadd.xlane.f32.xlu0 %v6436
    %v6438 = vpop.xlane.xlu0 %6437
    %v6439 = vmul.f32 %v6375, %v1274
    %v6440 = vmul.f32 %v6384, %v1274
    %v6441 = vmul.f32 %v6393, %v1274
    %v6442 = vmul.f32 %v6402, %v1274
    %v6443 = vmul.f32 %v6411, %v1274
    %v6444 = vmul.f32 %v6420, %v1274
    %v6445 = vmul.f32 %v6429, %v1274
    %v6446 = vmul.f32 %v6438, %v1274
    %v6447 = vmul.f32 %v6295, %v6295
    %v6448 = vmul.f32 %v6296, %v6296
    %v6449 = vmul.f32 %v6297, %v6297
    %v6450 = vmul.f32 %v6298, %v6298
    %v6451 = vmul.f32 %v6299, %v6299
    %v6452 = vmul.f32 %v6300, %v6300
    %v6453 = vmul.f32 %v6301, %v6301
    %v6454 = vmul.f32 %v6302, %v6302
    %v6455 = vsub.f32 %v6439, %v6447
    %v6456 = vsub.f32 %v6440, %v6448
    %v6457 = vsub.f32 %v6441, %v6449
    %v6458 = vsub.f32 %v6442, %v6450
    %v6459 = vsub.f32 %v6443, %v6451
    %v6460 = vsub.f32 %v6444, %v6452
    %v6461 = vsub.f32 %v6445, %v6453
    %v6462 = vsub.f32 %v6446, %v6454
    %v6463 = vmax.f32 %v6455, 0.0
    %v6464 = vmax.f32 %v6456, 0.0
    %v6465 = vmax.f32 %v6457, 0.0
    %v6466 = vmax.f32 %v6458, 0.0
    %v6467 = vmax.f32 %v6459, 0.0
    %v6468 = vmax.f32 %v6460, 0.0
    %v6469 = vmax.f32 %v6461, 0.0
    %v6470 = vmax.f32 %v6462, 0.0
    %v6471 = vsub.f32 %v6157, %v6295
    %v6472 = vsub.f32 %v6158, %v6295
    %v6473 = vsub.f32 %v6159, %v6295
    %v6474 = vsub.f32 %v6160, %v6295
    %v6475 = vsub.f32 %v6161, %v6295
    %v6476 = vsub.f32 %v6162, %v6295
    %v6477 = vsub.f32 %v6163, %v6295
    %v6478 = vsub.f32 %v6164, %v6295
    %v6479 = vsub.f32 %v6165, %v6296
    %v6480 = vsub.f32 %v6166, %v6296
    %v6481 = vsub.f32 %v6167, %v6296
    %v6482 = vsub.f32 %v6168, %v6296
    %v6483 = vsub.f32 %v6169, %v6296
    %v6484 = vsub.f32 %v6170, %v6296
    %v6485 = vsub.f32 %v6171, %v6296
    %v6486 = vsub.f32 %v6172, %v6296
    %v6487 = vsub.f32 %v6173, %v6297
    %v6488 = vsub.f32 %v6174, %v6297
    %v6489 = vsub.f32 %v6175, %v6297
    %v6490 = vsub.f32 %v6176, %v6297
    %v6491 = vsub.f32 %v6177, %v6297
    %v6492 = vsub.f32 %v6178, %v6297
    %v6493 = vsub.f32 %v6179, %v6297
    %v6494 = vsub.f32 %v6180, %v6297
    %v6495 = vsub.f32 %v6181, %v6298
    %v6496 = vsub.f32 %v6182, %v6298
    %v6497 = vsub.f32 %v6183, %v6298
    %v6498 = vsub.f32 %v6184, %v6298
    %v6499 = vsub.f32 %v6185, %v6298
    %v6500 = vsub.f32 %v6186, %v6298
    %v6501 = vsub.f32 %v6187, %v6298
    %v6502 = vsub.f32 %v6188, %v6298
    %v6503 = vsub.f32 %v6189, %v6299
    %v6504 = vsub.f32 %v6190, %v6299
    %v6505 = vsub.f32 %v6191, %v6299
    %v6506 = vsub.f32 %v6192, %v6299
    %v6507 = vsub.f32 %v6193, %v6299
    %v6508 = vsub.f32 %v6194, %v6299
    %v6509 = vsub.f32 %v6195, %v6299
    %v6510 = vsub.f32 %v6196, %v6299
    %v6511 = vsub.f32 %v6197, %v6300
    %v6512 = vsub.f32 %v6198, %v6300
    %v6513 = vsub.f32 %v6199, %v6300
    %v6514 = vsub.f32 %v6200, %v6300
    %v6515 = vsub.f32 %v6201, %v6300
    %v6516 = vsub.f32 %v6202, %v6300
    %v6517 = vsub.f32 %v6203, %v6300
    %v6518 = vsub.f32 %v6204, %v6300
    %v6519 = vsub.f32 %v6205, %v6301
    %v6520 = vsub.f32 %v6206, %v6301
    %v6521 = vsub.f32 %v6207, %v6301
    %v6522 = vsub.f32 %v6208, %v6301
    %v6523 = vsub.f32 %v6209, %v6301
    %v6524 = vsub.f32 %v6210, %v6301
    %v6525 = vsub.f32 %v6211, %v6301
    %v6526 = vsub.f32 %v6212, %v6301
    %v6527 = vsub.f32 %v6213, %v6302
    %v6528 = vsub.f32 %v6214, %v6302
    %v6529 = vsub.f32 %v6215, %v6302
    %v6530 = vsub.f32 %v6216, %v6302
    %v6531 = vsub.f32 %v6217, %v6302
    %v6532 = vsub.f32 %v6218, %v6302
    %v6533 = vsub.f32 %v6219, %v6302
    %v6534 = vsub.f32 %v6220, %v6302
    %v6535 = vadd.f32 %v6463, 1e-12
    %v6536 = vadd.f32 %v6464, 1e-12
    %v6537 = vadd.f32 %v6465, 1e-12
    %v6538 = vadd.f32 %v6466, 1e-12
    %v6539 = vadd.f32 %v6467, 1e-12
    %v6540 = vadd.f32 %v6468, 1e-12
    %v6541 = vadd.f32 %v6469, 1e-12
    %v6542 = vadd.f32 %v6470, 1e-12
    %v6543 = vrsqrt.pop %v6535
    %v6544 = vrsqrt.pop %v6536
    %v6545 = vrsqrt.pop %v6537
    %v6546 = vrsqrt.pop %v6538
    %v6547 = vrsqrt.pop %v6539
    %v6548 = vrsqrt.pop %v6540
    %v6549 = vrsqrt.pop %v6541
    %v6550 = vrsqrt.pop %v6542
    %v6551 = vmul.f32 %v6471, %v6543
    %v6552 = vmul.f32 %v6472, %v6543
    %v6553 = vmul.f32 %v6473, %v6543
    %v6554 = vmul.f32 %v6474, %v6543
    %v6555 = vmul.f32 %v6475, %v6543
    %v6556 = vmul.f32 %v6476, %v6543
    %v6557 = vmul.f32 %v6477, %v6543
    %v6558 = vmul.f32 %v6478, %v6543
    %v6559 = vmul.f32 %v6479, %v6544
    %v6560 = vmul.f32 %v6480, %v6544
    %v6561 = vmul.f32 %v6481, %v6544
    %v6562 = vmul.f32 %v6482, %v6544
    %v6563 = vmul.f32 %v6483, %v6544
    %v6564 = vmul.f32 %v6484, %v6544
    %v6565 = vmul.f32 %v6485, %v6544
    %v6566 = vmul.f32 %v6486, %v6544
    %v6567 = vmul.f32 %v6487, %v6545
    %v6568 = vmul.f32 %v6488, %v6545
    %v6569 = vmul.f32 %v6489, %v6545
    %v6570 = vmul.f32 %v6490, %v6545
    %v6571 = vmul.f32 %v6491, %v6545
    %v6572 = vmul.f32 %v6492, %v6545
    %v6573 = vmul.f32 %v6493, %v6545
    %v6574 = vmul.f32 %v6494, %v6545
    %v6575 = vmul.f32 %v6495, %v6546
    %v6576 = vmul.f32 %v6496, %v6546
    %v6577 = vmul.f32 %v6497, %v6546
    %v6578 = vmul.f32 %v6498, %v6546
    %v6579 = vmul.f32 %v6499, %v6546
    %v6580 = vmul.f32 %v6500, %v6546
    %v6581 = vmul.f32 %v6501, %v6546
    %v6582 = vmul.f32 %v6502, %v6546
    %v6583 = vmul.f32 %v6503, %v6547
    %v6584 = vmul.f32 %v6504, %v6547
    %v6585 = vmul.f32 %v6505, %v6547
    %v6586 = vmul.f32 %v6506, %v6547
    %v6587 = vmul.f32 %v6507, %v6547
    %v6588 = vmul.f32 %v6508, %v6547
    %v6589 = vmul.f32 %v6509, %v6547
    %v6590 = vmul.f32 %v6510, %v6547
    %v6591 = vmul.f32 %v6511, %v6548
    %v6592 = vmul.f32 %v6512, %v6548
    %v6593 = vmul.f32 %v6513, %v6548
    %v6594 = vmul.f32 %v6514, %v6548
    %v6595 = vmul.f32 %v6515, %v6548
    %v6596 = vmul.f32 %v6516, %v6548
    %v6597 = vmul.f32 %v6517, %v6548
    %v6598 = vmul.f32 %v6518, %v6548
    %v6599 = vmul.f32 %v6519, %v6549
    %v6600 = vmul.f32 %v6520, %v6549
    %v6601 = vmul.f32 %v6521, %v6549
    %v6602 = vmul.f32 %v6522, %v6549
    %v6603 = vmul.f32 %v6523, %v6549
    %v6604 = vmul.f32 %v6524, %v6549
    %v6605 = vmul.f32 %v6525, %v6549
    %v6606 = vmul.f32 %v6526, %v6549
    %v6607 = vmul.f32 %v6527, %v6550
    %v6608 = vmul.f32 %v6528, %v6550
    %v6609 = vmul.f32 %v6529, %v6550
    %v6610 = vmul.f32 %v6530, %v6550
    %v6611 = vmul.f32 %v6531, %v6550
    %v6612 = vmul.f32 %v6532, %v6550
    %v6613 = vmul.f32 %v6533, %v6550
    %v6614 = vmul.f32 %v6534, %v6550
    %v6616 = vlaneseq
    %v6617 = vshrl.u32 %v6616, 7
    %v6618 = vsub.s32 0, %v6617
    %v6619 = vrot.slane %v6221, %v6618
    %v6620 = vlaneseq
    %v6621 = vshrl.u32 %v6620, 7
    %v6622 = vsub.s32 1, %v6621
    %v6623 = vrot.slane %v6221, %v6622
    %v6624 = vlaneseq
    %v6625 = vshrl.u32 %v6624, 7
    %v6626 = vsub.s32 2, %v6625
    %v6627 = vrot.slane %v6221, %v6626
    %v6628 = vlaneseq
    %v6629 = vshrl.u32 %v6628, 7
    %v6630 = vsub.s32 3, %v6629
    %v6631 = vrot.slane %v6221, %v6630
    %v6632 = vlaneseq
    %v6633 = vshrl.u32 %v6632, 7
    %v6634 = vsub.s32 4, %v6633
    %v6635 = vrot.slane %v6221, %v6634
    %v6636 = vlaneseq
    %v6637 = vshrl.u32 %v6636, 7
    %v6638 = vsub.s32 5, %v6637
    %v6639 = vrot.slane %v6221, %v6638
    %v6640 = vlaneseq
    %v6641 = vshrl.u32 %v6640, 7
    %v6642 = vsub.s32 6, %v6641
    %v6643 = vrot.slane %v6221, %v6642
    %v6644 = vlaneseq
    %v6645 = vshrl.u32 %v6644, 7
    %v6646 = vsub.s32 7, %v6645
    %v6647 = vrot.slane %v6221, %v6646
    %v6656 = vmul.f32 %v6551, %v6619
    %v6657 = vmul.f32 %v6552, %v6623
    %v6658 = vmul.f32 %v6553, %v6627
    %v6659 = vmul.f32 %v6554, %v6631
    %v6660 = vmul.f32 %v6555, %v6635
    %v6661 = vmul.f32 %v6556, %v6639
    %v6662 = vmul.f32 %v6557, %v6643
    %v6663 = vmul.f32 %v6558, %v6647
    %v6664 = vmul.f32 %v6559, %v6619
    %v6665 = vmul.f32 %v6560, %v6623
    %v6666 = vmul.f32 %v6561, %v6627
    %v6667 = vmul.f32 %v6562, %v6631
    %v6668 = vmul.f32 %v6563, %v6635
    %v6669 = vmul.f32 %v6564, %v6639
    %v6670 = vmul.f32 %v6565, %v6643
    %v6671 = vmul.f32 %v6566, %v6647
    %v6672 = vmul.f32 %v6567, %v6619
    %v6673 = vmul.f32 %v6568, %v6623
    %v6674 = vmul.f32 %v6569, %v6627
    %v6675 = vmul.f32 %v6570, %v6631
    %v6676 = vmul.f32 %v6571, %v6635
    %v6677 = vmul.f32 %v6572, %v6639
    %v6678 = vmul.f32 %v6573, %v6643
    %v6679 = vmul.f32 %v6574, %v6647
    %v6680 = vmul.f32 %v6575, %v6619
    %v6681 = vmul.f32 %v6576, %v6623
    %v6682 = vmul.f32 %v6577, %v6627
    %v6683 = vmul.f32 %v6578, %v6631
    %v6684 = vmul.f32 %v6579, %v6635
    %v6685 = vmul.f32 %v6580, %v6639
    %v6686 = vmul.f32 %v6581, %v6643
    %v6687 = vmul.f32 %v6582, %v6647
    %v6688 = vmul.f32 %v6583, %v6619
    %v6689 = vmul.f32 %v6584, %v6623
    %v6690 = vmul.f32 %v6585, %v6627
    %v6691 = vmul.f32 %v6586, %v6631
    %v6692 = vmul.f32 %v6587, %v6635
    %v6693 = vmul.f32 %v6588, %v6639
    %v6694 = vmul.f32 %v6589, %v6643
    %v6695 = vmul.f32 %v6590, %v6647
    %v6696 = vmul.f32 %v6591, %v6619
    %v6697 = vmul.f32 %v6592, %v6623
    %v6698 = vmul.f32 %v6593, %v6627
    %v6699 = vmul.f32 %v6594, %v6631
    %v6700 = vmul.f32 %v6595, %v6635
    %v6701 = vmul.f32 %v6596, %v6639
    %v6702 = vmul.f32 %v6597, %v6643
    %v6703 = vmul.f32 %v6598, %v6647
    %v6704 = vmul.f32 %v6599, %v6619
    %v6705 = vmul.f32 %v6600, %v6623
    %v6706 = vmul.f32 %v6601, %v6627
    %v6707 = vmul.f32 %v6602, %v6631
    %v6708 = vmul.f32 %v6603, %v6635
    %v6709 = vmul.f32 %v6604, %v6639
    %v6710 = vmul.f32 %v6605, %v6643
    %v6711 = vmul.f32 %v6606, %v6647
    %v6712 = vmul.f32 %v6607, %v6619
    %v6713 = vmul.f32 %v6608, %v6623
    %v6714 = vmul.f32 %v6609, %v6627
    %v6715 = vmul.f32 %v6610, %v6631
    %v6716 = vmul.f32 %v6611, %v6635
    %v6717 = vmul.f32 %v6612, %v6639
    %v6718 = vmul.f32 %v6613, %v6643
    %v6719 = vmul.f32 %v6614, %v6647
    %v6721 = vlaneseq
    %v6722 = vshrl.u32 %v6721, 7
    %v6723 = vsub.s32 0, %v6722
    %v6724 = vrot.slane %v6222, %v6723
    %v6725 = vlaneseq
    %v6726 = vshrl.u32 %v6725, 7
    %v6727 = vsub.s32 1, %v6726
    %v6728 = vrot.slane %v6222, %v6727
    %v6729 = vlaneseq
    %v6730 = vshrl.u32 %v6729, 7
    %v6731 = vsub.s32 2, %v6730
    %v6732 = vrot.slane %v6222, %v6731
    %v6733 = vlaneseq
    %v6734 = vshrl.u32 %v6733, 7
    %v6735 = vsub.s32 3, %v6734
    %v6736 = vrot.slane %v6222, %v6735
    %v6737 = vlaneseq
    %v6738 = vshrl.u32 %v6737, 7
    %v6739 = vsub.s32 4, %v6738
    %v6740 = vrot.slane %v6222, %v6739
    %v6741 = vlaneseq
    %v6742 = vshrl.u32 %v6741, 7
    %v6743 = vsub.s32 5, %v6742
    %v6744 = vrot.slane %v6222, %v6743
    %v6745 = vlaneseq
    %v6746 = vshrl.u32 %v6745, 7
    %v6747 = vsub.s32 6, %v6746
    %v6748 = vrot.slane %v6222, %v6747
    %v6749 = vlaneseq
    %v6750 = vshrl.u32 %v6749, 7
    %v6751 = vsub.s32 7, %v6750
    %v6752 = vrot.slane %v6222, %v6751
    %v6761 = vadd.f32 %v6656, %v6724
    %v6762 = vadd.f32 %v6657, %v6728
    %v6763 = vadd.f32 %v6658, %v6732
    %v6764 = vadd.f32 %v6659, %v6736
    %v6765 = vadd.f32 %v6660, %v6740
    %v6766 = vadd.f32 %v6661, %v6744
    %v6767 = vadd.f32 %v6662, %v6748
    %v6768 = vadd.f32 %v6663, %v6752
    %v6769 = vadd.f32 %v6664, %v6724
    %v6770 = vadd.f32 %v6665, %v6728
    %v6771 = vadd.f32 %v6666, %v6732
    %v6772 = vadd.f32 %v6667, %v6736
    %v6773 = vadd.f32 %v6668, %v6740
    %v6774 = vadd.f32 %v6669, %v6744
    %v6775 = vadd.f32 %v6670, %v6748
    %v6776 = vadd.f32 %v6671, %v6752
    %v6777 = vadd.f32 %v6672, %v6724
    %v6778 = vadd.f32 %v6673, %v6728
    %v6779 = vadd.f32 %v6674, %v6732
    %v6780 = vadd.f32 %v6675, %v6736
    %v6781 = vadd.f32 %v6676, %v6740
    %v6782 = vadd.f32 %v6677, %v6744
    %v6783 = vadd.f32 %v6678, %v6748
    %v6784 = vadd.f32 %v6679, %v6752
    %v6785 = vadd.f32 %v6680, %v6724
    %v6786 = vadd.f32 %v6681, %v6728
    %v6787 = vadd.f32 %v6682, %v6732
    %v6788 = vadd.f32 %v6683, %v6736
    %v6789 = vadd.f32 %v6684, %v6740
    %v6790 = vadd.f32 %v6685, %v6744
    %v6791 = vadd.f32 %v6686, %v6748
    %v6792 = vadd.f32 %v6687, %v6752
    %v6793 = vadd.f32 %v6688, %v6724
    %v6794 = vadd.f32 %v6689, %v6728
    %v6795 = vadd.f32 %v6690, %v6732
    %v6796 = vadd.f32 %v6691, %v6736
    %v6797 = vadd.f32 %v6692, %v6740
    %v6798 = vadd.f32 %v6693, %v6744
    %v6799 = vadd.f32 %v6694, %v6748
    %v6800 = vadd.f32 %v6695, %v6752
    %v6801 = vadd.f32 %v6696, %v6724
    %v6802 = vadd.f32 %v6697, %v6728
    %v6803 = vadd.f32 %v6698, %v6732
    %v6804 = vadd.f32 %v6699, %v6736
    %v6805 = vadd.f32 %v6700, %v6740
    %v6806 = vadd.f32 %v6701, %v6744
    %v6807 = vadd.f32 %v6702, %v6748
    %v6808 = vadd.f32 %v6703, %v6752
    %v6809 = vadd.f32 %v6704, %v6724
    %v6810 = vadd.f32 %v6705, %v6728
    %v6811 = vadd.f32 %v6706, %v6732
    %v6812 = vadd.f32 %v6707, %v6736
    %v6813 = vadd.f32 %v6708, %v6740
    %v6814 = vadd.f32 %v6709, %v6744
    %v6815 = vadd.f32 %v6710, %v6748
    %v6816 = vadd.f32 %v6711, %v6752
    %v6817 = vadd.f32 %v6712, %v6724
    %v6818 = vadd.f32 %v6713, %v6728
    %v6819 = vadd.f32 %v6714, %v6732
    %v6820 = vadd.f32 %v6715, %v6736
    %v6821 = vadd.f32 %v6716, %v6740
    %v6822 = vadd.f32 %v6717, %v6744
    %v6823 = vadd.f32 %v6718, %v6748
    %v6824 = vadd.f32 %v6719, %v6752
    %v6825 = vadd.f32 %v6761, %v1741
    %v6826 = vadd.f32 %v6762, %v1742
    %v6827 = vadd.f32 %v6763, %v1743
    %v6828 = vadd.f32 %v6764, %v1744
    %v6829 = vadd.f32 %v6765, %v1745
    %v6830 = vadd.f32 %v6766, %v1746
    %v6831 = vadd.f32 %v6767, %v1747
    %v6832 = vadd.f32 %v6768, %v1748
    %v6833 = vadd.f32 %v6769, %v1749
    %v6834 = vadd.f32 %v6770, %v1750
    %v6835 = vadd.f32 %v6771, %v1751
    %v6836 = vadd.f32 %v6772, %v1752
    %v6837 = vadd.f32 %v6773, %v1753
    %v6838 = vadd.f32 %v6774, %v1754
    %v6839 = vadd.f32 %v6775, %v1755
    %v6840 = vadd.f32 %v6776, %v1756
    %v6841 = vadd.f32 %v6777, %v1757
    %v6842 = vadd.f32 %v6778, %v1758
    %v6843 = vadd.f32 %v6779, %v1759
    %v6844 = vadd.f32 %v6780, %v1760
    %v6845 = vadd.f32 %v6781, %v1761
    %v6846 = vadd.f32 %v6782, %v1762
    %v6847 = vadd.f32 %v6783, %v1763
    %v6848 = vadd.f32 %v6784, %v1764
    %v6849 = vadd.f32 %v6785, %v1765
    %v6850 = vadd.f32 %v6786, %v1766
    %v6851 = vadd.f32 %v6787, %v1767
    %v6852 = vadd.f32 %v6788, %v1768
    %v6853 = vadd.f32 %v6789, %v1769
    %v6854 = vadd.f32 %v6790, %v1770
    %v6855 = vadd.f32 %v6791, %v1771
    %v6856 = vadd.f32 %v6792, %v1772
    %v6857 = vadd.f32 %v6793, %v1773
    %v6858 = vadd.f32 %v6794, %v1774
    %v6859 = vadd.f32 %v6795, %v1775
    %v6860 = vadd.f32 %v6796, %v1776
    %v6861 = vadd.f32 %v6797, %v1777
    %v6862 = vadd.f32 %v6798, %v1778
    %v6863 = vadd.f32 %v6799, %v1779
    %v6864 = vadd.f32 %v6800, %v1780
    %v6865 = vadd.f32 %v6801, %v1781
    %v6866 = vadd.f32 %v6802, %v1782
    %v6867 = vadd.f32 %v6803, %v1783
    %v6868 = vadd.f32 %v6804, %v1784
    %v6869 = vadd.f32 %v6805, %v1785
    %v6870 = vadd.f32 %v6806, %v1786
    %v6871 = vadd.f32 %v6807, %v1787
    %v6872 = vadd.f32 %v6808, %v1788
    %v6873 = vadd.f32 %v6809, %v1789
    %v6874 = vadd.f32 %v6810, %v1790
    %v6875 = vadd.f32 %v6811, %v1791
    %v6876 = vadd.f32 %v6812, %v1792
    %v6877 = vadd.f32 %v6813, %v1793
    %v6878 = vadd.f32 %v6814, %v1794
    %v6879 = vadd.f32 %v6815, %v1795
    %v6880 = vadd.f32 %v6816, %v1796
    %v6881 = vadd.f32 %v6817, %v1797
    %v6882 = vadd.f32 %v6818, %v1798
    %v6883 = vadd.f32 %v6819, %v1799
    %v6884 = vadd.f32 %v6820, %v1800
    %v6885 = vadd.f32 %v6821, %v1801
    %v6886 = vadd.f32 %v6822, %v1802
    %v6887 = vadd.f32 %v6823, %v1803
    %v6888 = vadd.f32 %v6824, %v1804
    %v6889 = vld [vmem:[#allocation21] sm:$0xff]
    %v6891 = vlaneseq
    %v6892 = vshrl.u32 %v6891, 7
    %v6893 = vsub.s32 0, %v6892
    %v6894 = vrot.slane %v6889, %v6893
    %v6895 = vlaneseq
    %v6896 = vshrl.u32 %v6895, 7
    %v6897 = vsub.s32 1, %v6896
    %v6898 = vrot.slane %v6889, %v6897
    %v6899 = vlaneseq
    %v6900 = vshrl.u32 %v6899, 7
    %v6901 = vsub.s32 2, %v6900
    %v6902 = vrot.slane %v6889, %v6901
    %v6903 = vlaneseq
    %v6904 = vshrl.u32 %v6903, 7
    %v6905 = vsub.s32 3, %v6904
    %v6906 = vrot.slane %v6889, %v6905
    %v6907 = vlaneseq
    %v6908 = vshrl.u32 %v6907, 7
    %v6909 = vsub.s32 4, %v6908
    %v6910 = vrot.slane %v6889, %v6909
    %v6911 = vlaneseq
    %v6912 = vshrl.u32 %v6911, 7
    %v6913 = vsub.s32 5, %v6912
    %v6914 = vrot.slane %v6889, %v6913
    %v6915 = vlaneseq
    %v6916 = vshrl.u32 %v6915, 7
    %v6917 = vsub.s32 6, %v6916
    %v6918 = vrot.slane %v6889, %v6917
    %v6919 = vlaneseq
    %v6920 = vshrl.u32 %v6919, 7
    %v6921 = vsub.s32 7, %v6920
    %v6922 = vrot.slane %v6889, %v6921
    %v6931 = vmul.f32 %v6825, %v6894
    %v6932 = vmul.f32 %v6826, %v6898
    %v6933 = vmul.f32 %v6827, %v6902
    %v6934 = vmul.f32 %v6828, %v6906
    %v6935 = vmul.f32 %v6829, %v6910
    %v6936 = vmul.f32 %v6830, %v6914
    %v6937 = vmul.f32 %v6831, %v6918
    %v6938 = vmul.f32 %v6832, %v6922
    %v6939 = vmul.f32 %v6833, %v6894
    %v6940 = vmul.f32 %v6834, %v6898
    %v6941 = vmul.f32 %v6835, %v6902
    %v6942 = vmul.f32 %v6836, %v6906
    %v6943 = vmul.f32 %v6837, %v6910
    %v6944 = vmul.f32 %v6838, %v6914
    %v6945 = vmul.f32 %v6839, %v6918
    %v6946 = vmul.f32 %v6840, %v6922
    %v6947 = vmul.f32 %v6841, %v6894
    %v6948 = vmul.f32 %v6842, %v6898
    %v6949 = vmul.f32 %v6843, %v6902
    %v6950 = vmul.f32 %v6844, %v6906
    %v6951 = vmul.f32 %v6845, %v6910
    %v6952 = vmul.f32 %v6846, %v6914
    %v6953 = vmul.f32 %v6847, %v6918
    %v6954 = vmul.f32 %v6848, %v6922
    %v6955 = vmul.f32 %v6849, %v6894
    %v6956 = vmul.f32 %v6850, %v6898
    %v6957 = vmul.f32 %v6851, %v6902
    %v6958 = vmul.f32 %v6852, %v6906
    %v6959 = vmul.f32 %v6853, %v6910
    %v6960 = vmul.f32 %v6854, %v6914
    %v6961 = vmul.f32 %v6855, %v6918
    %v6962 = vmul.f32 %v6856, %v6922
    %v6963 = vmul.f32 %v6857, %v6894
    %v6964 = vmul.f32 %v6858, %v6898
    %v6965 = vmul.f32 %v6859, %v6902
    %v6966 = vmul.f32 %v6860, %v6906
    %v6967 = vmul.f32 %v6861, %v6910
    %v6968 = vmul.f32 %v6862, %v6914
    %v6969 = vmul.f32 %v6863, %v6918
    %v6970 = vmul.f32 %v6864, %v6922
    %v6971 = vmul.f32 %v6865, %v6894
    %v6972 = vmul.f32 %v6866, %v6898
    %v6973 = vmul.f32 %v6867, %v6902
    %v6974 = vmul.f32 %v6868, %v6906
    %v6975 = vmul.f32 %v6869, %v6910
    %v6976 = vmul.f32 %v6870, %v6914
    %v6977 = vmul.f32 %v6871, %v6918
    %v6978 = vmul.f32 %v6872, %v6922
    %v6979 = vmul.f32 %v6873, %v6894
    %v6980 = vmul.f32 %v6874, %v6898
    %v6981 = vmul.f32 %v6875, %v6902
    %v6982 = vmul.f32 %v6876, %v6906
    %v6983 = vmul.f32 %v6877, %v6910
    %v6984 = vmul.f32 %v6878, %v6914
    %v6985 = vmul.f32 %v6879, %v6918
    %v6986 = vmul.f32 %v6880, %v6922
    %v6987 = vmul.f32 %v6881, %v6894
    %v6988 = vmul.f32 %v6882, %v6898
    %v6989 = vmul.f32 %v6883, %v6902
    %v6990 = vmul.f32 %v6884, %v6906
    %v6991 = vmul.f32 %v6885, %v6910
    %v6992 = vmul.f32 %v6886, %v6914
    %v6993 = vmul.f32 %v6887, %v6918
    %v6994 = vmul.f32 %v6888, %v6922
    %v6995 = vpack.c.bf16 %v6931, %v6931
    %v6996 = vpack.c.bf16 %v6932, %v6932
    %v6997 = vpack.c.bf16 %v6933, %v6933
    %v6998 = vpack.c.bf16 %v6934, %v6934
    %v6999 = vpack.c.bf16 %v6935, %v6935
    %v7000 = vpack.c.bf16 %v6936, %v6936
    %v7001 = vpack.c.bf16 %v6937, %v6937
    %v7002 = vpack.c.bf16 %v6938, %v6938
    %v7003 = vpack.c.bf16 %v6939, %v6939
    %v7004 = vpack.c.bf16 %v6940, %v6940
    %v7005 = vpack.c.bf16 %v6941, %v6941
    %v7006 = vpack.c.bf16 %v6942, %v6942
    %v7007 = vpack.c.bf16 %v6943, %v6943
    %v7008 = vpack.c.bf16 %v6944, %v6944
    %v7009 = vpack.c.bf16 %v6945, %v6945
    %v7010 = vpack.c.bf16 %v6946, %v6946
    %v7011 = vpack.c.bf16 %v6947, %v6947
    %v7012 = vpack.c.bf16 %v6948, %v6948
    %v7013 = vpack.c.bf16 %v6949, %v6949
    %v7014 = vpack.c.bf16 %v6950, %v6950
    %v7015 = vpack.c.bf16 %v6951, %v6951
    %v7016 = vpack.c.bf16 %v6952, %v6952
    %v7017 = vpack.c.bf16 %v6953, %v6953
    %v7018 = vpack.c.bf16 %v6954, %v6954
    %v7019 = vpack.c.bf16 %v6955, %v6955
    %v7020 = vpack.c.bf16 %v6956, %v6956
    %v7021 = vpack.c.bf16 %v6957, %v6957
    %v7022 = vpack.c.bf16 %v6958, %v6958
    %v7023 = vpack.c.bf16 %v6959, %v6959
    %v7024 = vpack.c.bf16 %v6960, %v6960
    %v7025 = vpack.c.bf16 %v6961, %v6961
    %v7026 = vpack.c.bf16 %v6962, %v6962
    %v7027 = vpack.c.bf16 %v6963, %v6963
    %v7028 = vpack.c.bf16 %v6964, %v6964
    %v7029 = vpack.c.bf16 %v6965, %v6965
    %v7030 = vpack.c.bf16 %v6966, %v6966
    %v7031 = vpack.c.bf16 %v6967, %v6967
    %v7032 = vpack.c.bf16 %v6968, %v6968
    %v7033 = vpack.c.bf16 %v6969, %v6969
    %v7034 = vpack.c.bf16 %v6970, %v6970
    %v7035 = vpack.c.bf16 %v6971, %v6971
    %v7036 = vpack.c.bf16 %v6972, %v6972
    %v7037 = vpack.c.bf16 %v6973, %v6973
    %v7038 = vpack.c.bf16 %v6974, %v6974
    %v7039 = vpack.c.bf16 %v6975, %v6975
    %v7040 = vpack.c.bf16 %v6976, %v6976
    %v7041 = vpack.c.bf16 %v6977, %v6977
    %v7042 = vpack.c.bf16 %v6978, %v6978
    %v7043 = vpack.c.bf16 %v6979, %v6979
    %v7044 = vpack.c.bf16 %v6980, %v6980
    %v7045 = vpack.c.bf16 %v6981, %v6981
    %v7046 = vpack.c.bf16 %v6982, %v6982
    %v7047 = vpack.c.bf16 %v6983, %v6983
    %v7048 = vpack.c.bf16 %v6984, %v6984
    %v7049 = vpack.c.bf16 %v6985, %v6985
    %v7050 = vpack.c.bf16 %v6986, %v6986
    %v7051 = vpack.c.bf16 %v6987, %v6987
    %v7052 = vpack.c.bf16 %v6988, %v6988
    %v7053 = vpack.c.bf16 %v6989, %v6989
    %v7054 = vpack.c.bf16 %v6990, %v6990
    %v7055 = vpack.c.bf16 %v6991, %v6991
    %v7056 = vpack.c.bf16 %v6992, %v6992
    %v7057 = vpack.c.bf16 %v6993, %v6993
    %v7058 = vpack.c.bf16 %v6994, %v6994
    %v7059 = vpack.c.bf16 %v6825, %v6825
    %v7060 = vpack.c.bf16 %v6826, %v6826
    %v7061 = vpack.c.bf16 %v6827, %v6827
    %v7062 = vpack.c.bf16 %v6828, %v6828
    %v7063 = vpack.c.bf16 %v6829, %v6829
    %v7064 = vpack.c.bf16 %v6830, %v6830
    %v7065 = vpack.c.bf16 %v6831, %v6831
    %v7066 = vpack.c.bf16 %v6832, %v6832
    %v7067 = vpack.c.bf16 %v6833, %v6833
    %v7068 = vpack.c.bf16 %v6834, %v6834
    %v7069 = vpack.c.bf16 %v6835, %v6835
    %v7070 = vpack.c.bf16 %v6836, %v6836
    %v7071 = vpack.c.bf16 %v6837, %v6837
    %v7072 = vpack.c.bf16 %v6838, %v6838
    %v7073 = vpack.c.bf16 %v6839, %v6839
    %v7074 = vpack.c.bf16 %v6840, %v6840
    %v7075 = vpack.c.bf16 %v6841, %v6841
    %v7076 = vpack.c.bf16 %v6842, %v6842
    %v7077 = vpack.c.bf16 %v6843, %v6843
    %v7078 = vpack.c.bf16 %v6844, %v6844
    %v7079 = vpack.c.bf16 %v6845, %v6845
    %v7080 = vpack.c.bf16 %v6846, %v6846
    %v7081 = vpack.c.bf16 %v6847, %v6847
    %v7082 = vpack.c.bf16 %v6848, %v6848
    %v7083 = vpack.c.bf16 %v6849, %v6849
    %v7084 = vpack.c.bf16 %v6850, %v6850
    %v7085 = vpack.c.bf16 %v6851, %v6851
    %v7086 = vpack.c.bf16 %v6852, %v6852
    %v7087 = vpack.c.bf16 %v6853, %v6853
    %v7088 = vpack.c.bf16 %v6854, %v6854
    %v7089 = vpack.c.bf16 %v6855, %v6855
    %v7090 = vpack.c.bf16 %v6856, %v6856
    %v7091 = vpack.c.bf16 %v6857, %v6857
    %v7092 = vpack.c.bf16 %v6858, %v6858
    %v7093 = vpack.c.bf16 %v6859, %v6859
    %v7094 = vpack.c.bf16 %v6860, %v6860
    %v7095 = vpack.c.bf16 %v6861, %v6861
    %v7096 = vpack.c.bf16 %v6862, %v6862
    %v7097 = vpack.c.bf16 %v6863, %v6863
    %v7098 = vpack.c.bf16 %v6864, %v6864
    %v7099 = vpack.c.bf16 %v6865, %v6865
    %v7100 = vpack.c.bf16 %v6866, %v6866
    %v7101 = vpack.c.bf16 %v6867, %v6867
    %v7102 = vpack.c.bf16 %v6868, %v6868
    %v7103 = vpack.c.bf16 %v6869, %v6869
    %v7104 = vpack.c.bf16 %v6870, %v6870
    %v7105 = vpack.c.bf16 %v6871, %v6871
    %v7106 = vpack.c.bf16 %v6872, %v6872
    %v7107 = vpack.c.bf16 %v6873, %v6873
    %v7108 = vpack.c.bf16 %v6874, %v6874
    %v7109 = vpack.c.bf16 %v6875, %v6875
    %v7110 = vpack.c.bf16 %v6876, %v6876
    %v7111 = vpack.c.bf16 %v6877, %v6877
    %v7112 = vpack.c.bf16 %v6878, %v6878
    %v7113 = vpack.c.bf16 %v6879, %v6879
    %v7114 = vpack.c.bf16 %v6880, %v6880
    %v7115 = vpack.c.bf16 %v6881, %v6881
    %v7116 = vpack.c.bf16 %v6882, %v6882
    %v7117 = vpack.c.bf16 %v6883, %v6883
    %v7118 = vpack.c.bf16 %v6884, %v6884
    %v7119 = vpack.c.bf16 %v6885, %v6885
    %v7120 = vpack.c.bf16 %v6886, %v6886
    %v7121 = vpack.c.bf16 %v6887, %v6887
    %v7122 = vpack.c.bf16 %v6888, %v6888
    %s7123 = sld [smem:[#allocation5]]
    %v7124 = vstv %s7123
    %7125 = vmatprep.subr.bf16.mxu0 0
    %7126 = vmatpush1.bf16.xpose.msra.mxu0 0
    %7127 = vmatprep.subr.bf16.mxu0 0
    %7128 = vmatpush1.bf16.xpose.msra.mxu0 0
    %7129 = vmatprep.subr.bf16.mxu0 0
    %7130 = vmatpush1.bf16.xpose.msra.mxu0 0
    %7131 = vmatprep.subr.bf16.mxu0 0
    %7132 = vmatpush1.bf16.xpose.msra.mxu0 0
    %7133 = vmatprep.subr.bf16.mxu0 0
    %7134 = vmatpush1.bf16.xpose.msra.mxu0 0
    %7135 = vmatprep.subr.bf16.mxu0 0
    %7136 = vmatpush1.bf16.xpose.msra.mxu0 0
    %7137 = vmatprep.subr.bf16.mxu0 0
    %7138 = vmatpush1.bf16.xpose.msra.mxu0 0
    %7139 = vmatprep.subr.bf16.mxu0 %v7060
    %7140 = vmatpush1.bf16.xpose.msra.mxu0 %v7059
    %7141 = vmatprep.subr.bf16.mxu0 0
    %7142 = vmatpush2.bf16.xpose.msra.mxu0 0
    %7143 = vmatprep.subr.bf16.mxu0 0
    %7144 = vmatpush2.bf16.xpose.msra.mxu0 0
    %7145 = vmatprep.subr.bf16.mxu0 0
    %7146 = vmatpush2.bf16.xpose.msra.mxu0 0
    %7147 = vmatprep.subr.bf16.mxu0 0
    %7148 = vmatpush2.bf16.xpose.msra.mxu0 0
    %7149 = vmatprep.subr.bf16.mxu0 0
    %7150 = vmatpush2.bf16.xpose.msra.mxu0 0
    %7151 = vmatprep.subr.bf16.mxu0 0
    %7152 = vmatpush2.bf16.xpose.msra.mxu0 0
    %7153 = vmatprep.subr.bf16.mxu0 0
    %7154 = vmatpush2.bf16.xpose.msra.mxu0 0
    %7155 = vmatprep.subr.bf16.mxu0 0
    %7156 = vmatpush2.bf16.xpose.msra.mxu0 0
    %7157 = vmatprep.mubr.bf16.mxu0 %v6996
    %7158 = vmatmul.mubr.bf16.gmra.mxu0 %v6995
    %v7159 = vpop.f32.mrf.mxu0
    %v7160 = vadd.f32 %v7124, %v7159
    %v7161 = vpop.f32.mrf.mxu0
    %v7162 = vpop.f32.mrf.mxu0
    %v7163 = vpop.f32.mrf.mxu0
    %7164 = vdwg.mxu0
    %7165 = vmatprep.subr.bf16.mxu0 0
    %7166 = vmatpush1.bf16.xpose.msra.mxu0 0
    %7167 = vmatprep.subr.bf16.mxu0 0
    %7168 = vmatpush1.bf16.xpose.msra.mxu0 0
    %7169 = vmatprep.subr.bf16.mxu0 0
    %7170 = vmatpush1.bf16.xpose.msra.mxu0 0
    %7171 = vmatprep.subr.bf16.mxu0 0
    %7172 = vmatpush1.bf16.xpose.msra.mxu0 0
    %7173 = vmatprep.subr.bf16.mxu0 0
    %7174 = vmatpush1.bf16.xpose.msra.mxu0 0
    %7175 = vmatprep.subr.bf16.mxu0 0
    %7176 = vmatpush1.bf16.xpose.msra.mxu0 0
    %7177 = vmatprep.subr.bf16.mxu0 0
    %7178 = vmatpush1.bf16.xpose.msra.mxu0 0
    %7179 = vmatprep.subr.bf16.mxu0 %v7062
    %7180 = vmatpush1.bf16.xpose.msra.mxu0 %v7061
    %7181 = vmatprep.subr.bf16.mxu0 0
    %7182 = vmatpush2.bf16.xpose.msra.mxu0 0
    %7183 = vmatprep.subr.bf16.mxu0 0
    %7184 = vmatpush2.bf16.xpose.msra.mxu0 0
    %7185 = vmatprep.subr.bf16.mxu0 0
    %7186 = vmatpush2.bf16.xpose.msra.mxu0 0
    %7187 = vmatprep.subr.bf16.mxu0 0
    %7188 = vmatpush2.bf16.xpose.msra.mxu0 0
    %7189 = vmatprep.subr.bf16.mxu0 0
    %7190 = vmatpush2.bf16.xpose.msra.mxu0 0
    %7191 = vmatprep.subr.bf16.mxu0 0
    %7192 = vmatpush2.bf16.xpose.msra.mxu0 0
    %7193 = vmatprep.subr.bf16.mxu0 0
    %7194 = vmatpush2.bf16.xpose.msra.mxu0 0
    %7195 = vmatprep.subr.bf16.mxu0 0
    %7196 = vmatpush2.bf16.xpose.msra.mxu0 0
    %7197 = vmatprep.mubr.bf16.mxu0 %v6998
    %7198 = vmatmul.mubr.bf16.gmra.mxu0 %v6997
    %v7199 = vpop.f32.mrf.mxu0
    %v7200 = vadd.f32 %v7160, %v7199
    %v7201 = vpop.f32.mrf.mxu0
    %v7202 = vpop.f32.mrf.mxu0
    %v7203 = vpop.f32.mrf.mxu0
    %7204 = vdwg.mxu0
    %7205 = vmatprep.subr.bf16.mxu0 0
    %7206 = vmatpush1.bf16.xpose.msra.mxu0 0
    %7207 = vmatprep.subr.bf16.mxu0 0
    %7208 = vmatpush1.bf16.xpose.msra.mxu0 0
    %7209 = vmatprep.subr.bf16.mxu0 0
    %7210 = vmatpush1.bf16.xpose.msra.mxu0 0
    %7211 = vmatprep.subr.bf16.mxu0 0
    %7212 = vmatpush1.bf16.xpose.msra.mxu0 0
    %7213 = vmatprep.subr.bf16.mxu0 0
    %7214 = vmatpush1.bf16.xpose.msra.mxu0 0
    %7215 = vmatprep.subr.bf16.mxu0 0
    %7216 = vmatpush1.bf16.xpose.msra.mxu0 0
    %7217 = vmatprep.subr.bf16.mxu0 0
    %7218 = vmatpush1.bf16.xpose.msra.mxu0 0
    %7219 = vmatprep.subr.bf16.mxu0 %v7064
    %7220 = vmatpush1.bf16.xpose.msra.mxu0 %v7063
    %7221 = vmatprep.subr.bf16.mxu0 0
    %7222 = vmatpush2.bf16.xpose.msra.mxu0 0
    %7223 = vmatprep.subr.bf16.mxu0 0
    %7224 = vmatpush2.bf16.xpose.msra.mxu0 0
    %7225 = vmatprep.subr.bf16.mxu0 0
    %7226 = vmatpush2.bf16.xpose.msra.mxu0 0
    %7227 = vmatprep.subr.bf16.mxu0 0
    %7228 = vmatpush2.bf16.xpose.msra.mxu0 0
    %7229 = vmatprep.subr.bf16.mxu0 0
    %7230 = vmatpush2.bf16.xpose.msra.mxu0 0
    %7231 = vmatprep.subr.bf16.mxu0 0
    %7232 = vmatpush2.bf16.xpose.msra.mxu0 0
    %7233 = vmatprep.subr.bf16.mxu0 0
    %7234 = vmatpush2.bf16.xpose.msra.mxu0 0
    %7235 = vmatprep.subr.bf16.mxu0 0
    %7236 = vmatpush2.bf16.xpose.msra.mxu0 0
    %7237 = vmatprep.mubr.bf16.mxu0 %v7000
    %7238 = vmatmul.mubr.bf16.gmra.mxu0 %v6999
    %v7239 = vpop.f32.mrf.mxu0
    %v7240 = vadd.f32 %v7200, %v7239
    %v7241 = vpop.f32.mrf.mxu0
    %v7242 = vpop.f32.mrf.mxu0
    %v7243 = vpop.f32.mrf.mxu0
    %7244 = vdwg.mxu0
    %7245 = vmatprep.subr.bf16.mxu0 0
    %7246 = vmatpush1.bf16.xpose.msra.mxu0 0
    %7247 = vmatprep.subr.bf16.mxu0 0
    %7248 = vmatpush1.bf16.xpose.msra.mxu0 0
    %7249 = vmatprep.subr.bf16.mxu0 0
    %7250 = vmatpush1.bf16.xpose.msra.mxu0 0
    %7251 = vmatprep.subr.bf16.mxu0 0
    %7252 = vmatpush1.bf16.xpose.msra.mxu0 0
    %7253 = vmatprep.subr.bf16.mxu0 0
    %7254 = vmatpush1.bf16.xpose.msra.mxu0 0
    %7255 = vmatprep.subr.bf16.mxu0 0
    %7256 = vmatpush1.bf16.xpose.msra.mxu0 0
    %7257 = vmatprep.subr.bf16.mxu0 0
    %7258 = vmatpush1.bf16.xpose.msra.mxu0 0
    %7259 = vmatprep.subr.bf16.mxu0 %v7066
    %7260 = vmatpush1.bf16.xpose.msra.mxu0 %v7065
    %7261 = vmatprep.subr.bf16.mxu0 0
    %7262 = vmatpush2.bf16.xpose.msra.mxu0 0
    %7263 = vmatprep.subr.bf16.mxu0 0
    %7264 = vmatpush2.bf16.xpose.msra.mxu0 0
    %7265 = vmatprep.subr.bf16.mxu0 0
    %7266 = vmatpush2.bf16.xpose.msra.mxu0 0
    %7267 = vmatprep.subr.bf16.mxu0 0
    %7268 = vmatpush2.bf16.xpose.msra.mxu0 0
    %7269 = vmatprep.subr.bf16.mxu0 0
    %7270 = vmatpush2.bf16.xpose.msra.mxu0 0
    %7271 = vmatprep.subr.bf16.mxu0 0
    %7272 = vmatpush2.bf16.xpose.msra.mxu0 0
    %7273 = vmatprep.subr.bf16.mxu0 0
    %7274 = vmatpush2.bf16.xpose.msra.mxu0 0
    %7275 = vmatprep.subr.bf16.mxu0 0
    %7276 = vmatpush2.bf16.xpose.msra.mxu0 0
    %7277 = vmatprep.mubr.bf16.mxu0 %v7002
    %7278 = vmatmul.mubr.bf16.gmra.mxu0 %v7001
    %v7279 = vpop.f32.mrf.mxu0
    %v7280 = vadd.f32 %v7240, %v7279
    %v7281 = vpop.f32.mrf.mxu0
    %v7282 = vpop.f32.mrf.mxu0
    %v7283 = vpop.f32.mrf.mxu0
    %7284 = vdwg.mxu0
    %7285 = vmatprep.subr.bf16.mxu0 0
    %7286 = vmatpush1.bf16.xpose.msra.mxu0 0
    %7287 = vmatprep.subr.bf16.mxu0 0
    %7288 = vmatpush1.bf16.xpose.msra.mxu0 0
    %7289 = vmatprep.subr.bf16.mxu0 0
    %7290 = vmatpush1.bf16.xpose.msra.mxu0 0
    %7291 = vmatprep.subr.bf16.mxu0 0
    %7292 = vmatpush1.bf16.xpose.msra.mxu0 0
    %7293 = vmatprep.subr.bf16.mxu0 0
    %7294 = vmatpush1.bf16.xpose.msra.mxu0 0
    %7295 = vmatprep.subr.bf16.mxu0 0
    %7296 = vmatpush1.bf16.xpose.msra.mxu0 0
    %7297 = vmatprep.subr.bf16.mxu0 0
    %7298 = vmatpush1.bf16.xpose.msra.mxu0 0
    %7299 = vmatprep.subr.bf16.mxu0 %v7068
    %7300 = vmatpush1.bf16.xpose.msra.mxu0 %v7067
    %7301 = vmatprep.subr.bf16.mxu0 0
    %7302 = vmatpush2.bf16.xpose.msra.mxu0 0
    %7303 = vmatprep.subr.bf16.mxu0 0
    %7304 = vmatpush2.bf16.xpose.msra.mxu0 0
    %7305 = vmatprep.subr.bf16.mxu0 0
    %7306 = vmatpush2.bf16.xpose.msra.mxu0 0
    %7307 = vmatprep.subr.bf16.mxu0 0
    %7308 = vmatpush2.bf16.xpose.msra.mxu0 0
    %7309 = vmatprep.subr.bf16.mxu0 0
    %7310 = vmatpush2.bf16.xpose.msra.mxu0 0
    %7311 = vmatprep.subr.bf16.mxu0 0
    %7312 = vmatpush2.bf16.xpose.msra.mxu0 0
    %7313 = vmatprep.subr.bf16.mxu0 0
    %7314 = vmatpush2.bf16.xpose.msra.mxu0 0
    %7315 = vmatprep.subr.bf16.mxu0 0
    %7316 = vmatpush2.bf16.xpose.msra.mxu0 0
    %7317 = vmatprep.mubr.bf16.mxu0 %v7004
    %7318 = vmatmul.mubr.bf16.gmra.mxu0 %v7003
    %v7319 = vpop.f32.mrf.mxu0
    %v7320 = vadd.f32 %v7124, %v7319
    %v7321 = vpop.f32.mrf.mxu0
    %v7322 = vpop.f32.mrf.mxu0
    %v7323 = vpop.f32.mrf.mxu0
    %7324 = vdwg.mxu0
    %7325 = vmatprep.subr.bf16.mxu0 0
    %7326 = vmatpush1.bf16.xpose.msra.mxu0 0
    %7327 = vmatprep.subr.bf16.mxu0 0
    %7328 = vmatpush1.bf16.xpose.msra.mxu0 0
    %7329 = vmatprep.subr.bf16.mxu0 0
    %7330 = vmatpush1.bf16.xpose.msra.mxu0 0
    %7331 = vmatprep.subr.bf16.mxu0 0
    %7332 = vmatpush1.bf16.xpose.msra.mxu0 0
    %7333 = vmatprep.subr.bf16.mxu0 0
    %7334 = vmatpush1.bf16.xpose.msra.mxu0 0
    %7335 = vmatprep.subr.bf16.mxu0 0
    %7336 = vmatpush1.bf16.xpose.msra.mxu0 0
    %7337 = vmatprep.subr.bf16.mxu0 0
    %7338 = vmatpush1.bf16.xpose.msra.mxu0 0
    %7339 = vmatprep.subr.bf16.mxu0 %v7070
    %7340 = vmatpush1.bf16.xpose.msra.mxu0 %v7069
    %7341 = vmatprep.subr.bf16.mxu0 0
    %7342 = vmatpush2.bf16.xpose.msra.mxu0 0
    %7343 = vmatprep.subr.bf16.mxu0 0
    %7344 = vmatpush2.bf16.xpose.msra.mxu0 0
    %7345 = vmatprep.subr.bf16.mxu0 0
    %7346 = vmatpush2.bf16.xpose.msra.mxu0 0
    %7347 = vmatprep.subr.bf16.mxu0 0
    %7348 = vmatpush2.bf16.xpose.msra.mxu0 0
    %7349 = vmatprep.subr.bf16.mxu0 0
    %7350 = vmatpush2.bf16.xpose.msra.mxu0 0
    %7351 = vmatprep.subr.bf16.mxu0 0
    %7352 = vmatpush2.bf16.xpose.msra.mxu0 0
    %7353 = vmatprep.subr.bf16.mxu0 0
    %7354 = vmatpush2.bf16.xpose.msra.mxu0 0
    %7355 = vmatprep.subr.bf16.mxu0 0
    %7356 = vmatpush2.bf16.xpose.msra.mxu0 0
    %7357 = vmatprep.mubr.bf16.mxu0 %v7006
    %7358 = vmatmul.mubr.bf16.gmra.mxu0 %v7005
    %v7359 = vpop.f32.mrf.mxu0
    %v7360 = vadd.f32 %v7320, %v7359
    %v7361 = vpop.f32.mrf.mxu0
    %v7362 = vpop.f32.mrf.mxu0
    %v7363 = vpop.f32.mrf.mxu0
    %7364 = vdwg.mxu0
    %7365 = vmatprep.subr.bf16.mxu0 0
    %7366 = vmatpush1.bf16.xpose.msra.mxu0 0
    %7367 = vmatprep.subr.bf16.mxu0 0
    %7368 = vmatpush1.bf16.xpose.msra.mxu0 0
    %7369 = vmatprep.subr.bf16.mxu0 0
    %7370 = vmatpush1.bf16.xpose.msra.mxu0 0
    %7371 = vmatprep.subr.bf16.mxu0 0
    %7372 = vmatpush1.bf16.xpose.msra.mxu0 0
    %7373 = vmatprep.subr.bf16.mxu0 0
    %7374 = vmatpush1.bf16.xpose.msra.mxu0 0
    %7375 = vmatprep.subr.bf16.mxu0 0
    %7376 = vmatpush1.bf16.xpose.msra.mxu0 0
    %7377 = vmatprep.subr.bf16.mxu0 0
    %7378 = vmatpush1.bf16.xpose.msra.mxu0 0
    %7379 = vmatprep.subr.bf16.mxu0 %v7072
    %7380 = vmatpush1.bf16.xpose.msra.mxu0 %v7071
    %7381 = vmatprep.subr.bf16.mxu0 0
    %7382 = vmatpush2.bf16.xpose.msra.mxu0 0
    %7383 = vmatprep.subr.bf16.mxu0 0
    %7384 = vmatpush2.bf16.xpose.msra.mxu0 0
    %7385 = vmatprep.subr.bf16.mxu0 0
    %7386 = vmatpush2.bf16.xpose.msra.mxu0 0
    %7387 = vmatprep.subr.bf16.mxu0 0
    %7388 = vmatpush2.bf16.xpose.msra.mxu0 0
    %7389 = vmatprep.subr.bf16.mxu0 0
    %7390 = vmatpush2.bf16.xpose.msra.mxu0 0
    %7391 = vmatprep.subr.bf16.mxu0 0
    %7392 = vmatpush2.bf16.xpose.msra.mxu0 0
    %7393 = vmatprep.subr.bf16.mxu0 0
    %7394 = vmatpush2.bf16.xpose.msra.mxu0 0
    %7395 = vmatprep.subr.bf16.mxu0 0
    %7396 = vmatpush2.bf16.xpose.msra.mxu0 0
    %7397 = vmatprep.mubr.bf16.mxu0 %v7008
    %7398 = vmatmul.mubr.bf16.gmra.mxu0 %v7007
    %v7399 = vpop.f32.mrf.mxu0
    %v7400 = vadd.f32 %v7360, %v7399
    %v7401 = vpop.f32.mrf.mxu0
    %v7402 = vpop.f32.mrf.mxu0
    %v7403 = vpop.f32.mrf.mxu0
    %7404 = vdwg.mxu0
    %7405 = vmatprep.subr.bf16.mxu0 0
    %7406 = vmatpush1.bf16.xpose.msra.mxu0 0
    %7407 = vmatprep.subr.bf16.mxu0 0
    %7408 = vmatpush1.bf16.xpose.msra.mxu0 0
    %7409 = vmatprep.subr.bf16.mxu0 0
    %7410 = vmatpush1.bf16.xpose.msra.mxu0 0
    %7411 = vmatprep.subr.bf16.mxu0 0
    %7412 = vmatpush1.bf16.xpose.msra.mxu0 0
    %7413 = vmatprep.subr.bf16.mxu0 0
    %7414 = vmatpush1.bf16.xpose.msra.mxu0 0
    %7415 = vmatprep.subr.bf16.mxu0 0
    %7416 = vmatpush1.bf16.xpose.msra.mxu0 0
    %7417 = vmatprep.subr.bf16.mxu0 0
    %7418 = vmatpush1.bf16.xpose.msra.mxu0 0
    %7419 = vmatprep.subr.bf16.mxu0 %v7074
    %7420 = vmatpush1.bf16.xpose.msra.mxu0 %v7073
    %7421 = vmatprep.subr.bf16.mxu0 0
    %7422 = vmatpush2.bf16.xpose.msra.mxu0 0
    %7423 = vmatprep.subr.bf16.mxu0 0
    %7424 = vmatpush2.bf16.xpose.msra.mxu0 0
    %7425 = vmatprep.subr.bf16.mxu0 0
    %7426 = vmatpush2.bf16.xpose.msra.mxu0 0
    %7427 = vmatprep.subr.bf16.mxu0 0
    %7428 = vmatpush2.bf16.xpose.msra.mxu0 0
    %7429 = vmatprep.subr.bf16.mxu0 0
    %7430 = vmatpush2.bf16.xpose.msra.mxu0 0
    %7431 = vmatprep.subr.bf16.mxu0 0
    %7432 = vmatpush2.bf16.xpose.msra.mxu0 0
    %7433 = vmatprep.subr.bf16.mxu0 0
    %7434 = vmatpush2.bf16.xpose.msra.mxu0 0
    %7435 = vmatprep.subr.bf16.mxu0 0
    %7436 = vmatpush2.bf16.xpose.msra.mxu0 0
    %7437 = vmatprep.mubr.bf16.mxu0 %v7010
    %7438 = vmatmul.mubr.bf16.gmra.mxu0 %v7009
    %v7439 = vpop.f32.mrf.mxu0
    %v7440 = vadd.f32 %v7400, %v7439
    %v7441 = vpop.f32.mrf.mxu0
    %v7442 = vpop.f32.mrf.mxu0
    %v7443 = vpop.f32.mrf.mxu0
    %7444 = vdwg.mxu0
    %7445 = vmatprep.subr.bf16.mxu0 0
    %7446 = vmatpush1.bf16.xpose.msra.mxu0 0
    %7447 = vmatprep.subr.bf16.mxu0 0
    %7448 = vmatpush1.bf16.xpose.msra.mxu0 0
    %7449 = vmatprep.subr.bf16.mxu0 0
    %7450 = vmatpush1.bf16.xpose.msra.mxu0 0
    %7451 = vmatprep.subr.bf16.mxu0 0
    %7452 = vmatpush1.bf16.xpose.msra.mxu0 0
    %7453 = vmatprep.subr.bf16.mxu0 0
    %7454 = vmatpush1.bf16.xpose.msra.mxu0 0
    %7455 = vmatprep.subr.bf16.mxu0 0
    %7456 = vmatpush1.bf16.xpose.msra.mxu0 0
    %7457 = vmatprep.subr.bf16.mxu0 0
    %7458 = vmatpush1.bf16.xpose.msra.mxu0 0
    %7459 = vmatprep.subr.bf16.mxu0 %v7076
    %7460 = vmatpush1.bf16.xpose.msra.mxu0 %v7075
    %7461 = vmatprep.subr.bf16.mxu0 0
    %7462 = vmatpush2.bf16.xpose.msra.mxu0 0
    %7463 = vmatprep.subr.bf16.mxu0 0
    %7464 = vmatpush2.bf16.xpose.msra.mxu0 0
    %7465 = vmatprep.subr.bf16.mxu0 0
    %7466 = vmatpush2.bf16.xpose.msra.mxu0 0
    %7467 = vmatprep.subr.bf16.mxu0 0
    %7468 = vmatpush2.bf16.xpose.msra.mxu0 0
    %7469 = vmatprep.subr.bf16.mxu0 0
    %7470 = vmatpush2.bf16.xpose.msra.mxu0 0
    %7471 = vmatprep.subr.bf16.mxu0 0
    %7472 = vmatpush2.bf16.xpose.msra.mxu0 0
    %7473 = vmatprep.subr.bf16.mxu0 0
    %7474 = vmatpush2.bf16.xpose.msra.mxu0 0
    %7475 = vmatprep.subr.bf16.mxu0 0
    %7476 = vmatpush2.bf16.xpose.msra.mxu0 0
    %7477 = vmatprep.mubr.bf16.mxu0 %v7012
    %7478 = vmatmul.mubr.bf16.gmra.mxu0 %v7011
    %v7479 = vpop.f32.mrf.mxu0
    %v7480 = vadd.f32 %v7124, %v7479
    %v7481 = vpop.f32.mrf.mxu0
    %v7482 = vpop.f32.mrf.mxu0
    %v7483 = vpop.f32.mrf.mxu0
    %7484 = vdwg.mxu0
    %7485 = vmatprep.subr.bf16.mxu0 0
    %7486 = vmatpush1.bf16.xpose.msra.mxu0 0
    %7487 = vmatprep.subr.bf16.mxu0 0
    %7488 = vmatpush1.bf16.xpose.msra.mxu0 0
    %7489 = vmatprep.subr.bf16.mxu0 0
    %7490 = vmatpush1.bf16.xpose.msra.mxu0 0
    %7491 = vmatprep.subr.bf16.mxu0 0
    %7492 = vmatpush1.bf16.xpose.msra.mxu0 0
    %7493 = vmatprep.subr.bf16.mxu0 0
    %7494 = vmatpush1.bf16.xpose.msra.mxu0 0
    %7495 = vmatprep.subr.bf16.mxu0 0
    %7496 = vmatpush1.bf16.xpose.msra.mxu0 0
    %7497 = vmatprep.subr.bf16.mxu0 0
    %7498 = vmatpush1.bf16.xpose.msra.mxu0 0
    %7499 = vmatprep.subr.bf16.mxu0 %v7078
    %7500 = vmatpush1.bf16.xpose.msra.mxu0 %v7077
    %7501 = vmatprep.subr.bf16.mxu0 0
    %7502 = vmatpush2.bf16.xpose.msra.mxu0 0
    %7503 = vmatprep.subr.bf16.mxu0 0
    %7504 = vmatpush2.bf16.xpose.msra.mxu0 0
    %7505 = vmatprep.subr.bf16.mxu0 0
    %7506 = vmatpush2.bf16.xpose.msra.mxu0 0
    %7507 = vmatprep.subr.bf16.mxu0 0
    %7508 = vmatpush2.bf16.xpose.msra.mxu0 0
    %7509 = vmatprep.subr.bf16.mxu0 0
    %7510 = vmatpush2.bf16.xpose.msra.mxu0 0
    %7511 = vmatprep.subr.bf16.mxu0 0
    %7512 = vmatpush2.bf16.xpose.msra.mxu0 0
    %7513 = vmatprep.subr.bf16.mxu0 0
    %7514 = vmatpush2.bf16.xpose.msra.mxu0 0
    %7515 = vmatprep.subr.bf16.mxu0 0
    %7516 = vmatpush2.bf16.xpose.msra.mxu0 0
    %7517 = vmatprep.mubr.bf16.mxu0 %v7014
    %7518 = vmatmul.mubr.bf16.gmra.mxu0 %v7013
    %v7519 = vpop.f32.mrf.mxu0
    %v7520 = vadd.f32 %v7480, %v7519
    %v7521 = vpop.f32.mrf.mxu0
    %v7522 = vpop.f32.mrf.mxu0
    %v7523 = vpop.f32.mrf.mxu0
    %7524 = vdwg.mxu0
    %7525 = vmatprep.subr.bf16.mxu0 0
    %7526 = vmatpush1.bf16.xpose.msra.mxu0 0
    %7527 = vmatprep.subr.bf16.mxu0 0
    %7528 = vmatpush1.bf16.xpose.msra.mxu0 0
    %7529 = vmatprep.subr.bf16.mxu0 0
    %7530 = vmatpush1.bf16.xpose.msra.mxu0 0
    %7531 = vmatprep.subr.bf16.mxu0 0
    %7532 = vmatpush1.bf16.xpose.msra.mxu0 0
    %7533 = vmatprep.subr.bf16.mxu0 0
    %7534 = vmatpush1.bf16.xpose.msra.mxu0 0
    %7535 = vmatprep.subr.bf16.mxu0 0
    %7536 = vmatpush1.bf16.xpose.msra.mxu0 0
    %7537 = vmatprep.subr.bf16.mxu0 0
    %7538 = vmatpush1.bf16.xpose.msra.mxu0 0
    %7539 = vmatprep.subr.bf16.mxu0 %v7080
    %7540 = vmatpush1.bf16.xpose.msra.mxu0 %v7079
    %7541 = vmatprep.subr.bf16.mxu0 0
    %7542 = vmatpush2.bf16.xpose.msra.mxu0 0
    %7543 = vmatprep.subr.bf16.mxu0 0
    %7544 = vmatpush2.bf16.xpose.msra.mxu0 0
    %7545 = vmatprep.subr.bf16.mxu0 0
    %7546 = vmatpush2.bf16.xpose.msra.mxu0 0
    %7547 = vmatprep.subr.bf16.mxu0 0
    %7548 = vmatpush2.bf16.xpose.msra.mxu0 0
    %7549 = vmatprep.subr.bf16.mxu0 0
    %7550 = vmatpush2.bf16.xpose.msra.mxu0 0
    %7551 = vmatprep.subr.bf16.mxu0 0
    %7552 = vmatpush2.bf16.xpose.msra.mxu0 0
    %7553 = vmatprep.subr.bf16.mxu0 0
    %7554 = vmatpush2.bf16.xpose.msra.mxu0 0
    %7555 = vmatprep.subr.bf16.mxu0 0
    %7556 = vmatpush2.bf16.xpose.msra.mxu0 0
    %7557 = vmatprep.mubr.bf16.mxu0 %v7016
    %7558 = vmatmul.mubr.bf16.gmra.mxu0 %v7015
    %v7559 = vpop.f32.mrf.mxu0
    %v7560 = vadd.f32 %v7520, %v7559
    %v7561 = vpop.f32.mrf.mxu0
    %v7562 = vpop.f32.mrf.mxu0
    %v7563 = vpop.f32.mrf.mxu0
    %7564 = vdwg.mxu0
    %7565 = vmatprep.subr.bf16.mxu0 0
    %7566 = vmatpush1.bf16.xpose.msra.mxu0 0
    %7567 = vmatprep.subr.bf16.mxu0 0
    %7568 = vmatpush1.bf16.xpose.msra.mxu0 0
    %7569 = vmatprep.subr.bf16.mxu0 0
    %7570 = vmatpush1.bf16.xpose.msra.mxu0 0
    %7571 = vmatprep.subr.bf16.mxu0 0
    %7572 = vmatpush1.bf16.xpose.msra.mxu0 0
    %7573 = vmatprep.subr.bf16.mxu0 0
    %7574 = vmatpush1.bf16.xpose.msra.mxu0 0
    %7575 = vmatprep.subr.bf16.mxu0 0
    %7576 = vmatpush1.bf16.xpose.msra.mxu0 0
    %7577 = vmatprep.subr.bf16.mxu0 0
    %7578 = vmatpush1.bf16.xpose.msra.mxu0 0
    %7579 = vmatprep.subr.bf16.mxu0 %v7082
    %7580 = vmatpush1.bf16.xpose.msra.mxu0 %v7081
    %7581 = vmatprep.subr.bf16.mxu0 0
    %7582 = vmatpush2.bf16.xpose.msra.mxu0 0
    %7583 = vmatprep.subr.bf16.mxu0 0
    %7584 = vmatpush2.bf16.xpose.msra.mxu0 0
    %7585 = vmatprep.subr.bf16.mxu0 0
    %7586 = vmatpush2.bf16.xpose.msra.mxu0 0
    %7587 = vmatprep.subr.bf16.mxu0 0
    %7588 = vmatpush2.bf16.xpose.msra.mxu0 0
    %7589 = vmatprep.subr.bf16.mxu0 0
    %7590 = vmatpush2.bf16.xpose.msra.mxu0 0
    %7591 = vmatprep.subr.bf16.mxu0 0
    %7592 = vmatpush2.bf16.xpose.msra.mxu0 0
    %7593 = vmatprep.subr.bf16.mxu0 0
    %7594 = vmatpush2.bf16.xpose.msra.mxu0 0
    %7595 = vmatprep.subr.bf16.mxu0 0
    %7596 = vmatpush2.bf16.xpose.msra.mxu0 0
    %7597 = vmatprep.mubr.bf16.mxu0 %v7018
    %7598 = vmatmul.mubr.bf16.gmra.mxu0 %v7017
    %v7599 = vpop.f32.mrf.mxu0
    %v7600 = vadd.f32 %v7560, %v7599
    %v7601 = vpop.f32.mrf.mxu0
    %v7602 = vpop.f32.mrf.mxu0
    %v7603 = vpop.f32.mrf.mxu0
    %7604 = vdwg.mxu0
    %7605 = vmatprep.subr.bf16.mxu0 0
    %7606 = vmatpush1.bf16.xpose.msra.mxu0 0
    %7607 = vmatprep.subr.bf16.mxu0 0
    %7608 = vmatpush1.bf16.xpose.msra.mxu0 0
    %7609 = vmatprep.subr.bf16.mxu0 0
    %7610 = vmatpush1.bf16.xpose.msra.mxu0 0
    %7611 = vmatprep.subr.bf16.mxu0 0
    %7612 = vmatpush1.bf16.xpose.msra.mxu0 0
    %7613 = vmatprep.subr.bf16.mxu0 0
    %7614 = vmatpush1.bf16.xpose.msra.mxu0 0
    %7615 = vmatprep.subr.bf16.mxu0 0
    %7616 = vmatpush1.bf16.xpose.msra.mxu0 0
    %7617 = vmatprep.subr.bf16.mxu0 0
    %7618 = vmatpush1.bf16.xpose.msra.mxu0 0
    %7619 = vmatprep.subr.bf16.mxu0 %v7084
    %7620 = vmatpush1.bf16.xpose.msra.mxu0 %v7083
    %7621 = vmatprep.subr.bf16.mxu0 0
    %7622 = vmatpush2.bf16.xpose.msra.mxu0 0
    %7623 = vmatprep.subr.bf16.mxu0 0
    %7624 = vmatpush2.bf16.xpose.msra.mxu0 0
    %7625 = vmatprep.subr.bf16.mxu0 0
    %7626 = vmatpush2.bf16.xpose.msra.mxu0 0
    %7627 = vmatprep.subr.bf16.mxu0 0
    %7628 = vmatpush2.bf16.xpose.msra.mxu0 0
    %7629 = vmatprep.subr.bf16.mxu0 0
    %7630 = vmatpush2.bf16.xpose.msra.mxu0 0
    %7631 = vmatprep.subr.bf16.mxu0 0
    %7632 = vmatpush2.bf16.xpose.msra.mxu0 0
    %7633 = vmatprep.subr.bf16.mxu0 0
    %7634 = vmatpush2.bf16.xpose.msra.mxu0 0
    %7635 = vmatprep.subr.bf16.mxu0 0
    %7636 = vmatpush2.bf16.xpose.msra.mxu0 0
    %7637 = vmatprep.mubr.bf16.mxu0 %v7020
    %7638 = vmatmul.mubr.bf16.gmra.mxu0 %v7019
    %v7639 = vpop.f32.mrf.mxu0
    %v7640 = vadd.f32 %v7124, %v7639
    %v7641 = vpop.f32.mrf.mxu0
    %v7642 = vpop.f32.mrf.mxu0
    %v7643 = vpop.f32.mrf.mxu0
    %7644 = vdwg.mxu0
    %7645 = vmatprep.subr.bf16.mxu0 0
    %7646 = vmatpush1.bf16.xpose.msra.mxu0 0
    %7647 = vmatprep.subr.bf16.mxu0 0
    %7648 = vmatpush1.bf16.xpose.msra.mxu0 0
    %7649 = vmatprep.subr.bf16.mxu0 0
    %7650 = vmatpush1.bf16.xpose.msra.mxu0 0
    %7651 = vmatprep.subr.bf16.mxu0 0
    %7652 = vmatpush1.bf16.xpose.msra.mxu0 0
    %7653 = vmatprep.subr.bf16.mxu0 0
    %7654 = vmatpush1.bf16.xpose.msra.mxu0 0
    %7655 = vmatprep.subr.bf16.mxu0 0
    %7656 = vmatpush1.bf16.xpose.msra.mxu0 0
    %7657 = vmatprep.subr.bf16.mxu0 0
    %7658 = vmatpush1.bf16.xpose.msra.mxu0 0
    %7659 = vmatprep.subr.bf16.mxu0 %v7086
    %7660 = vmatpush1.bf16.xpose.msra.mxu0 %v7085
    %7661 = vmatprep.subr.bf16.mxu0 0
    %7662 = vmatpush2.bf16.xpose.msra.mxu0 0
    %7663 = vmatprep.subr.bf16.mxu0 0
    %7664 = vmatpush2.bf16.xpose.msra.mxu0 0
    %7665 = vmatprep.subr.bf16.mxu0 0
    %7666 = vmatpush2.bf16.xpose.msra.mxu0 0
    %7667 = vmatprep.subr.bf16.mxu0 0
    %7668 = vmatpush2.bf16.xpose.msra.mxu0 0
    %7669 = vmatprep.subr.bf16.mxu0 0
    %7670 = vmatpush2.bf16.xpose.msra.mxu0 0
    %7671 = vmatprep.subr.bf16.mxu0 0
    %7672 = vmatpush2.bf16.xpose.msra.mxu0 0
    %7673 = vmatprep.subr.bf16.mxu0 0
    %7674 = vmatpush2.bf16.xpose.msra.mxu0 0
    %7675 = vmatprep.subr.bf16.mxu0 0
    %7676 = vmatpush2.bf16.xpose.msra.mxu0 0
    %7677 = vmatprep.mubr.bf16.mxu0 %v7022
    %7678 = vmatmul.mubr.bf16.gmra.mxu0 %v7021
    %v7679 = vpop.f32.mrf.mxu0
    %v7680 = vadd.f32 %v7640, %v7679
    %v7681 = vpop.f32.mrf.mxu0
    %v7682 = vpop.f32.mrf.mxu0
    %v7683 = vpop.f32.mrf.mxu0
    %7684 = vdwg.mxu0
    %7685 = vmatprep.subr.bf16.mxu0 0
    %7686 = vmatpush1.bf16.xpose.msra.mxu0 0
    %7687 = vmatprep.subr.bf16.mxu0 0
    %7688 = vmatpush1.bf16.xpose.msra.mxu0 0
    %7689 = vmatprep.subr.bf16.mxu0 0
    %7690 = vmatpush1.bf16.xpose.msra.mxu0 0
    %7691 = vmatprep.subr.bf16.mxu0 0
    %7692 = vmatpush1.bf16.xpose.msra.mxu0 0
    %7693 = vmatprep.subr.bf16.mxu0 0
    %7694 = vmatpush1.bf16.xpose.msra.mxu0 0
    %7695 = vmatprep.subr.bf16.mxu0 0
    %7696 = vmatpush1.bf16.xpose.msra.mxu0 0
    %7697 = vmatprep.subr.bf16.mxu0 0
    %7698 = vmatpush1.bf16.xpose.msra.mxu0 0
    %7699 = vmatprep.subr.bf16.mxu0 %v7088
    %7700 = vmatpush1.bf16.xpose.msra.mxu0 %v7087
    %7701 = vmatprep.subr.bf16.mxu0 0
    %7702 = vmatpush2.bf16.xpose.msra.mxu0 0
    %7703 = vmatprep.subr.bf16.mxu0 0
    %7704 = vmatpush2.bf16.xpose.msra.mxu0 0
    %7705 = vmatprep.subr.bf16.mxu0 0
    %7706 = vmatpush2.bf16.xpose.msra.mxu0 0
    %7707 = vmatprep.subr.bf16.mxu0 0
    %7708 = vmatpush2.bf16.xpose.msra.mxu0 0
    %7709 = vmatprep.subr.bf16.mxu0 0
    %7710 = vmatpush2.bf16.xpose.msra.mxu0 0
    %7711 = vmatprep.subr.bf16.mxu0 0
    %7712 = vmatpush2.bf16.xpose.msra.mxu0 0
    %7713 = vmatprep.subr.bf16.mxu0 0
    %7714 = vmatpush2.bf16.xpose.msra.mxu0 0
    %7715 = vmatprep.subr.bf16.mxu0 0
    %7716 = vmatpush2.bf16.xpose.msra.mxu0 0
    %7717 = vmatprep.mubr.bf16.mxu0 %v7024
    %7718 = vmatmul.mubr.bf16.gmra.mxu0 %v7023
    %v7719 = vpop.f32.mrf.mxu0
    %v7720 = vadd.f32 %v7680, %v7719
    %v7721 = vpop.f32.mrf.mxu0
    %v7722 = vpop.f32.mrf.mxu0
    %v7723 = vpop.f32.mrf.mxu0
    %7724 = vdwg.mxu0
    %7725 = vmatprep.subr.bf16.mxu0 0
    %7726 = vmatpush1.bf16.xpose.msra.mxu0 0
    %7727 = vmatprep.subr.bf16.mxu0 0
    %7728 = vmatpush1.bf16.xpose.msra.mxu0 0
    %7729 = vmatprep.subr.bf16.mxu0 0
    %7730 = vmatpush1.bf16.xpose.msra.mxu0 0
    %7731 = vmatprep.subr.bf16.mxu0 0
    %7732 = vmatpush1.bf16.xpose.msra.mxu0 0
    %7733 = vmatprep.subr.bf16.mxu0 0
    %7734 = vmatpush1.bf16.xpose.msra.mxu0 0
    %7735 = vmatprep.subr.bf16.mxu0 0
    %7736 = vmatpush1.bf16.xpose.msra.mxu0 0
    %7737 = vmatprep.subr.bf16.mxu0 0
    %7738 = vmatpush1.bf16.xpose.msra.mxu0 0
    %7739 = vmatprep.subr.bf16.mxu0 %v7090
    %7740 = vmatpush1.bf16.xpose.msra.mxu0 %v7089
    %7741 = vmatprep.subr.bf16.mxu0 0
    %7742 = vmatpush2.bf16.xpose.msra.mxu0 0
    %7743 = vmatprep.subr.bf16.mxu0 0
    %7744 = vmatpush2.bf16.xpose.msra.mxu0 0
    %7745 = vmatprep.subr.bf16.mxu0 0
    %7746 = vmatpush2.bf16.xpose.msra.mxu0 0
    %7747 = vmatprep.subr.bf16.mxu0 0
    %7748 = vmatpush2.bf16.xpose.msra.mxu0 0
    %7749 = vmatprep.subr.bf16.mxu0 0
    %7750 = vmatpush2.bf16.xpose.msra.mxu0 0
    %7751 = vmatprep.subr.bf16.mxu0 0
    %7752 = vmatpush2.bf16.xpose.msra.mxu0 0
    %7753 = vmatprep.subr.bf16.mxu0 0
    %7754 = vmatpush2.bf16.xpose.msra.mxu0 0
    %7755 = vmatprep.subr.bf16.mxu0 0
    %7756 = vmatpush2.bf16.xpose.msra.mxu0 0
    %7757 = vmatprep.mubr.bf16.mxu0 %v7026
    %7758 = vmatmul.mubr.bf16.gmra.mxu0 %v7025
    %v7759 = vpop.f32.mrf.mxu0
    %v7760 = vadd.f32 %v7720, %v7759
    %v7761 = vpop.f32.mrf.mxu0
    %v7762 = vpop.f32.mrf.mxu0
    %v7763 = vpop.f32.mrf.mxu0
    %7764 = vdwg.mxu0
    %7765 = vmatprep.subr.bf16.mxu0 0
    %7766 = vmatpush1.bf16.xpose.msra.mxu0 0
    %7767 = vmatprep.subr.bf16.mxu0 0
    %7768 = vmatpush1.bf16.xpose.msra.mxu0 0
    %7769 = vmatprep.subr.bf16.mxu0 0
    %7770 = vmatpush1.bf16.xpose.msra.mxu0 0
    %7771 = vmatprep.subr.bf16.mxu0 0
    %7772 = vmatpush1.bf16.xpose.msra.mxu0 0
    %7773 = vmatprep.subr.bf16.mxu0 0
    %7774 = vmatpush1.bf16.xpose.msra.mxu0 0
    %7775 = vmatprep.subr.bf16.mxu0 0
    %7776 = vmatpush1.bf16.xpose.msra.mxu0 0
    %7777 = vmatprep.subr.bf16.mxu0 0
    %7778 = vmatpush1.bf16.xpose.msra.mxu0 0
    %7779 = vmatprep.subr.bf16.mxu0 %v7092
    %7780 = vmatpush1.bf16.xpose.msra.mxu0 %v7091
    %7781 = vmatprep.subr.bf16.mxu0 0
    %7782 = vmatpush2.bf16.xpose.msra.mxu0 0
    %7783 = vmatprep.subr.bf16.mxu0 0
    %7784 = vmatpush2.bf16.xpose.msra.mxu0 0
    %7785 = vmatprep.subr.bf16.mxu0 0
    %7786 = vmatpush2.bf16.xpose.msra.mxu0 0
    %7787 = vmatprep.subr.bf16.mxu0 0
    %7788 = vmatpush2.bf16.xpose.msra.mxu0 0
    %7789 = vmatprep.subr.bf16.mxu0 0
    %7790 = vmatpush2.bf16.xpose.msra.mxu0 0
    %7791 = vmatprep.subr.bf16.mxu0 0
    %7792 = vmatpush2.bf16.xpose.msra.mxu0 0
    %7793 = vmatprep.subr.bf16.mxu0 0
    %7794 = vmatpush2.bf16.xpose.msra.mxu0 0
    %7795 = vmatprep.subr.bf16.mxu0 0
    %7796 = vmatpush2.bf16.xpose.msra.mxu0 0
    %7797 = vmatprep.mubr.bf16.mxu0 %v7028
    %7798 = vmatmul.mubr.bf16.gmra.mxu0 %v7027
    %v7799 = vpop.f32.mrf.mxu0
    %v7800 = vadd.f32 %v7124, %v7799
    %v7801 = vpop.f32.mrf.mxu0
    %v7802 = vpop.f32.mrf.mxu0
    %v7803 = vpop.f32.mrf.mxu0
    %7804 = vdwg.mxu0
    %7805 = vmatprep.subr.bf16.mxu0 0
    %7806 = vmatpush1.bf16.xpose.msra.mxu0 0
    %7807 = vmatprep.subr.bf16.mxu0 0
    %7808 = vmatpush1.bf16.xpose.msra.mxu0 0
    %7809 = vmatprep.subr.bf16.mxu0 0
    %7810 = vmatpush1.bf16.xpose.msra.mxu0 0
    %7811 = vmatprep.subr.bf16.mxu0 0
    %7812 = vmatpush1.bf16.xpose.msra.mxu0 0
    %7813 = vmatprep.subr.bf16.mxu0 0
    %7814 = vmatpush1.bf16.xpose.msra.mxu0 0
    %7815 = vmatprep.subr.bf16.mxu0 0
    %7816 = vmatpush1.bf16.xpose.msra.mxu0 0
    %7817 = vmatprep.subr.bf16.mxu0 0
    %7818 = vmatpush1.bf16.xpose.msra.mxu0 0
    %7819 = vmatprep.subr.bf16.mxu0 %v7094
    %7820 = vmatpush1.bf16.xpose.msra.mxu0 %v7093
    %7821 = vmatprep.subr.bf16.mxu0 0
    %7822 = vmatpush2.bf16.xpose.msra.mxu0 0
    %7823 = vmatprep.subr.bf16.mxu0 0
    %7824 = vmatpush2.bf16.xpose.msra.mxu0 0
    %7825 = vmatprep.subr.bf16.mxu0 0
    %7826 = vmatpush2.bf16.xpose.msra.mxu0 0
    %7827 = vmatprep.subr.bf16.mxu0 0
    %7828 = vmatpush2.bf16.xpose.msra.mxu0 0
    %7829 = vmatprep.subr.bf16.mxu0 0
    %7830 = vmatpush2.bf16.xpose.msra.mxu0 0
    %7831 = vmatprep.subr.bf16.mxu0 0
    %7832 = vmatpush2.bf16.xpose.msra.mxu0 0
    %7833 = vmatprep.subr.bf16.mxu0 0
    %7834 = vmatpush2.bf16.xpose.msra.mxu0 0
    %7835 = vmatprep.subr.bf16.mxu0 0
    %7836 = vmatpush2.bf16.xpose.msra.mxu0 0
    %7837 = vmatprep.mubr.bf16.mxu0 %v7030
    %7838 = vmatmul.mubr.bf16.gmra.mxu0 %v7029
    %v7839 = vpop.f32.mrf.mxu0
    %v7840 = vadd.f32 %v7800, %v7839
    %v7841 = vpop.f32.mrf.mxu0
    %v7842 = vpop.f32.mrf.mxu0
    %v7843 = vpop.f32.mrf.mxu0
    %7844 = vdwg.mxu0
    %7845 = vmatprep.subr.bf16.mxu0 0
    %7846 = vmatpush1.bf16.xpose.msra.mxu0 0
    %7847 = vmatprep.subr.bf16.mxu0 0
    %7848 = vmatpush1.bf16.xpose.msra.mxu0 0
    %7849 = vmatprep.subr.bf16.mxu0 0
    %7850 = vmatpush1.bf16.xpose.msra.mxu0 0
    %7851 = vmatprep.subr.bf16.mxu0 0
    %7852 = vmatpush1.bf16.xpose.msra.mxu0 0
    %7853 = vmatprep.subr.bf16.mxu0 0
    %7854 = vmatpush1.bf16.xpose.msra.mxu0 0
    %7855 = vmatprep.subr.bf16.mxu0 0
    %7856 = vmatpush1.bf16.xpose.msra.mxu0 0
    %7857 = vmatprep.subr.bf16.mxu0 0
    %7858 = vmatpush1.bf16.xpose.msra.mxu0 0
    %7859 = vmatprep.subr.bf16.mxu0 %v7096
    %7860 = vmatpush1.bf16.xpose.msra.mxu0 %v7095
    %7861 = vmatprep.subr.bf16.mxu0 0
    %7862 = vmatpush2.bf16.xpose.msra.mxu0 0
    %7863 = vmatprep.subr.bf16.mxu0 0
    %7864 = vmatpush2.bf16.xpose.msra.mxu0 0
    %7865 = vmatprep.subr.bf16.mxu0 0
    %7866 = vmatpush2.bf16.xpose.msra.mxu0 0
    %7867 = vmatprep.subr.bf16.mxu0 0
    %7868 = vmatpush2.bf16.xpose.msra.mxu0 0
    %7869 = vmatprep.subr.bf16.mxu0 0
    %7870 = vmatpush2.bf16.xpose.msra.mxu0 0
    %7871 = vmatprep.subr.bf16.mxu0 0
    %7872 = vmatpush2.bf16.xpose.msra.mxu0 0
    %7873 = vmatprep.subr.bf16.mxu0 0
    %7874 = vmatpush2.bf16.xpose.msra.mxu0 0
    %7875 = vmatprep.subr.bf16.mxu0 0
    %7876 = vmatpush2.bf16.xpose.msra.mxu0 0
    %7877 = vmatprep.mubr.bf16.mxu0 %v7032
    %7878 = vmatmul.mubr.bf16.gmra.mxu0 %v7031
    %v7879 = vpop.f32.mrf.mxu0
    %v7880 = vadd.f32 %v7840, %v7879
    %v7881 = vpop.f32.mrf.mxu0
    %v7882 = vpop.f32.mrf.mxu0
    %v7883 = vpop.f32.mrf.mxu0
    %7884 = vdwg.mxu0
    %7885 = vmatprep.subr.bf16.mxu0 0
    %7886 = vmatpush1.bf16.xpose.msra.mxu0 0
    %7887 = vmatprep.subr.bf16.mxu0 0
    %7888 = vmatpush1.bf16.xpose.msra.mxu0 0
    %7889 = vmatprep.subr.bf16.mxu0 0
    %7890 = vmatpush1.bf16.xpose.msra.mxu0 0
    %7891 = vmatprep.subr.bf16.mxu0 0
    %7892 = vmatpush1.bf16.xpose.msra.mxu0 0
    %7893 = vmatprep.subr.bf16.mxu0 0
    %7894 = vmatpush1.bf16.xpose.msra.mxu0 0
    %7895 = vmatprep.subr.bf16.mxu0 0
    %7896 = vmatpush1.bf16.xpose.msra.mxu0 0
    %7897 = vmatprep.subr.bf16.mxu0 0
    %7898 = vmatpush1.bf16.xpose.msra.mxu0 0
    %7899 = vmatprep.subr.bf16.mxu0 %v7098
    %7900 = vmatpush1.bf16.xpose.msra.mxu0 %v7097
    %7901 = vmatprep.subr.bf16.mxu0 0
    %7902 = vmatpush2.bf16.xpose.msra.mxu0 0
    %7903 = vmatprep.subr.bf16.mxu0 0
    %7904 = vmatpush2.bf16.xpose.msra.mxu0 0
    %7905 = vmatprep.subr.bf16.mxu0 0
    %7906 = vmatpush2.bf16.xpose.msra.mxu0 0
    %7907 = vmatprep.subr.bf16.mxu0 0
    %7908 = vmatpush2.bf16.xpose.msra.mxu0 0
    %7909 = vmatprep.subr.bf16.mxu0 0
    %7910 = vmatpush2.bf16.xpose.msra.mxu0 0
    %7911 = vmatprep.subr.bf16.mxu0 0
    %7912 = vmatpush2.bf16.xpose.msra.mxu0 0
    %7913 = vmatprep.subr.bf16.mxu0 0
    %7914 = vmatpush2.bf16.xpose.msra.mxu0 0
    %7915 = vmatprep.subr.bf16.mxu0 0
    %7916 = vmatpush2.bf16.xpose.msra.mxu0 0
    %7917 = vmatprep.mubr.bf16.mxu0 %v7034
    %7918 = vmatmul.mubr.bf16.gmra.mxu0 %v7033
    %v7919 = vpop.f32.mrf.mxu0
    %v7920 = vadd.f32 %v7880, %v7919
    %v7921 = vpop.f32.mrf.mxu0
    %v7922 = vpop.f32.mrf.mxu0
    %v7923 = vpop.f32.mrf.mxu0
    %7924 = vdwg.mxu0
    %7925 = vmatprep.subr.bf16.mxu0 0
    %7926 = vmatpush1.bf16.xpose.msra.mxu0 0
    %7927 = vmatprep.subr.bf16.mxu0 0
    %7928 = vmatpush1.bf16.xpose.msra.mxu0 0
    %7929 = vmatprep.subr.bf16.mxu0 0
    %7930 = vmatpush1.bf16.xpose.msra.mxu0 0
    %7931 = vmatprep.subr.bf16.mxu0 0
    %7932 = vmatpush1.bf16.xpose.msra.mxu0 0
    %7933 = vmatprep.subr.bf16.mxu0 0
    %7934 = vmatpush1.bf16.xpose.msra.mxu0 0
    %7935 = vmatprep.subr.bf16.mxu0 0
    %7936 = vmatpush1.bf16.xpose.msra.mxu0 0
    %7937 = vmatprep.subr.bf16.mxu0 0
    %7938 = vmatpush1.bf16.xpose.msra.mxu0 0
    %7939 = vmatprep.subr.bf16.mxu0 %v7100
    %7940 = vmatpush1.bf16.xpose.msra.mxu0 %v7099
    %7941 = vmatprep.subr.bf16.mxu0 0
    %7942 = vmatpush2.bf16.xpose.msra.mxu0 0
    %7943 = vmatprep.subr.bf16.mxu0 0
    %7944 = vmatpush2.bf16.xpose.msra.mxu0 0
    %7945 = vmatprep.subr.bf16.mxu0 0
    %7946 = vmatpush2.bf16.xpose.msra.mxu0 0
    %7947 = vmatprep.subr.bf16.mxu0 0
    %7948 = vmatpush2.bf16.xpose.msra.mxu0 0
    %7949 = vmatprep.subr.bf16.mxu0 0
    %7950 = vmatpush2.bf16.xpose.msra.mxu0 0
    %7951 = vmatprep.subr.bf16.mxu0 0
    %7952 = vmatpush2.bf16.xpose.msra.mxu0 0
    %7953 = vmatprep.subr.bf16.mxu0 0
    %7954 = vmatpush2.bf16.xpose.msra.mxu0 0
    %7955 = vmatprep.subr.bf16.mxu0 0
    %7956 = vmatpush2.bf16.xpose.msra.mxu0 0
    %7957 = vmatprep.mubr.bf16.mxu0 %v7036
    %7958 = vmatmul.mubr.bf16.gmra.mxu0 %v7035
    %v7959 = vpop.f32.mrf.mxu0
    %v7960 = vadd.f32 %v7124, %v7959
    %v7961 = vpop.f32.mrf.mxu0
    %v7962 = vpop.f32.mrf.mxu0
    %v7963 = vpop.f32.mrf.mxu0
    %7964 = vdwg.mxu0
    %7965 = vmatprep.subr.bf16.mxu0 0
    %7966 = vmatpush1.bf16.xpose.msra.mxu0 0
    %7967 = vmatprep.subr.bf16.mxu0 0
    %7968 = vmatpush1.bf16.xpose.msra.mxu0 0
    %7969 = vmatprep.subr.bf16.mxu0 0
    %7970 = vmatpush1.bf16.xpose.msra.mxu0 0
    %7971 = vmatprep.subr.bf16.mxu0 0
    %7972 = vmatpush1.bf16.xpose.msra.mxu0 0
    %7973 = vmatprep.subr.bf16.mxu0 0
    %7974 = vmatpush1.bf16.xpose.msra.mxu0 0
    %7975 = vmatprep.subr.bf16.mxu0 0
    %7976 = vmatpush1.bf16.xpose.msra.mxu0 0
    %7977 = vmatprep.subr.bf16.mxu0 0
    %7978 = vmatpush1.bf16.xpose.msra.mxu0 0
    %7979 = vmatprep.subr.bf16.mxu0 %v7102
    %7980 = vmatpush1.bf16.xpose.msra.mxu0 %v7101
    %7981 = vmatprep.subr.bf16.mxu0 0
    %7982 = vmatpush2.bf16.xpose.msra.mxu0 0
    %7983 = vmatprep.subr.bf16.mxu0 0
    %7984 = vmatpush2.bf16.xpose.msra.mxu0 0
    %7985 = vmatprep.subr.bf16.mxu0 0
    %7986 = vmatpush2.bf16.xpose.msra.mxu0 0
    %7987 = vmatprep.subr.bf16.mxu0 0
    %7988 = vmatpush2.bf16.xpose.msra.mxu0 0
    %7989 = vmatprep.subr.bf16.mxu0 0
    %7990 = vmatpush2.bf16.xpose.msra.mxu0 0
    %7991 = vmatprep.subr.bf16.mxu0 0
    %7992 = vmatpush2.bf16.xpose.msra.mxu0 0
    %7993 = vmatprep.subr.bf16.mxu0 0
    %7994 = vmatpush2.bf16.xpose.msra.mxu0 0
    %7995 = vmatprep.subr.bf16.mxu0 0
    %7996 = vmatpush2.bf16.xpose.msra.mxu0 0
    %7997 = vmatprep.mubr.bf16.mxu0 %v7038
    %7998 = vmatmul.mubr.bf16.gmra.mxu0 %v7037
    %v7999 = vpop.f32.mrf.mxu0
    %v8000 = vadd.f32 %v7960, %v7999
    %v8001 = vpop.f32.mrf.mxu0
    %v8002 = vpop.f32.mrf.mxu0
    %v8003 = vpop.f32.mrf.mxu0
    %8004 = vdwg.mxu0
    %8005 = vmatprep.subr.bf16.mxu0 0
    %8006 = vmatpush1.bf16.xpose.msra.mxu0 0
    %8007 = vmatprep.subr.bf16.mxu0 0
    %8008 = vmatpush1.bf16.xpose.msra.mxu0 0
    %8009 = vmatprep.subr.bf16.mxu0 0
    %8010 = vmatpush1.bf16.xpose.msra.mxu0 0
    %8011 = vmatprep.subr.bf16.mxu0 0
    %8012 = vmatpush1.bf16.xpose.msra.mxu0 0
    %8013 = vmatprep.subr.bf16.mxu0 0
    %8014 = vmatpush1.bf16.xpose.msra.mxu0 0
    %8015 = vmatprep.subr.bf16.mxu0 0
    %8016 = vmatpush1.bf16.xpose.msra.mxu0 0
    %8017 = vmatprep.subr.bf16.mxu0 0
    %8018 = vmatpush1.bf16.xpose.msra.mxu0 0
    %8019 = vmatprep.subr.bf16.mxu0 %v7104
    %8020 = vmatpush1.bf16.xpose.msra.mxu0 %v7103
    %8021 = vmatprep.subr.bf16.mxu0 0
    %8022 = vmatpush2.bf16.xpose.msra.mxu0 0
    %8023 = vmatprep.subr.bf16.mxu0 0
    %8024 = vmatpush2.bf16.xpose.msra.mxu0 0
    %8025 = vmatprep.subr.bf16.mxu0 0
    %8026 = vmatpush2.bf16.xpose.msra.mxu0 0
    %8027 = vmatprep.subr.bf16.mxu0 0
    %8028 = vmatpush2.bf16.xpose.msra.mxu0 0
    %8029 = vmatprep.subr.bf16.mxu0 0
    %8030 = vmatpush2.bf16.xpose.msra.mxu0 0
    %8031 = vmatprep.subr.bf16.mxu0 0
    %8032 = vmatpush2.bf16.xpose.msra.mxu0 0
    %8033 = vmatprep.subr.bf16.mxu0 0
    %8034 = vmatpush2.bf16.xpose.msra.mxu0 0
    %8035 = vmatprep.subr.bf16.mxu0 0
    %8036 = vmatpush2.bf16.xpose.msra.mxu0 0
    %8037 = vmatprep.mubr.bf16.mxu0 %v7040
    %8038 = vmatmul.mubr.bf16.gmra.mxu0 %v7039
    %v8039 = vpop.f32.mrf.mxu0
    %v8040 = vadd.f32 %v8000, %v8039
    %v8041 = vpop.f32.mrf.mxu0
    %v8042 = vpop.f32.mrf.mxu0
    %v8043 = vpop.f32.mrf.mxu0
    %8044 = vdwg.mxu0
    %8045 = vmatprep.subr.bf16.mxu0 0
    %8046 = vmatpush1.bf16.xpose.msra.mxu0 0
    %8047 = vmatprep.subr.bf16.mxu0 0
    %8048 = vmatpush1.bf16.xpose.msra.mxu0 0
    %8049 = vmatprep.subr.bf16.mxu0 0
    %8050 = vmatpush1.bf16.xpose.msra.mxu0 0
    %8051 = vmatprep.subr.bf16.mxu0 0
    %8052 = vmatpush1.bf16.xpose.msra.mxu0 0
    %8053 = vmatprep.subr.bf16.mxu0 0
    %8054 = vmatpush1.bf16.xpose.msra.mxu0 0
    %8055 = vmatprep.subr.bf16.mxu0 0
    %8056 = vmatpush1.bf16.xpose.msra.mxu0 0
    %8057 = vmatprep.subr.bf16.mxu0 0
    %8058 = vmatpush1.bf16.xpose.msra.mxu0 0
    %8059 = vmatprep.subr.bf16.mxu0 %v7106
    %8060 = vmatpush1.bf16.xpose.msra.mxu0 %v7105
    %8061 = vmatprep.subr.bf16.mxu0 0
    %8062 = vmatpush2.bf16.xpose.msra.mxu0 0
    %8063 = vmatprep.subr.bf16.mxu0 0
    %8064 = vmatpush2.bf16.xpose.msra.mxu0 0
    %8065 = vmatprep.subr.bf16.mxu0 0
    %8066 = vmatpush2.bf16.xpose.msra.mxu0 0
    %8067 = vmatprep.subr.bf16.mxu0 0
    %8068 = vmatpush2.bf16.xpose.msra.mxu0 0
    %8069 = vmatprep.subr.bf16.mxu0 0
    %8070 = vmatpush2.bf16.xpose.msra.mxu0 0
    %8071 = vmatprep.subr.bf16.mxu0 0
    %8072 = vmatpush2.bf16.xpose.msra.mxu0 0
    %8073 = vmatprep.subr.bf16.mxu0 0
    %8074 = vmatpush2.bf16.xpose.msra.mxu0 0
    %8075 = vmatprep.subr.bf16.mxu0 0
    %8076 = vmatpush2.bf16.xpose.msra.mxu0 0
    %8077 = vmatprep.mubr.bf16.mxu0 %v7042
    %8078 = vmatmul.mubr.bf16.gmra.mxu0 %v7041
    %v8079 = vpop.f32.mrf.mxu0
    %v8080 = vadd.f32 %v8040, %v8079
    %v8081 = vpop.f32.mrf.mxu0
    %v8082 = vpop.f32.mrf.mxu0
    %v8083 = vpop.f32.mrf.mxu0
    %8084 = vdwg.mxu0
    %8085 = vmatprep.subr.bf16.mxu0 0
    %8086 = vmatpush1.bf16.xpose.msra.mxu0 0
    %8087 = vmatprep.subr.bf16.mxu0 0
    %8088 = vmatpush1.bf16.xpose.msra.mxu0 0
    %8089 = vmatprep.subr.bf16.mxu0 0
    %8090 = vmatpush1.bf16.xpose.msra.mxu0 0
    %8091 = vmatprep.subr.bf16.mxu0 0
    %8092 = vmatpush1.bf16.xpose.msra.mxu0 0
    %8093 = vmatprep.subr.bf16.mxu0 0
    %8094 = vmatpush1.bf16.xpose.msra.mxu0 0
    %8095 = vmatprep.subr.bf16.mxu0 0
    %8096 = vmatpush1.bf16.xpose.msra.mxu0 0
    %8097 = vmatprep.subr.bf16.mxu0 0
    %8098 = vmatpush1.bf16.xpose.msra.mxu0 0
    %8099 = vmatprep.subr.bf16.mxu0 %v7108
    %8100 = vmatpush1.bf16.xpose.msra.mxu0 %v7107
    %8101 = vmatprep.subr.bf16.mxu0 0
    %8102 = vmatpush2.bf16.xpose.msra.mxu0 0
    %8103 = vmatprep.subr.bf16.mxu0 0
    %8104 = vmatpush2.bf16.xpose.msra.mxu0 0
    %8105 = vmatprep.subr.bf16.mxu0 0
    %8106 = vmatpush2.bf16.xpose.msra.mxu0 0
    %8107 = vmatprep.subr.bf16.mxu0 0
    %8108 = vmatpush2.bf16.xpose.msra.mxu0 0
    %8109 = vmatprep.subr.bf16.mxu0 0
    %8110 = vmatpush2.bf16.xpose.msra.mxu0 0
    %8111 = vmatprep.subr.bf16.mxu0 0
    %8112 = vmatpush2.bf16.xpose.msra.mxu0 0
    %8113 = vmatprep.subr.bf16.mxu0 0
    %8114 = vmatpush2.bf16.xpose.msra.mxu0 0
    %8115 = vmatprep.subr.bf16.mxu0 0
    %8116 = vmatpush2.bf16.xpose.msra.mxu0 0
    %8117 = vmatprep.mubr.bf16.mxu0 %v7044
    %8118 = vmatmul.mubr.bf16.gmra.mxu0 %v7043
    %v8119 = vpop.f32.mrf.mxu0
    %v8120 = vadd.f32 %v7124, %v8119
    %v8121 = vpop.f32.mrf.mxu0
    %v8122 = vpop.f32.mrf.mxu0
    %v8123 = vpop.f32.mrf.mxu0
    %8124 = vdwg.mxu0
    %8125 = vmatprep.subr.bf16.mxu0 0
    %8126 = vmatpush1.bf16.xpose.msra.mxu0 0
    %8127 = vmatprep.subr.bf16.mxu0 0
    %8128 = vmatpush1.bf16.xpose.msra.mxu0 0
    %8129 = vmatprep.subr.bf16.mxu0 0
    %8130 = vmatpush1.bf16.xpose.msra.mxu0 0
    %8131 = vmatprep.subr.bf16.mxu0 0
    %8132 = vmatpush1.bf16.xpose.msra.mxu0 0
    %8133 = vmatprep.subr.bf16.mxu0 0
    %8134 = vmatpush1.bf16.xpose.msra.mxu0 0
    %8135 = vmatprep.subr.bf16.mxu0 0
    %8136 = vmatpush1.bf16.xpose.msra.mxu0 0
    %8137 = vmatprep.subr.bf16.mxu0 0
    %8138 = vmatpush1.bf16.xpose.msra.mxu0 0
    %8139 = vmatprep.subr.bf16.mxu0 %v7110
    %8140 = vmatpush1.bf16.xpose.msra.mxu0 %v7109
    %8141 = vmatprep.subr.bf16.mxu0 0
    %8142 = vmatpush2.bf16.xpose.msra.mxu0 0
    %8143 = vmatprep.subr.bf16.mxu0 0
    %8144 = vmatpush2.bf16.xpose.msra.mxu0 0
    %8145 = vmatprep.subr.bf16.mxu0 0
    %8146 = vmatpush2.bf16.xpose.msra.mxu0 0
    %8147 = vmatprep.subr.bf16.mxu0 0
    %8148 = vmatpush2.bf16.xpose.msra.mxu0 0
    %8149 = vmatprep.subr.bf16.mxu0 0
    %8150 = vmatpush2.bf16.xpose.msra.mxu0 0
    %8151 = vmatprep.subr.bf16.mxu0 0
    %8152 = vmatpush2.bf16.xpose.msra.mxu0 0
    %8153 = vmatprep.subr.bf16.mxu0 0
    %8154 = vmatpush2.bf16.xpose.msra.mxu0 0
    %8155 = vmatprep.subr.bf16.mxu0 0
    %8156 = vmatpush2.bf16.xpose.msra.mxu0 0
    %8157 = vmatprep.mubr.bf16.mxu0 %v7046
    %8158 = vmatmul.mubr.bf16.gmra.mxu0 %v7045
    %v8159 = vpop.f32.mrf.mxu0
    %v8160 = vadd.f32 %v8120, %v8159
    %v8161 = vpop.f32.mrf.mxu0
    %v8162 = vpop.f32.mrf.mxu0
    %v8163 = vpop.f32.mrf.mxu0
    %8164 = vdwg.mxu0
    %8165 = vmatprep.subr.bf16.mxu0 0
    %8166 = vmatpush1.bf16.xpose.msra.mxu0 0
    %8167 = vmatprep.subr.bf16.mxu0 0
    %8168 = vmatpush1.bf16.xpose.msra.mxu0 0
    %8169 = vmatprep.subr.bf16.mxu0 0
    %8170 = vmatpush1.bf16.xpose.msra.mxu0 0
    %8171 = vmatprep.subr.bf16.mxu0 0
    %8172 = vmatpush1.bf16.xpose.msra.mxu0 0
    %8173 = vmatprep.subr.bf16.mxu0 0
    %8174 = vmatpush1.bf16.xpose.msra.mxu0 0
    %8175 = vmatprep.subr.bf16.mxu0 0
    %8176 = vmatpush1.bf16.xpose.msra.mxu0 0
    %8177 = vmatprep.subr.bf16.mxu0 0
    %8178 = vmatpush1.bf16.xpose.msra.mxu0 0
    %8179 = vmatprep.subr.bf16.mxu0 %v7112
    %8180 = vmatpush1.bf16.xpose.msra.mxu0 %v7111
    %8181 = vmatprep.subr.bf16.mxu0 0
    %8182 = vmatpush2.bf16.xpose.msra.mxu0 0
    %8183 = vmatprep.subr.bf16.mxu0 0
    %8184 = vmatpush2.bf16.xpose.msra.mxu0 0
    %8185 = vmatprep.subr.bf16.mxu0 0
    %8186 = vmatpush2.bf16.xpose.msra.mxu0 0
    %8187 = vmatprep.subr.bf16.mxu0 0
    %8188 = vmatpush2.bf16.xpose.msra.mxu0 0
    %8189 = vmatprep.subr.bf16.mxu0 0
    %8190 = vmatpush2.bf16.xpose.msra.mxu0 0
    %8191 = vmatprep.subr.bf16.mxu0 0
    %8192 = vmatpush2.bf16.xpose.msra.mxu0 0
    %8193 = vmatprep.subr.bf16.mxu0 0
    %8194 = vmatpush2.bf16.xpose.msra.mxu0 0
    %8195 = vmatprep.subr.bf16.mxu0 0
    %8196 = vmatpush2.bf16.xpose.msra.mxu0 0
    %8197 = vmatprep.mubr.bf16.mxu0 %v7048
    %8198 = vmatmul.mubr.bf16.gmra.mxu0 %v7047
    %v8199 = vpop.f32.mrf.mxu0
    %v8200 = vadd.f32 %v8160, %v8199
    %v8201 = vpop.f32.mrf.mxu0
    %v8202 = vpop.f32.mrf.mxu0
    %v8203 = vpop.f32.mrf.mxu0
    %8204 = vdwg.mxu0
    %8205 = vmatprep.subr.bf16.mxu0 0
    %8206 = vmatpush1.bf16.xpose.msra.mxu0 0
    %8207 = vmatprep.subr.bf16.mxu0 0
    %8208 = vmatpush1.bf16.xpose.msra.mxu0 0
    %8209 = vmatprep.subr.bf16.mxu0 0
    %8210 = vmatpush1.bf16.xpose.msra.mxu0 0
    %8211 = vmatprep.subr.bf16.mxu0 0
    %8212 = vmatpush1.bf16.xpose.msra.mxu0 0
    %8213 = vmatprep.subr.bf16.mxu0 0
    %8214 = vmatpush1.bf16.xpose.msra.mxu0 0
    %8215 = vmatprep.subr.bf16.mxu0 0
    %8216 = vmatpush1.bf16.xpose.msra.mxu0 0
    %8217 = vmatprep.subr.bf16.mxu0 0
    %8218 = vmatpush1.bf16.xpose.msra.mxu0 0
    %8219 = vmatprep.subr.bf16.mxu0 %v7114
    %8220 = vmatpush1.bf16.xpose.msra.mxu0 %v7113
    %8221 = vmatprep.subr.bf16.mxu0 0
    %8222 = vmatpush2.bf16.xpose.msra.mxu0 0
    %8223 = vmatprep.subr.bf16.mxu0 0
    %8224 = vmatpush2.bf16.xpose.msra.mxu0 0
    %8225 = vmatprep.subr.bf16.mxu0 0
    %8226 = vmatpush2.bf16.xpose.msra.mxu0 0
    %8227 = vmatprep.subr.bf16.mxu0 0
    %8228 = vmatpush2.bf16.xpose.msra.mxu0 0
    %8229 = vmatprep.subr.bf16.mxu0 0
    %8230 = vmatpush2.bf16.xpose.msra.mxu0 0
    %8231 = vmatprep.subr.bf16.mxu0 0
    %8232 = vmatpush2.bf16.xpose.msra.mxu0 0
    %8233 = vmatprep.subr.bf16.mxu0 0
    %8234 = vmatpush2.bf16.xpose.msra.mxu0 0
    %8235 = vmatprep.subr.bf16.mxu0 0
    %8236 = vmatpush2.bf16.xpose.msra.mxu0 0
    %8237 = vmatprep.mubr.bf16.mxu0 %v7050
    %8238 = vmatmul.mubr.bf16.gmra.mxu0 %v7049
    %v8239 = vpop.f32.mrf.mxu0
    %v8240 = vadd.f32 %v8200, %v8239
    %v8241 = vpop.f32.mrf.mxu0
    %v8242 = vpop.f32.mrf.mxu0
    %v8243 = vpop.f32.mrf.mxu0
    %8244 = vdwg.mxu0
    %8245 = vmatprep.subr.bf16.mxu0 0
    %8246 = vmatpush1.bf16.xpose.msra.mxu0 0
    %8247 = vmatprep.subr.bf16.mxu0 0
    %8248 = vmatpush1.bf16.xpose.msra.mxu0 0
    %8249 = vmatprep.subr.bf16.mxu0 0
    %8250 = vmatpush1.bf16.xpose.msra.mxu0 0
    %8251 = vmatprep.subr.bf16.mxu0 0
    %8252 = vmatpush1.bf16.xpose.msra.mxu0 0
    %8253 = vmatprep.subr.bf16.mxu0 0
    %8254 = vmatpush1.bf16.xpose.msra.mxu0 0
    %8255 = vmatprep.subr.bf16.mxu0 0
    %8256 = vmatpush1.bf16.xpose.msra.mxu0 0
    %8257 = vmatprep.subr.bf16.mxu0 0
    %8258 = vmatpush1.bf16.xpose.msra.mxu0 0
    %8259 = vmatprep.subr.bf16.mxu0 %v7116
    %8260 = vmatpush1.bf16.xpose.msra.mxu0 %v7115
    %8261 = vmatprep.subr.bf16.mxu0 0
    %8262 = vmatpush2.bf16.xpose.msra.mxu0 0
    %8263 = vmatprep.subr.bf16.mxu0 0
    %8264 = vmatpush2.bf16.xpose.msra.mxu0 0
    %8265 = vmatprep.subr.bf16.mxu0 0
    %8266 = vmatpush2.bf16.xpose.msra.mxu0 0
    %8267 = vmatprep.subr.bf16.mxu0 0
    %8268 = vmatpush2.bf16.xpose.msra.mxu0 0
    %8269 = vmatprep.subr.bf16.mxu0 0
    %8270 = vmatpush2.bf16.xpose.msra.mxu0 0
    %8271 = vmatprep.subr.bf16.mxu0 0
    %8272 = vmatpush2.bf16.xpose.msra.mxu0 0
    %8273 = vmatprep.subr.bf16.mxu0 0
    %8274 = vmatpush2.bf16.xpose.msra.mxu0 0
    %8275 = vmatprep.subr.bf16.mxu0 0
    %8276 = vmatpush2.bf16.xpose.msra.mxu0 0
    %8277 = vmatprep.mubr.bf16.mxu0 %v7052
    %8278 = vmatmul.mubr.bf16.gmra.mxu0 %v7051
    %v8279 = vpop.f32.mrf.mxu0
    %v8280 = vadd.f32 %v7124, %v8279
    %v8281 = vpop.f32.mrf.mxu0
    %v8282 = vpop.f32.mrf.mxu0
    %v8283 = vpop.f32.mrf.mxu0
    %8284 = vdwg.mxu0
    %8285 = vmatprep.subr.bf16.mxu0 0
    %8286 = vmatpush1.bf16.xpose.msra.mxu0 0
    %8287 = vmatprep.subr.bf16.mxu0 0
    %8288 = vmatpush1.bf16.xpose.msra.mxu0 0
    %8289 = vmatprep.subr.bf16.mxu0 0
    %8290 = vmatpush1.bf16.xpose.msra.mxu0 0
    %8291 = vmatprep.subr.bf16.mxu0 0
    %8292 = vmatpush1.bf16.xpose.msra.mxu0 0
    %8293 = vmatprep.subr.bf16.mxu0 0
    %8294 = vmatpush1.bf16.xpose.msra.mxu0 0
    %8295 = vmatprep.subr.bf16.mxu0 0
    %8296 = vmatpush1.bf16.xpose.msra.mxu0 0
    %8297 = vmatprep.subr.bf16.mxu0 0
    %8298 = vmatpush1.bf16.xpose.msra.mxu0 0
    %8299 = vmatprep.subr.bf16.mxu0 %v7118
    %8300 = vmatpush1.bf16.xpose.msra.mxu0 %v7117
    %8301 = vmatprep.subr.bf16.mxu0 0
    %8302 = vmatpush2.bf16.xpose.msra.mxu0 0
    %8303 = vmatprep.subr.bf16.mxu0 0
    %8304 = vmatpush2.bf16.xpose.msra.mxu0 0
    %8305 = vmatprep.subr.bf16.mxu0 0
    %8306 = vmatpush2.bf16.xpose.msra.mxu0 0
    %8307 = vmatprep.subr.bf16.mxu0 0
    %8308 = vmatpush2.bf16.xpose.msra.mxu0 0
    %8309 = vmatprep.subr.bf16.mxu0 0
    %8310 = vmatpush2.bf16.xpose.msra.mxu0 0
    %8311 = vmatprep.subr.bf16.mxu0 0
    %8312 = vmatpush2.bf16.xpose.msra.mxu0 0
    %8313 = vmatprep.subr.bf16.mxu0 0
    %8314 = vmatpush2.bf16.xpose.msra.mxu0 0
    %8315 = vmatprep.subr.bf16.mxu0 0
    %8316 = vmatpush2.bf16.xpose.msra.mxu0 0
    %8317 = vmatprep.mubr.bf16.mxu0 %v7054
    %8318 = vmatmul.mubr.bf16.gmra.mxu0 %v7053
    %v8319 = vpop.f32.mrf.mxu0
    %v8320 = vadd.f32 %v8280, %v8319
    %v8321 = vpop.f32.mrf.mxu0
    %v8322 = vpop.f32.mrf.mxu0
    %v8323 = vpop.f32.mrf.mxu0
    %8324 = vdwg.mxu0
    %8325 = vmatprep.subr.bf16.mxu0 0
    %8326 = vmatpush1.bf16.xpose.msra.mxu0 0
    %8327 = vmatprep.subr.bf16.mxu0 0
    %8328 = vmatpush1.bf16.xpose.msra.mxu0 0
    %8329 = vmatprep.subr.bf16.mxu0 0
    %8330 = vmatpush1.bf16.xpose.msra.mxu0 0
    %8331 = vmatprep.subr.bf16.mxu0 0
    %8332 = vmatpush1.bf16.xpose.msra.mxu0 0
    %8333 = vmatprep.subr.bf16.mxu0 0
    %8334 = vmatpush1.bf16.xpose.msra.mxu0 0
    %8335 = vmatprep.subr.bf16.mxu0 0
    %8336 = vmatpush1.bf16.xpose.msra.mxu0 0
    %8337 = vmatprep.subr.bf16.mxu0 0
    %8338 = vmatpush1.bf16.xpose.msra.mxu0 0
    %8339 = vmatprep.subr.bf16.mxu0 %v7120
    %8340 = vmatpush1.bf16.xpose.msra.mxu0 %v7119
    %8341 = vmatprep.subr.bf16.mxu0 0
    %8342 = vmatpush2.bf16.xpose.msra.mxu0 0
    %8343 = vmatprep.subr.bf16.mxu0 0
    %8344 = vmatpush2.bf16.xpose.msra.mxu0 0
    %8345 = vmatprep.subr.bf16.mxu0 0
    %8346 = vmatpush2.bf16.xpose.msra.mxu0 0
    %8347 = vmatprep.subr.bf16.mxu0 0
    %8348 = vmatpush2.bf16.xpose.msra.mxu0 0
    %8349 = vmatprep.subr.bf16.mxu0 0
    %8350 = vmatpush2.bf16.xpose.msra.mxu0 0
    %8351 = vmatprep.subr.bf16.mxu0 0
    %8352 = vmatpush2.bf16.xpose.msra.mxu0 0
    %8353 = vmatprep.subr.bf16.mxu0 0
    %8354 = vmatpush2.bf16.xpose.msra.mxu0 0
    %8355 = vmatprep.subr.bf16.mxu0 0
    %8356 = vmatpush2.bf16.xpose.msra.mxu0 0
    %8357 = vmatprep.mubr.bf16.mxu0 %v7056
    %8358 = vmatmul.mubr.bf16.gmra.mxu0 %v7055
    %v8359 = vpop.f32.mrf.mxu0
    %v8360 = vadd.f32 %v8320, %v8359
    %v8361 = vpop.f32.mrf.mxu0
    %v8362 = vpop.f32.mrf.mxu0
    %v8363 = vpop.f32.mrf.mxu0
    %8364 = vdwg.mxu0
    %8365 = vmatprep.subr.bf16.mxu0 0
    %8366 = vmatpush1.bf16.xpose.msra.mxu0 0
    %8367 = vmatprep.subr.bf16.mxu0 0
    %8368 = vmatpush1.bf16.xpose.msra.mxu0 0
    %8369 = vmatprep.subr.bf16.mxu0 0
    %8370 = vmatpush1.bf16.xpose.msra.mxu0 0
    %8371 = vmatprep.subr.bf16.mxu0 0
    %8372 = vmatpush1.bf16.xpose.msra.mxu0 0
    %8373 = vmatprep.subr.bf16.mxu0 0
    %8374 = vmatpush1.bf16.xpose.msra.mxu0 0
    %8375 = vmatprep.subr.bf16.mxu0 0
    %8376 = vmatpush1.bf16.xpose.msra.mxu0 0
    %8377 = vmatprep.subr.bf16.mxu0 0
    %8378 = vmatpush1.bf16.xpose.msra.mxu0 0
    %8379 = vmatprep.subr.bf16.mxu0 %v7122
    %8380 = vmatpush1.bf16.xpose.msra.mxu0 %v7121
    %8381 = vmatprep.subr.bf16.mxu0 0
    %8382 = vmatpush2.bf16.xpose.msra.mxu0 0
    %8383 = vmatprep.subr.bf16.mxu0 0
    %8384 = vmatpush2.bf16.xpose.msra.mxu0 0
    %8385 = vmatprep.subr.bf16.mxu0 0
    %8386 = vmatpush2.bf16.xpose.msra.mxu0 0
    %8387 = vmatprep.subr.bf16.mxu0 0
    %8388 = vmatpush2.bf16.xpose.msra.mxu0 0
    %8389 = vmatprep.subr.bf16.mxu0 0
    %8390 = vmatpush2.bf16.xpose.msra.mxu0 0
    %8391 = vmatprep.subr.bf16.mxu0 0
    %8392 = vmatpush2.bf16.xpose.msra.mxu0 0
    %8393 = vmatprep.subr.bf16.mxu0 0
    %8394 = vmatpush2.bf16.xpose.msra.mxu0 0
    %8395 = vmatprep.subr.bf16.mxu0 0
    %8396 = vmatpush2.bf16.xpose.msra.mxu0 0
    %8397 = vmatprep.mubr.bf16.mxu0 %v7058
    %8398 = vmatmul.mubr.bf16.gmra.mxu0 %v7057
    %v8399 = vpop.f32.mrf.mxu0
    %v8400 = vadd.f32 %v8360, %v8399
    %v8401 = vpop.f32.mrf.mxu0
    %v8402 = vpop.f32.mrf.mxu0
    %v8403 = vpop.f32.mrf.mxu0
    %8404 = vdwg.mxu0
    %vm8405 = vcmask 64512
    %8406 = vst.msk [vmem:[%s15] sm:$0xff] %vm8405, %v7280
    %8407 = vst.msk [vmem:[%s15 + $0x8] sm:$0xff] %vm8405, %v7440
    %8408 = vst.msk [vmem:[%s15 + $0x10] sm:$0xff] %vm8405, %v7600
    %8409 = vst.msk [vmem:[%s15 + $0x18] sm:$0xff] %vm8405, %v7760
    %8410 = vst.msk [vmem:[%s15 + $0x20] sm:$0xff] %vm8405, %v7920
    %8411 = vst.msk [vmem:[%s15 + $0x28] sm:$0xff] %vm8405, %v8080
    %8412 = vst.msk [vmem:[%s15 + $0x30] sm:$0xff] %vm8405, %v8240
    %8413 = vst.msk [vmem:[%s15 + $0x38] sm:$0xff] %vm8405, %v8400
    %v8414 = vrot.slane %v6825, 4
    %v8415 = vadd.f32 %v6825, %v8414
    %v8416 = vrot.slane %v8415, 2
    %v8417 = vadd.f32 %v8415, %v8416
    %v8418 = vrot.slane %v8417, 1
    %v8419 = vadd.f32 %v8417, %v8418
    %v8420 = vrot.slane %v6826, 4
    %v8421 = vadd.f32 %v6826, %v8420
    %v8422 = vrot.slane %v8421, 2
    %v8423 = vadd.f32 %v8421, %v8422
    %v8424 = vrot.slane %v8423, 1
    %v8425 = vadd.f32 %v8423, %v8424
    %v8426 = vrot.slane %v6827, 4
    %v8427 = vadd.f32 %v6827, %v8426
    %v8428 = vrot.slane %v8427, 2
    %v8429 = vadd.f32 %v8427, %v8428
    %v8430 = vrot.slane %v8429, 1
    %v8431 = vadd.f32 %v8429, %v8430
    %v8432 = vrot.slane %v6828, 4
    %v8433 = vadd.f32 %v6828, %v8432
    %v8434 = vrot.slane %v8433, 2
    %v8435 = vadd.f32 %v8433, %v8434
    %v8436 = vrot.slane %v8435, 1
    %v8437 = vadd.f32 %v8435, %v8436
    %v8438 = vrot.slane %v6829, 4
    %v8439 = vadd.f32 %v6829, %v8438
    %v8440 = vrot.slane %v8439, 2
    %v8441 = vadd.f32 %v8439, %v8440
    %v8442 = vrot.slane %v8441, 1
    %v8443 = vadd.f32 %v8441, %v8442
    %v8444 = vrot.slane %v6830, 4
    %v8445 = vadd.f32 %v6830, %v8444
    %v8446 = vrot.slane %v8445, 2
    %v8447 = vadd.f32 %v8445, %v8446
    %v8448 = vrot.slane %v8447, 1
    %v8449 = vadd.f32 %v8447, %v8448
    %v8450 = vrot.slane %v6831, 4
    %v8451 = vadd.f32 %v6831, %v8450
    %v8452 = vrot.slane %v8451, 2
    %v8453 = vadd.f32 %v8451, %v8452
    %v8454 = vrot.slane %v8453, 1
    %v8455 = vadd.f32 %v8453, %v8454
    %v8456 = vrot.slane %v6832, 4
    %v8457 = vadd.f32 %v6832, %v8456
    %v8458 = vrot.slane %v8457, 2
    %v8459 = vadd.f32 %v8457, %v8458
    %v8460 = vrot.slane %v8459, 1
    %v8461 = vadd.f32 %v8459, %v8460
    %v8462 = vrot.slane %v6833, 4
    %v8463 = vadd.f32 %v6833, %v8462
    %v8464 = vrot.slane %v8463, 2
    %v8465 = vadd.f32 %v8463, %v8464
    %v8466 = vrot.slane %v8465, 1
    %v8467 = vadd.f32 %v8465, %v8466
    %v8468 = vrot.slane %v6834, 4
    %v8469 = vadd.f32 %v6834, %v8468
    %v8470 = vrot.slane %v8469, 2
    %v8471 = vadd.f32 %v8469, %v8470
    %v8472 = vrot.slane %v8471, 1
    %v8473 = vadd.f32 %v8471, %v8472
    %v8474 = vrot.slane %v6835, 4
    %v8475 = vadd.f32 %v6835, %v8474
    %v8476 = vrot.slane %v8475, 2
    %v8477 = vadd.f32 %v8475, %v8476
    %v8478 = vrot.slane %v8477, 1
    %v8479 = vadd.f32 %v8477, %v8478
    %v8480 = vrot.slane %v6836, 4
    %v8481 = vadd.f32 %v6836, %v8480
    %v8482 = vrot.slane %v8481, 2
    %v8483 = vadd.f32 %v8481, %v8482
    %v8484 = vrot.slane %v8483, 1
    %v8485 = vadd.f32 %v8483, %v8484
    %v8486 = vrot.slane %v6837, 4
    %v8487 = vadd.f32 %v6837, %v8486
    %v8488 = vrot.slane %v8487, 2
    %v8489 = vadd.f32 %v8487, %v8488
    %v8490 = vrot.slane %v8489, 1
    %v8491 = vadd.f32 %v8489, %v8490
    %v8492 = vrot.slane %v6838, 4
    %v8493 = vadd.f32 %v6838, %v8492
    %v8494 = vrot.slane %v8493, 2
    %v8495 = vadd.f32 %v8493, %v8494
    %v8496 = vrot.slane %v8495, 1
    %v8497 = vadd.f32 %v8495, %v8496
    %v8498 = vrot.slane %v6839, 4
    %v8499 = vadd.f32 %v6839, %v8498
    %v8500 = vrot.slane %v8499, 2
    %v8501 = vadd.f32 %v8499, %v8500
    %v8502 = vrot.slane %v8501, 1
    %v8503 = vadd.f32 %v8501, %v8502
    %v8504 = vrot.slane %v6840, 4
    %v8505 = vadd.f32 %v6840, %v8504
    %v8506 = vrot.slane %v8505, 2
    %v8507 = vadd.f32 %v8505, %v8506
    %v8508 = vrot.slane %v8507, 1
    %v8509 = vadd.f32 %v8507, %v8508
    %v8510 = vrot.slane %v6841, 4
    %v8511 = vadd.f32 %v6841, %v8510
    %v8512 = vrot.slane %v8511, 2
    %v8513 = vadd.f32 %v8511, %v8512
    %v8514 = vrot.slane %v8513, 1
    %v8515 = vadd.f32 %v8513, %v8514
    %v8516 = vrot.slane %v6842, 4
    %v8517 = vadd.f32 %v6842, %v8516
    %v8518 = vrot.slane %v8517, 2
    %v8519 = vadd.f32 %v8517, %v8518
    %v8520 = vrot.slane %v8519, 1
    %v8521 = vadd.f32 %v8519, %v8520
    %v8522 = vrot.slane %v6843, 4
    %v8523 = vadd.f32 %v6843, %v8522
    %v8524 = vrot.slane %v8523, 2
    %v8525 = vadd.f32 %v8523, %v8524
    %v8526 = vrot.slane %v8525, 1
    %v8527 = vadd.f32 %v8525, %v8526
    %v8528 = vrot.slane %v6844, 4
    %v8529 = vadd.f32 %v6844, %v8528
    %v8530 = vrot.slane %v8529, 2
    %v8531 = vadd.f32 %v8529, %v8530
    %v8532 = vrot.slane %v8531, 1
    %v8533 = vadd.f32 %v8531, %v8532
    %v8534 = vrot.slane %v6845, 4
    %v8535 = vadd.f32 %v6845, %v8534
    %v8536 = vrot.slane %v8535, 2
    %v8537 = vadd.f32 %v8535, %v8536
    %v8538 = vrot.slane %v8537, 1
    %v8539 = vadd.f32 %v8537, %v8538
    %v8540 = vrot.slane %v6846, 4
    %v8541 = vadd.f32 %v6846, %v8540
    %v8542 = vrot.slane %v8541, 2
    %v8543 = vadd.f32 %v8541, %v8542
    %v8544 = vrot.slane %v8543, 1
    %v8545 = vadd.f32 %v8543, %v8544
    %v8546 = vrot.slane %v6847, 4
    %v8547 = vadd.f32 %v6847, %v8546
    %v8548 = vrot.slane %v8547, 2
    %v8549 = vadd.f32 %v8547, %v8548
    %v8550 = vrot.slane %v8549, 1
    %v8551 = vadd.f32 %v8549, %v8550
    %v8552 = vrot.slane %v6848, 4
    %v8553 = vadd.f32 %v6848, %v8552
    %v8554 = vrot.slane %v8553, 2
    %v8555 = vadd.f32 %v8553, %v8554
    %v8556 = vrot.slane %v8555, 1
    %v8557 = vadd.f32 %v8555, %v8556
    %v8558 = vrot.slane %v6849, 4
    %v8559 = vadd.f32 %v6849, %v8558
    %v8560 = vrot.slane %v8559, 2
    %v8561 = vadd.f32 %v8559, %v8560
    %v8562 = vrot.slane %v8561, 1
    %v8563 = vadd.f32 %v8561, %v8562
    %v8564 = vrot.slane %v6850, 4
    %v8565 = vadd.f32 %v6850, %v8564
    %v8566 = vrot.slane %v8565, 2
    %v8567 = vadd.f32 %v8565, %v8566
    %v8568 = vrot.slane %v8567, 1
    %v8569 = vadd.f32 %v8567, %v8568
    %v8570 = vrot.slane %v6851, 4
    %v8571 = vadd.f32 %v6851, %v8570
    %v8572 = vrot.slane %v8571, 2
    %v8573 = vadd.f32 %v8571, %v8572
    %v8574 = vrot.slane %v8573, 1
    %v8575 = vadd.f32 %v8573, %v8574
    %v8576 = vrot.slane %v6852, 4
    %v8577 = vadd.f32 %v6852, %v8576
    %v8578 = vrot.slane %v8577, 2
    %v8579 = vadd.f32 %v8577, %v8578
    %v8580 = vrot.slane %v8579, 1
    %v8581 = vadd.f32 %v8579, %v8580
    %v8582 = vrot.slane %v6853, 4
    %v8583 = vadd.f32 %v6853, %v8582
    %v8584 = vrot.slane %v8583, 2
    %v8585 = vadd.f32 %v8583, %v8584
    %v8586 = vrot.slane %v8585, 1
    %v8587 = vadd.f32 %v8585, %v8586
    %v8588 = vrot.slane %v6854, 4
    %v8589 = vadd.f32 %v6854, %v8588
    %v8590 = vrot.slane %v8589, 2
    %v8591 = vadd.f32 %v8589, %v8590
    %v8592 = vrot.slane %v8591, 1
    %v8593 = vadd.f32 %v8591, %v8592
    %v8594 = vrot.slane %v6855, 4
    %v8595 = vadd.f32 %v6855, %v8594
    %v8596 = vrot.slane %v8595, 2
    %v8597 = vadd.f32 %v8595, %v8596
    %v8598 = vrot.slane %v8597, 1
    %v8599 = vadd.f32 %v8597, %v8598
    %v8600 = vrot.slane %v6856, 4
    %v8601 = vadd.f32 %v6856, %v8600
    %v8602 = vrot.slane %v8601, 2
    %v8603 = vadd.f32 %v8601, %v8602
    %v8604 = vrot.slane %v8603, 1
    %v8605 = vadd.f32 %v8603, %v8604
    %v8606 = vrot.slane %v6857, 4
    %v8607 = vadd.f32 %v6857, %v8606
    %v8608 = vrot.slane %v8607, 2
    %v8609 = vadd.f32 %v8607, %v8608
    %v8610 = vrot.slane %v8609, 1
    %v8611 = vadd.f32 %v8609, %v8610
    %v8612 = vrot.slane %v6858, 4
    %v8613 = vadd.f32 %v6858, %v8612
    %v8614 = vrot.slane %v8613, 2
    %v8615 = vadd.f32 %v8613, %v8614
    %v8616 = vrot.slane %v8615, 1
    %v8617 = vadd.f32 %v8615, %v8616
    %v8618 = vrot.slane %v6859, 4
    %v8619 = vadd.f32 %v6859, %v8618
    %v8620 = vrot.slane %v8619, 2
    %v8621 = vadd.f32 %v8619, %v8620
    %v8622 = vrot.slane %v8621, 1
    %v8623 = vadd.f32 %v8621, %v8622
    %v8624 = vrot.slane %v6860, 4
    %v8625 = vadd.f32 %v6860, %v8624
    %v8626 = vrot.slane %v8625, 2
    %v8627 = vadd.f32 %v8625, %v8626
    %v8628 = vrot.slane %v8627, 1
    %v8629 = vadd.f32 %v8627, %v8628
    %v8630 = vrot.slane %v6861, 4
    %v8631 = vadd.f32 %v6861, %v8630
    %v8632 = vrot.slane %v8631, 2
    %v8633 = vadd.f32 %v8631, %v8632
    %v8634 = vrot.slane %v8633, 1
    %v8635 = vadd.f32 %v8633, %v8634
    %v8636 = vrot.slane %v6862, 4
    %v8637 = vadd.f32 %v6862, %v8636
    %v8638 = vrot.slane %v8637, 2
    %v8639 = vadd.f32 %v8637, %v8638
    %v8640 = vrot.slane %v8639, 1
    %v8641 = vadd.f32 %v8639, %v8640
    %v8642 = vrot.slane %v6863, 4
    %v8643 = vadd.f32 %v6863, %v8642
    %v8644 = vrot.slane %v8643, 2
    %v8645 = vadd.f32 %v8643, %v8644
    %v8646 = vrot.slane %v8645, 1
    %v8647 = vadd.f32 %v8645, %v8646
    %v8648 = vrot.slane %v6864, 4
    %v8649 = vadd.f32 %v6864, %v8648
    %v8650 = vrot.slane %v8649, 2
    %v8651 = vadd.f32 %v8649, %v8650
    %v8652 = vrot.slane %v8651, 1
    %v8653 = vadd.f32 %v8651, %v8652
    %v8654 = vrot.slane %v6865, 4
    %v8655 = vadd.f32 %v6865, %v8654
    %v8656 = vrot.slane %v8655, 2
    %v8657 = vadd.f32 %v8655, %v8656
    %v8658 = vrot.slane %v8657, 1
    %v8659 = vadd.f32 %v8657, %v8658
    %v8660 = vrot.slane %v6866, 4
    %v8661 = vadd.f32 %v6866, %v8660
    %v8662 = vrot.slane %v8661, 2
    %v8663 = vadd.f32 %v8661, %v8662
    %v8664 = vrot.slane %v8663, 1
    %v8665 = vadd.f32 %v8663, %v8664
    %v8666 = vrot.slane %v6867, 4
    %v8667 = vadd.f32 %v6867, %v8666
    %v8668 = vrot.slane %v8667, 2
    %v8669 = vadd.f32 %v8667, %v8668
    %v8670 = vrot.slane %v8669, 1
    %v8671 = vadd.f32 %v8669, %v8670
    %v8672 = vrot.slane %v6868, 4
    %v8673 = vadd.f32 %v6868, %v8672
    %v8674 = vrot.slane %v8673, 2
    %v8675 = vadd.f32 %v8673, %v8674
    %v8676 = vrot.slane %v8675, 1
    %v8677 = vadd.f32 %v8675, %v8676
    %v8678 = vrot.slane %v6869, 4
    %v8679 = vadd.f32 %v6869, %v8678
    %v8680 = vrot.slane %v8679, 2
    %v8681 = vadd.f32 %v8679, %v8680
    %v8682 = vrot.slane %v8681, 1
    %v8683 = vadd.f32 %v8681, %v8682
    %v8684 = vrot.slane %v6870, 4
    %v8685 = vadd.f32 %v6870, %v8684
    %v8686 = vrot.slane %v8685, 2
    %v8687 = vadd.f32 %v8685, %v8686
    %v8688 = vrot.slane %v8687, 1
    %v8689 = vadd.f32 %v8687, %v8688
    %v8690 = vrot.slane %v6871, 4
    %v8691 = vadd.f32 %v6871, %v8690
    %v8692 = vrot.slane %v8691, 2
    %v8693 = vadd.f32 %v8691, %v8692
    %v8694 = vrot.slane %v8693, 1
    %v8695 = vadd.f32 %v8693, %v8694
    %v8696 = vrot.slane %v6872, 4
    %v8697 = vadd.f32 %v6872, %v8696
    %v8698 = vrot.slane %v8697, 2
    %v8699 = vadd.f32 %v8697, %v8698
    %v8700 = vrot.slane %v8699, 1
    %v8701 = vadd.f32 %v8699, %v8700
    %v8702 = vrot.slane %v6873, 4
    %v8703 = vadd.f32 %v6873, %v8702
    %v8704 = vrot.slane %v8703, 2
    %v8705 = vadd.f32 %v8703, %v8704
    %v8706 = vrot.slane %v8705, 1
    %v8707 = vadd.f32 %v8705, %v8706
    %v8708 = vrot.slane %v6874, 4
    %v8709 = vadd.f32 %v6874, %v8708
    %v8710 = vrot.slane %v8709, 2
    %v8711 = vadd.f32 %v8709, %v8710
    %v8712 = vrot.slane %v8711, 1
    %v8713 = vadd.f32 %v8711, %v8712
    %v8714 = vrot.slane %v6875, 4
    %v8715 = vadd.f32 %v6875, %v8714
    %v8716 = vrot.slane %v8715, 2
    %v8717 = vadd.f32 %v8715, %v8716
    %v8718 = vrot.slane %v8717, 1
    %v8719 = vadd.f32 %v8717, %v8718
    %v8720 = vrot.slane %v6876, 4
    %v8721 = vadd.f32 %v6876, %v8720
    %v8722 = vrot.slane %v8721, 2
    %v8723 = vadd.f32 %v8721, %v8722
    %v8724 = vrot.slane %v8723, 1
    %v8725 = vadd.f32 %v8723, %v8724
    %v8726 = vrot.slane %v6877, 4
    %v8727 = vadd.f32 %v6877, %v8726
    %v8728 = vrot.slane %v8727, 2
    %v8729 = vadd.f32 %v8727, %v8728
    %v8730 = vrot.slane %v8729, 1
    %v8731 = vadd.f32 %v8729, %v8730
    %v8732 = vrot.slane %v6878, 4
    %v8733 = vadd.f32 %v6878, %v8732
    %v8734 = vrot.slane %v8733, 2
    %v8735 = vadd.f32 %v8733, %v8734
    %v8736 = vrot.slane %v8735, 1
    %v8737 = vadd.f32 %v8735, %v8736
    %v8738 = vrot.slane %v6879, 4
    %v8739 = vadd.f32 %v6879, %v8738
    %v8740 = vrot.slane %v8739, 2
    %v8741 = vadd.f32 %v8739, %v8740
    %v8742 = vrot.slane %v8741, 1
    %v8743 = vadd.f32 %v8741, %v8742
    %v8744 = vrot.slane %v6880, 4
    %v8745 = vadd.f32 %v6880, %v8744
    %v8746 = vrot.slane %v8745, 2
    %v8747 = vadd.f32 %v8745, %v8746
    %v8748 = vrot.slane %v8747, 1
    %v8749 = vadd.f32 %v8747, %v8748
    %v8750 = vrot.slane %v6881, 4
    %v8751 = vadd.f32 %v6881, %v8750
    %v8752 = vrot.slane %v8751, 2
    %v8753 = vadd.f32 %v8751, %v8752
    %v8754 = vrot.slane %v8753, 1
    %v8755 = vadd.f32 %v8753, %v8754
    %v8756 = vrot.slane %v6882, 4
    %v8757 = vadd.f32 %v6882, %v8756
    %v8758 = vrot.slane %v8757, 2
    %v8759 = vadd.f32 %v8757, %v8758
    %v8760 = vrot.slane %v8759, 1
    %v8761 = vadd.f32 %v8759, %v8760
    %v8762 = vrot.slane %v6883, 4
    %v8763 = vadd.f32 %v6883, %v8762
    %v8764 = vrot.slane %v8763, 2
    %v8765 = vadd.f32 %v8763, %v8764
    %v8766 = vrot.slane %v8765, 1
    %v8767 = vadd.f32 %v8765, %v8766
    %v8768 = vrot.slane %v6884, 4
    %v8769 = vadd.f32 %v6884, %v8768
    %v8770 = vrot.slane %v8769, 2
    %v8771 = vadd.f32 %v8769, %v8770
    %v8772 = vrot.slane %v8771, 1
    %v8773 = vadd.f32 %v8771, %v8772
    %v8774 = vrot.slane %v6885, 4
    %v8775 = vadd.f32 %v6885, %v8774
    %v8776 = vrot.slane %v8775, 2
    %v8777 = vadd.f32 %v8775, %v8776
    %v8778 = vrot.slane %v8777, 1
    %v8779 = vadd.f32 %v8777, %v8778
    %v8780 = vrot.slane %v6886, 4
    %v8781 = vadd.f32 %v6886, %v8780
    %v8782 = vrot.slane %v8781, 2
    %v8783 = vadd.f32 %v8781, %v8782
    %v8784 = vrot.slane %v8783, 1
    %v8785 = vadd.f32 %v8783, %v8784
    %v8786 = vrot.slane %v6887, 4
    %v8787 = vadd.f32 %v6887, %v8786
    %v8788 = vrot.slane %v8787, 2
    %v8789 = vadd.f32 %v8787, %v8788
    %v8790 = vrot.slane %v8789, 1
    %v8791 = vadd.f32 %v8789, %v8790
    %v8792 = vrot.slane %v6888, 4
    %v8793 = vadd.f32 %v6888, %v8792
    %v8794 = vrot.slane %v8793, 2
    %v8795 = vadd.f32 %v8793, %v8794
    %v8796 = vrot.slane %v8795, 1
    %v8797 = vadd.f32 %v8795, %v8796
    %v8798 = vld [vmem:[#allocation9] sm:$0xff]
    %v8799 = vld [vmem:[#allocation9 + $0x8] sm:$0xff]
    %v8800 = vld [vmem:[#allocation9 + $0x10] sm:$0xff]
    %v8801 = vld [vmem:[#allocation9 + $0x18] sm:$0xff]
    %v8802 = vld [vmem:[#allocation9 + $0x20] sm:$0xff]
    %v8803 = vld [vmem:[#allocation9 + $0x28] sm:$0xff]
    %v8804 = vld [vmem:[#allocation9 + $0x30] sm:$0xff]
    %v8805 = vld [vmem:[#allocation9 + $0x38] sm:$0xff]
    %vm8870 = vcmask 1041409
    %v8871 = vsel %vm8870, %v8467, %v8419
    %vm8872 = vcmask 1042434
    %v8873 = vsel %vm8872, %v8515, %v8871
    %vm8874 = vcmask 1043459
    %v8875 = vsel %vm8874, %v8563, %v8873
    %vm8876 = vcmask 1044484
    %v8877 = vsel %vm8876, %v8611, %v8875
    %vm8878 = vcmask 1045509
    %v8879 = vsel %vm8878, %v8659, %v8877
    %vm8880 = vcmask 1046534
    %v8881 = vsel %vm8880, %v8707, %v8879
    %vm8882 = vcmask 1047559
    %v8883 = vsel %vm8882, %v8755, %v8881
    %v8884 = vsel %vm8870, %v8473, %v8425
    %v8885 = vsel %vm8872, %v8521, %v8884
    %v8886 = vsel %vm8874, %v8569, %v8885
    %v8887 = vsel %vm8876, %v8617, %v8886
    %v8888 = vsel %vm8878, %v8665, %v8887
    %v8889 = vsel %vm8880, %v8713, %v8888
    %v8890 = vsel %vm8882, %v8761, %v8889
    %v8891 = vsel %vm8870, %v8479, %v8431
    %v8892 = vsel %vm8872, %v8527, %v8891
    %v8893 = vsel %vm8874, %v8575, %v8892
    %v8894 = vsel %vm8876, %v8623, %v8893
    %v8895 = vsel %vm8878, %v8671, %v8894
    %v8896 = vsel %vm8880, %v8719, %v8895
    %v8897 = vsel %vm8882, %v8767, %v8896
    %v8898 = vsel %vm8870, %v8485, %v8437
    %v8899 = vsel %vm8872, %v8533, %v8898
    %v8900 = vsel %vm8874, %v8581, %v8899
    %v8901 = vsel %vm8876, %v8629, %v8900
    %v8902 = vsel %vm8878, %v8677, %v8901
    %v8903 = vsel %vm8880, %v8725, %v8902
    %v8904 = vsel %vm8882, %v8773, %v8903
    %v8905 = vsel %vm8870, %v8491, %v8443
    %v8906 = vsel %vm8872, %v8539, %v8905
    %v8907 = vsel %vm8874, %v8587, %v8906
    %v8908 = vsel %vm8876, %v8635, %v8907
    %v8909 = vsel %vm8878, %v8683, %v8908
    %v8910 = vsel %vm8880, %v8731, %v8909
    %v8911 = vsel %vm8882, %v8779, %v8910
    %v8912 = vsel %vm8870, %v8497, %v8449
    %v8913 = vsel %vm8872, %v8545, %v8912
    %v8914 = vsel %vm8874, %v8593, %v8913
    %v8915 = vsel %vm8876, %v8641, %v8914
    %v8916 = vsel %vm8878, %v8689, %v8915
    %v8917 = vsel %vm8880, %v8737, %v8916
    %v8918 = vsel %vm8882, %v8785, %v8917
    %v8919 = vsel %vm8870, %v8503, %v8455
    %v8920 = vsel %vm8872, %v8551, %v8919
    %v8921 = vsel %vm8874, %v8599, %v8920
    %v8922 = vsel %vm8876, %v8647, %v8921
    %v8923 = vsel %vm8878, %v8695, %v8922
    %v8924 = vsel %vm8880, %v8743, %v8923
    %v8925 = vsel %vm8882, %v8791, %v8924
    %v8926 = vsel %vm8870, %v8509, %v8461
    %v8927 = vsel %vm8872, %v8557, %v8926
    %v8928 = vsel %vm8874, %v8605, %v8927
    %v8929 = vsel %vm8876, %v8653, %v8928
    %v8930 = vsel %vm8878, %v8701, %v8929
    %v8931 = vsel %vm8880, %v8749, %v8930
    %v8932 = vsel %vm8882, %v8797, %v8931
    %v8941 = vmul.f32 %v8798, %v8883
    %v8942 = vmul.f32 %v8799, %v8890
    %v8943 = vmul.f32 %v8800, %v8897
    %v8944 = vmul.f32 %v8801, %v8904
    %v8945 = vmul.f32 %v8802, %v8911
    %v8946 = vmul.f32 %v8803, %v8918
    %v8947 = vmul.f32 %v8804, %v8925
    %v8948 = vmul.f32 %v8805, %v8932
    %v8949 = vld [vmem:[#allocation23] sm:$0xff]
    %v8951 = vlaneseq
    %v8952 = vshrl.u32 %v8951, 7
    %v8953 = vsub.s32 0, %v8952
    %v8954 = vrot.slane %v8949, %v8953
    %v8955 = vlaneseq
    %v8956 = vshrl.u32 %v8955, 7
    %v8957 = vsub.s32 1, %v8956
    %v8958 = vrot.slane %v8949, %v8957
    %v8959 = vlaneseq
    %v8960 = vshrl.u32 %v8959, 7
    %v8961 = vsub.s32 2, %v8960
    %v8962 = vrot.slane %v8949, %v8961
    %v8963 = vlaneseq
    %v8964 = vshrl.u32 %v8963, 7
    %v8965 = vsub.s32 3, %v8964
    %v8966 = vrot.slane %v8949, %v8965
    %v8967 = vlaneseq
    %v8968 = vshrl.u32 %v8967, 7
    %v8969 = vsub.s32 4, %v8968
    %v8970 = vrot.slane %v8949, %v8969
    %v8971 = vlaneseq
    %v8972 = vshrl.u32 %v8971, 7
    %v8973 = vsub.s32 5, %v8972
    %v8974 = vrot.slane %v8949, %v8973
    %v8975 = vlaneseq
    %v8976 = vshrl.u32 %v8975, 7
    %v8977 = vsub.s32 6, %v8976
    %v8978 = vrot.slane %v8949, %v8977
    %v8979 = vlaneseq
    %v8980 = vshrl.u32 %v8979, 7
    %v8981 = vsub.s32 7, %v8980
    %v8982 = vrot.slane %v8949, %v8981
    %v8991 = vmul.f32 %v8941, %v8954
    %v8992 = vmul.f32 %v8942, %v8958
    %v8993 = vmul.f32 %v8943, %v8962
    %v8994 = vmul.f32 %v8944, %v8966
    %v8995 = vmul.f32 %v8945, %v8970
    %v8996 = vmul.f32 %v8946, %v8974
    %v8997 = vmul.f32 %v8947, %v8978
    %v8998 = vmul.f32 %v8948, %v8982
    %v8999 = vadd.f32 %v8991, %v8992
    %v9000 = vadd.f32 %v8999, %v8993
    %v9001 = vadd.f32 %v9000, %v8994
    %v9002 = vadd.f32 %v9001, %v8995
    %v9003 = vadd.f32 %v9002, %v8996
    %v9004 = vadd.f32 %v9003, %v8997
    %v9005 = vadd.f32 %v9004, %v8998
    %9006 = vadd.xlane.f32.xlu0 %v9005
    %v9007 = vpop.xlane.xlu0 %9006
    %s9008 = sld [smem:[#allocation6]]
    %v9009 = vstv %s9008
    %v9010 = vadd.f32 %v9007, %v9009
    %vm9011 = vcmask 7168
    %9012 = vst.msk [vmem:[%s16] sm:$0xff] %vm9011, %v9010
    // Predicated region
    $region110: #{forward.1} parent=1 // pred_check
      _
    $region111: #{forward.1} parent=1 // pred_check_branch
      %9014 = sbr.rel (0) target = $region113
    $region112: #{forward.1} parent=1 // pred_region
      _
    $region113: #{forward.1} parent=1 // pred_fallthru
      _
    // Predicated region
    $region114: #{forward.1} parent=1 // pred_check
      _
    $region115: #{forward.1} parent=1 // pred_check_branch
      %9016 = sbr.rel (0) target = $region117
    $region116: #{forward.1} parent=1 // pred_region
      _
    $region117: #{forward.1} parent=1 // pred_fallthru
      _
    // Predicated region
    $region118: #{forward.1} parent=1 // pred_check
      _
    $region119: #{forward.1} parent=1 // pred_check_branch
      %9018 = sbr.rel (0) target = $region121
    $region120: #{forward.1} parent=1 // pred_region
      _
    $region121: #{forward.1} parent=1 // pred_fallthru
      _
    // Predicated region
    $region122: #{forward.1} parent=1 // pred_check
      _
    $region123: #{forward.1} parent=1 // pred_check_branch
      %9020 = sbr.rel (0) target = $region125
    $region124: #{forward.1} parent=1 // pred_region
      _
    $region125: #{forward.1} parent=1 // pred_fallthru
      _
    %9021 = vsyncpa [#allocation8], 1
    %9022 = vsyncpa [#allocation10], 1
    %9023 = vsyncpa [#allocation13], 1
    %9024 = vsyncpa [#allocation16], 1
    %9025 = vsyncpa [#allocation19], 1
    %9026 = vsyncpa [#allocation22], 1
  %9027 = vsyncmov [#allocation4]
  %s9028 = vpop.sfrf %9027
  %p9029 = scmp.eq.s32.totalorder %s9028, 0
  %p9030 = pneg %p9029
  %9032 = shalt.err (%p9030)
  %s9033 = scalar_lea.sflag [#allocation4], 1
  %9034 = vsyncmov %s9033
  %s9035 = vpop.sfrf %9034
  %p9036 = scmp.eq.s32.totalorder %s9035, 0
  %p9037 = pneg %p9036
  %9039 = shalt.err (%p9037)

</llo_original>
